<compile_context>
chip_gen: v5e
topology: v5e:2x2
jax: 0.10.0
libtpu: 0.0.40
codegen_flags: <defaults>
</compile_context>

<pallas_src>
import jax
import jax.numpy as jnp
import numpy as np
from jax.experimental import pallas as pl
from jax.experimental.pallas import tpu as pltpu

HIDDEN = 64            # LSTM hidden_dim per branch
H2 = 2 * HIDDEN        # lane-packed hidden state width [h1 | h2] = 128
G4 = 4 * H2            # packed gate width = 512
OUT_DIM = 128          # fc1 / fc2 output_dim
NUM_LAYERS = 3
SEQ = 12               # per-branch sequence length (24 split into 12 + 12)
XK = 8                 # padded contraction dim for the layer-0 projection

# Packed gate order: position -> source PyTorch gate index ([i f g o] source).
# Packed layout is [i | f | o | g] so the 3 sigmoid gates are contiguous.
GATE_ORDER = (0, 1, 3, 2)


# ---------------------------------------------------------------------------
# Pallas kernel: full forward pass (both LSTM branches, fc1/fc2, classifier).
# ---------------------------------------------------------------------------
def lstm_model_kernel(x_ref, bef_ref, wih0_ref, whh0_ref, wstack_ref, bias_ref,
                      fcw_ref, fcb_ref, clsw_ref, clsb_ref, out_ref):
    B = bef_ref.shape[0]
    bias = bias_ref[...]                       # (3, G4) f32, gate-major [i f o g]

    # Layer-0 input projections for all 12 steps + bias: one small MXU matmul.
    # x rows are t*B + b, columns [x1, x2, 0...]; wih0 rows 0/1 are the two
    # branch-masked layer-0 weight rows.
    gx0 = (jnp.dot(x_ref[...], wih0_ref[...],
                   preferred_element_type=jnp.float32)
           + bias[0:1])                                     # (SEQ*B, G4) f32

    whh0 = whh0_ref[...]                                    # (H2, G4) bf16
    wst = [wstack_ref[0], wstack_ref[1]]                    # each (2*H2, G4) bf16
    bl = [bias[1:2], bias[2:3]]

    def cell(gates, c_prev):
        # All slices 128-lane aligned; 3 sigmoid gates in one contiguous slice.
        sg = jax.nn.sigmoid(gates[:, 0:3 * H2])             # (B, 384)
        i = sg[:, 0 * H2:1 * H2]
        f = sg[:, 1 * H2:2 * H2]
        o = sg[:, 2 * H2:3 * H2]
        g = jnp.tanh(gates[:, 3 * H2:4 * H2])
        c_new = f * c_prev + i * g
        h_new = o * jnp.tanh(c_new)
        return h_new, c_new

    zero = jnp.zeros((B, H2), jnp.float32)
    h = [zero, zero, zero]                                  # f32 gate-math state
    hb = [zero.astype(jnp.bfloat16)] * NUM_LAYERS           # bf16 matmul operand
    c = [zero, zero, zero]

    # Wavefront schedule: at step w compute cell (l, t = w - l) for valid l.
    # Process layers top-down so every read within a wavefront still sees the
    # previous wavefront's values.  Cells inside a wavefront are independent.
    for w in range(SEQ + NUM_LAYERS - 1):                   # 14 wavefront steps
        for l in (2, 1, 0):
            t = w - l
            if t < 0 or t >= SEQ:
                continue
            if l == 0:
                gates = gx0[t * B:(t + 1) * B]
                if t > 0:
                    gates = gates + jnp.dot(hb[0], whh0,
                                            preferred_element_type=jnp.float32)
            else:
                if t == 0:
                    # h_same(t-1) == 0: only the W_ih half contributes.
                    gates = jnp.dot(hb[l - 1], wst[l - 1][:H2],
                                    preferred_element_type=jnp.float32) + bl[l - 1]
                else:
                    # Fused cell matmul: [h_below(t) | h_same(t-1)] @ [W_ih; W_hh]
                    lhs = jnp.concatenate([hb[l - 1], hb[l]], axis=1)  # (B, 2*H2)
                    gates = jnp.dot(lhs, wst[l - 1],
                                    preferred_element_type=jnp.float32) + bl[l - 1]
            h_new, c_new = cell(gates, c[l])
            h[l], c[l] = h_new, c_new
            hb[l] = h_new.astype(jnp.bfloat16)

    # fc1(h1) - fc2(h2) as a single matmul against [fcw1; -fcw2].
    diff = (jnp.dot(hb[2], fcw_ref[...], preferred_element_type=jnp.float32)
            + fcb_ref[...])                                 # (B, OUT_DIM) f32

    # Classifier MLP (serial tail): bf16 matmuls, f32 bias/ReLU.
    cw = clsw_ref[...]                                      # (240, 64) bf16
    cb = clsb_ref[...]                                      # (5, 64) f32
    bef = bef_ref[...]                                      # (B, 1) f32

    # Linear(129, 64): cat([diff, bef]) @ W == diff @ W[:128] + bef * W[128:].
    z = jnp.maximum(
        jnp.dot(diff.astype(jnp.bfloat16), cw[0:128, :],
                preferred_element_type=jnp.float32)
        + bef * cb[4:5, :] + cb[0:1, :], 0.0)               # (B, 64)
    z = jnp.maximum(
        jnp.dot(z.astype(jnp.bfloat16), cw[128:192, 0:32],
                preferred_element_type=jnp.float32)
        + cb[1:2, 0:32], 0.0)                               # (B, 32)
    z = jnp.maximum(
        jnp.dot(z.astype(jnp.bfloat16), cw[192:224, 0:16],
                preferred_element_type=jnp.float32)
        + cb[2:3, 0:16], 0.0)                               # (B, 16)
    out_ref[...] = (jnp.dot(z.astype(jnp.bfloat16), cw[224:240, 0:1],
                            preferred_element_type=jnp.float32)
                    + cb[3:4, 0:1])                         # (B, 1)


# ---------------------------------------------------------------------------
# Weight packing helpers (run ONCE at init, not per call).
# ---------------------------------------------------------------------------
def _pack_vec(v1, v2):
    """Two per-branch (4*HIDDEN,) gate vectors ([i f g o] blocks) -> one (G4,)
    gate-major vector [i1 i2 | f1 f2 | o1 o2 | g1 g2]."""
    segs = []
    for src in GATE_ORDER:
        segs.append(v1[src * HIDDEN:(src + 1) * HIDDEN])
        segs.append(v2[src * HIDDEN:(src + 1) * HIDDEN])
    return jnp.concatenate(segs, axis=0)


def _pack_blockdiag(w1, w2):
    """Two per-branch (K, 4*HIDDEN) weights -> block-diagonal (2K, G4):
    rows [branch1; branch2], cols gate-major [i f o g], zeros off-branch."""
    K = w1.shape[0]
    out = jnp.zeros((2 * K, G4), jnp.float32)
    for p, src in enumerate(GATE_ORDER):
        out = out.at[:K, p * H2:p * H2 + HIDDEN].set(
            w1[:, src * HIDDEN:(src + 1) * HIDDEN])
        out = out.at[K:, p * H2 + HIDDEN:(p + 1) * H2].set(
            w2[:, src * HIDDEN:(src + 1) * HIDDEN])
    return out


def pack_params(params):
    """Pack raw per-branch parameters into the kernel's consolidated arrays.
    Call once; the packed tuple is call-invariant."""
    wih0_1, wih12_1, whh_1, bias_1 = params["lstm1"]
    wih0_2, wih12_2, whh_2, bias_2 = params["lstm2"]
    fcw1, fcb1 = params["fc1"]
    fcw2, fcb2 = params["fc2"]
    wc1d, wc1b, bc1, wc2, bc2, wc3, bc3, wc4, bc4 = params["cls"]

    z256 = jnp.zeros((4 * HIDDEN,), jnp.float32)
    # Layer-0 input weights: (XK, G4), rows 0/1 = branch-masked weight rows.
    wih0_pk = jnp.zeros((XK, G4), jnp.float32)
    wih0_pk = wih0_pk.at[0].set(_pack_vec(wih0_1[0], z256))
    wih0_pk = wih0_pk.at[1].set(_pack_vec(z256, wih0_2[0]))

    bias_pk = jnp.stack([_pack_vec(bias_1[l], bias_2[l])
                         for l in range(NUM_LAYERS)])                  # (3, G4)

    whh0_pk = _pack_blockdiag(whh_1[0], whh_2[0]).astype(jnp.bfloat16)  # (H2, G4)

    # Upper layers: stacked [W_ih; W_hh] (2*H2, G4) per layer -> one fused
    # cell matmul per (layer, step).
    wstack_pk = jnp.stack([
        jnp.concatenate([_pack_blockdiag(wih12_1[l - 1], wih12_2[l - 1]),
                         _pack_blockdiag(whh_1[l], whh_2[l])], axis=0)
        for l in (1, 2)]).astype(jnp.bfloat16)                          # (2, 2*H2, G4)

    fcw_pk = jnp.concatenate([fcw1, -fcw2], axis=0).astype(jnp.bfloat16)  # (H2, 128)
    fcb_pk = (fcb1 - fcb2).astype(jnp.float32)                            # (1, 128)

    # Classifier weights/biases consolidated into two zero-padded arrays.
    clsw = jnp.zeros((240, 64), jnp.float32)
    clsw = clsw.at[0:128, :].set(wc1d)          # Linear(129,64) diff part
    clsw = clsw.at[128:192, 0:32].set(wc2)      # Linear(64,32)
    clsw = clsw.at[192:224, 0:16].set(wc3)      # Linear(32,16)
    clsw = clsw.at[224:240, 0:1].set(wc4)       # Linear(16,1)
    clsw = clsw.astype(jnp.bfloat16)
    clsb = jnp.zeros((5, 64), jnp.float32)
    clsb = clsb.at[0, :].set(bc1[0])
    clsb = clsb.at[1, 0:32].set(bc2[0])
    clsb = clsb.at[2, 0:16].set(bc3[0])
    clsb = clsb.at[3, 0:1].set(bc4[0])
    clsb = clsb.at[4, :].set(wc1b[0])           # the `bef` row of Linear(129,64)

    return (wih0_pk, whh0_pk, wstack_pk, bias_pk, fcw_pk, fcb_pk, clsw, clsb)


# ---------------------------------------------------------------------------
# Jitted forward wrapper: x glue in plain JAX, compute in the Pallas kernel.
# ---------------------------------------------------------------------------
@jax.jit
def lstm_model_forward(x, bef, packed):
    B = x.shape[0]
    assert x.shape[1] == 1 and x.shape[2] == 1 and x.shape[3] == 2 * SEQ, \
        "PyTorch module requires C == H == 1 and W == 24"

    # Mirror the PyTorch permute/slice chain; end with time-major rows t*B + b.
    xp = jnp.transpose(x, (3, 0, 1, 2))                     # (24, B, 1, 1)
    x1 = xp[:SEQ, :, 0, 0].reshape(SEQ * B)
    x2 = xp[SEQ:, :, 0, 0].reshape(SEQ * B)
    x_in = jnp.zeros((SEQ * B, XK), jnp.float32)
    x_in = x_in.at[:, 0].set(x1.astype(jnp.float32))
    x_in = x_in.at[:, 1].set(x2.astype(jnp.float32))
    bef2 = bef.reshape(-1, 1).astype(jnp.float32)           # (B, 1)

    inputs = (x_in, bef2) + tuple(packed)

    vmem = pl.BlockSpec(memory_space=pltpu.MemorySpace.VMEM)
    return pl.pallas_call(
        lstm_model_kernel,
        out_shape=jax.ShapeDtypeStruct((B, 1), jnp.float32),
        in_specs=[vmem] * len(inputs),
        out_specs=vmem,
    )(*inputs)


# ---------------------------------------------------------------------------
# Deterministic parameter init (matches the PyTorch module's init scheme:
# LSTM -> default U(-1/sqrt(H), 1/sqrt(H)); Linear -> N(0, 0.01) weights, 0 bias).
# Weights stored pre-transposed as (in, out), gate columns [i f g o].
# ---------------------------------------------------------------------------
def init_params(key):
    bound = 1.0 / np.sqrt(HIDDEN)
    keys = iter(jax.random.split(key, 64))

    def unif(shape):
        return jax.random.uniform(next(keys), shape, jnp.float32, -bound, bound)

    def lin_w(shape):
        return 0.01 * jax.random.normal(next(keys), shape, jnp.float32)

    def lstm_params():
        wih0 = unif((1, 4 * HIDDEN))                                   # layer 0
        wih12 = jnp.stack([unif((HIDDEN, 4 * HIDDEN)) for _ in range(2)])
        whh = jnp.stack([unif((HIDDEN, 4 * HIDDEN)) for _ in range(3)])
        bias = jnp.stack([unif((4 * HIDDEN,)) + unif((4 * HIDDEN,))    # b_ih+b_hh
                          for _ in range(3)])
        return (wih0, wih12, whh, bias)

    params = {}
    params["lstm1"] = lstm_params()
    params["lstm2"] = lstm_params()
    params["fc1"] = (lin_w((HIDDEN, OUT_DIM)), jnp.zeros((1, OUT_DIM), jnp.float32))
    params["fc2"] = (lin_w((HIDDEN, OUT_DIM)), jnp.zeros((1, OUT_DIM), jnp.float32))

    wc1_full = lin_w((OUT_DIM + 1, 64))           # Linear(129, 64), transposed
    params["cls"] = (
        wc1_full[:OUT_DIM],                       # (128, 64)
        wc1_full[OUT_DIM:],                       # (1, 64)   (the `bef` row)
        jnp.zeros((1, 64), jnp.float32),
        lin_w((64, 32)), jnp.zeros((1, 32), jnp.float32),
        lin_w((32, 16)), jnp.zeros((1, 16), jnp.float32),
        lin_w((16, 1)), jnp.zeros((1, 1), jnp.float32),
    )
    return params


# ---------------------------------------------------------------------------
# Pure-JAX f32 reference (per-branch, unpacked) for the correctness check.
# ---------------------------------------------------------------------------
def _ref_lstm_cell(gx, h_prev, c_prev, w_hh, b):
    gates = gx + jnp.dot(h_prev, w_hh, preferred_element_type=jnp.float32) + b
    i = jax.nn.sigmoid(gates[:, 0:HIDDEN])
    f = jax.nn.sigmoid(gates[:, HIDDEN:2 * HIDDEN])
    g = jnp.tanh(gates[:, 2 * HIDDEN:3 * HIDDEN])
    o = jax.nn.sigmoid(gates[:, 3 * HIDDEN:4 * HIDDEN])
    c_new = f * c_prev + i * g
    h_new = o * jnp.tanh(c_new)
    return h_new, c_new


def _ref_lstm_branch(x, w_ih0, w_ih12, w_hh, bias):
    B = x.shape[0]
    h = [jnp.zeros((B, HIDDEN), jnp.float32) for _ in range(NUM_LAYERS)]
    c = [jnp.zeros((B, HIDDEN), jnp.float32) for _ in range(NUM_LAYERS)]
    for t in range(SEQ):
        x_t = x[:, t:t + 1]                      # (B, 1); input feature dim = 1
        gx = x_t * w_ih0
        h[0], c[0] = _ref_lstm_cell(gx, h[0], c[0], w_hh[0], bias[0])
        for l in (1, 2):
            gx = jnp.dot(h[l - 1], w_ih12[l - 1],
                         preferred_element_type=jnp.float32)
            h[l], c[l] = _ref_lstm_cell(gx, h[l], c[l], w_hh[l], bias[l])
    return h[NUM_LAYERS - 1]


def reference_forward(x, bef, params):
    B = x.shape[0]
    xp = jnp.transpose(x, (3, 0, 1, 2))
    x1 = jnp.transpose(xp[:SEQ], (1, 3, 2, 0)).reshape(B, SEQ).astype(jnp.float32)
    x2 = jnp.transpose(xp[SEQ:], (1, 3, 2, 0)).reshape(B, SEQ).astype(jnp.float32)

    h1 = _ref_lstm_branch(x1, *params["lstm1"])
    y1 = h1 @ params["fc1"][0] + params["fc1"][1]
    h2 = _ref_lstm_branch(x2, *params["lstm2"])
    y2 = h2 @ params["fc2"][0] + params["fc2"][1]

    wc1d, wc1b, bc1, wc2, bc2, wc3, bc3, wc4, bc4 = params["cls"]
    z = jnp.concatenate([y1 - y2, bef.reshape(-1, 1)], axis=1)      # (B, 129)
    w1 = jnp.concatenate([wc1d, wc1b], axis=0)                      # (129, 64)
    z = jax.nn.relu(z @ w1 + bc1)
    z = jax.nn.relu(z @ wc2 + bc2)
    z = jax.nn.relu(z @ wc3 + bc3)
    return z @ wc4 + bc4


if __name__ == "__main__":
    key = jax.random.PRNGKey(0)
    pkey, xkey, bkey = jax.random.split(key, 3)

    B = 8
    params = init_params(pkey)
    packed = pack_params(params)                 # packed once, call-invariant
    x = jax.random.normal(xkey, (B, 1, 1, 2 * SEQ), jnp.float32)    # (8, 1, 1, 24)
    bef = jax.random.normal(bkey, (B,), jnp.float32)

    out = lstm_model_forward(x, bef, packed)
    out = jax.block_until_ready(out)
    assert out.shape == (B, 1)

    ref = reference_forward(x, bef, params)
    # NOTE: recurrent / input-projection weights and the classifier matmuls are
    # bf16 (f32 accumulation, f32 gate/cell math); error compounds over 12x3
    # cells, so the check uses 2e-2 tolerances by design.
    np.testing.assert_allclose(np.asarray(out), np.asarray(ref),
                               rtol=2e-2, atol=2e-2)
    print("KERNEL_OK")
</pallas_src>

<mosaic_0001>
module attributes {stable_mosaic.version = 11 : i64} {
  func.func @lstm_model_kernel(%arg0: memref<96x8xf32, #tpu.memory_space<vmem>>, %arg1: memref<8x1xf32, #tpu.memory_space<vmem>>, %arg2: memref<8x512xf32, #tpu.memory_space<vmem>>, %arg3: memref<128x512xbf16, #tpu.memory_space<vmem>>, %arg4: memref<2x256x512xbf16, #tpu.memory_space<vmem>>, %arg5: memref<3x512xf32, #tpu.memory_space<vmem>>, %arg6: memref<128x128xbf16, #tpu.memory_space<vmem>>, %arg7: memref<1x128xf32, #tpu.memory_space<vmem>>, %arg8: memref<240x64xbf16, #tpu.memory_space<vmem>>, %arg9: memref<5x64xf32, #tpu.memory_space<vmem>>, %arg10: memref<8x1xf32, #tpu.memory_space<vmem>>) attributes {dimension_semantics = [], scalar_prefetch = 0 : i64, scratch_operands = 0 : i64, tpu.core_type = #tpu.core_type<tc>} {
    %c0 = arith.constant 0 : index
    %c0_0 = arith.constant 0 : index
    %0 = vector.load %arg5[%c0, %c0_0] : memref<3x512xf32, #tpu.memory_space<vmem>>, vector<3x512xf32>
    %c0_1 = arith.constant 0 : index
    %c0_2 = arith.constant 0 : index
    %1 = vector.load %arg0[%c0_1, %c0_2] : memref<96x8xf32, #tpu.memory_space<vmem>>, vector<96x8xf32>
    %c0_3 = arith.constant 0 : index
    %c0_4 = arith.constant 0 : index
    %2 = vector.load %arg2[%c0_3, %c0_4] : memref<8x512xf32, #tpu.memory_space<vmem>>, vector<8x512xf32>
    %cst = arith.constant dense<0.000000e+00> : vector<96x512xf32>
    %3 = tpu.matmul %1, %2, %cst {dimension_numbers = #tpu.dot_dimension_numbers<[1], [0], [0], [1], [0, 0, 1, 1], [], []>} : vector<96x8xf32>, vector<8x512xf32>, vector<96x512xf32> -> vector<96x512xf32>
    %4 = vector.extract_strided_slice %0 {offsets = [0, 0], sizes = [1, 512], strides = [1, 1]} : vector<3x512xf32> to vector<1x512xf32>
    %5 = vector.broadcast %4 : vector<1x512xf32> to vector<96x512xf32>
    %6 = arith.addf %3, %5 : vector<96x512xf32>
    %c0_5 = arith.constant 0 : index
    %c0_6 = arith.constant 0 : index
    %7 = vector.load %arg3[%c0_5, %c0_6] : memref<128x512xbf16, #tpu.memory_space<vmem>>, vector<128x512xbf16>
    %c0_7 = arith.constant 0 : index
    %c0_8 = arith.constant 0 : index
    %c0_9 = arith.constant 0 : index
    %8 = vector.load %arg4[%c0_7, %c0_8, %c0_9] : memref<2x256x512xbf16, #tpu.memory_space<vmem>>, vector<1x256x512xbf16>
    %9 = vector.shape_cast %8 : vector<1x256x512xbf16> to vector<256x512xbf16>
    %c1 = arith.constant 1 : index
    %c0_10 = arith.constant 0 : index
    %c0_11 = arith.constant 0 : index
    %10 = vector.load %arg4[%c1, %c0_10, %c0_11] : memref<2x256x512xbf16, #tpu.memory_space<vmem>>, vector<1x256x512xbf16>
    %11 = vector.shape_cast %10 : vector<1x256x512xbf16> to vector<256x512xbf16>
    %12 = vector.extract_strided_slice %0 {offsets = [1, 0], sizes = [1, 512], strides = [1, 1]} : vector<3x512xf32> to vector<1x512xf32>
    %13 = vector.extract_strided_slice %0 {offsets = [2, 0], sizes = [1, 512], strides = [1, 1]} : vector<3x512xf32> to vector<1x512xf32>
    %cst_12 = arith.constant 0.000000e+00 : f32
    %14 = vector.broadcast %cst_12 : f32 to vector<8x128xf32>
    %15 = vector.extract_strided_slice %6 {offsets = [0, 0], sizes = [8, 512], strides = [1, 1]} : vector<96x512xf32> to vector<8x512xf32>
    %16 = vector.extract_strided_slice %15 {offsets = [0, 0], sizes = [8, 384], strides = [1, 1]} : vector<8x512xf32> to vector<8x384xf32>
    %17 = arith.negf %16 : vector<8x384xf32>
    %18 = math.exp %17 : vector<8x384xf32>
    %cst_13 = arith.constant 1.000000e+00 : f32
    %19 = vector.broadcast %cst_13 : f32 to vector<8x384xf32>
    %20 = arith.addf %19, %18 : vector<8x384xf32>
    %21 = arith.divf %19, %20 : vector<8x384xf32>
    %22 = vector.extract_strided_slice %21 {offsets = [0, 0], sizes = [8, 128], strides = [1, 1]} : vector<8x384xf32> to vector<8x128xf32>
    %23 = vector.extract_strided_slice %21 {offsets = [0, 128], sizes = [8, 128], strides = [1, 1]} : vector<8x384xf32> to vector<8x128xf32>
    %24 = vector.extract_strided_slice %21 {offsets = [0, 256], sizes = [8, 128], strides = [1, 1]} : vector<8x384xf32> to vector<8x128xf32>
    %25 = vector.extract_strided_slice %15 {offsets = [0, 384], sizes = [8, 128], strides = [1, 1]} : vector<8x512xf32> to vector<8x128xf32>
    %26 = math.tanh %25 : vector<8x128xf32>
    %27 = arith.mulf %23, %14 : vector<8x128xf32>
    %28 = arith.mulf %22, %26 : vector<8x128xf32>
    %29 = arith.addf %27, %28 : vector<8x128xf32>
    %30 = math.tanh %29 : vector<8x128xf32>
    %31 = arith.mulf %24, %30 : vector<8x128xf32>
    %32 = arith.truncf %31 : vector<8x128xf32> to vector<8x128xbf16>
    %33 = vector.extract_strided_slice %9 {offsets = [0, 0], sizes = [128, 512], strides = [1, 1]} : vector<256x512xbf16> to vector<128x512xbf16>
    %cst_14 = arith.constant dense<0.000000e+00> : vector<8x512xf32>
    %34 = tpu.matmul %32, %33, %cst_14 {dimension_numbers = #tpu.dot_dimension_numbers<[1], [0], [0], [1], [0, 0, 1, 1], [], []>} : vector<8x128xbf16>, vector<128x512xbf16>, vector<8x512xf32> -> vector<8x512xf32>
    %35 = vector.broadcast %12 : vector<1x512xf32> to vector<8x512xf32>
    %36 = arith.addf %34, %35 : vector<8x512xf32>
    %37 = vector.extract_strided_slice %36 {offsets = [0, 0], sizes = [8, 384], strides = [1, 1]} : vector<8x512xf32> to vector<8x384xf32>
    %38 = arith.negf %37 : vector<8x384xf32>
    %39 = math.exp %38 : vector<8x384xf32>
    %cst_15 = arith.constant 1.000000e+00 : f32
    %40 = vector.broadcast %cst_15 : f32 to vector<8x384xf32>
    %41 = arith.addf %40, %39 : vector<8x384xf32>
    %42 = arith.divf %40, %41 : vector<8x384xf32>
    %43 = vector.extract_strided_slice %42 {offsets = [0, 0], sizes = [8, 128], strides = [1, 1]} : vector<8x384xf32> to vector<8x128xf32>
    %44 = vector.extract_strided_slice %42 {offsets = [0, 128], sizes = [8, 128], strides = [1, 1]} : vector<8x384xf32> to vector<8x128xf32>
    %45 = vector.extract_strided_slice %42 {offsets = [0, 256], sizes = [8, 128], strides = [1, 1]} : vector<8x384xf32> to vector<8x128xf32>
    %46 = vector.extract_strided_slice %36 {offsets = [0, 384], sizes = [8, 128], strides = [1, 1]} : vector<8x512xf32> to vector<8x128xf32>
    %47 = math.tanh %46 : vector<8x128xf32>
    %48 = arith.mulf %44, %14 : vector<8x128xf32>
    %49 = arith.mulf %43, %47 : vector<8x128xf32>
    %50 = arith.addf %48, %49 : vector<8x128xf32>
    %51 = math.tanh %50 : vector<8x128xf32>
    %52 = arith.mulf %45, %51 : vector<8x128xf32>
    %53 = arith.truncf %52 : vector<8x128xf32> to vector<8x128xbf16>
    %54 = vector.extract_strided_slice %6 {offsets = [8, 0], sizes = [8, 512], strides = [1, 1]} : vector<96x512xf32> to vector<8x512xf32>
    %cst_16 = arith.constant dense<0.000000e+00> : vector<8x512xf32>
    %55 = tpu.matmul %32, %7, %cst_16 {dimension_numbers = #tpu.dot_dimension_numbers<[1], [0], [0], [1], [0, 0, 1, 1], [], []>} : vector<8x128xbf16>, vector<128x512xbf16>, vector<8x512xf32> -> vector<8x512xf32>
    %56 = arith.addf %54, %55 : vector<8x512xf32>
    %57 = vector.extract_strided_slice %56 {offsets = [0, 0], sizes = [8, 384], strides = [1, 1]} : vector<8x512xf32> to vector<8x384xf32>
    %58 = arith.negf %57 : vector<8x384xf32>
    %59 = math.exp %58 : vector<8x384xf32>
    %cst_17 = arith.constant 1.000000e+00 : f32
    %60 = vector.broadcast %cst_17 : f32 to vector<8x384xf32>
    %61 = arith.addf %60, %59 : vector<8x384xf32>
    %62 = arith.divf %60, %61 : vector<8x384xf32>
    %63 = vector.extract_strided_slice %62 {offsets = [0, 0], sizes = [8, 128], strides = [1, 1]} : vector<8x384xf32> to vector<8x128xf32>
    %64 = vector.extract_strided_slice %62 {offsets = [0, 128], sizes = [8, 128], strides = [1, 1]} : vector<8x384xf32> to vector<8x128xf32>
    %65 = vector.extract_strided_slice %62 {offsets = [0, 256], sizes = [8, 128], strides = [1, 1]} : vector<8x384xf32> to vector<8x128xf32>
    %66 = vector.extract_strided_slice %56 {offsets = [0, 384], sizes = [8, 128], strides = [1, 1]} : vector<8x512xf32> to vector<8x128xf32>
    %67 = math.tanh %66 : vector<8x128xf32>
    %68 = arith.mulf %64, %29 : vector<8x128xf32>
    %69 = arith.mulf %63, %67 : vector<8x128xf32>
    %70 = arith.addf %68, %69 : vector<8x128xf32>
    %71 = math.tanh %70 : vector<8x128xf32>
    %72 = arith.mulf %65, %71 : vector<8x128xf32>
    %73 = arith.truncf %72 : vector<8x128xf32> to vector<8x128xbf16>
    %74 = vector.extract_strided_slice %11 {offsets = [0, 0], sizes = [128, 512], strides = [1, 1]} : vector<256x512xbf16> to vector<128x512xbf16>
    %cst_18 = arith.constant dense<0.000000e+00> : vector<8x512xf32>
    %75 = tpu.matmul %53, %74, %cst_18 {dimension_numbers = #tpu.dot_dimension_numbers<[1], [0], [0], [1], [0, 0, 1, 1], [], []>} : vector<8x128xbf16>, vector<128x512xbf16>, vector<8x512xf32> -> vector<8x512xf32>
    %76 = vector.broadcast %13 : vector<1x512xf32> to vector<8x512xf32>
    %77 = arith.addf %75, %76 : vector<8x512xf32>
    %78 = vector.extract_strided_slice %77 {offsets = [0, 0], sizes = [8, 384], strides = [1, 1]} : vector<8x512xf32> to vector<8x384xf32>
    %79 = arith.negf %78 : vector<8x384xf32>
    %80 = math.exp %79 : vector<8x384xf32>
    %cst_19 = arith.constant 1.000000e+00 : f32
    %81 = vector.broadcast %cst_19 : f32 to vector<8x384xf32>
    %82 = arith.addf %81, %80 : vector<8x384xf32>
    %83 = arith.divf %81, %82 : vector<8x384xf32>
    %84 = vector.extract_strided_slice %83 {offsets = [0, 0], sizes = [8, 128], strides = [1, 1]} : vector<8x384xf32> to vector<8x128xf32>
    %85 = vector.extract_strided_slice %83 {offsets = [0, 128], sizes = [8, 128], strides = [1, 1]} : vector<8x384xf32> to vector<8x128xf32>
    %86 = vector.extract_strided_slice %83 {offsets = [0, 256], sizes = [8, 128], strides = [1, 1]} : vector<8x384xf32> to vector<8x128xf32>
    %87 = vector.extract_strided_slice %77 {offsets = [0, 384], sizes = [8, 128], strides = [1, 1]} : vector<8x512xf32> to vector<8x128xf32>
    %88 = math.tanh %87 : vector<8x128xf32>
    %89 = arith.mulf %85, %14 : vector<8x128xf32>
    %90 = arith.mulf %84, %88 : vector<8x128xf32>
    %91 = arith.addf %89, %90 : vector<8x128xf32>
    %92 = math.tanh %91 : vector<8x128xf32>
    %93 = arith.mulf %86, %92 : vector<8x128xf32>
    %94 = arith.truncf %93 : vector<8x128xf32> to vector<8x128xbf16>
    %95 = tpu.concatenate %73, %53 in 1 : vector<8x128xbf16>, vector<8x128xbf16> -> vector<8x256xbf16>
    %cst_20 = arith.constant dense<0.000000e+00> : vector<8x512xf32>
    %96 = tpu.matmul %95, %9, %cst_20 {dimension_numbers = #tpu.dot_dimension_numbers<[1], [0], [0], [1], [0, 0, 1, 1], [], []>} : vector<8x256xbf16>, vector<256x512xbf16>, vector<8x512xf32> -> vector<8x512xf32>
    %97 = vector.broadcast %12 : vector<1x512xf32> to vector<8x512xf32>
    %98 = arith.addf %96, %97 : vector<8x512xf32>
    %99 = vector.extract_strided_slice %98 {offsets = [0, 0], sizes = [8, 384], strides = [1, 1]} : vector<8x512xf32> to vector<8x384xf32>
    %100 = arith.negf %99 : vector<8x384xf32>
    %101 = math.exp %100 : vector<8x384xf32>
    %cst_21 = arith.constant 1.000000e+00 : f32
    %102 = vector.broadcast %cst_21 : f32 to vector<8x384xf32>
    %103 = arith.addf %102, %101 : vector<8x384xf32>
    %104 = arith.divf %102, %103 : vector<8x384xf32>
    %105 = vector.extract_strided_slice %104 {offsets = [0, 0], sizes = [8, 128], strides = [1, 1]} : vector<8x384xf32> to vector<8x128xf32>
    %106 = vector.extract_strided_slice %104 {offsets = [0, 128], sizes = [8, 128], strides = [1, 1]} : vector<8x384xf32> to vector<8x128xf32>
    %107 = vector.extract_strided_slice %104 {offsets = [0, 256], sizes = [8, 128], strides = [1, 1]} : vector<8x384xf32> to vector<8x128xf32>
    %108 = vector.extract_strided_slice %98 {offsets = [0, 384], sizes = [8, 128], strides = [1, 1]} : vector<8x512xf32> to vector<8x128xf32>
    %109 = math.tanh %108 : vector<8x128xf32>
    %110 = arith.mulf %106, %50 : vector<8x128xf32>
    %111 = arith.mulf %105, %109 : vector<8x128xf32>
    %112 = arith.addf %110, %111 : vector<8x128xf32>
    %113 = math.tanh %112 : vector<8x128xf32>
    %114 = arith.mulf %107, %113 : vector<8x128xf32>
    %115 = arith.truncf %114 : vector<8x128xf32> to vector<8x128xbf16>
    %116 = vector.extract_strided_slice %6 {offsets = [16, 0], sizes = [8, 512], strides = [1, 1]} : vector<96x512xf32> to vector<8x512xf32>
    %cst_22 = arith.constant dense<0.000000e+00> : vector<8x512xf32>
    %117 = tpu.matmul %73, %7, %cst_22 {dimension_numbers = #tpu.dot_dimension_numbers<[1], [0], [0], [1], [0, 0, 1, 1], [], []>} : vector<8x128xbf16>, vector<128x512xbf16>, vector<8x512xf32> -> vector<8x512xf32>
    %118 = arith.addf %116, %117 : vector<8x512xf32>
    %119 = vector.extract_strided_slice %118 {offsets = [0, 0], sizes = [8, 384], strides = [1, 1]} : vector<8x512xf32> to vector<8x384xf32>
    %120 = arith.negf %119 : vector<8x384xf32>
    %121 = math.exp %120 : vector<8x384xf32>
    %cst_23 = arith.constant 1.000000e+00 : f32
    %122 = vector.broadcast %cst_23 : f32 to vector<8x384xf32>
    %123 = arith.addf %122, %121 : vector<8x384xf32>
    %124 = arith.divf %122, %123 : vector<8x384xf32>
    %125 = vector.extract_strided_slice %124 {offsets = [0, 0], sizes = [8, 128], strides = [1, 1]} : vector<8x384xf32> to vector<8x128xf32>
    %126 = vector.extract_strided_slice %124 {offsets = [0, 128], sizes = [8, 128], strides = [1, 1]} : vector<8x384xf32> to vector<8x128xf32>
    %127 = vector.extract_strided_slice %124 {offsets = [0, 256], sizes = [8, 128], strides = [1, 1]} : vector<8x384xf32> to vector<8x128xf32>
    %128 = vector.extract_strided_slice %118 {offsets = [0, 384], sizes = [8, 128], strides = [1, 1]} : vector<8x512xf32> to vector<8x128xf32>
    %129 = math.tanh %128 : vector<8x128xf32>
    %130 = arith.mulf %126, %70 : vector<8x128xf32>
    %131 = arith.mulf %125, %129 : vector<8x128xf32>
    %132 = arith.addf %130, %131 : vector<8x128xf32>
    %133 = math.tanh %132 : vector<8x128xf32>
    %134 = arith.mulf %127, %133 : vector<8x128xf32>
    %135 = arith.truncf %134 : vector<8x128xf32> to vector<8x128xbf16>
    %136 = tpu.concatenate %115, %94 in 1 : vector<8x128xbf16>, vector<8x128xbf16> -> vector<8x256xbf16>
    %cst_24 = arith.constant dense<0.000000e+00> : vector<8x512xf32>
    %137 = tpu.matmul %136, %11, %cst_24 {dimension_numbers = #tpu.dot_dimension_numbers<[1], [0], [0], [1], [0, 0, 1, 1], [], []>} : vector<8x256xbf16>, vector<256x512xbf16>, vector<8x512xf32> -> vector<8x512xf32>
    %138 = vector.broadcast %13 : vector<1x512xf32> to vector<8x512xf32>
    %139 = arith.addf %137, %138 : vector<8x512xf32>
    %140 = vector.extract_strided_slice %139 {offsets = [0, 0], sizes = [8, 384], strides = [1, 1]} : vector<8x512xf32> to vector<8x384xf32>
    %141 = arith.negf %140 : vector<8x384xf32>
    %142 = math.exp %141 : vector<8x384xf32>
    %cst_25 = arith.constant 1.000000e+00 : f32
    %143 = vector.broadcast %cst_25 : f32 to vector<8x384xf32>
    %144 = arith.addf %143, %142 : vector<8x384xf32>
    %145 = arith.divf %143, %144 : vector<8x384xf32>
    %146 = vector.extract_strided_slice %145 {offsets = [0, 0], sizes = [8, 128], strides = [1, 1]} : vector<8x384xf32> to vector<8x128xf32>
    %147 = vector.extract_strided_slice %145 {offsets = [0, 128], sizes = [8, 128], strides = [1, 1]} : vector<8x384xf32> to vector<8x128xf32>
    %148 = vector.extract_strided_slice %145 {offsets = [0, 256], sizes = [8, 128], strides = [1, 1]} : vector<8x384xf32> to vector<8x128xf32>
    %149 = vector.extract_strided_slice %139 {offsets = [0, 384], sizes = [8, 128], strides = [1, 1]} : vector<8x512xf32> to vector<8x128xf32>
    %150 = math.tanh %149 : vector<8x128xf32>
    %151 = arith.mulf %147, %91 : vector<8x128xf32>
    %152 = arith.mulf %146, %150 : vector<8x128xf32>
    %153 = arith.addf %151, %152 : vector<8x128xf32>
    %154 = math.tanh %153 : vector<8x128xf32>
    %155 = arith.mulf %148, %154 : vector<8x128xf32>
    %156 = arith.truncf %155 : vector<8x128xf32> to vector<8x128xbf16>
    %157 = tpu.concatenate %135, %115 in 1 : vector<8x128xbf16>, vector<8x128xbf16> -> vector<8x256xbf16>
    %cst_26 = arith.constant dense<0.000000e+00> : vector<8x512xf32>
    %158 = tpu.matmul %157, %9, %cst_26 {dimension_numbers = #tpu.dot_dimension_numbers<[1], [0], [0], [1], [0, 0, 1, 1], [], []>} : vector<8x256xbf16>, vector<256x512xbf16>, vector<8x512xf32> -> vector<8x512xf32>
    %159 = vector.broadcast %12 : vector<1x512xf32> to vector<8x512xf32>
    %160 = arith.addf %158, %159 : vector<8x512xf32>
    %161 = vector.extract_strided_slice %160 {offsets = [0, 0], sizes = [8, 384], strides = [1, 1]} : vector<8x512xf32> to vector<8x384xf32>
    %162 = arith.negf %161 : vector<8x384xf32>
    %163 = math.exp %162 : vector<8x384xf32>
    %cst_27 = arith.constant 1.000000e+00 : f32
    %164 = vector.broadcast %cst_27 : f32 to vector<8x384xf32>
    %165 = arith.addf %164, %163 : vector<8x384xf32>
    %166 = arith.divf %164, %165 : vector<8x384xf32>
    %167 = vector.extract_strided_slice %166 {offsets = [0, 0], sizes = [8, 128], strides = [1, 1]} : vector<8x384xf32> to vector<8x128xf32>
    %168 = vector.extract_strided_slice %166 {offsets = [0, 128], sizes = [8, 128], strides = [1, 1]} : vector<8x384xf32> to vector<8x128xf32>
    %169 = vector.extract_strided_slice %166 {offsets = [0, 256], sizes = [8, 128], strides = [1, 1]} : vector<8x384xf32> to vector<8x128xf32>
    %170 = vector.extract_strided_slice %160 {offsets = [0, 384], sizes = [8, 128], strides = [1, 1]} : vector<8x512xf32> to vector<8x128xf32>
    %171 = math.tanh %170 : vector<8x128xf32>
    %172 = arith.mulf %168, %112 : vector<8x128xf32>
    %173 = arith.mulf %167, %171 : vector<8x128xf32>
    %174 = arith.addf %172, %173 : vector<8x128xf32>
    %175 = math.tanh %174 : vector<8x128xf32>
    %176 = arith.mulf %169, %175 : vector<8x128xf32>
    %177 = arith.truncf %176 : vector<8x128xf32> to vector<8x128xbf16>
    %178 = vector.extract_strided_slice %6 {offsets = [24, 0], sizes = [8, 512], strides = [1, 1]} : vector<96x512xf32> to vector<8x512xf32>
    %cst_28 = arith.constant dense<0.000000e+00> : vector<8x512xf32>
    %179 = tpu.matmul %135, %7, %cst_28 {dimension_numbers = #tpu.dot_dimension_numbers<[1], [0], [0], [1], [0, 0, 1, 1], [], []>} : vector<8x128xbf16>, vector<128x512xbf16>, vector<8x512xf32> -> vector<8x512xf32>
    %180 = arith.addf %178, %179 : vector<8x512xf32>
    %181 = vector.extract_strided_slice %180 {offsets = [0, 0], sizes = [8, 384], strides = [1, 1]} : vector<8x512xf32> to vector<8x384xf32>
    %182 = arith.negf %181 : vector<8x384xf32>
    %183 = math.exp %182 : vector<8x384xf32>
    %cst_29 = arith.constant 1.000000e+00 : f32
    %184 = vector.broadcast %cst_29 : f32 to vector<8x384xf32>
    %185 = arith.addf %184, %183 : vector<8x384xf32>
    %186 = arith.divf %184, %185 : vector<8x384xf32>
    %187 = vector.extract_strided_slice %186 {offsets = [0, 0], sizes = [8, 128], strides = [1, 1]} : vector<8x384xf32> to vector<8x128xf32>
    %188 = vector.extract_strided_slice %186 {offsets = [0, 128], sizes = [8, 128], strides = [1, 1]} : vector<8x384xf32> to vector<8x128xf32>
    %189 = vector.extract_strided_slice %186 {offsets = [0, 256], sizes = [8, 128], strides = [1, 1]} : vector<8x384xf32> to vector<8x128xf32>
    %190 = vector.extract_strided_slice %180 {offsets = [0, 384], sizes = [8, 128], strides = [1, 1]} : vector<8x512xf32> to vector<8x128xf32>
    %191 = math.tanh %190 : vector<8x128xf32>
    %192 = arith.mulf %188, %132 : vector<8x128xf32>
    %193 = arith.mulf %187, %191 : vector<8x128xf32>
    %194 = arith.addf %192, %193 : vector<8x128xf32>
    %195 = math.tanh %194 : vector<8x128xf32>
    %196 = arith.mulf %189, %195 : vector<8x128xf32>
    %197 = arith.truncf %196 : vector<8x128xf32> to vector<8x128xbf16>
    %198 = tpu.concatenate %177, %156 in 1 : vector<8x128xbf16>, vector<8x128xbf16> -> vector<8x256xbf16>
    %cst_30 = arith.constant dense<0.000000e+00> : vector<8x512xf32>
    %199 = tpu.matmul %198, %11, %cst_30 {dimension_numbers = #tpu.dot_dimension_numbers<[1], [0], [0], [1], [0, 0, 1, 1], [], []>} : vector<8x256xbf16>, vector<256x512xbf16>, vector<8x512xf32> -> vector<8x512xf32>
    %200 = vector.broadcast %13 : vector<1x512xf32> to vector<8x512xf32>
    %201 = arith.addf %199, %200 : vector<8x512xf32>
    %202 = vector.extract_strided_slice %201 {offsets = [0, 0], sizes = [8, 384], strides = [1, 1]} : vector<8x512xf32> to vector<8x384xf32>
    %203 = arith.negf %202 : vector<8x384xf32>
    %204 = math.exp %203 : vector<8x384xf32>
    %cst_31 = arith.constant 1.000000e+00 : f32
    %205 = vector.broadcast %cst_31 : f32 to vector<8x384xf32>
    %206 = arith.addf %205, %204 : vector<8x384xf32>
    %207 = arith.divf %205, %206 : vector<8x384xf32>
    %208 = vector.extract_strided_slice %207 {offsets = [0, 0], sizes = [8, 128], strides = [1, 1]} : vector<8x384xf32> to vector<8x128xf32>
    %209 = vector.extract_strided_slice %207 {offsets = [0, 128], sizes = [8, 128], strides = [1, 1]} : vector<8x384xf32> to vector<8x128xf32>
    %210 = vector.extract_strided_slice %207 {offsets = [0, 256], sizes = [8, 128], strides = [1, 1]} : vector<8x384xf32> to vector<8x128xf32>
    %211 = vector.extract_strided_slice %201 {offsets = [0, 384], sizes = [8, 128], strides = [1, 1]} : vector<8x512xf32> to vector<8x128xf32>
    %212 = math.tanh %211 : vector<8x128xf32>
    %213 = arith.mulf %209, %153 : vector<8x128xf32>
    %214 = arith.mulf %208, %212 : vector<8x128xf32>
    %215 = arith.addf %213, %214 : vector<8x128xf32>
    %216 = math.tanh %215 : vector<8x128xf32>
    %217 = arith.mulf %210, %216 : vector<8x128xf32>
    %218 = arith.truncf %217 : vector<8x128xf32> to vector<8x128xbf16>
    %219 = tpu.concatenate %197, %177 in 1 : vector<8x128xbf16>, vector<8x128xbf16> -> vector<8x256xbf16>
    %cst_32 = arith.constant dense<0.000000e+00> : vector<8x512xf32>
    %220 = tpu.matmul %219, %9, %cst_32 {dimension_numbers = #tpu.dot_dimension_numbers<[1], [0], [0], [1], [0, 0, 1, 1], [], []>} : vector<8x256xbf16>, vector<256x512xbf16>, vector<8x512xf32> -> vector<8x512xf32>
    %221 = vector.broadcast %12 : vector<1x512xf32> to vector<8x512xf32>
    %222 = arith.addf %220, %221 : vector<8x512xf32>
    %223 = vector.extract_strided_slice %222 {offsets = [0, 0], sizes = [8, 384], strides = [1, 1]} : vector<8x512xf32> to vector<8x384xf32>
    %224 = arith.negf %223 : vector<8x384xf32>
    %225 = math.exp %224 : vector<8x384xf32>
    %cst_33 = arith.constant 1.000000e+00 : f32
    %226 = vector.broadcast %cst_33 : f32 to vector<8x384xf32>
    %227 = arith.addf %226, %225 : vector<8x384xf32>
    %228 = arith.divf %226, %227 : vector<8x384xf32>
    %229 = vector.extract_strided_slice %228 {offsets = [0, 0], sizes = [8, 128], strides = [1, 1]} : vector<8x384xf32> to vector<8x128xf32>
    %230 = vector.extract_strided_slice %228 {offsets = [0, 128], sizes = [8, 128], strides = [1, 1]} : vector<8x384xf32> to vector<8x128xf32>
    %231 = vector.extract_strided_slice %228 {offsets = [0, 256], sizes = [8, 128], strides = [1, 1]} : vector<8x384xf32> to vector<8x128xf32>
    %232 = vector.extract_strided_slice %222 {offsets = [0, 384], sizes = [8, 128], strides = [1, 1]} : vector<8x512xf32> to vector<8x128xf32>
    %233 = math.tanh %232 : vector<8x128xf32>
    %234 = arith.mulf %230, %174 : vector<8x128xf32>
    %235 = arith.mulf %229, %233 : vector<8x128xf32>
    %236 = arith.addf %234, %235 : vector<8x128xf32>
    %237 = math.tanh %236 : vector<8x128xf32>
    %238 = arith.mulf %231, %237 : vector<8x128xf32>
    %239 = arith.truncf %238 : vector<8x128xf32> to vector<8x128xbf16>
    %240 = vector.extract_strided_slice %6 {offsets = [32, 0], sizes = [8, 512], strides = [1, 1]} : vector<96x512xf32> to vector<8x512xf32>
    %cst_34 = arith.constant dense<0.000000e+00> : vector<8x512xf32>
    %241 = tpu.matmul %197, %7, %cst_34 {dimension_numbers = #tpu.dot_dimension_numbers<[1], [0], [0], [1], [0, 0, 1, 1], [], []>} : vector<8x128xbf16>, vector<128x512xbf16>, vector<8x512xf32> -> vector<8x512xf32>
    %242 = arith.addf %240, %241 : vector<8x512xf32>
    %243 = vector.extract_strided_slice %242 {offsets = [0, 0], sizes = [8, 384], strides = [1, 1]} : vector<8x512xf32> to vector<8x384xf32>
    %244 = arith.negf %243 : vector<8x384xf32>
    %245 = math.exp %244 : vector<8x384xf32>
    %cst_35 = arith.constant 1.000000e+00 : f32
    %246 = vector.broadcast %cst_35 : f32 to vector<8x384xf32>
    %247 = arith.addf %246, %245 : vector<8x384xf32>
    %248 = arith.divf %246, %247 : vector<8x384xf32>
    %249 = vector.extract_strided_slice %248 {offsets = [0, 0], sizes = [8, 128], strides = [1, 1]} : vector<8x384xf32> to vector<8x128xf32>
    %250 = vector.extract_strided_slice %248 {offsets = [0, 128], sizes = [8, 128], strides = [1, 1]} : vector<8x384xf32> to vector<8x128xf32>
    %251 = vector.extract_strided_slice %248 {offsets = [0, 256], sizes = [8, 128], strides = [1, 1]} : vector<8x384xf32> to vector<8x128xf32>
    %252 = vector.extract_strided_slice %242 {offsets = [0, 384], sizes = [8, 128], strides = [1, 1]} : vector<8x512xf32> to vector<8x128xf32>
    %253 = math.tanh %252 : vector<8x128xf32>
    %254 = arith.mulf %250, %194 : vector<8x128xf32>
    %255 = arith.mulf %249, %253 : vector<8x128xf32>
    %256 = arith.addf %254, %255 : vector<8x128xf32>
    %257 = math.tanh %256 : vector<8x128xf32>
    %258 = arith.mulf %251, %257 : vector<8x128xf32>
    %259 = arith.truncf %258 : vector<8x128xf32> to vector<8x128xbf16>
    %260 = tpu.concatenate %239, %218 in 1 : vector<8x128xbf16>, vector<8x128xbf16> -> vector<8x256xbf16>
    %cst_36 = arith.constant dense<0.000000e+00> : vector<8x512xf32>
    %261 = tpu.matmul %260, %11, %cst_36 {dimension_numbers = #tpu.dot_dimension_numbers<[1], [0], [0], [1], [0, 0, 1, 1], [], []>} : vector<8x256xbf16>, vector<256x512xbf16>, vector<8x512xf32> -> vector<8x512xf32>
    %262 = vector.broadcast %13 : vector<1x512xf32> to vector<8x512xf32>
    %263 = arith.addf %261, %262 : vector<8x512xf32>
    %264 = vector.extract_strided_slice %263 {offsets = [0, 0], sizes = [8, 384], strides = [1, 1]} : vector<8x512xf32> to vector<8x384xf32>
    %265 = arith.negf %264 : vector<8x384xf32>
    %266 = math.exp %265 : vector<8x384xf32>
    %cst_37 = arith.constant 1.000000e+00 : f32
    %267 = vector.broadcast %cst_37 : f32 to vector<8x384xf32>
    %268 = arith.addf %267, %266 : vector<8x384xf32>
    %269 = arith.divf %267, %268 : vector<8x384xf32>
    %270 = vector.extract_strided_slice %269 {offsets = [0, 0], sizes = [8, 128], strides = [1, 1]} : vector<8x384xf32> to vector<8x128xf32>
    %271 = vector.extract_strided_slice %269 {offsets = [0, 128], sizes = [8, 128], strides = [1, 1]} : vector<8x384xf32> to vector<8x128xf32>
    %272 = vector.extract_strided_slice %269 {offsets = [0, 256], sizes = [8, 128], strides = [1, 1]} : vector<8x384xf32> to vector<8x128xf32>
    %273 = vector.extract_strided_slice %263 {offsets = [0, 384], sizes = [8, 128], strides = [1, 1]} : vector<8x512xf32> to vector<8x128xf32>
    %274 = math.tanh %273 : vector<8x128xf32>
    %275 = arith.mulf %271, %215 : vector<8x128xf32>
    %276 = arith.mulf %270, %274 : vector<8x128xf32>
    %277 = arith.addf %275, %276 : vector<8x128xf32>
    %278 = math.tanh %277 : vector<8x128xf32>
    %279 = arith.mulf %272, %278 : vector<8x128xf32>
    %280 = arith.truncf %279 : vector<8x128xf32> to vector<8x128xbf16>
    %281 = tpu.concatenate %259, %239 in 1 : vector<8x128xbf16>, vector<8x128xbf16> -> vector<8x256xbf16>
    %cst_38 = arith.constant dense<0.000000e+00> : vector<8x512xf32>
    %282 = tpu.matmul %281, %9, %cst_38 {dimension_numbers = #tpu.dot_dimension_numbers<[1], [0], [0], [1], [0, 0, 1, 1], [], []>} : vector<8x256xbf16>, vector<256x512xbf16>, vector<8x512xf32> -> vector<8x512xf32>
    %283 = vector.broadcast %12 : vector<1x512xf32> to vector<8x512xf32>
    %284 = arith.addf %282, %283 : vector<8x512xf32>
    %285 = vector.extract_strided_slice %284 {offsets = [0, 0], sizes = [8, 384], strides = [1, 1]} : vector<8x512xf32> to vector<8x384xf32>
    %286 = arith.negf %285 : vector<8x384xf32>
    %287 = math.exp %286 : vector<8x384xf32>
    %cst_39 = arith.constant 1.000000e+00 : f32
    %288 = vector.broadcast %cst_39 : f32 to vector<8x384xf32>
    %289 = arith.addf %288, %287 : vector<8x384xf32>
    %290 = arith.divf %288, %289 : vector<8x384xf32>
    %291 = vector.extract_strided_slice %290 {offsets = [0, 0], sizes = [8, 128], strides = [1, 1]} : vector<8x384xf32> to vector<8x128xf32>
    %292 = vector.extract_strided_slice %290 {offsets = [0, 128], sizes = [8, 128], strides = [1, 1]} : vector<8x384xf32> to vector<8x128xf32>
    %293 = vector.extract_strided_slice %290 {offsets = [0, 256], sizes = [8, 128], strides = [1, 1]} : vector<8x384xf32> to vector<8x128xf32>
    %294 = vector.extract_strided_slice %284 {offsets = [0, 384], sizes = [8, 128], strides = [1, 1]} : vector<8x512xf32> to vector<8x128xf32>
    %295 = math.tanh %294 : vector<8x128xf32>
    %296 = arith.mulf %292, %236 : vector<8x128xf32>
    %297 = arith.mulf %291, %295 : vector<8x128xf32>
    %298 = arith.addf %296, %297 : vector<8x128xf32>
    %299 = math.tanh %298 : vector<8x128xf32>
    %300 = arith.mulf %293, %299 : vector<8x128xf32>
    %301 = arith.truncf %300 : vector<8x128xf32> to vector<8x128xbf16>
    %302 = vector.extract_strided_slice %6 {offsets = [40, 0], sizes = [8, 512], strides = [1, 1]} : vector<96x512xf32> to vector<8x512xf32>
    %cst_40 = arith.constant dense<0.000000e+00> : vector<8x512xf32>
    %303 = tpu.matmul %259, %7, %cst_40 {dimension_numbers = #tpu.dot_dimension_numbers<[1], [0], [0], [1], [0, 0, 1, 1], [], []>} : vector<8x128xbf16>, vector<128x512xbf16>, vector<8x512xf32> -> vector<8x512xf32>
    %304 = arith.addf %302, %303 : vector<8x512xf32>
    %305 = vector.extract_strided_slice %304 {offsets = [0, 0], sizes = [8, 384], strides = [1, 1]} : vector<8x512xf32> to vector<8x384xf32>
    %306 = arith.negf %305 : vector<8x384xf32>
    %307 = math.exp %306 : vector<8x384xf32>
    %cst_41 = arith.constant 1.000000e+00 : f32
    %308 = vector.broadcast %cst_41 : f32 to vector<8x384xf32>
    %309 = arith.addf %308, %307 : vector<8x384xf32>
    %310 = arith.divf %308, %309 : vector<8x384xf32>
    %311 = vector.extract_strided_slice %310 {offsets = [0, 0], sizes = [8, 128], strides = [1, 1]} : vector<8x384xf32> to vector<8x128xf32>
    %312 = vector.extract_strided_slice %310 {offsets = [0, 128], sizes = [8, 128], strides = [1, 1]} : vector<8x384xf32> to vector<8x128xf32>
    %313 = vector.extract_strided_slice %310 {offsets = [0, 256], sizes = [8, 128], strides = [1, 1]} : vector<8x384xf32> to vector<8x128xf32>
    %314 = vector.extract_strided_slice %304 {offsets = [0, 384], sizes = [8, 128], strides = [1, 1]} : vector<8x512xf32> to vector<8x128xf32>
    %315 = math.tanh %314 : vector<8x128xf32>
    %316 = arith.mulf %312, %256 : vector<8x128xf32>
    %317 = arith.mulf %311, %315 : vector<8x128xf32>
    %318 = arith.addf %316, %317 : vector<8x128xf32>
    %319 = math.tanh %318 : vector<8x128xf32>
    %320 = arith.mulf %313, %319 : vector<8x128xf32>
    %321 = arith.truncf %320 : vector<8x128xf32> to vector<8x128xbf16>
    %322 = tpu.concatenate %301, %280 in 1 : vector<8x128xbf16>, vector<8x128xbf16> -> vector<8x256xbf16>
    %cst_42 = arith.constant dense<0.000000e+00> : vector<8x512xf32>
    %323 = tpu.matmul %322, %11, %cst_42 {dimension_numbers = #tpu.dot_dimension_numbers<[1], [0], [0], [1], [0, 0, 1, 1], [], []>} : vector<8x256xbf16>, vector<256x512xbf16>, vector<8x512xf32> -> vector<8x512xf32>
    %324 = vector.broadcast %13 : vector<1x512xf32> to vector<8x512xf32>
    %325 = arith.addf %323, %324 : vector<8x512xf32>
    %326 = vector.extract_strided_slice %325 {offsets = [0, 0], sizes = [8, 384], strides = [1, 1]} : vector<8x512xf32> to vector<8x384xf32>
    %327 = arith.negf %326 : vector<8x384xf32>
    %328 = math.exp %327 : vector<8x384xf32>
    %cst_43 = arith.constant 1.000000e+00 : f32
    %329 = vector.broadcast %cst_43 : f32 to vector<8x384xf32>
    %330 = arith.addf %329, %328 : vector<8x384xf32>
    %331 = arith.divf %329, %330 : vector<8x384xf32>
    %332 = vector.extract_strided_slice %331 {offsets = [0, 0], sizes = [8, 128], strides = [1, 1]} : vector<8x384xf32> to vector<8x128xf32>
    %333 = vector.extract_strided_slice %331 {offsets = [0, 128], sizes = [8, 128], strides = [1, 1]} : vector<8x384xf32> to vector<8x128xf32>
    %334 = vector.extract_strided_slice %331 {offsets = [0, 256], sizes = [8, 128], strides = [1, 1]} : vector<8x384xf32> to vector<8x128xf32>
    %335 = vector.extract_strided_slice %325 {offsets = [0, 384], sizes = [8, 128], strides = [1, 1]} : vector<8x512xf32> to vector<8x128xf32>
    %336 = math.tanh %335 : vector<8x128xf32>
    %337 = arith.mulf %333, %277 : vector<8x128xf32>
    %338 = arith.mulf %332, %336 : vector<8x128xf32>
    %339 = arith.addf %337, %338 : vector<8x128xf32>
    %340 = math.tanh %339 : vector<8x128xf32>
    %341 = arith.mulf %334, %340 : vector<8x128xf32>
    %342 = arith.truncf %341 : vector<8x128xf32> to vector<8x128xbf16>
    %343 = tpu.concatenate %321, %301 in 1 : vector<8x128xbf16>, vector<8x128xbf16> -> vector<8x256xbf16>
    %cst_44 = arith.constant dense<0.000000e+00> : vector<8x512xf32>
    %344 = tpu.matmul %343, %9, %cst_44 {dimension_numbers = #tpu.dot_dimension_numbers<[1], [0], [0], [1], [0, 0, 1, 1], [], []>} : vector<8x256xbf16>, vector<256x512xbf16>, vector<8x512xf32> -> vector<8x512xf32>
    %345 = vector.broadcast %12 : vector<1x512xf32> to vector<8x512xf32>
    %346 = arith.addf %344, %345 : vector<8x512xf32>
    %347 = vector.extract_strided_slice %346 {offsets = [0, 0], sizes = [8, 384], strides = [1, 1]} : vector<8x512xf32> to vector<8x384xf32>
    %348 = arith.negf %347 : vector<8x384xf32>
    %349 = math.exp %348 : vector<8x384xf32>
    %cst_45 = arith.constant 1.000000e+00 : f32
    %350 = vector.broadcast %cst_45 : f32 to vector<8x384xf32>
    %351 = arith.addf %350, %349 : vector<8x384xf32>
    %352 = arith.divf %350, %351 : vector<8x384xf32>
    %353 = vector.extract_strided_slice %352 {offsets = [0, 0], sizes = [8, 128], strides = [1, 1]} : vector<8x384xf32> to vector<8x128xf32>
    %354 = vector.extract_strided_slice %352 {offsets = [0, 128], sizes = [8, 128], strides = [1, 1]} : vector<8x384xf32> to vector<8x128xf32>
    %355 = vector.extract_strided_slice %352 {offsets = [0, 256], sizes = [8, 128], strides = [1, 1]} : vector<8x384xf32> to vector<8x128xf32>
    %356 = vector.extract_strided_slice %346 {offsets = [0, 384], sizes = [8, 128], strides = [1, 1]} : vector<8x512xf32> to vector<8x128xf32>
    %357 = math.tanh %356 : vector<8x128xf32>
    %358 = arith.mulf %354, %298 : vector<8x128xf32>
    %359 = arith.mulf %353, %357 : vector<8x128xf32>
    %360 = arith.addf %358, %359 : vector<8x128xf32>
    %361 = math.tanh %360 : vector<8x128xf32>
    %362 = arith.mulf %355, %361 : vector<8x128xf32>
    %363 = arith.truncf %362 : vector<8x128xf32> to vector<8x128xbf16>
    %364 = vector.extract_strided_slice %6 {offsets = [48, 0], sizes = [8, 512], strides = [1, 1]} : vector<96x512xf32> to vector<8x512xf32>
    %cst_46 = arith.constant dense<0.000000e+00> : vector<8x512xf32>
    %365 = tpu.matmul %321, %7, %cst_46 {dimension_numbers = #tpu.dot_dimension_numbers<[1], [0], [0], [1], [0, 0, 1, 1], [], []>} : vector<8x128xbf16>, vector<128x512xbf16>, vector<8x512xf32> -> vector<8x512xf32>
    %366 = arith.addf %364, %365 : vector<8x512xf32>
    %367 = vector.extract_strided_slice %366 {offsets = [0, 0], sizes = [8, 384], strides = [1, 1]} : vector<8x512xf32> to vector<8x384xf32>
    %368 = arith.negf %367 : vector<8x384xf32>
    %369 = math.exp %368 : vector<8x384xf32>
    %cst_47 = arith.constant 1.000000e+00 : f32
    %370 = vector.broadcast %cst_47 : f32 to vector<8x384xf32>
    %371 = arith.addf %370, %369 : vector<8x384xf32>
    %372 = arith.divf %370, %371 : vector<8x384xf32>
    %373 = vector.extract_strided_slice %372 {offsets = [0, 0], sizes = [8, 128], strides = [1, 1]} : vector<8x384xf32> to vector<8x128xf32>
    %374 = vector.extract_strided_slice %372 {offsets = [0, 128], sizes = [8, 128], strides = [1, 1]} : vector<8x384xf32> to vector<8x128xf32>
    %375 = vector.extract_strided_slice %372 {offsets = [0, 256], sizes = [8, 128], strides = [1, 1]} : vector<8x384xf32> to vector<8x128xf32>
    %376 = vector.extract_strided_slice %366 {offsets = [0, 384], sizes = [8, 128], strides = [1, 1]} : vector<8x512xf32> to vector<8x128xf32>
    %377 = math.tanh %376 : vector<8x128xf32>
    %378 = arith.mulf %374, %318 : vector<8x128xf32>
    %379 = arith.mulf %373, %377 : vector<8x128xf32>
    %380 = arith.addf %378, %379 : vector<8x128xf32>
    %381 = math.tanh %380 : vector<8x128xf32>
    %382 = arith.mulf %375, %381 : vector<8x128xf32>
    %383 = arith.truncf %382 : vector<8x128xf32> to vector<8x128xbf16>
    %384 = tpu.concatenate %363, %342 in 1 : vector<8x128xbf16>, vector<8x128xbf16> -> vector<8x256xbf16>
    %cst_48 = arith.constant dense<0.000000e+00> : vector<8x512xf32>
    %385 = tpu.matmul %384, %11, %cst_48 {dimension_numbers = #tpu.dot_dimension_numbers<[1], [0], [0], [1], [0, 0, 1, 1], [], []>} : vector<8x256xbf16>, vector<256x512xbf16>, vector<8x512xf32> -> vector<8x512xf32>
    %386 = vector.broadcast %13 : vector<1x512xf32> to vector<8x512xf32>
    %387 = arith.addf %385, %386 : vector<8x512xf32>
    %388 = vector.extract_strided_slice %387 {offsets = [0, 0], sizes = [8, 384], strides = [1, 1]} : vector<8x512xf32> to vector<8x384xf32>
    %389 = arith.negf %388 : vector<8x384xf32>
    %390 = math.exp %389 : vector<8x384xf32>
    %cst_49 = arith.constant 1.000000e+00 : f32
    %391 = vector.broadcast %cst_49 : f32 to vector<8x384xf32>
    %392 = arith.addf %391, %390 : vector<8x384xf32>
    %393 = arith.divf %391, %392 : vector<8x384xf32>
    %394 = vector.extract_strided_slice %393 {offsets = [0, 0], sizes = [8, 128], strides = [1, 1]} : vector<8x384xf32> to vector<8x128xf32>
    %395 = vector.extract_strided_slice %393 {offsets = [0, 128], sizes = [8, 128], strides = [1, 1]} : vector<8x384xf32> to vector<8x128xf32>
    %396 = vector.extract_strided_slice %393 {offsets = [0, 256], sizes = [8, 128], strides = [1, 1]} : vector<8x384xf32> to vector<8x128xf32>
    %397 = vector.extract_strided_slice %387 {offsets = [0, 384], sizes = [8, 128], strides = [1, 1]} : vector<8x512xf32> to vector<8x128xf32>
    %398 = math.tanh %397 : vector<8x128xf32>
    %399 = arith.mulf %395, %339 : vector<8x128xf32>
    %400 = arith.mulf %394, %398 : vector<8x128xf32>
    %401 = arith.addf %399, %400 : vector<8x128xf32>
    %402 = math.tanh %401 : vector<8x128xf32>
    %403 = arith.mulf %396, %402 : vector<8x128xf32>
    %404 = arith.truncf %403 : vector<8x128xf32> to vector<8x128xbf16>
    %405 = tpu.concatenate %383, %363 in 1 : vector<8x128xbf16>, vector<8x128xbf16> -> vector<8x256xbf16>
    %cst_50 = arith.constant dense<0.000000e+00> : vector<8x512xf32>
    %406 = tpu.matmul %405, %9, %cst_50 {dimension_numbers = #tpu.dot_dimension_numbers<[1], [0], [0], [1], [0, 0, 1, 1], [], []>} : vector<8x256xbf16>, vector<256x512xbf16>, vector<8x512xf32> -> vector<8x512xf32>
    %407 = vector.broadcast %12 : vector<1x512xf32> to vector<8x512xf32>
    %408 = arith.addf %406, %407 : vector<8x512xf32>
    %409 = vector.extract_strided_slice %408 {offsets = [0, 0], sizes = [8, 384], strides = [1, 1]} : vector<8x512xf32> to vector<8x384xf32>
    %410 = arith.negf %409 : vector<8x384xf32>
    %411 = math.exp %410 : vector<8x384xf32>
    %cst_51 = arith.constant 1.000000e+00 : f32
    %412 = vector.broadcast %cst_51 : f32 to vector<8x384xf32>
    %413 = arith.addf %412, %411 : vector<8x384xf32>
    %414 = arith.divf %412, %413 : vector<8x384xf32>
    %415 = vector.extract_strided_slice %414 {offsets = [0, 0], sizes = [8, 128], strides = [1, 1]} : vector<8x384xf32> to vector<8x128xf32>
    %416 = vector.extract_strided_slice %414 {offsets = [0, 128], sizes = [8, 128], strides = [1, 1]} : vector<8x384xf32> to vector<8x128xf32>
    %417 = vector.extract_strided_slice %414 {offsets = [0, 256], sizes = [8, 128], strides = [1, 1]} : vector<8x384xf32> to vector<8x128xf32>
    %418 = vector.extract_strided_slice %408 {offsets = [0, 384], sizes = [8, 128], strides = [1, 1]} : vector<8x512xf32> to vector<8x128xf32>
    %419 = math.tanh %418 : vector<8x128xf32>
    %420 = arith.mulf %416, %360 : vector<8x128xf32>
    %421 = arith.mulf %415, %419 : vector<8x128xf32>
    %422 = arith.addf %420, %421 : vector<8x128xf32>
    %423 = math.tanh %422 : vector<8x128xf32>
    %424 = arith.mulf %417, %423 : vector<8x128xf32>
    %425 = arith.truncf %424 : vector<8x128xf32> to vector<8x128xbf16>
    %426 = vector.extract_strided_slice %6 {offsets = [56, 0], sizes = [8, 512], strides = [1, 1]} : vector<96x512xf32> to vector<8x512xf32>
    %cst_52 = arith.constant dense<0.000000e+00> : vector<8x512xf32>
    %427 = tpu.matmul %383, %7, %cst_52 {dimension_numbers = #tpu.dot_dimension_numbers<[1], [0], [0], [1], [0, 0, 1, 1], [], []>} : vector<8x128xbf16>, vector<128x512xbf16>, vector<8x512xf32> -> vector<8x512xf32>
    %428 = arith.addf %426, %427 : vector<8x512xf32>
    %429 = vector.extract_strided_slice %428 {offsets = [0, 0], sizes = [8, 384], strides = [1, 1]} : vector<8x512xf32> to vector<8x384xf32>
    %430 = arith.negf %429 : vector<8x384xf32>
    %431 = math.exp %430 : vector<8x384xf32>
    %cst_53 = arith.constant 1.000000e+00 : f32
    %432 = vector.broadcast %cst_53 : f32 to vector<8x384xf32>
    %433 = arith.addf %432, %431 : vector<8x384xf32>
    %434 = arith.divf %432, %433 : vector<8x384xf32>
    %435 = vector.extract_strided_slice %434 {offsets = [0, 0], sizes = [8, 128], strides = [1, 1]} : vector<8x384xf32> to vector<8x128xf32>
    %436 = vector.extract_strided_slice %434 {offsets = [0, 128], sizes = [8, 128], strides = [1, 1]} : vector<8x384xf32> to vector<8x128xf32>
    %437 = vector.extract_strided_slice %434 {offsets = [0, 256], sizes = [8, 128], strides = [1, 1]} : vector<8x384xf32> to vector<8x128xf32>
    %438 = vector.extract_strided_slice %428 {offsets = [0, 384], sizes = [8, 128], strides = [1, 1]} : vector<8x512xf32> to vector<8x128xf32>
    %439 = math.tanh %438 : vector<8x128xf32>
    %440 = arith.mulf %436, %380 : vector<8x128xf32>
    %441 = arith.mulf %435, %439 : vector<8x128xf32>
    %442 = arith.addf %440, %441 : vector<8x128xf32>
    %443 = math.tanh %442 : vector<8x128xf32>
    %444 = arith.mulf %437, %443 : vector<8x128xf32>
    %445 = arith.truncf %444 : vector<8x128xf32> to vector<8x128xbf16>
    %446 = tpu.concatenate %425, %404 in 1 : vector<8x128xbf16>, vector<8x128xbf16> -> vector<8x256xbf16>
    %cst_54 = arith.constant dense<0.000000e+00> : vector<8x512xf32>
    %447 = tpu.matmul %446, %11, %cst_54 {dimension_numbers = #tpu.dot_dimension_numbers<[1], [0], [0], [1], [0, 0, 1, 1], [], []>} : vector<8x256xbf16>, vector<256x512xbf16>, vector<8x512xf32> -> vector<8x512xf32>
    %448 = vector.broadcast %13 : vector<1x512xf32> to vector<8x512xf32>
    %449 = arith.addf %447, %448 : vector<8x512xf32>
    %450 = vector.extract_strided_slice %449 {offsets = [0, 0], sizes = [8, 384], strides = [1, 1]} : vector<8x512xf32> to vector<8x384xf32>
    %451 = arith.negf %450 : vector<8x384xf32>
    %452 = math.exp %451 : vector<8x384xf32>
    %cst_55 = arith.constant 1.000000e+00 : f32
    %453 = vector.broadcast %cst_55 : f32 to vector<8x384xf32>
    %454 = arith.addf %453, %452 : vector<8x384xf32>
    %455 = arith.divf %453, %454 : vector<8x384xf32>
    %456 = vector.extract_strided_slice %455 {offsets = [0, 0], sizes = [8, 128], strides = [1, 1]} : vector<8x384xf32> to vector<8x128xf32>
    %457 = vector.extract_strided_slice %455 {offsets = [0, 128], sizes = [8, 128], strides = [1, 1]} : vector<8x384xf32> to vector<8x128xf32>
    %458 = vector.extract_strided_slice %455 {offsets = [0, 256], sizes = [8, 128], strides = [1, 1]} : vector<8x384xf32> to vector<8x128xf32>
    %459 = vector.extract_strided_slice %449 {offsets = [0, 384], sizes = [8, 128], strides = [1, 1]} : vector<8x512xf32> to vector<8x128xf32>
    %460 = math.tanh %459 : vector<8x128xf32>
    %461 = arith.mulf %457, %401 : vector<8x128xf32>
    %462 = arith.mulf %456, %460 : vector<8x128xf32>
    %463 = arith.addf %461, %462 : vector<8x128xf32>
    %464 = math.tanh %463 : vector<8x128xf32>
    %465 = arith.mulf %458, %464 : vector<8x128xf32>
    %466 = arith.truncf %465 : vector<8x128xf32> to vector<8x128xbf16>
    %467 = tpu.concatenate %445, %425 in 1 : vector<8x128xbf16>, vector<8x128xbf16> -> vector<8x256xbf16>
    %cst_56 = arith.constant dense<0.000000e+00> : vector<8x512xf32>
    %468 = tpu.matmul %467, %9, %cst_56 {dimension_numbers = #tpu.dot_dimension_numbers<[1], [0], [0], [1], [0, 0, 1, 1], [], []>} : vector<8x256xbf16>, vector<256x512xbf16>, vector<8x512xf32> -> vector<8x512xf32>
    %469 = vector.broadcast %12 : vector<1x512xf32> to vector<8x512xf32>
    %470 = arith.addf %468, %469 : vector<8x512xf32>
    %471 = vector.extract_strided_slice %470 {offsets = [0, 0], sizes = [8, 384], strides = [1, 1]} : vector<8x512xf32> to vector<8x384xf32>
    %472 = arith.negf %471 : vector<8x384xf32>
    %473 = math.exp %472 : vector<8x384xf32>
    %cst_57 = arith.constant 1.000000e+00 : f32
    %474 = vector.broadcast %cst_57 : f32 to vector<8x384xf32>
    %475 = arith.addf %474, %473 : vector<8x384xf32>
    %476 = arith.divf %474, %475 : vector<8x384xf32>
    %477 = vector.extract_strided_slice %476 {offsets = [0, 0], sizes = [8, 128], strides = [1, 1]} : vector<8x384xf32> to vector<8x128xf32>
    %478 = vector.extract_strided_slice %476 {offsets = [0, 128], sizes = [8, 128], strides = [1, 1]} : vector<8x384xf32> to vector<8x128xf32>
    %479 = vector.extract_strided_slice %476 {offsets = [0, 256], sizes = [8, 128], strides = [1, 1]} : vector<8x384xf32> to vector<8x128xf32>
    %480 = vector.extract_strided_slice %470 {offsets = [0, 384], sizes = [8, 128], strides = [1, 1]} : vector<8x512xf32> to vector<8x128xf32>
    %481 = math.tanh %480 : vector<8x128xf32>
    %482 = arith.mulf %478, %422 : vector<8x128xf32>
    %483 = arith.mulf %477, %481 : vector<8x128xf32>
    %484 = arith.addf %482, %483 : vector<8x128xf32>
    %485 = math.tanh %484 : vector<8x128xf32>
    %486 = arith.mulf %479, %485 : vector<8x128xf32>
    %487 = arith.truncf %486 : vector<8x128xf32> to vector<8x128xbf16>
    %488 = vector.extract_strided_slice %6 {offsets = [64, 0], sizes = [8, 512], strides = [1, 1]} : vector<96x512xf32> to vector<8x512xf32>
    %cst_58 = arith.constant dense<0.000000e+00> : vector<8x512xf32>
    %489 = tpu.matmul %445, %7, %cst_58 {dimension_numbers = #tpu.dot_dimension_numbers<[1], [0], [0], [1], [0, 0, 1, 1], [], []>} : vector<8x128xbf16>, vector<128x512xbf16>, vector<8x512xf32> -> vector<8x512xf32>
    %490 = arith.addf %488, %489 : vector<8x512xf32>
    %491 = vector.extract_strided_slice %490 {offsets = [0, 0], sizes = [8, 384], strides = [1, 1]} : vector<8x512xf32> to vector<8x384xf32>
    %492 = arith.negf %491 : vector<8x384xf32>
    %493 = math.exp %492 : vector<8x384xf32>
    %cst_59 = arith.constant 1.000000e+00 : f32
    %494 = vector.broadcast %cst_59 : f32 to vector<8x384xf32>
    %495 = arith.addf %494, %493 : vector<8x384xf32>
    %496 = arith.divf %494, %495 : vector<8x384xf32>
    %497 = vector.extract_strided_slice %496 {offsets = [0, 0], sizes = [8, 128], strides = [1, 1]} : vector<8x384xf32> to vector<8x128xf32>
    %498 = vector.extract_strided_slice %496 {offsets = [0, 128], sizes = [8, 128], strides = [1, 1]} : vector<8x384xf32> to vector<8x128xf32>
    %499 = vector.extract_strided_slice %496 {offsets = [0, 256], sizes = [8, 128], strides = [1, 1]} : vector<8x384xf32> to vector<8x128xf32>
    %500 = vector.extract_strided_slice %490 {offsets = [0, 384], sizes = [8, 128], strides = [1, 1]} : vector<8x512xf32> to vector<8x128xf32>
    %501 = math.tanh %500 : vector<8x128xf32>
    %502 = arith.mulf %498, %442 : vector<8x128xf32>
    %503 = arith.mulf %497, %501 : vector<8x128xf32>
    %504 = arith.addf %502, %503 : vector<8x128xf32>
    %505 = math.tanh %504 : vector<8x128xf32>
    %506 = arith.mulf %499, %505 : vector<8x128xf32>
    %507 = arith.truncf %506 : vector<8x128xf32> to vector<8x128xbf16>
    %508 = tpu.concatenate %487, %466 in 1 : vector<8x128xbf16>, vector<8x128xbf16> -> vector<8x256xbf16>
    %cst_60 = arith.constant dense<0.000000e+00> : vector<8x512xf32>
    %509 = tpu.matmul %508, %11, %cst_60 {dimension_numbers = #tpu.dot_dimension_numbers<[1], [0], [0], [1], [0, 0, 1, 1], [], []>} : vector<8x256xbf16>, vector<256x512xbf16>, vector<8x512xf32> -> vector<8x512xf32>
    %510 = vector.broadcast %13 : vector<1x512xf32> to vector<8x512xf32>
    %511 = arith.addf %509, %510 : vector<8x512xf32>
    %512 = vector.extract_strided_slice %511 {offsets = [0, 0], sizes = [8, 384], strides = [1, 1]} : vector<8x512xf32> to vector<8x384xf32>
    %513 = arith.negf %512 : vector<8x384xf32>
    %514 = math.exp %513 : vector<8x384xf32>
    %cst_61 = arith.constant 1.000000e+00 : f32
    %515 = vector.broadcast %cst_61 : f32 to vector<8x384xf32>
    %516 = arith.addf %515, %514 : vector<8x384xf32>
    %517 = arith.divf %515, %516 : vector<8x384xf32>
    %518 = vector.extract_strided_slice %517 {offsets = [0, 0], sizes = [8, 128], strides = [1, 1]} : vector<8x384xf32> to vector<8x128xf32>
    %519 = vector.extract_strided_slice %517 {offsets = [0, 128], sizes = [8, 128], strides = [1, 1]} : vector<8x384xf32> to vector<8x128xf32>
    %520 = vector.extract_strided_slice %517 {offsets = [0, 256], sizes = [8, 128], strides = [1, 1]} : vector<8x384xf32> to vector<8x128xf32>
    %521 = vector.extract_strided_slice %511 {offsets = [0, 384], sizes = [8, 128], strides = [1, 1]} : vector<8x512xf32> to vector<8x128xf32>
    %522 = math.tanh %521 : vector<8x128xf32>
    %523 = arith.mulf %519, %463 : vector<8x128xf32>
    %524 = arith.mulf %518, %522 : vector<8x128xf32>
    %525 = arith.addf %523, %524 : vector<8x128xf32>
    %526 = math.tanh %525 : vector<8x128xf32>
    %527 = arith.mulf %520, %526 : vector<8x128xf32>
    %528 = arith.truncf %527 : vector<8x128xf32> to vector<8x128xbf16>
    %529 = tpu.concatenate %507, %487 in 1 : vector<8x128xbf16>, vector<8x128xbf16> -> vector<8x256xbf16>
    %cst_62 = arith.constant dense<0.000000e+00> : vector<8x512xf32>
    %530 = tpu.matmul %529, %9, %cst_62 {dimension_numbers = #tpu.dot_dimension_numbers<[1], [0], [0], [1], [0, 0, 1, 1], [], []>} : vector<8x256xbf16>, vector<256x512xbf16>, vector<8x512xf32> -> vector<8x512xf32>
    %531 = vector.broadcast %12 : vector<1x512xf32> to vector<8x512xf32>
    %532 = arith.addf %530, %531 : vector<8x512xf32>
    %533 = vector.extract_strided_slice %532 {offsets = [0, 0], sizes = [8, 384], strides = [1, 1]} : vector<8x512xf32> to vector<8x384xf32>
    %534 = arith.negf %533 : vector<8x384xf32>
    %535 = math.exp %534 : vector<8x384xf32>
    %cst_63 = arith.constant 1.000000e+00 : f32
    %536 = vector.broadcast %cst_63 : f32 to vector<8x384xf32>
    %537 = arith.addf %536, %535 : vector<8x384xf32>
    %538 = arith.divf %536, %537 : vector<8x384xf32>
    %539 = vector.extract_strided_slice %538 {offsets = [0, 0], sizes = [8, 128], strides = [1, 1]} : vector<8x384xf32> to vector<8x128xf32>
    %540 = vector.extract_strided_slice %538 {offsets = [0, 128], sizes = [8, 128], strides = [1, 1]} : vector<8x384xf32> to vector<8x128xf32>
    %541 = vector.extract_strided_slice %538 {offsets = [0, 256], sizes = [8, 128], strides = [1, 1]} : vector<8x384xf32> to vector<8x128xf32>
    %542 = vector.extract_strided_slice %532 {offsets = [0, 384], sizes = [8, 128], strides = [1, 1]} : vector<8x512xf32> to vector<8x128xf32>
    %543 = math.tanh %542 : vector<8x128xf32>
    %544 = arith.mulf %540, %484 : vector<8x128xf32>
    %545 = arith.mulf %539, %543 : vector<8x128xf32>
    %546 = arith.addf %544, %545 : vector<8x128xf32>
    %547 = math.tanh %546 : vector<8x128xf32>
    %548 = arith.mulf %541, %547 : vector<8x128xf32>
    %549 = arith.truncf %548 : vector<8x128xf32> to vector<8x128xbf16>
    %550 = vector.extract_strided_slice %6 {offsets = [72, 0], sizes = [8, 512], strides = [1, 1]} : vector<96x512xf32> to vector<8x512xf32>
    %cst_64 = arith.constant dense<0.000000e+00> : vector<8x512xf32>
    %551 = tpu.matmul %507, %7, %cst_64 {dimension_numbers = #tpu.dot_dimension_numbers<[1], [0], [0], [1], [0, 0, 1, 1], [], []>} : vector<8x128xbf16>, vector<128x512xbf16>, vector<8x512xf32> -> vector<8x512xf32>
    %552 = arith.addf %550, %551 : vector<8x512xf32>
    %553 = vector.extract_strided_slice %552 {offsets = [0, 0], sizes = [8, 384], strides = [1, 1]} : vector<8x512xf32> to vector<8x384xf32>
    %554 = arith.negf %553 : vector<8x384xf32>
    %555 = math.exp %554 : vector<8x384xf32>
    %cst_65 = arith.constant 1.000000e+00 : f32
    %556 = vector.broadcast %cst_65 : f32 to vector<8x384xf32>
    %557 = arith.addf %556, %555 : vector<8x384xf32>
    %558 = arith.divf %556, %557 : vector<8x384xf32>
    %559 = vector.extract_strided_slice %558 {offsets = [0, 0], sizes = [8, 128], strides = [1, 1]} : vector<8x384xf32> to vector<8x128xf32>
    %560 = vector.extract_strided_slice %558 {offsets = [0, 128], sizes = [8, 128], strides = [1, 1]} : vector<8x384xf32> to vector<8x128xf32>
    %561 = vector.extract_strided_slice %558 {offsets = [0, 256], sizes = [8, 128], strides = [1, 1]} : vector<8x384xf32> to vector<8x128xf32>
    %562 = vector.extract_strided_slice %552 {offsets = [0, 384], sizes = [8, 128], strides = [1, 1]} : vector<8x512xf32> to vector<8x128xf32>
    %563 = math.tanh %562 : vector<8x128xf32>
    %564 = arith.mulf %560, %504 : vector<8x128xf32>
    %565 = arith.mulf %559, %563 : vector<8x128xf32>
    %566 = arith.addf %564, %565 : vector<8x128xf32>
    %567 = math.tanh %566 : vector<8x128xf32>
    %568 = arith.mulf %561, %567 : vector<8x128xf32>
    %569 = arith.truncf %568 : vector<8x128xf32> to vector<8x128xbf16>
    %570 = tpu.concatenate %549, %528 in 1 : vector<8x128xbf16>, vector<8x128xbf16> -> vector<8x256xbf16>
    %cst_66 = arith.constant dense<0.000000e+00> : vector<8x512xf32>
    %571 = tpu.matmul %570, %11, %cst_66 {dimension_numbers = #tpu.dot_dimension_numbers<[1], [0], [0], [1], [0, 0, 1, 1], [], []>} : vector<8x256xbf16>, vector<256x512xbf16>, vector<8x512xf32> -> vector<8x512xf32>
    %572 = vector.broadcast %13 : vector<1x512xf32> to vector<8x512xf32>
    %573 = arith.addf %571, %572 : vector<8x512xf32>
    %574 = vector.extract_strided_slice %573 {offsets = [0, 0], sizes = [8, 384], strides = [1, 1]} : vector<8x512xf32> to vector<8x384xf32>
    %575 = arith.negf %574 : vector<8x384xf32>
    %576 = math.exp %575 : vector<8x384xf32>
    %cst_67 = arith.constant 1.000000e+00 : f32
    %577 = vector.broadcast %cst_67 : f32 to vector<8x384xf32>
    %578 = arith.addf %577, %576 : vector<8x384xf32>
    %579 = arith.divf %577, %578 : vector<8x384xf32>
    %580 = vector.extract_strided_slice %579 {offsets = [0, 0], sizes = [8, 128], strides = [1, 1]} : vector<8x384xf32> to vector<8x128xf32>
    %581 = vector.extract_strided_slice %579 {offsets = [0, 128], sizes = [8, 128], strides = [1, 1]} : vector<8x384xf32> to vector<8x128xf32>
    %582 = vector.extract_strided_slice %579 {offsets = [0, 256], sizes = [8, 128], strides = [1, 1]} : vector<8x384xf32> to vector<8x128xf32>
    %583 = vector.extract_strided_slice %573 {offsets = [0, 384], sizes = [8, 128], strides = [1, 1]} : vector<8x512xf32> to vector<8x128xf32>
    %584 = math.tanh %583 : vector<8x128xf32>
    %585 = arith.mulf %581, %525 : vector<8x128xf32>
    %586 = arith.mulf %580, %584 : vector<8x128xf32>
    %587 = arith.addf %585, %586 : vector<8x128xf32>
    %588 = math.tanh %587 : vector<8x128xf32>
    %589 = arith.mulf %582, %588 : vector<8x128xf32>
    %590 = arith.truncf %589 : vector<8x128xf32> to vector<8x128xbf16>
    %591 = tpu.concatenate %569, %549 in 1 : vector<8x128xbf16>, vector<8x128xbf16> -> vector<8x256xbf16>
    %cst_68 = arith.constant dense<0.000000e+00> : vector<8x512xf32>
    %592 = tpu.matmul %591, %9, %cst_68 {dimension_numbers = #tpu.dot_dimension_numbers<[1], [0], [0], [1], [0, 0, 1, 1], [], []>} : vector<8x256xbf16>, vector<256x512xbf16>, vector<8x512xf32> -> vector<8x512xf32>
    %593 = vector.broadcast %12 : vector<1x512xf32> to vector<8x512xf32>
    %594 = arith.addf %592, %593 : vector<8x512xf32>
    %595 = vector.extract_strided_slice %594 {offsets = [0, 0], sizes = [8, 384], strides = [1, 1]} : vector<8x512xf32> to vector<8x384xf32>
    %596 = arith.negf %595 : vector<8x384xf32>
    %597 = math.exp %596 : vector<8x384xf32>
    %cst_69 = arith.constant 1.000000e+00 : f32
    %598 = vector.broadcast %cst_69 : f32 to vector<8x384xf32>
    %599 = arith.addf %598, %597 : vector<8x384xf32>
    %600 = arith.divf %598, %599 : vector<8x384xf32>
    %601 = vector.extract_strided_slice %600 {offsets = [0, 0], sizes = [8, 128], strides = [1, 1]} : vector<8x384xf32> to vector<8x128xf32>
    %602 = vector.extract_strided_slice %600 {offsets = [0, 128], sizes = [8, 128], strides = [1, 1]} : vector<8x384xf32> to vector<8x128xf32>
    %603 = vector.extract_strided_slice %600 {offsets = [0, 256], sizes = [8, 128], strides = [1, 1]} : vector<8x384xf32> to vector<8x128xf32>
    %604 = vector.extract_strided_slice %594 {offsets = [0, 384], sizes = [8, 128], strides = [1, 1]} : vector<8x512xf32> to vector<8x128xf32>
    %605 = math.tanh %604 : vector<8x128xf32>
    %606 = arith.mulf %602, %546 : vector<8x128xf32>
    %607 = arith.mulf %601, %605 : vector<8x128xf32>
    %608 = arith.addf %606, %607 : vector<8x128xf32>
    %609 = math.tanh %608 : vector<8x128xf32>
    %610 = arith.mulf %603, %609 : vector<8x128xf32>
    %611 = arith.truncf %610 : vector<8x128xf32> to vector<8x128xbf16>
    %612 = vector.extract_strided_slice %6 {offsets = [80, 0], sizes = [8, 512], strides = [1, 1]} : vector<96x512xf32> to vector<8x512xf32>
    %cst_70 = arith.constant dense<0.000000e+00> : vector<8x512xf32>
    %613 = tpu.matmul %569, %7, %cst_70 {dimension_numbers = #tpu.dot_dimension_numbers<[1], [0], [0], [1], [0, 0, 1, 1], [], []>} : vector<8x128xbf16>, vector<128x512xbf16>, vector<8x512xf32> -> vector<8x512xf32>
    %614 = arith.addf %612, %613 : vector<8x512xf32>
    %615 = vector.extract_strided_slice %614 {offsets = [0, 0], sizes = [8, 384], strides = [1, 1]} : vector<8x512xf32> to vector<8x384xf32>
    %616 = arith.negf %615 : vector<8x384xf32>
    %617 = math.exp %616 : vector<8x384xf32>
    %cst_71 = arith.constant 1.000000e+00 : f32
    %618 = vector.broadcast %cst_71 : f32 to vector<8x384xf32>
    %619 = arith.addf %618, %617 : vector<8x384xf32>
    %620 = arith.divf %618, %619 : vector<8x384xf32>
    %621 = vector.extract_strided_slice %620 {offsets = [0, 0], sizes = [8, 128], strides = [1, 1]} : vector<8x384xf32> to vector<8x128xf32>
    %622 = vector.extract_strided_slice %620 {offsets = [0, 128], sizes = [8, 128], strides = [1, 1]} : vector<8x384xf32> to vector<8x128xf32>
    %623 = vector.extract_strided_slice %620 {offsets = [0, 256], sizes = [8, 128], strides = [1, 1]} : vector<8x384xf32> to vector<8x128xf32>
    %624 = vector.extract_strided_slice %614 {offsets = [0, 384], sizes = [8, 128], strides = [1, 1]} : vector<8x512xf32> to vector<8x128xf32>
    %625 = math.tanh %624 : vector<8x128xf32>
    %626 = arith.mulf %622, %566 : vector<8x128xf32>
    %627 = arith.mulf %621, %625 : vector<8x128xf32>
    %628 = arith.addf %626, %627 : vector<8x128xf32>
    %629 = math.tanh %628 : vector<8x128xf32>
    %630 = arith.mulf %623, %629 : vector<8x128xf32>
    %631 = arith.truncf %630 : vector<8x128xf32> to vector<8x128xbf16>
    %632 = tpu.concatenate %611, %590 in 1 : vector<8x128xbf16>, vector<8x128xbf16> -> vector<8x256xbf16>
    %cst_72 = arith.constant dense<0.000000e+00> : vector<8x512xf32>
    %633 = tpu.matmul %632, %11, %cst_72 {dimension_numbers = #tpu.dot_dimension_numbers<[1], [0], [0], [1], [0, 0, 1, 1], [], []>} : vector<8x256xbf16>, vector<256x512xbf16>, vector<8x512xf32> -> vector<8x512xf32>
    %634 = vector.broadcast %13 : vector<1x512xf32> to vector<8x512xf32>
    %635 = arith.addf %633, %634 : vector<8x512xf32>
    %636 = vector.extract_strided_slice %635 {offsets = [0, 0], sizes = [8, 384], strides = [1, 1]} : vector<8x512xf32> to vector<8x384xf32>
    %637 = arith.negf %636 : vector<8x384xf32>
    %638 = math.exp %637 : vector<8x384xf32>
    %cst_73 = arith.constant 1.000000e+00 : f32
    %639 = vector.broadcast %cst_73 : f32 to vector<8x384xf32>
    %640 = arith.addf %639, %638 : vector<8x384xf32>
    %641 = arith.divf %639, %640 : vector<8x384xf32>
    %642 = vector.extract_strided_slice %641 {offsets = [0, 0], sizes = [8, 128], strides = [1, 1]} : vector<8x384xf32> to vector<8x128xf32>
    %643 = vector.extract_strided_slice %641 {offsets = [0, 128], sizes = [8, 128], strides = [1, 1]} : vector<8x384xf32> to vector<8x128xf32>
    %644 = vector.extract_strided_slice %641 {offsets = [0, 256], sizes = [8, 128], strides = [1, 1]} : vector<8x384xf32> to vector<8x128xf32>
    %645 = vector.extract_strided_slice %635 {offsets = [0, 384], sizes = [8, 128], strides = [1, 1]} : vector<8x512xf32> to vector<8x128xf32>
    %646 = math.tanh %645 : vector<8x128xf32>
    %647 = arith.mulf %643, %587 : vector<8x128xf32>
    %648 = arith.mulf %642, %646 : vector<8x128xf32>
    %649 = arith.addf %647, %648 : vector<8x128xf32>
    %650 = math.tanh %649 : vector<8x128xf32>
    %651 = arith.mulf %644, %650 : vector<8x128xf32>
    %652 = arith.truncf %651 : vector<8x128xf32> to vector<8x128xbf16>
    %653 = tpu.concatenate %631, %611 in 1 : vector<8x128xbf16>, vector<8x128xbf16> -> vector<8x256xbf16>
    %cst_74 = arith.constant dense<0.000000e+00> : vector<8x512xf32>
    %654 = tpu.matmul %653, %9, %cst_74 {dimension_numbers = #tpu.dot_dimension_numbers<[1], [0], [0], [1], [0, 0, 1, 1], [], []>} : vector<8x256xbf16>, vector<256x512xbf16>, vector<8x512xf32> -> vector<8x512xf32>
    %655 = vector.broadcast %12 : vector<1x512xf32> to vector<8x512xf32>
    %656 = arith.addf %654, %655 : vector<8x512xf32>
    %657 = vector.extract_strided_slice %656 {offsets = [0, 0], sizes = [8, 384], strides = [1, 1]} : vector<8x512xf32> to vector<8x384xf32>
    %658 = arith.negf %657 : vector<8x384xf32>
    %659 = math.exp %658 : vector<8x384xf32>
    %cst_75 = arith.constant 1.000000e+00 : f32
    %660 = vector.broadcast %cst_75 : f32 to vector<8x384xf32>
    %661 = arith.addf %660, %659 : vector<8x384xf32>
    %662 = arith.divf %660, %661 : vector<8x384xf32>
    %663 = vector.extract_strided_slice %662 {offsets = [0, 0], sizes = [8, 128], strides = [1, 1]} : vector<8x384xf32> to vector<8x128xf32>
    %664 = vector.extract_strided_slice %662 {offsets = [0, 128], sizes = [8, 128], strides = [1, 1]} : vector<8x384xf32> to vector<8x128xf32>
    %665 = vector.extract_strided_slice %662 {offsets = [0, 256], sizes = [8, 128], strides = [1, 1]} : vector<8x384xf32> to vector<8x128xf32>
    %666 = vector.extract_strided_slice %656 {offsets = [0, 384], sizes = [8, 128], strides = [1, 1]} : vector<8x512xf32> to vector<8x128xf32>
    %667 = math.tanh %666 : vector<8x128xf32>
    %668 = arith.mulf %664, %608 : vector<8x128xf32>
    %669 = arith.mulf %663, %667 : vector<8x128xf32>
    %670 = arith.addf %668, %669 : vector<8x128xf32>
    %671 = math.tanh %670 : vector<8x128xf32>
    %672 = arith.mulf %665, %671 : vector<8x128xf32>
    %673 = arith.truncf %672 : vector<8x128xf32> to vector<8x128xbf16>
    %674 = vector.extract_strided_slice %6 {offsets = [88, 0], sizes = [8, 512], strides = [1, 1]} : vector<96x512xf32> to vector<8x512xf32>
    %cst_76 = arith.constant dense<0.000000e+00> : vector<8x512xf32>
    %675 = tpu.matmul %631, %7, %cst_76 {dimension_numbers = #tpu.dot_dimension_numbers<[1], [0], [0], [1], [0, 0, 1, 1], [], []>} : vector<8x128xbf16>, vector<128x512xbf16>, vector<8x512xf32> -> vector<8x512xf32>
    %676 = arith.addf %674, %675 : vector<8x512xf32>
    %677 = vector.extract_strided_slice %676 {offsets = [0, 0], sizes = [8, 384], strides = [1, 1]} : vector<8x512xf32> to vector<8x384xf32>
    %678 = arith.negf %677 : vector<8x384xf32>
    %679 = math.exp %678 : vector<8x384xf32>
    %cst_77 = arith.constant 1.000000e+00 : f32
    %680 = vector.broadcast %cst_77 : f32 to vector<8x384xf32>
    %681 = arith.addf %680, %679 : vector<8x384xf32>
    %682 = arith.divf %680, %681 : vector<8x384xf32>
    %683 = vector.extract_strided_slice %682 {offsets = [0, 0], sizes = [8, 128], strides = [1, 1]} : vector<8x384xf32> to vector<8x128xf32>
    %684 = vector.extract_strided_slice %682 {offsets = [0, 128], sizes = [8, 128], strides = [1, 1]} : vector<8x384xf32> to vector<8x128xf32>
    %685 = vector.extract_strided_slice %682 {offsets = [0, 256], sizes = [8, 128], strides = [1, 1]} : vector<8x384xf32> to vector<8x128xf32>
    %686 = vector.extract_strided_slice %676 {offsets = [0, 384], sizes = [8, 128], strides = [1, 1]} : vector<8x512xf32> to vector<8x128xf32>
    %687 = math.tanh %686 : vector<8x128xf32>
    %688 = arith.mulf %684, %628 : vector<8x128xf32>
    %689 = arith.mulf %683, %687 : vector<8x128xf32>
    %690 = arith.addf %688, %689 : vector<8x128xf32>
    %691 = math.tanh %690 : vector<8x128xf32>
    %692 = arith.mulf %685, %691 : vector<8x128xf32>
    %693 = arith.truncf %692 : vector<8x128xf32> to vector<8x128xbf16>
    %694 = tpu.concatenate %673, %652 in 1 : vector<8x128xbf16>, vector<8x128xbf16> -> vector<8x256xbf16>
    %cst_78 = arith.constant dense<0.000000e+00> : vector<8x512xf32>
    %695 = tpu.matmul %694, %11, %cst_78 {dimension_numbers = #tpu.dot_dimension_numbers<[1], [0], [0], [1], [0, 0, 1, 1], [], []>} : vector<8x256xbf16>, vector<256x512xbf16>, vector<8x512xf32> -> vector<8x512xf32>
    %696 = vector.broadcast %13 : vector<1x512xf32> to vector<8x512xf32>
    %697 = arith.addf %695, %696 : vector<8x512xf32>
    %698 = vector.extract_strided_slice %697 {offsets = [0, 0], sizes = [8, 384], strides = [1, 1]} : vector<8x512xf32> to vector<8x384xf32>
    %699 = arith.negf %698 : vector<8x384xf32>
    %700 = math.exp %699 : vector<8x384xf32>
    %cst_79 = arith.constant 1.000000e+00 : f32
    %701 = vector.broadcast %cst_79 : f32 to vector<8x384xf32>
    %702 = arith.addf %701, %700 : vector<8x384xf32>
    %703 = arith.divf %701, %702 : vector<8x384xf32>
    %704 = vector.extract_strided_slice %703 {offsets = [0, 0], sizes = [8, 128], strides = [1, 1]} : vector<8x384xf32> to vector<8x128xf32>
    %705 = vector.extract_strided_slice %703 {offsets = [0, 128], sizes = [8, 128], strides = [1, 1]} : vector<8x384xf32> to vector<8x128xf32>
    %706 = vector.extract_strided_slice %703 {offsets = [0, 256], sizes = [8, 128], strides = [1, 1]} : vector<8x384xf32> to vector<8x128xf32>
    %707 = vector.extract_strided_slice %697 {offsets = [0, 384], sizes = [8, 128], strides = [1, 1]} : vector<8x512xf32> to vector<8x128xf32>
    %708 = math.tanh %707 : vector<8x128xf32>
    %709 = arith.mulf %705, %649 : vector<8x128xf32>
    %710 = arith.mulf %704, %708 : vector<8x128xf32>
    %711 = arith.addf %709, %710 : vector<8x128xf32>
    %712 = math.tanh %711 : vector<8x128xf32>
    %713 = arith.mulf %706, %712 : vector<8x128xf32>
    %714 = arith.truncf %713 : vector<8x128xf32> to vector<8x128xbf16>
    %715 = tpu.concatenate %693, %673 in 1 : vector<8x128xbf16>, vector<8x128xbf16> -> vector<8x256xbf16>
    %cst_80 = arith.constant dense<0.000000e+00> : vector<8x512xf32>
    %716 = tpu.matmul %715, %9, %cst_80 {dimension_numbers = #tpu.dot_dimension_numbers<[1], [0], [0], [1], [0, 0, 1, 1], [], []>} : vector<8x256xbf16>, vector<256x512xbf16>, vector<8x512xf32> -> vector<8x512xf32>
    %717 = vector.broadcast %12 : vector<1x512xf32> to vector<8x512xf32>
    %718 = arith.addf %716, %717 : vector<8x512xf32>
    %719 = vector.extract_strided_slice %718 {offsets = [0, 0], sizes = [8, 384], strides = [1, 1]} : vector<8x512xf32> to vector<8x384xf32>
    %720 = arith.negf %719 : vector<8x384xf32>
    %721 = math.exp %720 : vector<8x384xf32>
    %cst_81 = arith.constant 1.000000e+00 : f32
    %722 = vector.broadcast %cst_81 : f32 to vector<8x384xf32>
    %723 = arith.addf %722, %721 : vector<8x384xf32>
    %724 = arith.divf %722, %723 : vector<8x384xf32>
    %725 = vector.extract_strided_slice %724 {offsets = [0, 0], sizes = [8, 128], strides = [1, 1]} : vector<8x384xf32> to vector<8x128xf32>
    %726 = vector.extract_strided_slice %724 {offsets = [0, 128], sizes = [8, 128], strides = [1, 1]} : vector<8x384xf32> to vector<8x128xf32>
    %727 = vector.extract_strided_slice %724 {offsets = [0, 256], sizes = [8, 128], strides = [1, 1]} : vector<8x384xf32> to vector<8x128xf32>
    %728 = vector.extract_strided_slice %718 {offsets = [0, 384], sizes = [8, 128], strides = [1, 1]} : vector<8x512xf32> to vector<8x128xf32>
    %729 = math.tanh %728 : vector<8x128xf32>
    %730 = arith.mulf %726, %670 : vector<8x128xf32>
    %731 = arith.mulf %725, %729 : vector<8x128xf32>
    %732 = arith.addf %730, %731 : vector<8x128xf32>
    %733 = math.tanh %732 : vector<8x128xf32>
    %734 = arith.mulf %727, %733 : vector<8x128xf32>
    %735 = arith.truncf %734 : vector<8x128xf32> to vector<8x128xbf16>
    %736 = tpu.concatenate %735, %714 in 1 : vector<8x128xbf16>, vector<8x128xbf16> -> vector<8x256xbf16>
    %cst_82 = arith.constant dense<0.000000e+00> : vector<8x512xf32>
    %737 = tpu.matmul %736, %11, %cst_82 {dimension_numbers = #tpu.dot_dimension_numbers<[1], [0], [0], [1], [0, 0, 1, 1], [], []>} : vector<8x256xbf16>, vector<256x512xbf16>, vector<8x512xf32> -> vector<8x512xf32>
    %738 = vector.broadcast %13 : vector<1x512xf32> to vector<8x512xf32>
    %739 = arith.addf %737, %738 : vector<8x512xf32>
    %740 = vector.extract_strided_slice %739 {offsets = [0, 0], sizes = [8, 384], strides = [1, 1]} : vector<8x512xf32> to vector<8x384xf32>
    %741 = arith.negf %740 : vector<8x384xf32>
    %742 = math.exp %741 : vector<8x384xf32>
    %cst_83 = arith.constant 1.000000e+00 : f32
    %743 = vector.broadcast %cst_83 : f32 to vector<8x384xf32>
    %744 = arith.addf %743, %742 : vector<8x384xf32>
    %745 = arith.divf %743, %744 : vector<8x384xf32>
    %746 = vector.extract_strided_slice %745 {offsets = [0, 0], sizes = [8, 128], strides = [1, 1]} : vector<8x384xf32> to vector<8x128xf32>
    %747 = vector.extract_strided_slice %745 {offsets = [0, 128], sizes = [8, 128], strides = [1, 1]} : vector<8x384xf32> to vector<8x128xf32>
    %748 = vector.extract_strided_slice %745 {offsets = [0, 256], sizes = [8, 128], strides = [1, 1]} : vector<8x384xf32> to vector<8x128xf32>
    %749 = vector.extract_strided_slice %739 {offsets = [0, 384], sizes = [8, 128], strides = [1, 1]} : vector<8x512xf32> to vector<8x128xf32>
    %750 = math.tanh %749 : vector<8x128xf32>
    %751 = arith.mulf %747, %711 : vector<8x128xf32>
    %752 = arith.mulf %746, %750 : vector<8x128xf32>
    %753 = arith.addf %751, %752 : vector<8x128xf32>
    %754 = math.tanh %753 : vector<8x128xf32>
    %755 = arith.mulf %748, %754 : vector<8x128xf32>
    %756 = arith.truncf %755 : vector<8x128xf32> to vector<8x128xbf16>
    %c0_84 = arith.constant 0 : index
    %c0_85 = arith.constant 0 : index
    %757 = vector.load %arg6[%c0_84, %c0_85] : memref<128x128xbf16, #tpu.memory_space<vmem>>, vector<128x128xbf16>
    %cst_86 = arith.constant dense<0.000000e+00> : vector<8x128xf32>
    %758 = tpu.matmul %756, %757, %cst_86 {dimension_numbers = #tpu.dot_dimension_numbers<[1], [0], [0], [1], [0, 0, 1, 1], [], []>} : vector<8x128xbf16>, vector<128x128xbf16>, vector<8x128xf32> -> vector<8x128xf32>
    %c0_87 = arith.constant 0 : index
    %c0_88 = arith.constant 0 : index
    %759 = vector.load %arg7[%c0_87, %c0_88] : memref<1x128xf32, #tpu.memory_space<vmem>>, vector<1x128xf32>
    %760 = vector.broadcast %759 : vector<1x128xf32> to vector<8x128xf32>
    %761 = arith.addf %758, %760 : vector<8x128xf32>
    %c0_89 = arith.constant 0 : index
    %c0_90 = arith.constant 0 : index
    %762 = vector.load %arg8[%c0_89, %c0_90] : memref<240x64xbf16, #tpu.memory_space<vmem>>, vector<240x64xbf16>
    %c0_91 = arith.constant 0 : index
    %c0_92 = arith.constant 0 : index
    %763 = vector.load %arg9[%c0_91, %c0_92] : memref<5x64xf32, #tpu.memory_space<vmem>>, vector<5x64xf32>
    %c0_93 = arith.constant 0 : index
    %c0_94 = arith.constant 0 : index
    %764 = vector.load %arg1[%c0_93, %c0_94] : memref<8x1xf32, #tpu.memory_space<vmem>>, vector<8x1xf32>
    %765 = arith.truncf %761 : vector<8x128xf32> to vector<8x128xbf16>
    %766 = vector.extract_strided_slice %762 {offsets = [0, 0], sizes = [128, 64], strides = [1, 1]} : vector<240x64xbf16> to vector<128x64xbf16>
    %cst_95 = arith.constant dense<0.000000e+00> : vector<8x64xf32>
    %767 = tpu.matmul %765, %766, %cst_95 {dimension_numbers = #tpu.dot_dimension_numbers<[1], [0], [0], [1], [0, 0, 1, 1], [], []>} : vector<8x128xbf16>, vector<128x64xbf16>, vector<8x64xf32> -> vector<8x64xf32>
    %768 = vector.extract_strided_slice %763 {offsets = [4, 0], sizes = [1, 64], strides = [1, 1]} : vector<5x64xf32> to vector<1x64xf32>
    %769 = vector.broadcast %764 : vector<8x1xf32> to vector<8x64xf32>
    %770 = vector.broadcast %768 : vector<1x64xf32> to vector<8x64xf32>
    %771 = arith.mulf %769, %770 : vector<8x64xf32>
    %772 = arith.addf %767, %771 : vector<8x64xf32>
    %773 = vector.extract_strided_slice %763 {offsets = [0, 0], sizes = [1, 64], strides = [1, 1]} : vector<5x64xf32> to vector<1x64xf32>
    %774 = vector.broadcast %773 : vector<1x64xf32> to vector<8x64xf32>
    %775 = arith.addf %772, %774 : vector<8x64xf32>
    %cst_96 = arith.constant 0.000000e+00 : f32
    %776 = vector.broadcast %cst_96 : f32 to vector<8x64xf32>
    %777 = arith.maximumf %775, %776 : vector<8x64xf32>
    %778 = arith.truncf %777 : vector<8x64xf32> to vector<8x64xbf16>
    %779 = vector.extract_strided_slice %762 {offsets = [128, 0], sizes = [64, 32], strides = [1, 1]} : vector<240x64xbf16> to vector<64x32xbf16>
    %cst_97 = arith.constant dense<0.000000e+00> : vector<8x32xf32>
    %780 = tpu.matmul %778, %779, %cst_97 {dimension_numbers = #tpu.dot_dimension_numbers<[1], [0], [0], [1], [0, 0, 1, 1], [], []>} : vector<8x64xbf16>, vector<64x32xbf16>, vector<8x32xf32> -> vector<8x32xf32>
    %781 = vector.extract_strided_slice %763 {offsets = [1, 0], sizes = [1, 32], strides = [1, 1]} : vector<5x64xf32> to vector<1x32xf32>
    %782 = vector.broadcast %781 : vector<1x32xf32> to vector<8x32xf32>
    %783 = arith.addf %780, %782 : vector<8x32xf32>
    %cst_98 = arith.constant 0.000000e+00 : f32
    %784 = vector.broadcast %cst_98 : f32 to vector<8x32xf32>
    %785 = arith.maximumf %783, %784 : vector<8x32xf32>
    %786 = arith.truncf %785 : vector<8x32xf32> to vector<8x32xbf16>
    %787 = vector.extract_strided_slice %762 {offsets = [192, 0], sizes = [32, 16], strides = [1, 1]} : vector<240x64xbf16> to vector<32x16xbf16>
    %cst_99 = arith.constant dense<0.000000e+00> : vector<8x16xf32>
    %788 = tpu.matmul %786, %787, %cst_99 {dimension_numbers = #tpu.dot_dimension_numbers<[1], [0], [0], [1], [0, 0, 1, 1], [], []>} : vector<8x32xbf16>, vector<32x16xbf16>, vector<8x16xf32> -> vector<8x16xf32>
    %789 = vector.extract_strided_slice %763 {offsets = [2, 0], sizes = [1, 16], strides = [1, 1]} : vector<5x64xf32> to vector<1x16xf32>
    %790 = vector.broadcast %789 : vector<1x16xf32> to vector<8x16xf32>
    %791 = arith.addf %788, %790 : vector<8x16xf32>
    %cst_100 = arith.constant 0.000000e+00 : f32
    %792 = vector.broadcast %cst_100 : f32 to vector<8x16xf32>
    %793 = arith.maximumf %791, %792 : vector<8x16xf32>
    %794 = arith.truncf %793 : vector<8x16xf32> to vector<8x16xbf16>
    %795 = vector.extract_strided_slice %762 {offsets = [224, 0], sizes = [16, 1], strides = [1, 1]} : vector<240x64xbf16> to vector<16x1xbf16>
    %cst_101 = arith.constant dense<0.000000e+00> : vector<8x1xf32>
    %796 = tpu.matmul %794, %795, %cst_101 {dimension_numbers = #tpu.dot_dimension_numbers<[1], [0], [0], [1], [0, 0, 1, 1], [], []>} : vector<8x16xbf16>, vector<16x1xbf16>, vector<8x1xf32> -> vector<8x1xf32>
    %797 = vector.extract_strided_slice %763 {offsets = [3, 0], sizes = [1, 1], strides = [1, 1]} : vector<5x64xf32> to vector<1x1xf32>
    %798 = vector.broadcast %797 : vector<1x1xf32> to vector<8x1xf32>
    %799 = arith.addf %796, %798 : vector<8x1xf32>
    %c0_102 = arith.constant 0 : index
    %c0_103 = arith.constant 0 : index
    %800 = vector.load %arg10[%c0_102, %c0_103] : memref<8x1xf32, #tpu.memory_space<vmem>>, vector<8x1xf32>
    tpu.vector_store %arg10[%c0_102, %c0_103], %799 {strides = array<i32>} : memref<8x1xf32, #tpu.memory_space<vmem>>, vector<8x1xf32>,
    return
  }
}

</mosaic_0001>

<llo_original>
// kernel: lstm_model_forward.1
$region0: #{lstm_model_forward.1}
  #allocation0 [shape = 'u32[]', space=smem, size = 0x4, offset = 0x4, fixed_abs, tag = 'smem constant byte address 0x4 - core index']
  #allocation1 [shape = 'u32[72,128]{1,0:T(1,128)}', space=vmem, size = 0x9000, scoped, tag = 'internal scratch']
  %s0 = inlined_call_operand.vmem [shape: f32[96,8], index: 0, kind: input, shape index: {}]
  %s1 = inlined_call_operand.vmem [shape: f32[8,1], index: 1, kind: input, shape index: {}]
  %s2 = inlined_call_operand.vmem [shape: f32[8,512], index: 2, kind: input, shape index: {}]
  %s3 = inlined_call_operand.vmem [shape: bf16[128,512], index: 3, kind: input, shape index: {}]
  %s4 = inlined_call_operand.hbm [shape: bf16[2,256,512], index: 4, kind: input, shape index: {}]
  %s5 = inlined_call_operand.vmem [shape: f32[3,512], index: 5, kind: input, shape index: {}]
  %s6 = inlined_call_operand.vmem [shape: bf16[128,128], index: 6, kind: input, shape index: {}]
  %s7 = inlined_call_operand.vmem [shape: f32[1,128], index: 7, kind: input, shape index: {}]
  %s8 = inlined_call_operand.vmem [shape: bf16[240,64], index: 8, kind: input, shape index: {}]
  %s9 = inlined_call_operand.vmem [shape: f32[5,64], index: 9, kind: input, shape index: {}]
  %s10 = inlined_call_operand.vmem [shape: f32[8,1], index: 10, kind: output, shape index: {}]
  %s11 = sld [smem:[#allocation0]]
  $region54: #{lstm_model_forward.1} parent=0
    _
  %s13 = ssub.s32 1, %s11
  %s14 = scalar_select 0, %s13, %s11
  $region1: #{lstm_model_forward.1} parent=0
    #allocation2 [shape = 'u8[524288]{0}', space=vmem, size = 0x80000, scoped, tag = 'input window, operand 4, single buffered']
    #allocation3 [shape = 's32[1]{0}', space=sflag, size = 0x4, scoped, tag = 'scoped memory for lstm_model_forward.1']
    %15 = vsyncpa [#allocation3], 0
    // Predicated region
    $region2: #{lstm_model_forward.1} parent=1 // pred_check
      _
    $region3: #{lstm_model_forward.1} parent=1 // pred_check_branch
      %17 = sbr.rel (0) target = $region5
    $region4: #{lstm_model_forward.1} parent=1 // pred_region
      _
    $region5: #{lstm_model_forward.1} parent=1 // pred_fallthru
      _
    // Predicated region
    $region6: #{lstm_model_forward.1} parent=1 // pred_check
      _
    $region7: #{lstm_model_forward.1} parent=1 // pred_check_branch
      %19 = sbr.rel (0) target = $region9
    $region8: #{lstm_model_forward.1} parent=1 // pred_region
      _
    $region9: #{lstm_model_forward.1} parent=1 // pred_fallthru
      _
    // Predicated region
    $region10: #{lstm_model_forward.1} parent=1 // pred_check
      _
    $region11: #{lstm_model_forward.1} parent=1 // pred_check_branch
      %21 = sbr.rel (0) target = $region13
    $region12: #{lstm_model_forward.1} parent=1 // pred_region
      _
    $region13: #{lstm_model_forward.1} parent=1 // pred_fallthru
      _
    // Predicated region
    $region14: #{lstm_model_forward.1} parent=1 // pred_check
      _
    $region15: #{lstm_model_forward.1} parent=1 // pred_check_branch
      %23 = sbr.rel (0) target = $region17
    $region16: #{lstm_model_forward.1} parent=1 // pred_region
      _
    $region17: #{lstm_model_forward.1} parent=1 // pred_fallthru
      _
    // Predicated region
    $region18: #{lstm_model_forward.1} parent=1 // pred_check
      _
    $region19: #{lstm_model_forward.1} parent=1 // pred_check_branch
      %25 = sbr.rel (0) target = $region21
    $region20: #{lstm_model_forward.1} parent=1 // pred_region
      %27 = vsyncadd [#allocation3], 0
      %s28 = sshll.u32 %s4, 4
      %s29 = int_to_ptr.hbm [resolvable:$true] %s28
      %s30 = sshll.u32 [#allocation2], 4
      %s31 = int_to_ptr.vmem [resolvable:$true] %s30
      %36 = dma.hbm_to_vmem [thread:$0]  %s29, 16384, %s31, [#allocation3], 256, 256, 16
    $region21: #{lstm_model_forward.1} parent=1 // pred_fallthru
      _
    // Predicated region
    $region22: #{lstm_model_forward.1} parent=1 // pred_check
      _
    $region23: #{lstm_model_forward.1} parent=1 // pred_check_branch
      %38 = sbr.rel (0) target = $region25
    $region24: #{lstm_model_forward.1} parent=1 // pred_region
      _
    $region25: #{lstm_model_forward.1} parent=1 // pred_fallthru
      _
    // Predicated region
    $region26: #{lstm_model_forward.1} parent=1 // pred_check
      _
    $region27: #{lstm_model_forward.1} parent=1 // pred_check_branch
      %40 = sbr.rel (0) target = $region29
    $region28: #{lstm_model_forward.1} parent=1 // pred_region
      _
    $region29: #{lstm_model_forward.1} parent=1 // pred_fallthru
      _
    // Predicated region
    $region30: #{lstm_model_forward.1} parent=1 // pred_check
      _
    $region31: #{lstm_model_forward.1} parent=1 // pred_check_branch
      %42 = sbr.rel (0) target = $region33
    $region32: #{lstm_model_forward.1} parent=1 // pred_region
      _
    $region33: #{lstm_model_forward.1} parent=1 // pred_fallthru
      _
    // Predicated region
    $region34: #{lstm_model_forward.1} parent=1 // pred_check
      _
    $region35: #{lstm_model_forward.1} parent=1 // pred_check_branch
      %44 = sbr.rel (0) target = $region37
    $region36: #{lstm_model_forward.1} parent=1 // pred_region
      _
    $region37: #{lstm_model_forward.1} parent=1 // pred_fallthru
      _
    // Predicated region
    $region38: #{lstm_model_forward.1} parent=1 // pred_check
      _
    $region39: #{lstm_model_forward.1} parent=1 // pred_check_branch
      %46 = sbr.rel (0) target = $region41
    $region40: #{lstm_model_forward.1} parent=1 // pred_region
      _
    $region41: #{lstm_model_forward.1} parent=1 // pred_fallthru
      _
    // Predicated region
    $region42: #{lstm_model_forward.1} parent=1 // pred_check
      _
    $region43: #{lstm_model_forward.1} parent=1 // pred_check_branch
      %48 = sbr.rel (0) target = $region45
    $region44: #{lstm_model_forward.1} parent=1 // pred_region
      %50 = dma.done [#allocation3], 16384
    $region45: #{lstm_model_forward.1} parent=1 // pred_fallthru
      _
    %v52 = vld [vmem:[%s5] sm:$0x77]
    %v53 = vld [vmem:[%s5 + $0x8] sm:$0x77]
    %v54 = vld [vmem:[%s0] sm:$0xff]
    %v55 = vld [vmem:[%s0 + $0x8] sm:$0xff]
    %v56 = vld [vmem:[%s0 + $0x10] sm:$0xff]
    %v57 = vld [vmem:[%s0 + $0x18] sm:$0xff]
    %v58 = vld [vmem:[%s0 + $0x20] sm:$0xff]
    %v59 = vld [vmem:[%s0 + $0x28] sm:$0xff]
    %v60 = vld [vmem:[%s0 + $0x30] sm:$0xff]
    %v61 = vld [vmem:[%s0 + $0x38] sm:$0xff]
    %v62 = vld [vmem:[%s0 + $0x40] sm:$0xff]
    %v63 = vld [vmem:[%s0 + $0x48] sm:$0xff]
    %v64 = vld [vmem:[%s0 + $0x50] sm:$0xff]
    %v65 = vld [vmem:[%s0 + $0x58] sm:$0xff]
    %v66 = vld [vmem:[%s2] sm:$0xff]
    %v67 = vld [vmem:[%s2 + $0x8] sm:$0xff]
    %v68 = vld [vmem:[%s2 + $0x10] sm:$0xff]
    %v69 = vld [vmem:[%s2 + $0x18] sm:$0xff]
    %v72 = vperm.slane %v52, 0
    %v73 = vperm.slane %v52, 4
    %v74 = vperm.slane %v53, 0
    %v75 = vperm.slane %v53, 4
    %v80 = vperm.slane %v72, 0
    %v81 = vperm.slane %v73, 0
    %v82 = vperm.slane %v74, 0
    %v83 = vperm.slane %v75, 0
    %vm84 = vcmask 64512
    %v86 = vsel %vm84, %v54, 0
    %v89 = vsel %vm84, %v55, 0
    %v92 = vsel %vm84, %v56, 0
    %v95 = vsel %vm84, %v57, 0
    %v98 = vsel %vm84, %v58, 0
    %v101 = vsel %vm84, %v59, 0
    %v104 = vsel %vm84, %v60, 0
    %v107 = vsel %vm84, %v61, 0
    %v110 = vsel %vm84, %v62, 0
    %v113 = vsel %vm84, %v63, 0
    %v116 = vsel %vm84, %v64, 0
    %v119 = vsel %vm84, %v65, 0
    %121 = vmatpush.msra.mxu0 0.0
    %122 = vmatpush.msra.mxu0 0.0
    %123 = vmatpush.msra.mxu0 0.0
    %124 = vmatpush.msra.mxu0 0.0
    %125 = vmatpush.msra.mxu0 0.0
    %126 = vmatpush.msra.mxu0 0.0
    %127 = vmatpush.msra.mxu0 0.0
    %128 = vmatpush.msra.mxu0 0.0
    %129 = vmatpush.msra.mxu0 0.0
    %130 = vmatpush.msra.mxu0 0.0
    %131 = vmatpush.msra.mxu0 0.0
    %132 = vmatpush.msra.mxu0 0.0
    %133 = vmatpush.msra.mxu0 0.0
    %134 = vmatpush.msra.mxu0 0.0
    %135 = vmatpush.msra.mxu0 0.0
    %136 = vmatpush.msra.mxu0 %v66
    %137 = vmatmul.f32.gmra.mxu0 %v86
    %v138 = vpop.f32.mrf.mxu0
    %v139 = vadd.f32 %v80, %v138
    %140 = vmatmul.f32.gmra.mxu0 %v89
    %v141 = vpop.f32.mrf.mxu0
    %v142 = vadd.f32 %v80, %v141
    %143 = vmatmul.f32.gmra.mxu0 %v92
    %v144 = vpop.f32.mrf.mxu0
    %v145 = vadd.f32 %v80, %v144
    %146 = vmatmul.f32.gmra.mxu0 %v95
    %v147 = vpop.f32.mrf.mxu0
    %v148 = vadd.f32 %v80, %v147
    %149 = vmatmul.f32.gmra.mxu0 %v98
    %v150 = vpop.f32.mrf.mxu0
    %v151 = vadd.f32 %v80, %v150
    %152 = vmatmul.f32.gmra.mxu0 %v101
    %v153 = vpop.f32.mrf.mxu0
    %v154 = vadd.f32 %v80, %v153
    %155 = vmatmul.f32.gmra.mxu0 %v104
    %v156 = vpop.f32.mrf.mxu0
    %v157 = vadd.f32 %v80, %v156
    %158 = vmatmul.f32.gmra.mxu0 %v107
    %v159 = vpop.f32.mrf.mxu0
    %v160 = vadd.f32 %v80, %v159
    %161 = vmatmul.f32.gmra.mxu0 %v110
    %v162 = vpop.f32.mrf.mxu0
    %v163 = vadd.f32 %v80, %v162
    %164 = vmatmul.f32.gmra.mxu0 %v113
    %v165 = vpop.f32.mrf.mxu0
    %v166 = vadd.f32 %v80, %v165
    %167 = vmatmul.f32.gmra.mxu0 %v116
    %v168 = vpop.f32.mrf.mxu0
    %v169 = vadd.f32 %v80, %v168
    %170 = vmatmul.f32.gmra.mxu0 %v119
    %v171 = vpop.f32.mrf.mxu0
    %v172 = vadd.f32 %v80, %v171
    %173 = vdwg.mxu0
    %174 = vmatpush.msra.mxu0 0.0
    %175 = vmatpush.msra.mxu0 0.0
    %176 = vmatpush.msra.mxu0 0.0
    %177 = vmatpush.msra.mxu0 0.0
    %178 = vmatpush.msra.mxu0 0.0
    %179 = vmatpush.msra.mxu0 0.0
    %180 = vmatpush.msra.mxu0 0.0
    %181 = vmatpush.msra.mxu0 0.0
    %182 = vmatpush.msra.mxu0 0.0
    %183 = vmatpush.msra.mxu0 0.0
    %184 = vmatpush.msra.mxu0 0.0
    %185 = vmatpush.msra.mxu0 0.0
    %186 = vmatpush.msra.mxu0 0.0
    %187 = vmatpush.msra.mxu0 0.0
    %188 = vmatpush.msra.mxu0 0.0
    %189 = vmatpush.msra.mxu0 %v67
    %190 = vmatmul.f32.gmra.mxu0 %v86
    %v191 = vpop.f32.mrf.mxu0
    %v192 = vadd.f32 %v81, %v191
    %193 = vmatmul.f32.gmra.mxu0 %v89
    %v194 = vpop.f32.mrf.mxu0
    %v195 = vadd.f32 %v81, %v194
    %196 = vmatmul.f32.gmra.mxu0 %v92
    %v197 = vpop.f32.mrf.mxu0
    %v198 = vadd.f32 %v81, %v197
    %199 = vmatmul.f32.gmra.mxu0 %v95
    %v200 = vpop.f32.mrf.mxu0
    %v201 = vadd.f32 %v81, %v200
    %202 = vmatmul.f32.gmra.mxu0 %v98
    %v203 = vpop.f32.mrf.mxu0
    %v204 = vadd.f32 %v81, %v203
    %205 = vmatmul.f32.gmra.mxu0 %v101
    %v206 = vpop.f32.mrf.mxu0
    %v207 = vadd.f32 %v81, %v206
    %208 = vmatmul.f32.gmra.mxu0 %v104
    %v209 = vpop.f32.mrf.mxu0
    %v210 = vadd.f32 %v81, %v209
    %211 = vmatmul.f32.gmra.mxu0 %v107
    %v212 = vpop.f32.mrf.mxu0
    %v213 = vadd.f32 %v81, %v212
    %214 = vmatmul.f32.gmra.mxu0 %v110
    %v215 = vpop.f32.mrf.mxu0
    %v216 = vadd.f32 %v81, %v215
    %217 = vmatmul.f32.gmra.mxu0 %v113
    %v218 = vpop.f32.mrf.mxu0
    %v219 = vadd.f32 %v81, %v218
    %220 = vmatmul.f32.gmra.mxu0 %v116
    %v221 = vpop.f32.mrf.mxu0
    %v222 = vadd.f32 %v81, %v221
    %223 = vmatmul.f32.gmra.mxu0 %v119
    %v224 = vpop.f32.mrf.mxu0
    %v225 = vadd.f32 %v81, %v224
    %226 = vdwg.mxu0
    %227 = vmatpush.msra.mxu0 0.0
    %228 = vmatpush.msra.mxu0 0.0
    %229 = vmatpush.msra.mxu0 0.0
    %230 = vmatpush.msra.mxu0 0.0
    %231 = vmatpush.msra.mxu0 0.0
    %232 = vmatpush.msra.mxu0 0.0
    %233 = vmatpush.msra.mxu0 0.0
    %234 = vmatpush.msra.mxu0 0.0
    %235 = vmatpush.msra.mxu0 0.0
    %236 = vmatpush.msra.mxu0 0.0
    %237 = vmatpush.msra.mxu0 0.0
    %238 = vmatpush.msra.mxu0 0.0
    %239 = vmatpush.msra.mxu0 0.0
    %240 = vmatpush.msra.mxu0 0.0
    %241 = vmatpush.msra.mxu0 0.0
    %242 = vmatpush.msra.mxu0 %v68
    %243 = vmatmul.f32.gmra.mxu0 %v86
    %v244 = vpop.f32.mrf.mxu0
    %v245 = vadd.f32 %v82, %v244
    %246 = vmatmul.f32.gmra.mxu0 %v89
    %v247 = vpop.f32.mrf.mxu0
    %v248 = vadd.f32 %v82, %v247
    %249 = vmatmul.f32.gmra.mxu0 %v92
    %v250 = vpop.f32.mrf.mxu0
    %v251 = vadd.f32 %v82, %v250
    %252 = vmatmul.f32.gmra.mxu0 %v95
    %v253 = vpop.f32.mrf.mxu0
    %v254 = vadd.f32 %v82, %v253
    %255 = vmatmul.f32.gmra.mxu0 %v98
    %v256 = vpop.f32.mrf.mxu0
    %v257 = vadd.f32 %v82, %v256
    %258 = vmatmul.f32.gmra.mxu0 %v101
    %v259 = vpop.f32.mrf.mxu0
    %v260 = vadd.f32 %v82, %v259
    %261 = vmatmul.f32.gmra.mxu0 %v104
    %v262 = vpop.f32.mrf.mxu0
    %v263 = vadd.f32 %v82, %v262
    %264 = vmatmul.f32.gmra.mxu0 %v107
    %v265 = vpop.f32.mrf.mxu0
    %v266 = vadd.f32 %v82, %v265
    %267 = vmatmul.f32.gmra.mxu0 %v110
    %v268 = vpop.f32.mrf.mxu0
    %v269 = vadd.f32 %v82, %v268
    %270 = vmatmul.f32.gmra.mxu0 %v113
    %v271 = vpop.f32.mrf.mxu0
    %v272 = vadd.f32 %v82, %v271
    %273 = vmatmul.f32.gmra.mxu0 %v116
    %v274 = vpop.f32.mrf.mxu0
    %v275 = vadd.f32 %v82, %v274
    %276 = vmatmul.f32.gmra.mxu0 %v119
    %v277 = vpop.f32.mrf.mxu0
    %v278 = vadd.f32 %v82, %v277
    %279 = vdwg.mxu0
    %280 = vmatpush.msra.mxu0 0.0
    %281 = vmatpush.msra.mxu0 0.0
    %282 = vmatpush.msra.mxu0 0.0
    %283 = vmatpush.msra.mxu0 0.0
    %284 = vmatpush.msra.mxu0 0.0
    %285 = vmatpush.msra.mxu0 0.0
    %286 = vmatpush.msra.mxu0 0.0
    %287 = vmatpush.msra.mxu0 0.0
    %288 = vmatpush.msra.mxu0 0.0
    %289 = vmatpush.msra.mxu0 0.0
    %290 = vmatpush.msra.mxu0 0.0
    %291 = vmatpush.msra.mxu0 0.0
    %292 = vmatpush.msra.mxu0 0.0
    %293 = vmatpush.msra.mxu0 0.0
    %294 = vmatpush.msra.mxu0 0.0
    %295 = vmatpush.msra.mxu0 %v69
    %296 = vmatmul.f32.gmra.mxu0 %v86
    %v297 = vpop.f32.mrf.mxu0
    %v298 = vadd.f32 %v83, %v297
    %299 = vmatmul.f32.gmra.mxu0 %v89
    %v300 = vpop.f32.mrf.mxu0
    %v301 = vadd.f32 %v83, %v300
    %302 = vmatmul.f32.gmra.mxu0 %v92
    %v303 = vpop.f32.mrf.mxu0
    %v304 = vadd.f32 %v83, %v303
    %305 = vmatmul.f32.gmra.mxu0 %v95
    %v306 = vpop.f32.mrf.mxu0
    %v307 = vadd.f32 %v83, %v306
    %308 = vmatmul.f32.gmra.mxu0 %v98
    %v309 = vpop.f32.mrf.mxu0
    %v310 = vadd.f32 %v83, %v309
    %311 = vmatmul.f32.gmra.mxu0 %v101
    %v312 = vpop.f32.mrf.mxu0
    %v313 = vadd.f32 %v83, %v312
    %314 = vmatmul.f32.gmra.mxu0 %v104
    %v315 = vpop.f32.mrf.mxu0
    %v316 = vadd.f32 %v83, %v315
    %317 = vmatmul.f32.gmra.mxu0 %v107
    %v318 = vpop.f32.mrf.mxu0
    %v319 = vadd.f32 %v83, %v318
    %320 = vmatmul.f32.gmra.mxu0 %v110
    %v321 = vpop.f32.mrf.mxu0
    %v322 = vadd.f32 %v83, %v321
    %323 = vmatmul.f32.gmra.mxu0 %v113
    %v324 = vpop.f32.mrf.mxu0
    %v325 = vadd.f32 %v83, %v324
    %326 = vmatmul.f32.gmra.mxu0 %v116
    %v327 = vpop.f32.mrf.mxu0
    %v328 = vadd.f32 %v83, %v327
    %329 = vmatmul.f32.gmra.mxu0 %v119
    %v330 = vpop.f32.mrf.mxu0
    %v331 = vadd.f32 %v83, %v330
    %332 = vdwg.mxu0
    %v333 = vld [vmem:[%s3] sm:$0xff]
    %v334 = vld [vmem:[%s3 + $0x8] sm:$0xff]
    %v335 = vld [vmem:[%s3 + $0x10] sm:$0xff]
    %v336 = vld [vmem:[%s3 + $0x18] sm:$0xff]
    %v337 = vld [vmem:[%s3 + $0x20] sm:$0xff]
    %v338 = vld [vmem:[%s3 + $0x28] sm:$0xff]
    %v339 = vld [vmem:[%s3 + $0x30] sm:$0xff]
    %v340 = vld [vmem:[%s3 + $0x38] sm:$0xff]
    %v341 = vld [vmem:[%s3 + $0x40] sm:$0xff]
    %v342 = vld [vmem:[%s3 + $0x48] sm:$0xff]
    %v343 = vld [vmem:[%s3 + $0x50] sm:$0xff]
    %v344 = vld [vmem:[%s3 + $0x58] sm:$0xff]
    %v345 = vld [vmem:[%s3 + $0x60] sm:$0xff]
    %v346 = vld [vmem:[%s3 + $0x68] sm:$0xff]
    %v347 = vld [vmem:[%s3 + $0x70] sm:$0xff]
    %v348 = vld [vmem:[%s3 + $0x78] sm:$0xff]
    %v349 = vld [vmem:[%s3 + $0x80] sm:$0xff]
    %v350 = vld [vmem:[%s3 + $0x88] sm:$0xff]
    %v351 = vld [vmem:[%s3 + $0x90] sm:$0xff]
    %v352 = vld [vmem:[%s3 + $0x98] sm:$0xff]
    %v353 = vld [vmem:[%s3 + $0xa0] sm:$0xff]
    %v354 = vld [vmem:[%s3 + $0xa8] sm:$0xff]
    %v355 = vld [vmem:[%s3 + $0xb0] sm:$0xff]
    %v356 = vld [vmem:[%s3 + $0xb8] sm:$0xff]
    %v357 = vld [vmem:[%s3 + $0xc0] sm:$0xff]
    %v358 = vld [vmem:[%s3 + $0xc8] sm:$0xff]
    %v359 = vld [vmem:[%s3 + $0xd0] sm:$0xff]
    %v360 = vld [vmem:[%s3 + $0xd8] sm:$0xff]
    %v361 = vld [vmem:[%s3 + $0xe0] sm:$0xff]
    %v362 = vld [vmem:[%s3 + $0xe8] sm:$0xff]
    %v363 = vld [vmem:[%s3 + $0xf0] sm:$0xff]
    %v364 = vld [vmem:[%s3 + $0xf8] sm:$0xff]
    %v365 = vld [vmem:[#allocation2] sm:$0xff]
    %v366 = vld [vmem:[#allocation2 + $0x8] sm:$0xff]
    %v367 = vld [vmem:[#allocation2 + $0x10] sm:$0xff]
    %v368 = vld [vmem:[#allocation2 + $0x18] sm:$0xff]
    %v369 = vld [vmem:[#allocation2 + $0x20] sm:$0xff]
    %v370 = vld [vmem:[#allocation2 + $0x28] sm:$0xff]
    %v371 = vld [vmem:[#allocation2 + $0x30] sm:$0xff]
    %v372 = vld [vmem:[#allocation2 + $0x38] sm:$0xff]
    %v373 = vld [vmem:[#allocation2 + $0x40] sm:$0xff]
    %v374 = vld [vmem:[#allocation2 + $0x48] sm:$0xff]
    %v375 = vld [vmem:[#allocation2 + $0x50] sm:$0xff]
    %v376 = vld [vmem:[#allocation2 + $0x58] sm:$0xff]
    %v377 = vld [vmem:[#allocation2 + $0x60] sm:$0xff]
    %v378 = vld [vmem:[#allocation2 + $0x68] sm:$0xff]
    %v379 = vld [vmem:[#allocation2 + $0x70] sm:$0xff]
    %v380 = vld [vmem:[#allocation2 + $0x78] sm:$0xff]
    %v381 = vld [vmem:[#allocation2 + $0x80] sm:$0xff]
    %v382 = vld [vmem:[#allocation2 + $0x88] sm:$0xff]
    %v383 = vld [vmem:[#allocation2 + $0x90] sm:$0xff]
    %v384 = vld [vmem:[#allocation2 + $0x98] sm:$0xff]
    %v385 = vld [vmem:[#allocation2 + $0xa0] sm:$0xff]
    %v386 = vld [vmem:[#allocation2 + $0xa8] sm:$0xff]
    %v387 = vld [vmem:[#allocation2 + $0xb0] sm:$0xff]
    %v388 = vld [vmem:[#allocation2 + $0xb8] sm:$0xff]
    %v389 = vld [vmem:[#allocation2 + $0xc0] sm:$0xff]
    %v390 = vld [vmem:[#allocation2 + $0xc8] sm:$0xff]
    %v391 = vld [vmem:[#allocation2 + $0xd0] sm:$0xff]
    %v392 = vld [vmem:[#allocation2 + $0xd8] sm:$0xff]
    %v393 = vld [vmem:[#allocation2 + $0xe0] sm:$0xff]
    %v394 = vld [vmem:[#allocation2 + $0xe8] sm:$0xff]
    %v395 = vld [vmem:[#allocation2 + $0xf0] sm:$0xff]
    %v396 = vld [vmem:[#allocation2 + $0xf8] sm:$0xff]
    %v397 = vld [vmem:[#allocation2 + $0x100] sm:$0xff]
    %v398 = vld [vmem:[#allocation2 + $0x108] sm:$0xff]
    %v399 = vld [vmem:[#allocation2 + $0x110] sm:$0xff]
    %v400 = vld [vmem:[#allocation2 + $0x118] sm:$0xff]
    %v401 = vld [vmem:[#allocation2 + $0x120] sm:$0xff]
    %v402 = vld [vmem:[#allocation2 + $0x128] sm:$0xff]
    %v403 = vld [vmem:[#allocation2 + $0x130] sm:$0xff]
    %v404 = vld [vmem:[#allocation2 + $0x138] sm:$0xff]
    %v405 = vld [vmem:[#allocation2 + $0x140] sm:$0xff]
    %v406 = vld [vmem:[#allocation2 + $0x148] sm:$0xff]
    %v407 = vld [vmem:[#allocation2 + $0x150] sm:$0xff]
    %v408 = vld [vmem:[#allocation2 + $0x158] sm:$0xff]
    %v409 = vld [vmem:[#allocation2 + $0x160] sm:$0xff]
    %v410 = vld [vmem:[#allocation2 + $0x168] sm:$0xff]
    %v411 = vld [vmem:[#allocation2 + $0x170] sm:$0xff]
    %v412 = vld [vmem:[#allocation2 + $0x178] sm:$0xff]
    %v413 = vld [vmem:[#allocation2 + $0x180] sm:$0xff]
    %v414 = vld [vmem:[#allocation2 + $0x188] sm:$0xff]
    %v415 = vld [vmem:[#allocation2 + $0x190] sm:$0xff]
    %v416 = vld [vmem:[#allocation2 + $0x198] sm:$0xff]
    %v417 = vld [vmem:[#allocation2 + $0x1a0] sm:$0xff]
    %v418 = vld [vmem:[#allocation2 + $0x1a8] sm:$0xff]
    %v419 = vld [vmem:[#allocation2 + $0x1b0] sm:$0xff]
    %v420 = vld [vmem:[#allocation2 + $0x1b8] sm:$0xff]
    %v421 = vld [vmem:[#allocation2 + $0x1c0] sm:$0xff]
    %v422 = vld [vmem:[#allocation2 + $0x1c8] sm:$0xff]
    %v423 = vld [vmem:[#allocation2 + $0x1d0] sm:$0xff]
    %v424 = vld [vmem:[#allocation2 + $0x1d8] sm:$0xff]
    %v425 = vld [vmem:[#allocation2 + $0x1e0] sm:$0xff]
    %v426 = vld [vmem:[#allocation2 + $0x1e8] sm:$0xff]
    %v427 = vld [vmem:[#allocation2 + $0x1f0] sm:$0xff]
    %v428 = vld [vmem:[#allocation2 + $0x1f8] sm:$0xff]
    %s429 = scalar_lea.vmem [#allocation2], 512
    %v430 = vld [vmem:[%s429] sm:$0xff]
    %v431 = vld [vmem:[%s429 + $0x8] sm:$0xff]
    %v432 = vld [vmem:[%s429 + $0x10] sm:$0xff]
    %v433 = vld [vmem:[%s429 + $0x18] sm:$0xff]
    %v434 = vld [vmem:[%s429 + $0x20] sm:$0xff]
    %v435 = vld [vmem:[%s429 + $0x28] sm:$0xff]
    %v436 = vld [vmem:[%s429 + $0x30] sm:$0xff]
    %v437 = vld [vmem:[%s429 + $0x38] sm:$0xff]
    %v438 = vld [vmem:[%s429 + $0x40] sm:$0xff]
    %v439 = vld [vmem:[%s429 + $0x48] sm:$0xff]
    %v440 = vld [vmem:[%s429 + $0x50] sm:$0xff]
    %v441 = vld [vmem:[%s429 + $0x58] sm:$0xff]
    %v442 = vld [vmem:[%s429 + $0x60] sm:$0xff]
    %v443 = vld [vmem:[%s429 + $0x68] sm:$0xff]
    %v444 = vld [vmem:[%s429 + $0x70] sm:$0xff]
    %v445 = vld [vmem:[%s429 + $0x78] sm:$0xff]
    %v446 = vld [vmem:[%s429 + $0x80] sm:$0xff]
    %v447 = vld [vmem:[%s429 + $0x88] sm:$0xff]
    %v448 = vld [vmem:[%s429 + $0x90] sm:$0xff]
    %v449 = vld [vmem:[%s429 + $0x98] sm:$0xff]
    %v450 = vld [vmem:[%s429 + $0xa0] sm:$0xff]
    %v451 = vld [vmem:[%s429 + $0xa8] sm:$0xff]
    %v452 = vld [vmem:[%s429 + $0xb0] sm:$0xff]
    %v453 = vld [vmem:[%s429 + $0xb8] sm:$0xff]
    %v454 = vld [vmem:[%s429 + $0xc0] sm:$0xff]
    %v455 = vld [vmem:[%s429 + $0xc8] sm:$0xff]
    %v456 = vld [vmem:[%s429 + $0xd0] sm:$0xff]
    %v457 = vld [vmem:[%s429 + $0xd8] sm:$0xff]
    %v458 = vld [vmem:[%s429 + $0xe0] sm:$0xff]
    %v459 = vld [vmem:[%s429 + $0xe8] sm:$0xff]
    %v460 = vld [vmem:[%s429 + $0xf0] sm:$0xff]
    %v461 = vld [vmem:[%s429 + $0xf8] sm:$0xff]
    %v462 = vld [vmem:[%s429 + $0x100] sm:$0xff]
    %v463 = vld [vmem:[%s429 + $0x108] sm:$0xff]
    %v464 = vld [vmem:[%s429 + $0x110] sm:$0xff]
    %v465 = vld [vmem:[%s429 + $0x118] sm:$0xff]
    %v466 = vld [vmem:[%s429 + $0x120] sm:$0xff]
    %v467 = vld [vmem:[%s429 + $0x128] sm:$0xff]
    %v468 = vld [vmem:[%s429 + $0x130] sm:$0xff]
    %v469 = vld [vmem:[%s429 + $0x138] sm:$0xff]
    %v470 = vld [vmem:[%s429 + $0x140] sm:$0xff]
    %v471 = vld [vmem:[%s429 + $0x148] sm:$0xff]
    %v472 = vld [vmem:[%s429 + $0x150] sm:$0xff]
    %v473 = vld [vmem:[%s429 + $0x158] sm:$0xff]
    %v474 = vld [vmem:[%s429 + $0x160] sm:$0xff]
    %v475 = vld [vmem:[%s429 + $0x168] sm:$0xff]
    %v476 = vld [vmem:[%s429 + $0x170] sm:$0xff]
    %v477 = vld [vmem:[%s429 + $0x178] sm:$0xff]
    %v478 = vld [vmem:[%s429 + $0x180] sm:$0xff]
    %v479 = vld [vmem:[%s429 + $0x188] sm:$0xff]
    %v480 = vld [vmem:[%s429 + $0x190] sm:$0xff]
    %v481 = vld [vmem:[%s429 + $0x198] sm:$0xff]
    %v482 = vld [vmem:[%s429 + $0x1a0] sm:$0xff]
    %v483 = vld [vmem:[%s429 + $0x1a8] sm:$0xff]
    %v484 = vld [vmem:[%s429 + $0x1b0] sm:$0xff]
    %v485 = vld [vmem:[%s429 + $0x1b8] sm:$0xff]
    %v486 = vld [vmem:[%s429 + $0x1c0] sm:$0xff]
    %v487 = vld [vmem:[%s429 + $0x1c8] sm:$0xff]
    %v488 = vld [vmem:[%s429 + $0x1d0] sm:$0xff]
    %v489 = vld [vmem:[%s429 + $0x1d8] sm:$0xff]
    %v490 = vld [vmem:[%s429 + $0x1e0] sm:$0xff]
    %v491 = vld [vmem:[%s429 + $0x1e8] sm:$0xff]
    %v492 = vld [vmem:[%s429 + $0x1f0] sm:$0xff]
    %v493 = vld [vmem:[%s429 + $0x1f8] sm:$0xff]
    %v494 = vxor.u32 %v139, 2147483648
    %v495 = vxor.u32 %v192, 2147483648
    %v496 = vxor.u32 %v245, 2147483648
    %v497 = vmul.f32 %v494, 1.442695
    %v498 = vpow.pop %v497
    %v499 = vmul.f32 %v495, 1.442695
    %v500 = vpow.pop %v499
    %v501 = vmul.f32 %v496, 1.442695
    %v502 = vpow.pop %v501
    %v503 = vadd.f32 %v498, 1.0
    %v504 = vadd.f32 %v500, 1.0
    %v505 = vadd.f32 %v502, 1.0
    %v506 = vrcp.pop %v503
    %v507 = vmul.f32 %v503, %v506
    %v508 = vsub.f32 1.0, %v507
    %v509 = vmul.f32 %v506, %v508
    %v510 = vadd.f32 %v506, %v509
    %vm511 = vweird.f32 %v503
    %vm512 = vweird.f32 %v506
    %vm513 = vmor %vm511, %vm512
    %v514 = vsel %vm513, %v506, %v510
    %v515 = vand.u32 2147483647, %v503
    %vm516 = vcmp.eq.f32.partialorder %v515, 8.507059e+37
    %v517 = vand.u32 %v503, 2147483648
    %v518 = vor.u32 1.1754944e-38, %v517
    %v519 = vsel %vm516, %v518, %v514
    %v520 = vmul.f32 1.0, %v519
    %v521 = vrcp.pop %v504
    %v522 = vmul.f32 %v504, %v521
    %v523 = vsub.f32 1.0, %v522
    %v524 = vmul.f32 %v521, %v523
    %v525 = vadd.f32 %v521, %v524
    %vm526 = vweird.f32 %v504
    %vm527 = vweird.f32 %v521
    %vm528 = vmor %vm526, %vm527
    %v529 = vsel %vm528, %v521, %v525
    %v530 = vand.u32 2147483647, %v504
    %vm531 = vcmp.eq.f32.partialorder %v530, 8.507059e+37
    %v532 = vand.u32 %v504, 2147483648
    %v533 = vor.u32 1.1754944e-38, %v532
    %v534 = vsel %vm531, %v533, %v529
    %v535 = vmul.f32 1.0, %v534
    %v536 = vrcp.pop %v505
    %v537 = vmul.f32 %v505, %v536
    %v538 = vsub.f32 1.0, %v537
    %v539 = vmul.f32 %v536, %v538
    %v540 = vadd.f32 %v536, %v539
    %vm541 = vweird.f32 %v505
    %vm542 = vweird.f32 %v536
    %vm543 = vmor %vm541, %vm542
    %v544 = vsel %vm543, %v536, %v540
    %v545 = vand.u32 2147483647, %v505
    %vm546 = vcmp.eq.f32.partialorder %v545, 8.507059e+37
    %v547 = vand.u32 %v505, 2147483648
    %v548 = vor.u32 1.1754944e-38, %v547
    %v549 = vsel %vm546, %v548, %v544
    %v550 = vmul.f32 1.0, %v549
    %v551 = vtanh.pop %v298
    %v552 = vmul.f32 %v535, 0.0
    %v553 = vmul.f32 %v520, %v551
    %v554 = vadd.f32 %v552, %v553
    %v555 = vtanh.pop %v554
    %v556 = vmul.f32 %v550, %v555
    %v557 = vpack.c.bf16 %v556, %v556
    %v558 = vperm.slane %v52, 1
    %v559 = vperm.slane %v52, 5
    %v560 = vperm.slane %v53, 1
    %v561 = vperm.slane %v53, 5
    %v566 = vperm.slane %v558, 1
    %v567 = vperm.slane %v559, 1
    %v568 = vperm.slane %v560, 1
    %v569 = vperm.slane %v561, 1
    %v602 = vunpack.c.l.b16 %v365
    %v603 = vunpack.c.h.b16 %v365
    %v604 = vunpack.c.l.b16 %v366
    %v605 = vunpack.c.h.b16 %v366
    %v606 = vunpack.c.l.b16 %v367
    %v607 = vunpack.c.h.b16 %v367
    %v608 = vunpack.c.l.b16 %v368
    %v609 = vunpack.c.h.b16 %v368
    %v610 = vunpack.c.l.b16 %v369
    %v611 = vunpack.c.h.b16 %v369
    %v612 = vunpack.c.l.b16 %v370
    %v613 = vunpack.c.h.b16 %v370
    %v614 = vunpack.c.l.b16 %v371
    %v615 = vunpack.c.h.b16 %v371
    %v616 = vunpack.c.l.b16 %v372
    %v617 = vunpack.c.h.b16 %v372
    %v618 = vunpack.c.l.b16 %v373
    %v619 = vunpack.c.h.b16 %v373
    %v620 = vunpack.c.l.b16 %v374
    %v621 = vunpack.c.h.b16 %v374
    %v622 = vunpack.c.l.b16 %v375
    %v623 = vunpack.c.h.b16 %v375
    %v624 = vunpack.c.l.b16 %v376
    %v625 = vunpack.c.h.b16 %v376
    %v626 = vunpack.c.l.b16 %v377
    %v627 = vunpack.c.h.b16 %v377
    %v628 = vunpack.c.l.b16 %v378
    %v629 = vunpack.c.h.b16 %v378
    %v630 = vunpack.c.l.b16 %v379
    %v631 = vunpack.c.h.b16 %v379
    %v632 = vunpack.c.l.b16 %v380
    %v633 = vunpack.c.h.b16 %v380
    %v634 = vunpack.c.l.b16 %v381
    %v635 = vunpack.c.h.b16 %v381
    %v636 = vunpack.c.l.b16 %v382
    %v637 = vunpack.c.h.b16 %v382
    %v638 = vunpack.c.l.b16 %v383
    %v639 = vunpack.c.h.b16 %v383
    %v640 = vunpack.c.l.b16 %v384
    %v641 = vunpack.c.h.b16 %v384
    %v642 = vunpack.c.l.b16 %v385
    %v643 = vunpack.c.h.b16 %v385
    %v644 = vunpack.c.l.b16 %v386
    %v645 = vunpack.c.h.b16 %v386
    %v646 = vunpack.c.l.b16 %v387
    %v647 = vunpack.c.h.b16 %v387
    %v648 = vunpack.c.l.b16 %v388
    %v649 = vunpack.c.h.b16 %v388
    %v650 = vunpack.c.l.b16 %v389
    %v651 = vunpack.c.h.b16 %v389
    %v652 = vunpack.c.l.b16 %v390
    %v653 = vunpack.c.h.b16 %v390
    %v654 = vunpack.c.l.b16 %v391
    %v655 = vunpack.c.h.b16 %v391
    %v656 = vunpack.c.l.b16 %v392
    %v657 = vunpack.c.h.b16 %v392
    %v658 = vunpack.c.l.b16 %v393
    %v659 = vunpack.c.h.b16 %v393
    %v660 = vunpack.c.l.b16 %v394
    %v661 = vunpack.c.h.b16 %v394
    %v662 = vunpack.c.l.b16 %v395
    %v663 = vunpack.c.h.b16 %v395
    %v664 = vunpack.c.l.b16 %v396
    %v665 = vunpack.c.h.b16 %v396
    %v666 = vpack.c.b16 %v606, %v602
    %v667 = vpack.c.b16 %v607, %v603
    %v668 = vpack.c.b16 %v608, %v604
    %v669 = vpack.c.b16 %v609, %v605
    %v670 = vpack.c.b16 %v614, %v610
    %v671 = vpack.c.b16 %v615, %v611
    %v672 = vpack.c.b16 %v616, %v612
    %v673 = vpack.c.b16 %v617, %v613
    %v674 = vpack.c.b16 %v622, %v618
    %v675 = vpack.c.b16 %v623, %v619
    %v676 = vpack.c.b16 %v624, %v620
    %v677 = vpack.c.b16 %v625, %v621
    %v678 = vpack.c.b16 %v630, %v626
    %v679 = vpack.c.b16 %v631, %v627
    %v680 = vpack.c.b16 %v632, %v628
    %v681 = vpack.c.b16 %v633, %v629
    %v682 = vpack.c.b16 %v638, %v634
    %v683 = vpack.c.b16 %v639, %v635
    %v684 = vpack.c.b16 %v640, %v636
    %v685 = vpack.c.b16 %v641, %v637
    %v686 = vpack.c.b16 %v646, %v642
    %v687 = vpack.c.b16 %v647, %v643
    %v688 = vpack.c.b16 %v648, %v644
    %v689 = vpack.c.b16 %v649, %v645
    %v690 = vpack.c.b16 %v654, %v650
    %v691 = vpack.c.b16 %v655, %v651
    %v692 = vpack.c.b16 %v656, %v652
    %v693 = vpack.c.b16 %v657, %v653
    %v694 = vpack.c.b16 %v662, %v658
    %v695 = vpack.c.b16 %v663, %v659
    %v696 = vpack.c.b16 %v664, %v660
    %v697 = vpack.c.b16 %v665, %v661
    %730 = vmatpush.bf16.msra.mxu0 %v694
    %731 = vmatpush.bf16.msra.mxu0 %v690
    %732 = vmatpush.bf16.msra.mxu0 %v686
    %733 = vmatpush.bf16.msra.mxu0 %v682
    %734 = vmatpush.bf16.msra.mxu0 %v678
    %735 = vmatpush.bf16.msra.mxu0 %v674
    %736 = vmatpush.bf16.msra.mxu0 %v670
    %737 = vmatpush.bf16.msra.mxu0 %v666
    %738 = vmatmul.bf16.gmra.mxu0 %v557
    %v739 = vpop.f32.mrf.mxu0
    %v740 = vadd.f32 %v566, %v739
    %v741 = vpop.f32.mrf.mxu0
    %742 = vdwg.mxu0
    %743 = vmatpush.bf16.msra.mxu0 %v695
    %744 = vmatpush.bf16.msra.mxu0 %v691
    %745 = vmatpush.bf16.msra.mxu0 %v687
    %746 = vmatpush.bf16.msra.mxu0 %v683
    %747 = vmatpush.bf16.msra.mxu0 %v679
    %748 = vmatpush.bf16.msra.mxu0 %v675
    %749 = vmatpush.bf16.msra.mxu0 %v671
    %750 = vmatpush.bf16.msra.mxu0 %v667
    %751 = vmatmul.bf16.gmra.mxu0 %v557
    %v752 = vpop.f32.mrf.mxu0
    %v753 = vadd.f32 %v567, %v752
    %v754 = vpop.f32.mrf.mxu0
    %755 = vdwg.mxu0
    %756 = vmatpush.bf16.msra.mxu0 %v696
    %757 = vmatpush.bf16.msra.mxu0 %v692
    %758 = vmatpush.bf16.msra.mxu0 %v688
    %759 = vmatpush.bf16.msra.mxu0 %v684
    %760 = vmatpush.bf16.msra.mxu0 %v680
    %761 = vmatpush.bf16.msra.mxu0 %v676
    %762 = vmatpush.bf16.msra.mxu0 %v672
    %763 = vmatpush.bf16.msra.mxu0 %v668
    %764 = vmatmul.bf16.gmra.mxu0 %v557
    %v765 = vpop.f32.mrf.mxu0
    %v766 = vadd.f32 %v568, %v765
    %v767 = vpop.f32.mrf.mxu0
    %768 = vdwg.mxu0
    %769 = vmatpush.bf16.msra.mxu0 %v697
    %770 = vmatpush.bf16.msra.mxu0 %v693
    %771 = vmatpush.bf16.msra.mxu0 %v689
    %772 = vmatpush.bf16.msra.mxu0 %v685
    %773 = vmatpush.bf16.msra.mxu0 %v681
    %774 = vmatpush.bf16.msra.mxu0 %v677
    %775 = vmatpush.bf16.msra.mxu0 %v673
    %776 = vmatpush.bf16.msra.mxu0 %v669
    %777 = vmatmul.bf16.gmra.mxu0 %v557
    %v778 = vpop.f32.mrf.mxu0
    %v779 = vadd.f32 %v569, %v778
    %v780 = vpop.f32.mrf.mxu0
    %781 = vdwg.mxu0
    %v782 = vxor.u32 %v740, 2147483648
    %v783 = vxor.u32 %v753, 2147483648
    %v784 = vxor.u32 %v766, 2147483648
    %v785 = vmul.f32 %v782, 1.442695
    %v786 = vpow.pop %v785
    %v787 = vmul.f32 %v783, 1.442695
    %v788 = vpow.pop %v787
    %v789 = vmul.f32 %v784, 1.442695
    %v790 = vpow.pop %v789
    %v791 = vadd.f32 %v786, 1.0
    %v792 = vadd.f32 %v788, 1.0
    %v793 = vadd.f32 %v790, 1.0
    %v794 = vrcp.pop %v791
    %v795 = vmul.f32 %v791, %v794
    %v796 = vsub.f32 1.0, %v795
    %v797 = vmul.f32 %v794, %v796
    %v798 = vadd.f32 %v794, %v797
    %vm799 = vweird.f32 %v791
    %vm800 = vweird.f32 %v794
    %vm801 = vmor %vm799, %vm800
    %v802 = vsel %vm801, %v794, %v798
    %v803 = vand.u32 2147483647, %v791
    %vm804 = vcmp.eq.f32.partialorder %v803, 8.507059e+37
    %v805 = vand.u32 %v791, 2147483648
    %v806 = vor.u32 1.1754944e-38, %v805
    %v807 = vsel %vm804, %v806, %v802
    %v808 = vmul.f32 1.0, %v807
    %v809 = vrcp.pop %v792
    %v810 = vmul.f32 %v792, %v809
    %v811 = vsub.f32 1.0, %v810
    %v812 = vmul.f32 %v809, %v811
    %v813 = vadd.f32 %v809, %v812
    %vm814 = vweird.f32 %v792
    %vm815 = vweird.f32 %v809
    %vm816 = vmor %vm814, %vm815
    %v817 = vsel %vm816, %v809, %v813
    %v818 = vand.u32 2147483647, %v792
    %vm819 = vcmp.eq.f32.partialorder %v818, 8.507059e+37
    %v820 = vand.u32 %v792, 2147483648
    %v821 = vor.u32 1.1754944e-38, %v820
    %v822 = vsel %vm819, %v821, %v817
    %v823 = vmul.f32 1.0, %v822
    %v824 = vrcp.pop %v793
    %v825 = vmul.f32 %v793, %v824
    %v826 = vsub.f32 1.0, %v825
    %v827 = vmul.f32 %v824, %v826
    %v828 = vadd.f32 %v824, %v827
    %vm829 = vweird.f32 %v793
    %vm830 = vweird.f32 %v824
    %vm831 = vmor %vm829, %vm830
    %v832 = vsel %vm831, %v824, %v828
    %v833 = vand.u32 2147483647, %v793
    %vm834 = vcmp.eq.f32.partialorder %v833, 8.507059e+37
    %v835 = vand.u32 %v793, 2147483648
    %v836 = vor.u32 1.1754944e-38, %v835
    %v837 = vsel %vm834, %v836, %v832
    %v838 = vmul.f32 1.0, %v837
    %v839 = vtanh.pop %v779
    %v840 = vmul.f32 %v823, 0.0
    %v841 = vmul.f32 %v808, %v839
    %v842 = vadd.f32 %v840, %v841
    %v843 = vtanh.pop %v842
    %v844 = vmul.f32 %v838, %v843
    %v845 = vpack.c.bf16 %v844, %v844
    %v878 = vunpack.c.l.b16 %v333
    %v879 = vunpack.c.h.b16 %v333
    %v880 = vunpack.c.l.b16 %v334
    %v881 = vunpack.c.h.b16 %v334
    %v882 = vunpack.c.l.b16 %v335
    %v883 = vunpack.c.h.b16 %v335
    %v884 = vunpack.c.l.b16 %v336
    %v885 = vunpack.c.h.b16 %v336
    %v886 = vunpack.c.l.b16 %v337
    %v887 = vunpack.c.h.b16 %v337
    %v888 = vunpack.c.l.b16 %v338
    %v889 = vunpack.c.h.b16 %v338
    %v890 = vunpack.c.l.b16 %v339
    %v891 = vunpack.c.h.b16 %v339
    %v892 = vunpack.c.l.b16 %v340
    %v893 = vunpack.c.h.b16 %v340
    %v894 = vunpack.c.l.b16 %v341
    %v895 = vunpack.c.h.b16 %v341
    %v896 = vunpack.c.l.b16 %v342
    %v897 = vunpack.c.h.b16 %v342
    %v898 = vunpack.c.l.b16 %v343
    %v899 = vunpack.c.h.b16 %v343
    %v900 = vunpack.c.l.b16 %v344
    %v901 = vunpack.c.h.b16 %v344
    %v902 = vunpack.c.l.b16 %v345
    %v903 = vunpack.c.h.b16 %v345
    %v904 = vunpack.c.l.b16 %v346
    %v905 = vunpack.c.h.b16 %v346
    %v906 = vunpack.c.l.b16 %v347
    %v907 = vunpack.c.h.b16 %v347
    %v908 = vunpack.c.l.b16 %v348
    %v909 = vunpack.c.h.b16 %v348
    %v910 = vunpack.c.l.b16 %v349
    %v911 = vunpack.c.h.b16 %v349
    %v912 = vunpack.c.l.b16 %v350
    %v913 = vunpack.c.h.b16 %v350
    %v914 = vunpack.c.l.b16 %v351
    %v915 = vunpack.c.h.b16 %v351
    %v916 = vunpack.c.l.b16 %v352
    %v917 = vunpack.c.h.b16 %v352
    %v918 = vunpack.c.l.b16 %v353
    %v919 = vunpack.c.h.b16 %v353
    %v920 = vunpack.c.l.b16 %v354
    %v921 = vunpack.c.h.b16 %v354
    %v922 = vunpack.c.l.b16 %v355
    %v923 = vunpack.c.h.b16 %v355
    %v924 = vunpack.c.l.b16 %v356
    %v925 = vunpack.c.h.b16 %v356
    %v926 = vunpack.c.l.b16 %v357
    %v927 = vunpack.c.h.b16 %v357
    %v928 = vunpack.c.l.b16 %v358
    %v929 = vunpack.c.h.b16 %v358
    %v930 = vunpack.c.l.b16 %v359
    %v931 = vunpack.c.h.b16 %v359
    %v932 = vunpack.c.l.b16 %v360
    %v933 = vunpack.c.h.b16 %v360
    %v934 = vunpack.c.l.b16 %v361
    %v935 = vunpack.c.h.b16 %v361
    %v936 = vunpack.c.l.b16 %v362
    %v937 = vunpack.c.h.b16 %v362
    %v938 = vunpack.c.l.b16 %v363
    %v939 = vunpack.c.h.b16 %v363
    %v940 = vunpack.c.l.b16 %v364
    %v941 = vunpack.c.h.b16 %v364
    %v942 = vpack.c.b16 %v882, %v878
    %v943 = vpack.c.b16 %v883, %v879
    %v944 = vpack.c.b16 %v884, %v880
    %v945 = vpack.c.b16 %v885, %v881
    %v946 = vpack.c.b16 %v890, %v886
    %v947 = vpack.c.b16 %v891, %v887
    %v948 = vpack.c.b16 %v892, %v888
    %v949 = vpack.c.b16 %v893, %v889
    %v950 = vpack.c.b16 %v898, %v894
    %v951 = vpack.c.b16 %v899, %v895
    %v952 = vpack.c.b16 %v900, %v896
    %v953 = vpack.c.b16 %v901, %v897
    %v954 = vpack.c.b16 %v906, %v902
    %v955 = vpack.c.b16 %v907, %v903
    %v956 = vpack.c.b16 %v908, %v904
    %v957 = vpack.c.b16 %v909, %v905
    %v958 = vpack.c.b16 %v914, %v910
    %v959 = vpack.c.b16 %v915, %v911
    %v960 = vpack.c.b16 %v916, %v912
    %v961 = vpack.c.b16 %v917, %v913
    %v962 = vpack.c.b16 %v922, %v918
    %v963 = vpack.c.b16 %v923, %v919
    %v964 = vpack.c.b16 %v924, %v920
    %v965 = vpack.c.b16 %v925, %v921
    %v966 = vpack.c.b16 %v930, %v926
    %v967 = vpack.c.b16 %v931, %v927
    %v968 = vpack.c.b16 %v932, %v928
    %v969 = vpack.c.b16 %v933, %v929
    %v970 = vpack.c.b16 %v938, %v934
    %v971 = vpack.c.b16 %v939, %v935
    %v972 = vpack.c.b16 %v940, %v936
    %v973 = vpack.c.b16 %v941, %v937
    %1006 = vmatpush.bf16.msra.mxu0 %v970
    %1007 = vmatpush.bf16.msra.mxu0 %v966
    %1008 = vmatpush.bf16.msra.mxu0 %v962
    %1009 = vmatpush.bf16.msra.mxu0 %v958
    %1010 = vmatpush.bf16.msra.mxu0 %v954
    %1011 = vmatpush.bf16.msra.mxu0 %v950
    %1012 = vmatpush.bf16.msra.mxu0 %v946
    %1013 = vmatpush.bf16.msra.mxu0 %v942
    %1014 = vmatmul.bf16.gmra.mxu0 %v557
    %v1015 = vpop.f32.mrf.mxu0
    %v1016 = vadd.f32 0.0, %v1015
    %v1017 = vpop.f32.mrf.mxu0
    %1018 = vdwg.mxu0
    %1019 = vmatpush.bf16.msra.mxu0 %v971
    %1020 = vmatpush.bf16.msra.mxu0 %v967
    %1021 = vmatpush.bf16.msra.mxu0 %v963
    %1022 = vmatpush.bf16.msra.mxu0 %v959
    %1023 = vmatpush.bf16.msra.mxu0 %v955
    %1024 = vmatpush.bf16.msra.mxu0 %v951
    %1025 = vmatpush.bf16.msra.mxu0 %v947
    %1026 = vmatpush.bf16.msra.mxu0 %v943
    %1027 = vmatmul.bf16.gmra.mxu0 %v557
    %v1028 = vpop.f32.mrf.mxu0
    %v1029 = vadd.f32 0.0, %v1028
    %v1030 = vpop.f32.mrf.mxu0
    %1031 = vdwg.mxu0
    %1032 = vmatpush.bf16.msra.mxu0 %v972
    %1033 = vmatpush.bf16.msra.mxu0 %v968
    %1034 = vmatpush.bf16.msra.mxu0 %v964
    %1035 = vmatpush.bf16.msra.mxu0 %v960
    %1036 = vmatpush.bf16.msra.mxu0 %v956
    %1037 = vmatpush.bf16.msra.mxu0 %v952
    %1038 = vmatpush.bf16.msra.mxu0 %v948
    %1039 = vmatpush.bf16.msra.mxu0 %v944
    %1040 = vmatmul.bf16.gmra.mxu0 %v557
    %v1041 = vpop.f32.mrf.mxu0
    %v1042 = vadd.f32 0.0, %v1041
    %v1043 = vpop.f32.mrf.mxu0
    %1044 = vdwg.mxu0
    %1045 = vmatpush.bf16.msra.mxu0 %v973
    %1046 = vmatpush.bf16.msra.mxu0 %v969
    %1047 = vmatpush.bf16.msra.mxu0 %v965
    %1048 = vmatpush.bf16.msra.mxu0 %v961
    %1049 = vmatpush.bf16.msra.mxu0 %v957
    %1050 = vmatpush.bf16.msra.mxu0 %v953
    %1051 = vmatpush.bf16.msra.mxu0 %v949
    %1052 = vmatpush.bf16.msra.mxu0 %v945
    %1053 = vmatmul.bf16.gmra.mxu0 %v557
    %v1054 = vpop.f32.mrf.mxu0
    %v1055 = vadd.f32 0.0, %v1054
    %v1056 = vpop.f32.mrf.mxu0
    %1057 = vdwg.mxu0
    %v1058 = vadd.f32 %v142, %v1016
    %v1059 = vadd.f32 %v195, %v1029
    %v1060 = vadd.f32 %v248, %v1042
    %v1061 = vadd.f32 %v301, %v1055
    %v1062 = vxor.u32 %v1058, 2147483648
    %v1063 = vxor.u32 %v1059, 2147483648
    %v1064 = vxor.u32 %v1060, 2147483648
    %v1065 = vmul.f32 %v1062, 1.442695
    %v1066 = vpow.pop %v1065
    %v1067 = vmul.f32 %v1063, 1.442695
    %v1068 = vpow.pop %v1067
    %v1069 = vmul.f32 %v1064, 1.442695
    %v1070 = vpow.pop %v1069
    %v1071 = vadd.f32 %v1066, 1.0
    %v1072 = vadd.f32 %v1068, 1.0
    %v1073 = vadd.f32 %v1070, 1.0
    %v1074 = vrcp.pop %v1071
    %v1075 = vmul.f32 %v1071, %v1074
    %v1076 = vsub.f32 1.0, %v1075
    %v1077 = vmul.f32 %v1074, %v1076
    %v1078 = vadd.f32 %v1074, %v1077
    %vm1079 = vweird.f32 %v1071
    %vm1080 = vweird.f32 %v1074
    %vm1081 = vmor %vm1079, %vm1080
    %v1082 = vsel %vm1081, %v1074, %v1078
    %v1083 = vand.u32 2147483647, %v1071
    %vm1084 = vcmp.eq.f32.partialorder %v1083, 8.507059e+37
    %v1085 = vand.u32 %v1071, 2147483648
    %v1086 = vor.u32 1.1754944e-38, %v1085
    %v1087 = vsel %vm1084, %v1086, %v1082
    %v1088 = vmul.f32 1.0, %v1087
    %v1089 = vrcp.pop %v1072
    %v1090 = vmul.f32 %v1072, %v1089
    %v1091 = vsub.f32 1.0, %v1090
    %v1092 = vmul.f32 %v1089, %v1091
    %v1093 = vadd.f32 %v1089, %v1092
    %vm1094 = vweird.f32 %v1072
    %vm1095 = vweird.f32 %v1089
    %vm1096 = vmor %vm1094, %vm1095
    %v1097 = vsel %vm1096, %v1089, %v1093
    %v1098 = vand.u32 2147483647, %v1072
    %vm1099 = vcmp.eq.f32.partialorder %v1098, 8.507059e+37
    %v1100 = vand.u32 %v1072, 2147483648
    %v1101 = vor.u32 1.1754944e-38, %v1100
    %v1102 = vsel %vm1099, %v1101, %v1097
    %v1103 = vmul.f32 1.0, %v1102
    %v1104 = vrcp.pop %v1073
    %v1105 = vmul.f32 %v1073, %v1104
    %v1106 = vsub.f32 1.0, %v1105
    %v1107 = vmul.f32 %v1104, %v1106
    %v1108 = vadd.f32 %v1104, %v1107
    %vm1109 = vweird.f32 %v1073
    %vm1110 = vweird.f32 %v1104
    %vm1111 = vmor %vm1109, %vm1110
    %v1112 = vsel %vm1111, %v1104, %v1108
    %v1113 = vand.u32 2147483647, %v1073
    %vm1114 = vcmp.eq.f32.partialorder %v1113, 8.507059e+37
    %v1115 = vand.u32 %v1073, 2147483648
    %v1116 = vor.u32 1.1754944e-38, %v1115
    %v1117 = vsel %vm1114, %v1116, %v1112
    %v1118 = vmul.f32 1.0, %v1117
    %v1119 = vtanh.pop %v1061
    %v1120 = vmul.f32 %v1103, %v554
    %v1121 = vmul.f32 %v1088, %v1119
    %v1122 = vadd.f32 %v1120, %v1121
    %v1123 = vtanh.pop %v1122
    %v1124 = vmul.f32 %v1118, %v1123
    %v1125 = vpack.c.bf16 %v1124, %v1124
    %v1126 = vperm.slane %v52, 2
    %v1127 = vperm.slane %v52, 6
    %v1128 = vperm.slane %v53, 2
    %v1129 = vperm.slane %v53, 6
    %v1134 = vperm.slane %v1126, 2
    %v1135 = vperm.slane %v1127, 2
    %v1136 = vperm.slane %v1128, 2
    %v1137 = vperm.slane %v1129, 2
    %v1170 = vunpack.c.l.b16 %v430
    %v1171 = vunpack.c.h.b16 %v430
    %v1172 = vunpack.c.l.b16 %v431
    %v1173 = vunpack.c.h.b16 %v431
    %v1174 = vunpack.c.l.b16 %v432
    %v1175 = vunpack.c.h.b16 %v432
    %v1176 = vunpack.c.l.b16 %v433
    %v1177 = vunpack.c.h.b16 %v433
    %v1178 = vunpack.c.l.b16 %v434
    %v1179 = vunpack.c.h.b16 %v434
    %v1180 = vunpack.c.l.b16 %v435
    %v1181 = vunpack.c.h.b16 %v435
    %v1182 = vunpack.c.l.b16 %v436
    %v1183 = vunpack.c.h.b16 %v436
    %v1184 = vunpack.c.l.b16 %v437
    %v1185 = vunpack.c.h.b16 %v437
    %v1186 = vunpack.c.l.b16 %v438
    %v1187 = vunpack.c.h.b16 %v438
    %v1188 = vunpack.c.l.b16 %v439
    %v1189 = vunpack.c.h.b16 %v439
    %v1190 = vunpack.c.l.b16 %v440
    %v1191 = vunpack.c.h.b16 %v440
    %v1192 = vunpack.c.l.b16 %v441
    %v1193 = vunpack.c.h.b16 %v441
    %v1194 = vunpack.c.l.b16 %v442
    %v1195 = vunpack.c.h.b16 %v442
    %v1196 = vunpack.c.l.b16 %v443
    %v1197 = vunpack.c.h.b16 %v443
    %v1198 = vunpack.c.l.b16 %v444
    %v1199 = vunpack.c.h.b16 %v444
    %v1200 = vunpack.c.l.b16 %v445
    %v1201 = vunpack.c.h.b16 %v445
    %v1202 = vunpack.c.l.b16 %v446
    %v1203 = vunpack.c.h.b16 %v446
    %v1204 = vunpack.c.l.b16 %v447
    %v1205 = vunpack.c.h.b16 %v447
    %v1206 = vunpack.c.l.b16 %v448
    %v1207 = vunpack.c.h.b16 %v448
    %v1208 = vunpack.c.l.b16 %v449
    %v1209 = vunpack.c.h.b16 %v449
    %v1210 = vunpack.c.l.b16 %v450
    %v1211 = vunpack.c.h.b16 %v450
    %v1212 = vunpack.c.l.b16 %v451
    %v1213 = vunpack.c.h.b16 %v451
    %v1214 = vunpack.c.l.b16 %v452
    %v1215 = vunpack.c.h.b16 %v452
    %v1216 = vunpack.c.l.b16 %v453
    %v1217 = vunpack.c.h.b16 %v453
    %v1218 = vunpack.c.l.b16 %v454
    %v1219 = vunpack.c.h.b16 %v454
    %v1220 = vunpack.c.l.b16 %v455
    %v1221 = vunpack.c.h.b16 %v455
    %v1222 = vunpack.c.l.b16 %v456
    %v1223 = vunpack.c.h.b16 %v456
    %v1224 = vunpack.c.l.b16 %v457
    %v1225 = vunpack.c.h.b16 %v457
    %v1226 = vunpack.c.l.b16 %v458
    %v1227 = vunpack.c.h.b16 %v458
    %v1228 = vunpack.c.l.b16 %v459
    %v1229 = vunpack.c.h.b16 %v459
    %v1230 = vunpack.c.l.b16 %v460
    %v1231 = vunpack.c.h.b16 %v460
    %v1232 = vunpack.c.l.b16 %v461
    %v1233 = vunpack.c.h.b16 %v461
    %v1234 = vpack.c.b16 %v1174, %v1170
    %v1235 = vpack.c.b16 %v1175, %v1171
    %v1236 = vpack.c.b16 %v1176, %v1172
    %v1237 = vpack.c.b16 %v1177, %v1173
    %v1238 = vpack.c.b16 %v1182, %v1178
    %v1239 = vpack.c.b16 %v1183, %v1179
    %v1240 = vpack.c.b16 %v1184, %v1180
    %v1241 = vpack.c.b16 %v1185, %v1181
    %v1242 = vpack.c.b16 %v1190, %v1186
    %v1243 = vpack.c.b16 %v1191, %v1187
    %v1244 = vpack.c.b16 %v1192, %v1188
    %v1245 = vpack.c.b16 %v1193, %v1189
    %v1246 = vpack.c.b16 %v1198, %v1194
    %v1247 = vpack.c.b16 %v1199, %v1195
    %v1248 = vpack.c.b16 %v1200, %v1196
    %v1249 = vpack.c.b16 %v1201, %v1197
    %v1250 = vpack.c.b16 %v1206, %v1202
    %v1251 = vpack.c.b16 %v1207, %v1203
    %v1252 = vpack.c.b16 %v1208, %v1204
    %v1253 = vpack.c.b16 %v1209, %v1205
    %v1254 = vpack.c.b16 %v1214, %v1210
    %v1255 = vpack.c.b16 %v1215, %v1211
    %v1256 = vpack.c.b16 %v1216, %v1212
    %v1257 = vpack.c.b16 %v1217, %v1213
    %v1258 = vpack.c.b16 %v1222, %v1218
    %v1259 = vpack.c.b16 %v1223, %v1219
    %v1260 = vpack.c.b16 %v1224, %v1220
    %v1261 = vpack.c.b16 %v1225, %v1221
    %v1262 = vpack.c.b16 %v1230, %v1226
    %v1263 = vpack.c.b16 %v1231, %v1227
    %v1264 = vpack.c.b16 %v1232, %v1228
    %v1265 = vpack.c.b16 %v1233, %v1229
    %1298 = vmatpush.bf16.msra.mxu0 %v1262
    %1299 = vmatpush.bf16.msra.mxu0 %v1258
    %1300 = vmatpush.bf16.msra.mxu0 %v1254
    %1301 = vmatpush.bf16.msra.mxu0 %v1250
    %1302 = vmatpush.bf16.msra.mxu0 %v1246
    %1303 = vmatpush.bf16.msra.mxu0 %v1242
    %1304 = vmatpush.bf16.msra.mxu0 %v1238
    %1305 = vmatpush.bf16.msra.mxu0 %v1234
    %1306 = vmatmul.bf16.gmra.mxu0 %v845
    %v1307 = vpop.f32.mrf.mxu0
    %v1308 = vadd.f32 %v1134, %v1307
    %v1309 = vpop.f32.mrf.mxu0
    %1310 = vdwg.mxu0
    %1311 = vmatpush.bf16.msra.mxu0 %v1263
    %1312 = vmatpush.bf16.msra.mxu0 %v1259
    %1313 = vmatpush.bf16.msra.mxu0 %v1255
    %1314 = vmatpush.bf16.msra.mxu0 %v1251
    %1315 = vmatpush.bf16.msra.mxu0 %v1247
    %1316 = vmatpush.bf16.msra.mxu0 %v1243
    %1317 = vmatpush.bf16.msra.mxu0 %v1239
    %1318 = vmatpush.bf16.msra.mxu0 %v1235
    %1319 = vmatmul.bf16.gmra.mxu0 %v845
    %v1320 = vpop.f32.mrf.mxu0
    %v1321 = vadd.f32 %v1135, %v1320
    %v1322 = vpop.f32.mrf.mxu0
    %1323 = vdwg.mxu0
    %1324 = vmatpush.bf16.msra.mxu0 %v1264
    %1325 = vmatpush.bf16.msra.mxu0 %v1260
    %1326 = vmatpush.bf16.msra.mxu0 %v1256
    %1327 = vmatpush.bf16.msra.mxu0 %v1252
    %1328 = vmatpush.bf16.msra.mxu0 %v1248
    %1329 = vmatpush.bf16.msra.mxu0 %v1244
    %1330 = vmatpush.bf16.msra.mxu0 %v1240
    %1331 = vmatpush.bf16.msra.mxu0 %v1236
    %1332 = vmatmul.bf16.gmra.mxu0 %v845
    %v1333 = vpop.f32.mrf.mxu0
    %v1334 = vadd.f32 %v1136, %v1333
    %v1335 = vpop.f32.mrf.mxu0
    %1336 = vdwg.mxu0
    %1337 = vmatpush.bf16.msra.mxu0 %v1265
    %1338 = vmatpush.bf16.msra.mxu0 %v1261
    %1339 = vmatpush.bf16.msra.mxu0 %v1257
    %1340 = vmatpush.bf16.msra.mxu0 %v1253
    %1341 = vmatpush.bf16.msra.mxu0 %v1249
    %1342 = vmatpush.bf16.msra.mxu0 %v1245
    %1343 = vmatpush.bf16.msra.mxu0 %v1241
    %1344 = vmatpush.bf16.msra.mxu0 %v1237
    %1345 = vmatmul.bf16.gmra.mxu0 %v845
    %v1346 = vpop.f32.mrf.mxu0
    %v1347 = vadd.f32 %v1137, %v1346
    %v1348 = vpop.f32.mrf.mxu0
    %1349 = vdwg.mxu0
    %v1350 = vxor.u32 %v1308, 2147483648
    %v1351 = vxor.u32 %v1321, 2147483648
    %v1352 = vxor.u32 %v1334, 2147483648
    %v1353 = vmul.f32 %v1350, 1.442695
    %v1354 = vpow.pop %v1353
    %v1355 = vmul.f32 %v1351, 1.442695
    %v1356 = vpow.pop %v1355
    %v1357 = vmul.f32 %v1352, 1.442695
    %v1358 = vpow.pop %v1357
    %v1359 = vadd.f32 %v1354, 1.0
    %v1360 = vadd.f32 %v1356, 1.0
    %v1361 = vadd.f32 %v1358, 1.0
    %v1362 = vrcp.pop %v1359
    %v1363 = vmul.f32 %v1359, %v1362
    %v1364 = vsub.f32 1.0, %v1363
    %v1365 = vmul.f32 %v1362, %v1364
    %v1366 = vadd.f32 %v1362, %v1365
    %vm1367 = vweird.f32 %v1359
    %vm1368 = vweird.f32 %v1362
    %vm1369 = vmor %vm1367, %vm1368
    %v1370 = vsel %vm1369, %v1362, %v1366
    %v1371 = vand.u32 2147483647, %v1359
    %vm1372 = vcmp.eq.f32.partialorder %v1371, 8.507059e+37
    %v1373 = vand.u32 %v1359, 2147483648
    %v1374 = vor.u32 1.1754944e-38, %v1373
    %v1375 = vsel %vm1372, %v1374, %v1370
    %v1376 = vmul.f32 1.0, %v1375
    %v1377 = vrcp.pop %v1360
    %v1378 = vmul.f32 %v1360, %v1377
    %v1379 = vsub.f32 1.0, %v1378
    %v1380 = vmul.f32 %v1377, %v1379
    %v1381 = vadd.f32 %v1377, %v1380
    %vm1382 = vweird.f32 %v1360
    %vm1383 = vweird.f32 %v1377
    %vm1384 = vmor %vm1382, %vm1383
    %v1385 = vsel %vm1384, %v1377, %v1381
    %v1386 = vand.u32 2147483647, %v1360
    %vm1387 = vcmp.eq.f32.partialorder %v1386, 8.507059e+37
    %v1388 = vand.u32 %v1360, 2147483648
    %v1389 = vor.u32 1.1754944e-38, %v1388
    %v1390 = vsel %vm1387, %v1389, %v1385
    %v1391 = vmul.f32 1.0, %v1390
    %v1392 = vrcp.pop %v1361
    %v1393 = vmul.f32 %v1361, %v1392
    %v1394 = vsub.f32 1.0, %v1393
    %v1395 = vmul.f32 %v1392, %v1394
    %v1396 = vadd.f32 %v1392, %v1395
    %vm1397 = vweird.f32 %v1361
    %vm1398 = vweird.f32 %v1392
    %vm1399 = vmor %vm1397, %vm1398
    %v1400 = vsel %vm1399, %v1392, %v1396
    %v1401 = vand.u32 2147483647, %v1361
    %vm1402 = vcmp.eq.f32.partialorder %v1401, 8.507059e+37
    %v1403 = vand.u32 %v1361, 2147483648
    %v1404 = vor.u32 1.1754944e-38, %v1403
    %v1405 = vsel %vm1402, %v1404, %v1400
    %v1406 = vmul.f32 1.0, %v1405
    %v1407 = vtanh.pop %v1347
    %v1408 = vmul.f32 %v1391, 0.0
    %v1409 = vmul.f32 %v1376, %v1407
    %v1410 = vadd.f32 %v1408, %v1409
    %v1411 = vtanh.pop %v1410
    %v1412 = vmul.f32 %v1406, %v1411
    %v1413 = vpack.c.bf16 %v1412, %v1412
    %v1446 = vunpack.c.l.b16 %v397
    %v1447 = vunpack.c.h.b16 %v397
    %v1448 = vunpack.c.l.b16 %v398
    %v1449 = vunpack.c.h.b16 %v398
    %v1450 = vunpack.c.l.b16 %v399
    %v1451 = vunpack.c.h.b16 %v399
    %v1452 = vunpack.c.l.b16 %v400
    %v1453 = vunpack.c.h.b16 %v400
    %v1454 = vunpack.c.l.b16 %v401
    %v1455 = vunpack.c.h.b16 %v401
    %v1456 = vunpack.c.l.b16 %v402
    %v1457 = vunpack.c.h.b16 %v402
    %v1458 = vunpack.c.l.b16 %v403
    %v1459 = vunpack.c.h.b16 %v403
    %v1460 = vunpack.c.l.b16 %v404
    %v1461 = vunpack.c.h.b16 %v404
    %v1462 = vunpack.c.l.b16 %v405
    %v1463 = vunpack.c.h.b16 %v405
    %v1464 = vunpack.c.l.b16 %v406
    %v1465 = vunpack.c.h.b16 %v406
    %v1466 = vunpack.c.l.b16 %v407
    %v1467 = vunpack.c.h.b16 %v407
    %v1468 = vunpack.c.l.b16 %v408
    %v1469 = vunpack.c.h.b16 %v408
    %v1470 = vunpack.c.l.b16 %v409
    %v1471 = vunpack.c.h.b16 %v409
    %v1472 = vunpack.c.l.b16 %v410
    %v1473 = vunpack.c.h.b16 %v410
    %v1474 = vunpack.c.l.b16 %v411
    %v1475 = vunpack.c.h.b16 %v411
    %v1476 = vunpack.c.l.b16 %v412
    %v1477 = vunpack.c.h.b16 %v412
    %v1478 = vunpack.c.l.b16 %v413
    %v1479 = vunpack.c.h.b16 %v413
    %v1480 = vunpack.c.l.b16 %v414
    %v1481 = vunpack.c.h.b16 %v414
    %v1482 = vunpack.c.l.b16 %v415
    %v1483 = vunpack.c.h.b16 %v415
    %v1484 = vunpack.c.l.b16 %v416
    %v1485 = vunpack.c.h.b16 %v416
    %v1486 = vunpack.c.l.b16 %v417
    %v1487 = vunpack.c.h.b16 %v417
    %v1488 = vunpack.c.l.b16 %v418
    %v1489 = vunpack.c.h.b16 %v418
    %v1490 = vunpack.c.l.b16 %v419
    %v1491 = vunpack.c.h.b16 %v419
    %v1492 = vunpack.c.l.b16 %v420
    %v1493 = vunpack.c.h.b16 %v420
    %v1494 = vunpack.c.l.b16 %v421
    %v1495 = vunpack.c.h.b16 %v421
    %v1496 = vunpack.c.l.b16 %v422
    %v1497 = vunpack.c.h.b16 %v422
    %v1498 = vunpack.c.l.b16 %v423
    %v1499 = vunpack.c.h.b16 %v423
    %v1500 = vunpack.c.l.b16 %v424
    %v1501 = vunpack.c.h.b16 %v424
    %v1502 = vunpack.c.l.b16 %v425
    %v1503 = vunpack.c.h.b16 %v425
    %v1504 = vunpack.c.l.b16 %v426
    %v1505 = vunpack.c.h.b16 %v426
    %v1506 = vunpack.c.l.b16 %v427
    %v1507 = vunpack.c.h.b16 %v427
    %v1508 = vunpack.c.l.b16 %v428
    %v1509 = vunpack.c.h.b16 %v428
    %v1510 = vpack.c.b16 %v1450, %v1446
    %v1511 = vpack.c.b16 %v1451, %v1447
    %v1512 = vpack.c.b16 %v1452, %v1448
    %v1513 = vpack.c.b16 %v1453, %v1449
    %v1514 = vpack.c.b16 %v1458, %v1454
    %v1515 = vpack.c.b16 %v1459, %v1455
    %v1516 = vpack.c.b16 %v1460, %v1456
    %v1517 = vpack.c.b16 %v1461, %v1457
    %v1518 = vpack.c.b16 %v1466, %v1462
    %v1519 = vpack.c.b16 %v1467, %v1463
    %v1520 = vpack.c.b16 %v1468, %v1464
    %v1521 = vpack.c.b16 %v1469, %v1465
    %v1522 = vpack.c.b16 %v1474, %v1470
    %v1523 = vpack.c.b16 %v1475, %v1471
    %v1524 = vpack.c.b16 %v1476, %v1472
    %v1525 = vpack.c.b16 %v1477, %v1473
    %v1526 = vpack.c.b16 %v1482, %v1478
    %v1527 = vpack.c.b16 %v1483, %v1479
    %v1528 = vpack.c.b16 %v1484, %v1480
    %v1529 = vpack.c.b16 %v1485, %v1481
    %v1530 = vpack.c.b16 %v1490, %v1486
    %v1531 = vpack.c.b16 %v1491, %v1487
    %v1532 = vpack.c.b16 %v1492, %v1488
    %v1533 = vpack.c.b16 %v1493, %v1489
    %v1534 = vpack.c.b16 %v1498, %v1494
    %v1535 = vpack.c.b16 %v1499, %v1495
    %v1536 = vpack.c.b16 %v1500, %v1496
    %v1537 = vpack.c.b16 %v1501, %v1497
    %v1538 = vpack.c.b16 %v1506, %v1502
    %v1539 = vpack.c.b16 %v1507, %v1503
    %v1540 = vpack.c.b16 %v1508, %v1504
    %v1541 = vpack.c.b16 %v1509, %v1505
    %1574 = vmatpush.bf16.msra.mxu0 %v694
    %1575 = vmatpush.bf16.msra.mxu0 %v690
    %1576 = vmatpush.bf16.msra.mxu0 %v686
    %1577 = vmatpush.bf16.msra.mxu0 %v682
    %1578 = vmatpush.bf16.msra.mxu0 %v678
    %1579 = vmatpush.bf16.msra.mxu0 %v674
    %1580 = vmatpush.bf16.msra.mxu0 %v670
    %1581 = vmatpush.bf16.msra.mxu0 %v666
    %1582 = vmatmul.bf16.gmra.mxu0 %v1125
    %v1583 = vpop.f32.mrf.mxu0
    %v1584 = vadd.f32 %v566, %v1583
    %v1585 = vpop.f32.mrf.mxu0
    %1586 = vdwg.mxu0
    %1587 = vmatpush.bf16.msra.mxu0 %v1538
    %1588 = vmatpush.bf16.msra.mxu0 %v1534
    %1589 = vmatpush.bf16.msra.mxu0 %v1530
    %1590 = vmatpush.bf16.msra.mxu0 %v1526
    %1591 = vmatpush.bf16.msra.mxu0 %v1522
    %1592 = vmatpush.bf16.msra.mxu0 %v1518
    %1593 = vmatpush.bf16.msra.mxu0 %v1514
    %1594 = vmatpush.bf16.msra.mxu0 %v1510
    %1595 = vmatmul.bf16.gmra.mxu0 %v845
    %v1596 = vpop.f32.mrf.mxu0
    %v1597 = vadd.f32 %v1584, %v1596
    %v1598 = vpop.f32.mrf.mxu0
    %1599 = vdwg.mxu0
    %1600 = vmatpush.bf16.msra.mxu0 %v695
    %1601 = vmatpush.bf16.msra.mxu0 %v691
    %1602 = vmatpush.bf16.msra.mxu0 %v687
    %1603 = vmatpush.bf16.msra.mxu0 %v683
    %1604 = vmatpush.bf16.msra.mxu0 %v679
    %1605 = vmatpush.bf16.msra.mxu0 %v675
    %1606 = vmatpush.bf16.msra.mxu0 %v671
    %1607 = vmatpush.bf16.msra.mxu0 %v667
    %1608 = vmatmul.bf16.gmra.mxu0 %v1125
    %v1609 = vpop.f32.mrf.mxu0
    %v1610 = vadd.f32 %v567, %v1609
    %v1611 = vpop.f32.mrf.mxu0
    %1612 = vdwg.mxu0
    %1613 = vmatpush.bf16.msra.mxu0 %v1539
    %1614 = vmatpush.bf16.msra.mxu0 %v1535
    %1615 = vmatpush.bf16.msra.mxu0 %v1531
    %1616 = vmatpush.bf16.msra.mxu0 %v1527
    %1617 = vmatpush.bf16.msra.mxu0 %v1523
    %1618 = vmatpush.bf16.msra.mxu0 %v1519
    %1619 = vmatpush.bf16.msra.mxu0 %v1515
    %1620 = vmatpush.bf16.msra.mxu0 %v1511
    %1621 = vmatmul.bf16.gmra.mxu0 %v845
    %v1622 = vpop.f32.mrf.mxu0
    %v1623 = vadd.f32 %v1610, %v1622
    %v1624 = vpop.f32.mrf.mxu0
    %1625 = vdwg.mxu0
    %1626 = vmatpush.bf16.msra.mxu0 %v696
    %1627 = vmatpush.bf16.msra.mxu0 %v692
    %1628 = vmatpush.bf16.msra.mxu0 %v688
    %1629 = vmatpush.bf16.msra.mxu0 %v684
    %1630 = vmatpush.bf16.msra.mxu0 %v680
    %1631 = vmatpush.bf16.msra.mxu0 %v676
    %1632 = vmatpush.bf16.msra.mxu0 %v672
    %1633 = vmatpush.bf16.msra.mxu0 %v668
    %1634 = vmatmul.bf16.gmra.mxu0 %v1125
    %v1635 = vpop.f32.mrf.mxu0
    %v1636 = vadd.f32 %v568, %v1635
    %v1637 = vpop.f32.mrf.mxu0
    %1638 = vdwg.mxu0
    %1639 = vmatpush.bf16.msra.mxu0 %v1540
    %1640 = vmatpush.bf16.msra.mxu0 %v1536
    %1641 = vmatpush.bf16.msra.mxu0 %v1532
    %1642 = vmatpush.bf16.msra.mxu0 %v1528
    %1643 = vmatpush.bf16.msra.mxu0 %v1524
    %1644 = vmatpush.bf16.msra.mxu0 %v1520
    %1645 = vmatpush.bf16.msra.mxu0 %v1516
    %1646 = vmatpush.bf16.msra.mxu0 %v1512
    %1647 = vmatmul.bf16.gmra.mxu0 %v845
    %v1648 = vpop.f32.mrf.mxu0
    %v1649 = vadd.f32 %v1636, %v1648
    %v1650 = vpop.f32.mrf.mxu0
    %1651 = vdwg.mxu0
    %1652 = vmatpush.bf16.msra.mxu0 %v697
    %1653 = vmatpush.bf16.msra.mxu0 %v693
    %1654 = vmatpush.bf16.msra.mxu0 %v689
    %1655 = vmatpush.bf16.msra.mxu0 %v685
    %1656 = vmatpush.bf16.msra.mxu0 %v681
    %1657 = vmatpush.bf16.msra.mxu0 %v677
    %1658 = vmatpush.bf16.msra.mxu0 %v673
    %1659 = vmatpush.bf16.msra.mxu0 %v669
    %1660 = vmatmul.bf16.gmra.mxu0 %v1125
    %v1661 = vpop.f32.mrf.mxu0
    %v1662 = vadd.f32 %v569, %v1661
    %v1663 = vpop.f32.mrf.mxu0
    %1664 = vdwg.mxu0
    %1665 = vmatpush.bf16.msra.mxu0 %v1541
    %1666 = vmatpush.bf16.msra.mxu0 %v1537
    %1667 = vmatpush.bf16.msra.mxu0 %v1533
    %1668 = vmatpush.bf16.msra.mxu0 %v1529
    %1669 = vmatpush.bf16.msra.mxu0 %v1525
    %1670 = vmatpush.bf16.msra.mxu0 %v1521
    %1671 = vmatpush.bf16.msra.mxu0 %v1517
    %1672 = vmatpush.bf16.msra.mxu0 %v1513
    %1673 = vmatmul.bf16.gmra.mxu0 %v845
    %v1674 = vpop.f32.mrf.mxu0
    %v1675 = vadd.f32 %v1662, %v1674
    %v1676 = vpop.f32.mrf.mxu0
    %1677 = vdwg.mxu0
    %v1678 = vxor.u32 %v1597, 2147483648
    %v1679 = vxor.u32 %v1623, 2147483648
    %v1680 = vxor.u32 %v1649, 2147483648
    %v1681 = vmul.f32 %v1678, 1.442695
    %v1682 = vpow.pop %v1681
    %v1683 = vmul.f32 %v1679, 1.442695
    %v1684 = vpow.pop %v1683
    %v1685 = vmul.f32 %v1680, 1.442695
    %v1686 = vpow.pop %v1685
    %v1687 = vadd.f32 %v1682, 1.0
    %v1688 = vadd.f32 %v1684, 1.0
    %v1689 = vadd.f32 %v1686, 1.0
    %v1690 = vrcp.pop %v1687
    %v1691 = vmul.f32 %v1687, %v1690
    %v1692 = vsub.f32 1.0, %v1691
    %v1693 = vmul.f32 %v1690, %v1692
    %v1694 = vadd.f32 %v1690, %v1693
    %vm1695 = vweird.f32 %v1687
    %vm1696 = vweird.f32 %v1690
    %vm1697 = vmor %vm1695, %vm1696
    %v1698 = vsel %vm1697, %v1690, %v1694
    %v1699 = vand.u32 2147483647, %v1687
    %vm1700 = vcmp.eq.f32.partialorder %v1699, 8.507059e+37
    %v1701 = vand.u32 %v1687, 2147483648
    %v1702 = vor.u32 1.1754944e-38, %v1701
    %v1703 = vsel %vm1700, %v1702, %v1698
    %v1704 = vmul.f32 1.0, %v1703
    %v1705 = vrcp.pop %v1688
    %v1706 = vmul.f32 %v1688, %v1705
    %v1707 = vsub.f32 1.0, %v1706
    %v1708 = vmul.f32 %v1705, %v1707
    %v1709 = vadd.f32 %v1705, %v1708
    %vm1710 = vweird.f32 %v1688
    %vm1711 = vweird.f32 %v1705
    %vm1712 = vmor %vm1710, %vm1711
    %v1713 = vsel %vm1712, %v1705, %v1709
    %v1714 = vand.u32 2147483647, %v1688
    %vm1715 = vcmp.eq.f32.partialorder %v1714, 8.507059e+37
    %v1716 = vand.u32 %v1688, 2147483648
    %v1717 = vor.u32 1.1754944e-38, %v1716
    %v1718 = vsel %vm1715, %v1717, %v1713
    %v1719 = vmul.f32 1.0, %v1718
    %v1720 = vrcp.pop %v1689
    %v1721 = vmul.f32 %v1689, %v1720
    %v1722 = vsub.f32 1.0, %v1721
    %v1723 = vmul.f32 %v1720, %v1722
    %v1724 = vadd.f32 %v1720, %v1723
    %vm1725 = vweird.f32 %v1689
    %vm1726 = vweird.f32 %v1720
    %vm1727 = vmor %vm1725, %vm1726
    %v1728 = vsel %vm1727, %v1720, %v1724
    %v1729 = vand.u32 2147483647, %v1689
    %vm1730 = vcmp.eq.f32.partialorder %v1729, 8.507059e+37
    %v1731 = vand.u32 %v1689, 2147483648
    %v1732 = vor.u32 1.1754944e-38, %v1731
    %v1733 = vsel %vm1730, %v1732, %v1728
    %v1734 = vmul.f32 1.0, %v1733
    %v1735 = vtanh.pop %v1675
    %v1736 = vmul.f32 %v1719, %v842
    %v1737 = vmul.f32 %v1704, %v1735
    %v1738 = vadd.f32 %v1736, %v1737
    %v1739 = vtanh.pop %v1738
    %v1740 = vmul.f32 %v1734, %v1739
    %v1741 = vpack.c.bf16 %v1740, %v1740
    %1742 = vmatpush.bf16.msra.mxu0 %v970
    %1743 = vmatpush.bf16.msra.mxu0 %v966
    %1744 = vmatpush.bf16.msra.mxu0 %v962
    %1745 = vmatpush.bf16.msra.mxu0 %v958
    %1746 = vmatpush.bf16.msra.mxu0 %v954
    %1747 = vmatpush.bf16.msra.mxu0 %v950
    %1748 = vmatpush.bf16.msra.mxu0 %v946
    %1749 = vmatpush.bf16.msra.mxu0 %v942
    %1750 = vmatmul.bf16.gmra.mxu0 %v1125
    %v1751 = vpop.f32.mrf.mxu0
    %v1752 = vadd.f32 0.0, %v1751
    %v1753 = vpop.f32.mrf.mxu0
    %1754 = vdwg.mxu0
    %1755 = vmatpush.bf16.msra.mxu0 %v971
    %1756 = vmatpush.bf16.msra.mxu0 %v967
    %1757 = vmatpush.bf16.msra.mxu0 %v963
    %1758 = vmatpush.bf16.msra.mxu0 %v959
    %1759 = vmatpush.bf16.msra.mxu0 %v955
    %1760 = vmatpush.bf16.msra.mxu0 %v951
    %1761 = vmatpush.bf16.msra.mxu0 %v947
    %1762 = vmatpush.bf16.msra.mxu0 %v943
    %1763 = vmatmul.bf16.gmra.mxu0 %v1125
    %v1764 = vpop.f32.mrf.mxu0
    %v1765 = vadd.f32 0.0, %v1764
    %v1766 = vpop.f32.mrf.mxu0
    %1767 = vdwg.mxu0
    %1768 = vmatpush.bf16.msra.mxu0 %v972
    %1769 = vmatpush.bf16.msra.mxu0 %v968
    %1770 = vmatpush.bf16.msra.mxu0 %v964
    %1771 = vmatpush.bf16.msra.mxu0 %v960
    %1772 = vmatpush.bf16.msra.mxu0 %v956
    %1773 = vmatpush.bf16.msra.mxu0 %v952
    %1774 = vmatpush.bf16.msra.mxu0 %v948
    %1775 = vmatpush.bf16.msra.mxu0 %v944
    %1776 = vmatmul.bf16.gmra.mxu0 %v1125
    %v1777 = vpop.f32.mrf.mxu0
    %v1778 = vadd.f32 0.0, %v1777
    %v1779 = vpop.f32.mrf.mxu0
    %1780 = vdwg.mxu0
    %1781 = vmatpush.bf16.msra.mxu0 %v973
    %1782 = vmatpush.bf16.msra.mxu0 %v969
    %1783 = vmatpush.bf16.msra.mxu0 %v965
    %1784 = vmatpush.bf16.msra.mxu0 %v961
    %1785 = vmatpush.bf16.msra.mxu0 %v957
    %1786 = vmatpush.bf16.msra.mxu0 %v953
    %1787 = vmatpush.bf16.msra.mxu0 %v949
    %1788 = vmatpush.bf16.msra.mxu0 %v945
    %1789 = vmatmul.bf16.gmra.mxu0 %v1125
    %v1790 = vpop.f32.mrf.mxu0
    %v1791 = vadd.f32 0.0, %v1790
    %v1792 = vpop.f32.mrf.mxu0
    %1793 = vdwg.mxu0
    %v1794 = vadd.f32 %v145, %v1752
    %v1795 = vadd.f32 %v198, %v1765
    %v1796 = vadd.f32 %v251, %v1778
    %v1797 = vadd.f32 %v304, %v1791
    %v1798 = vxor.u32 %v1794, 2147483648
    %v1799 = vxor.u32 %v1795, 2147483648
    %v1800 = vxor.u32 %v1796, 2147483648
    %v1801 = vmul.f32 %v1798, 1.442695
    %v1802 = vpow.pop %v1801
    %v1803 = vmul.f32 %v1799, 1.442695
    %v1804 = vpow.pop %v1803
    %v1805 = vmul.f32 %v1800, 1.442695
    %v1806 = vpow.pop %v1805
    %v1807 = vadd.f32 %v1802, 1.0
    %v1808 = vadd.f32 %v1804, 1.0
    %v1809 = vadd.f32 %v1806, 1.0
    %v1810 = vrcp.pop %v1807
    %v1811 = vmul.f32 %v1807, %v1810
    %v1812 = vsub.f32 1.0, %v1811
    %v1813 = vmul.f32 %v1810, %v1812
    %v1814 = vadd.f32 %v1810, %v1813
    %vm1815 = vweird.f32 %v1807
    %vm1816 = vweird.f32 %v1810
    %vm1817 = vmor %vm1815, %vm1816
    %v1818 = vsel %vm1817, %v1810, %v1814
    %v1819 = vand.u32 2147483647, %v1807
    %vm1820 = vcmp.eq.f32.partialorder %v1819, 8.507059e+37
    %v1821 = vand.u32 %v1807, 2147483648
    %v1822 = vor.u32 1.1754944e-38, %v1821
    %v1823 = vsel %vm1820, %v1822, %v1818
    %v1824 = vmul.f32 1.0, %v1823
    %v1825 = vrcp.pop %v1808
    %v1826 = vmul.f32 %v1808, %v1825
    %v1827 = vsub.f32 1.0, %v1826
    %v1828 = vmul.f32 %v1825, %v1827
    %v1829 = vadd.f32 %v1825, %v1828
    %vm1830 = vweird.f32 %v1808
    %vm1831 = vweird.f32 %v1825
    %vm1832 = vmor %vm1830, %vm1831
    %v1833 = vsel %vm1832, %v1825, %v1829
    %v1834 = vand.u32 2147483647, %v1808
    %vm1835 = vcmp.eq.f32.partialorder %v1834, 8.507059e+37
    %v1836 = vand.u32 %v1808, 2147483648
    %v1837 = vor.u32 1.1754944e-38, %v1836
    %v1838 = vsel %vm1835, %v1837, %v1833
    %v1839 = vmul.f32 1.0, %v1838
    %v1840 = vrcp.pop %v1809
    %v1841 = vmul.f32 %v1809, %v1840
    %v1842 = vsub.f32 1.0, %v1841
    %v1843 = vmul.f32 %v1840, %v1842
    %v1844 = vadd.f32 %v1840, %v1843
    %vm1845 = vweird.f32 %v1809
    %vm1846 = vweird.f32 %v1840
    %vm1847 = vmor %vm1845, %vm1846
    %v1848 = vsel %vm1847, %v1840, %v1844
    %v1849 = vand.u32 2147483647, %v1809
    %vm1850 = vcmp.eq.f32.partialorder %v1849, 8.507059e+37
    %v1851 = vand.u32 %v1809, 2147483648
    %v1852 = vor.u32 1.1754944e-38, %v1851
    %v1853 = vsel %vm1850, %v1852, %v1848
    %v1854 = vmul.f32 1.0, %v1853
    %v1855 = vtanh.pop %v1797
    %v1856 = vmul.f32 %v1839, %v1122
    %v1857 = vmul.f32 %v1824, %v1855
    %v1858 = vadd.f32 %v1856, %v1857
    %v1859 = vtanh.pop %v1858
    %v1860 = vmul.f32 %v1854, %v1859
    %v1861 = vpack.c.bf16 %v1860, %v1860
    %v1894 = vunpack.c.l.b16 %v462
    %v1895 = vunpack.c.h.b16 %v462
    %v1896 = vunpack.c.l.b16 %v463
    %v1897 = vunpack.c.h.b16 %v463
    %v1898 = vunpack.c.l.b16 %v464
    %v1899 = vunpack.c.h.b16 %v464
    %v1900 = vunpack.c.l.b16 %v465
    %v1901 = vunpack.c.h.b16 %v465
    %v1902 = vunpack.c.l.b16 %v466
    %v1903 = vunpack.c.h.b16 %v466
    %v1904 = vunpack.c.l.b16 %v467
    %v1905 = vunpack.c.h.b16 %v467
    %v1906 = vunpack.c.l.b16 %v468
    %v1907 = vunpack.c.h.b16 %v468
    %v1908 = vunpack.c.l.b16 %v469
    %v1909 = vunpack.c.h.b16 %v469
    %v1910 = vunpack.c.l.b16 %v470
    %v1911 = vunpack.c.h.b16 %v470
    %v1912 = vunpack.c.l.b16 %v471
    %v1913 = vunpack.c.h.b16 %v471
    %v1914 = vunpack.c.l.b16 %v472
    %v1915 = vunpack.c.h.b16 %v472
    %v1916 = vunpack.c.l.b16 %v473
    %v1917 = vunpack.c.h.b16 %v473
    %v1918 = vunpack.c.l.b16 %v474
    %v1919 = vunpack.c.h.b16 %v474
    %v1920 = vunpack.c.l.b16 %v475
    %v1921 = vunpack.c.h.b16 %v475
    %v1922 = vunpack.c.l.b16 %v476
    %v1923 = vunpack.c.h.b16 %v476
    %v1924 = vunpack.c.l.b16 %v477
    %v1925 = vunpack.c.h.b16 %v477
    %v1926 = vunpack.c.l.b16 %v478
    %v1927 = vunpack.c.h.b16 %v478
    %v1928 = vunpack.c.l.b16 %v479
    %v1929 = vunpack.c.h.b16 %v479
    %v1930 = vunpack.c.l.b16 %v480
    %v1931 = vunpack.c.h.b16 %v480
    %v1932 = vunpack.c.l.b16 %v481
    %v1933 = vunpack.c.h.b16 %v481
    %v1934 = vunpack.c.l.b16 %v482
    %v1935 = vunpack.c.h.b16 %v482
    %v1936 = vunpack.c.l.b16 %v483
    %v1937 = vunpack.c.h.b16 %v483
    %v1938 = vunpack.c.l.b16 %v484
    %v1939 = vunpack.c.h.b16 %v484
    %v1940 = vunpack.c.l.b16 %v485
    %v1941 = vunpack.c.h.b16 %v485
    %v1942 = vunpack.c.l.b16 %v486
    %v1943 = vunpack.c.h.b16 %v486
    %v1944 = vunpack.c.l.b16 %v487
    %v1945 = vunpack.c.h.b16 %v487
    %v1946 = vunpack.c.l.b16 %v488
    %v1947 = vunpack.c.h.b16 %v488
    %v1948 = vunpack.c.l.b16 %v489
    %v1949 = vunpack.c.h.b16 %v489
    %v1950 = vunpack.c.l.b16 %v490
    %v1951 = vunpack.c.h.b16 %v490
    %v1952 = vunpack.c.l.b16 %v491
    %v1953 = vunpack.c.h.b16 %v491
    %v1954 = vunpack.c.l.b16 %v492
    %v1955 = vunpack.c.h.b16 %v492
    %v1956 = vunpack.c.l.b16 %v493
    %v1957 = vunpack.c.h.b16 %v493
    %v1958 = vpack.c.b16 %v1898, %v1894
    %v1959 = vpack.c.b16 %v1899, %v1895
    %v1960 = vpack.c.b16 %v1900, %v1896
    %v1961 = vpack.c.b16 %v1901, %v1897
    %v1962 = vpack.c.b16 %v1906, %v1902
    %v1963 = vpack.c.b16 %v1907, %v1903
    %v1964 = vpack.c.b16 %v1908, %v1904
    %v1965 = vpack.c.b16 %v1909, %v1905
    %v1966 = vpack.c.b16 %v1914, %v1910
    %v1967 = vpack.c.b16 %v1915, %v1911
    %v1968 = vpack.c.b16 %v1916, %v1912
    %v1969 = vpack.c.b16 %v1917, %v1913
    %v1970 = vpack.c.b16 %v1922, %v1918
    %v1971 = vpack.c.b16 %v1923, %v1919
    %v1972 = vpack.c.b16 %v1924, %v1920
    %v1973 = vpack.c.b16 %v1925, %v1921
    %v1974 = vpack.c.b16 %v1930, %v1926
    %v1975 = vpack.c.b16 %v1931, %v1927
    %v1976 = vpack.c.b16 %v1932, %v1928
    %v1977 = vpack.c.b16 %v1933, %v1929
    %v1978 = vpack.c.b16 %v1938, %v1934
    %v1979 = vpack.c.b16 %v1939, %v1935
    %v1980 = vpack.c.b16 %v1940, %v1936
    %v1981 = vpack.c.b16 %v1941, %v1937
    %v1982 = vpack.c.b16 %v1946, %v1942
    %v1983 = vpack.c.b16 %v1947, %v1943
    %v1984 = vpack.c.b16 %v1948, %v1944
    %v1985 = vpack.c.b16 %v1949, %v1945
    %v1986 = vpack.c.b16 %v1954, %v1950
    %v1987 = vpack.c.b16 %v1955, %v1951
    %v1988 = vpack.c.b16 %v1956, %v1952
    %v1989 = vpack.c.b16 %v1957, %v1953
    %2022 = vmatpush.bf16.msra.mxu0 %v1262
    %2023 = vmatpush.bf16.msra.mxu0 %v1258
    %2024 = vmatpush.bf16.msra.mxu0 %v1254
    %2025 = vmatpush.bf16.msra.mxu0 %v1250
    %2026 = vmatpush.bf16.msra.mxu0 %v1246
    %2027 = vmatpush.bf16.msra.mxu0 %v1242
    %2028 = vmatpush.bf16.msra.mxu0 %v1238
    %2029 = vmatpush.bf16.msra.mxu0 %v1234
    %2030 = vmatmul.bf16.gmra.mxu0 %v1741
    %v2031 = vpop.f32.mrf.mxu0
    %v2032 = vadd.f32 %v1134, %v2031
    %v2033 = vpop.f32.mrf.mxu0
    %2034 = vdwg.mxu0
    %2035 = vmatpush.bf16.msra.mxu0 %v1986
    %2036 = vmatpush.bf16.msra.mxu0 %v1982
    %2037 = vmatpush.bf16.msra.mxu0 %v1978
    %2038 = vmatpush.bf16.msra.mxu0 %v1974
    %2039 = vmatpush.bf16.msra.mxu0 %v1970
    %2040 = vmatpush.bf16.msra.mxu0 %v1966
    %2041 = vmatpush.bf16.msra.mxu0 %v1962
    %2042 = vmatpush.bf16.msra.mxu0 %v1958
    %2043 = vmatmul.bf16.gmra.mxu0 %v1413
    %v2044 = vpop.f32.mrf.mxu0
    %v2045 = vadd.f32 %v2032, %v2044
    %v2046 = vpop.f32.mrf.mxu0
    %2047 = vdwg.mxu0
    %2048 = vmatpush.bf16.msra.mxu0 %v1263
    %2049 = vmatpush.bf16.msra.mxu0 %v1259
    %2050 = vmatpush.bf16.msra.mxu0 %v1255
    %2051 = vmatpush.bf16.msra.mxu0 %v1251
    %2052 = vmatpush.bf16.msra.mxu0 %v1247
    %2053 = vmatpush.bf16.msra.mxu0 %v1243
    %2054 = vmatpush.bf16.msra.mxu0 %v1239
    %2055 = vmatpush.bf16.msra.mxu0 %v1235
    %2056 = vmatmul.bf16.gmra.mxu0 %v1741
    %v2057 = vpop.f32.mrf.mxu0
    %v2058 = vadd.f32 %v1135, %v2057
    %v2059 = vpop.f32.mrf.mxu0
    %2060 = vdwg.mxu0
    %2061 = vmatpush.bf16.msra.mxu0 %v1987
    %2062 = vmatpush.bf16.msra.mxu0 %v1983
    %2063 = vmatpush.bf16.msra.mxu0 %v1979
    %2064 = vmatpush.bf16.msra.mxu0 %v1975
    %2065 = vmatpush.bf16.msra.mxu0 %v1971
    %2066 = vmatpush.bf16.msra.mxu0 %v1967
    %2067 = vmatpush.bf16.msra.mxu0 %v1963
    %2068 = vmatpush.bf16.msra.mxu0 %v1959
    %2069 = vmatmul.bf16.gmra.mxu0 %v1413
    %v2070 = vpop.f32.mrf.mxu0
    %v2071 = vadd.f32 %v2058, %v2070
    %v2072 = vpop.f32.mrf.mxu0
    %2073 = vdwg.mxu0
    %2074 = vmatpush.bf16.msra.mxu0 %v1264
    %2075 = vmatpush.bf16.msra.mxu0 %v1260
    %2076 = vmatpush.bf16.msra.mxu0 %v1256
    %2077 = vmatpush.bf16.msra.mxu0 %v1252
    %2078 = vmatpush.bf16.msra.mxu0 %v1248
    %2079 = vmatpush.bf16.msra.mxu0 %v1244
    %2080 = vmatpush.bf16.msra.mxu0 %v1240
    %2081 = vmatpush.bf16.msra.mxu0 %v1236
    %2082 = vmatmul.bf16.gmra.mxu0 %v1741
    %v2083 = vpop.f32.mrf.mxu0
    %v2084 = vadd.f32 %v1136, %v2083
    %v2085 = vpop.f32.mrf.mxu0
    %2086 = vdwg.mxu0
    %2087 = vmatpush.bf16.msra.mxu0 %v1988
    %2088 = vmatpush.bf16.msra.mxu0 %v1984
    %2089 = vmatpush.bf16.msra.mxu0 %v1980
    %2090 = vmatpush.bf16.msra.mxu0 %v1976
    %2091 = vmatpush.bf16.msra.mxu0 %v1972
    %2092 = vmatpush.bf16.msra.mxu0 %v1968
    %2093 = vmatpush.bf16.msra.mxu0 %v1964
    %2094 = vmatpush.bf16.msra.mxu0 %v1960
    %2095 = vmatmul.bf16.gmra.mxu0 %v1413
    %v2096 = vpop.f32.mrf.mxu0
    %v2097 = vadd.f32 %v2084, %v2096
    %v2098 = vpop.f32.mrf.mxu0
    %2099 = vdwg.mxu0
    %2100 = vmatpush.bf16.msra.mxu0 %v1265
    %2101 = vmatpush.bf16.msra.mxu0 %v1261
    %2102 = vmatpush.bf16.msra.mxu0 %v1257
    %2103 = vmatpush.bf16.msra.mxu0 %v1253
    %2104 = vmatpush.bf16.msra.mxu0 %v1249
    %2105 = vmatpush.bf16.msra.mxu0 %v1245
    %2106 = vmatpush.bf16.msra.mxu0 %v1241
    %2107 = vmatpush.bf16.msra.mxu0 %v1237
    %2108 = vmatmul.bf16.gmra.mxu0 %v1741
    %v2109 = vpop.f32.mrf.mxu0
    %v2110 = vadd.f32 %v1137, %v2109
    %v2111 = vpop.f32.mrf.mxu0
    %2112 = vdwg.mxu0
    %2113 = vmatpush.bf16.msra.mxu0 %v1989
    %2114 = vmatpush.bf16.msra.mxu0 %v1985
    %2115 = vmatpush.bf16.msra.mxu0 %v1981
    %2116 = vmatpush.bf16.msra.mxu0 %v1977
    %2117 = vmatpush.bf16.msra.mxu0 %v1973
    %2118 = vmatpush.bf16.msra.mxu0 %v1969
    %2119 = vmatpush.bf16.msra.mxu0 %v1965
    %2120 = vmatpush.bf16.msra.mxu0 %v1961
    %2121 = vmatmul.bf16.gmra.mxu0 %v1413
    %v2122 = vpop.f32.mrf.mxu0
    %v2123 = vadd.f32 %v2110, %v2122
    %v2124 = vpop.f32.mrf.mxu0
    %2125 = vdwg.mxu0
    %v2126 = vxor.u32 %v2045, 2147483648
    %v2127 = vxor.u32 %v2071, 2147483648
    %v2128 = vxor.u32 %v2097, 2147483648
    %v2129 = vmul.f32 %v2126, 1.442695
    %v2130 = vpow.pop %v2129
    %v2131 = vmul.f32 %v2127, 1.442695
    %v2132 = vpow.pop %v2131
    %v2133 = vmul.f32 %v2128, 1.442695
    %v2134 = vpow.pop %v2133
    %v2135 = vadd.f32 %v2130, 1.0
    %v2136 = vadd.f32 %v2132, 1.0
    %v2137 = vadd.f32 %v2134, 1.0
    %v2138 = vrcp.pop %v2135
    %v2139 = vmul.f32 %v2135, %v2138
    %v2140 = vsub.f32 1.0, %v2139
    %v2141 = vmul.f32 %v2138, %v2140
    %v2142 = vadd.f32 %v2138, %v2141
    %vm2143 = vweird.f32 %v2135
    %vm2144 = vweird.f32 %v2138
    %vm2145 = vmor %vm2143, %vm2144
    %v2146 = vsel %vm2145, %v2138, %v2142
    %v2147 = vand.u32 2147483647, %v2135
    %vm2148 = vcmp.eq.f32.partialorder %v2147, 8.507059e+37
    %v2149 = vand.u32 %v2135, 2147483648
    %v2150 = vor.u32 1.1754944e-38, %v2149
    %v2151 = vsel %vm2148, %v2150, %v2146
    %v2152 = vmul.f32 1.0, %v2151
    %v2153 = vrcp.pop %v2136
    %v2154 = vmul.f32 %v2136, %v2153
    %v2155 = vsub.f32 1.0, %v2154
    %v2156 = vmul.f32 %v2153, %v2155
    %v2157 = vadd.f32 %v2153, %v2156
    %vm2158 = vweird.f32 %v2136
    %vm2159 = vweird.f32 %v2153
    %vm2160 = vmor %vm2158, %vm2159
    %v2161 = vsel %vm2160, %v2153, %v2157
    %v2162 = vand.u32 2147483647, %v2136
    %vm2163 = vcmp.eq.f32.partialorder %v2162, 8.507059e+37
    %v2164 = vand.u32 %v2136, 2147483648
    %v2165 = vor.u32 1.1754944e-38, %v2164
    %v2166 = vsel %vm2163, %v2165, %v2161
    %v2167 = vmul.f32 1.0, %v2166
    %v2168 = vrcp.pop %v2137
    %v2169 = vmul.f32 %v2137, %v2168
    %v2170 = vsub.f32 1.0, %v2169
    %v2171 = vmul.f32 %v2168, %v2170
    %v2172 = vadd.f32 %v2168, %v2171
    %vm2173 = vweird.f32 %v2137
    %vm2174 = vweird.f32 %v2168
    %vm2175 = vmor %vm2173, %vm2174
    %v2176 = vsel %vm2175, %v2168, %v2172
    %v2177 = vand.u32 2147483647, %v2137
    %vm2178 = vcmp.eq.f32.partialorder %v2177, 8.507059e+37
    %v2179 = vand.u32 %v2137, 2147483648
    %v2180 = vor.u32 1.1754944e-38, %v2179
    %v2181 = vsel %vm2178, %v2180, %v2176
    %v2182 = vmul.f32 1.0, %v2181
    %v2183 = vtanh.pop %v2123
    %v2184 = vmul.f32 %v2167, %v1410
    %v2185 = vmul.f32 %v2152, %v2183
    %v2186 = vadd.f32 %v2184, %v2185
    %v2187 = vtanh.pop %v2186
    %v2188 = vmul.f32 %v2182, %v2187
    %v2189 = vpack.c.bf16 %v2188, %v2188
    %2190 = vmatpush.bf16.msra.mxu0 %v694
    %2191 = vmatpush.bf16.msra.mxu0 %v690
    %2192 = vmatpush.bf16.msra.mxu0 %v686
    %2193 = vmatpush.bf16.msra.mxu0 %v682
    %2194 = vmatpush.bf16.msra.mxu0 %v678
    %2195 = vmatpush.bf16.msra.mxu0 %v674
    %2196 = vmatpush.bf16.msra.mxu0 %v670
    %2197 = vmatpush.bf16.msra.mxu0 %v666
    %2198 = vmatmul.bf16.gmra.mxu0 %v1861
    %v2199 = vpop.f32.mrf.mxu0
    %v2200 = vadd.f32 %v566, %v2199
    %v2201 = vpop.f32.mrf.mxu0
    %2202 = vdwg.mxu0
    %2203 = vmatpush.bf16.msra.mxu0 %v1538
    %2204 = vmatpush.bf16.msra.mxu0 %v1534
    %2205 = vmatpush.bf16.msra.mxu0 %v1530
    %2206 = vmatpush.bf16.msra.mxu0 %v1526
    %2207 = vmatpush.bf16.msra.mxu0 %v1522
    %2208 = vmatpush.bf16.msra.mxu0 %v1518
    %2209 = vmatpush.bf16.msra.mxu0 %v1514
    %2210 = vmatpush.bf16.msra.mxu0 %v1510
    %2211 = vmatmul.bf16.gmra.mxu0 %v1741
    %v2212 = vpop.f32.mrf.mxu0
    %v2213 = vadd.f32 %v2200, %v2212
    %v2214 = vpop.f32.mrf.mxu0
    %2215 = vdwg.mxu0
    %2216 = vmatpush.bf16.msra.mxu0 %v695
    %2217 = vmatpush.bf16.msra.mxu0 %v691
    %2218 = vmatpush.bf16.msra.mxu0 %v687
    %2219 = vmatpush.bf16.msra.mxu0 %v683
    %2220 = vmatpush.bf16.msra.mxu0 %v679
    %2221 = vmatpush.bf16.msra.mxu0 %v675
    %2222 = vmatpush.bf16.msra.mxu0 %v671
    %2223 = vmatpush.bf16.msra.mxu0 %v667
    %2224 = vmatmul.bf16.gmra.mxu0 %v1861
    %v2225 = vpop.f32.mrf.mxu0
    %v2226 = vadd.f32 %v567, %v2225
    %v2227 = vpop.f32.mrf.mxu0
    %2228 = vdwg.mxu0
    %2229 = vmatpush.bf16.msra.mxu0 %v1539
    %2230 = vmatpush.bf16.msra.mxu0 %v1535
    %2231 = vmatpush.bf16.msra.mxu0 %v1531
    %2232 = vmatpush.bf16.msra.mxu0 %v1527
    %2233 = vmatpush.bf16.msra.mxu0 %v1523
    %2234 = vmatpush.bf16.msra.mxu0 %v1519
    %2235 = vmatpush.bf16.msra.mxu0 %v1515
    %2236 = vmatpush.bf16.msra.mxu0 %v1511
    %2237 = vmatmul.bf16.gmra.mxu0 %v1741
    %v2238 = vpop.f32.mrf.mxu0
    %v2239 = vadd.f32 %v2226, %v2238
    %v2240 = vpop.f32.mrf.mxu0
    %2241 = vdwg.mxu0
    %2242 = vmatpush.bf16.msra.mxu0 %v696
    %2243 = vmatpush.bf16.msra.mxu0 %v692
    %2244 = vmatpush.bf16.msra.mxu0 %v688
    %2245 = vmatpush.bf16.msra.mxu0 %v684
    %2246 = vmatpush.bf16.msra.mxu0 %v680
    %2247 = vmatpush.bf16.msra.mxu0 %v676
    %2248 = vmatpush.bf16.msra.mxu0 %v672
    %2249 = vmatpush.bf16.msra.mxu0 %v668
    %2250 = vmatmul.bf16.gmra.mxu0 %v1861
    %v2251 = vpop.f32.mrf.mxu0
    %v2252 = vadd.f32 %v568, %v2251
    %v2253 = vpop.f32.mrf.mxu0
    %2254 = vdwg.mxu0
    %2255 = vmatpush.bf16.msra.mxu0 %v1540
    %2256 = vmatpush.bf16.msra.mxu0 %v1536
    %2257 = vmatpush.bf16.msra.mxu0 %v1532
    %2258 = vmatpush.bf16.msra.mxu0 %v1528
    %2259 = vmatpush.bf16.msra.mxu0 %v1524
    %2260 = vmatpush.bf16.msra.mxu0 %v1520
    %2261 = vmatpush.bf16.msra.mxu0 %v1516
    %2262 = vmatpush.bf16.msra.mxu0 %v1512
    %2263 = vmatmul.bf16.gmra.mxu0 %v1741
    %v2264 = vpop.f32.mrf.mxu0
    %v2265 = vadd.f32 %v2252, %v2264
    %v2266 = vpop.f32.mrf.mxu0
    %2267 = vdwg.mxu0
    %2268 = vmatpush.bf16.msra.mxu0 %v697
    %2269 = vmatpush.bf16.msra.mxu0 %v693
    %2270 = vmatpush.bf16.msra.mxu0 %v689
    %2271 = vmatpush.bf16.msra.mxu0 %v685
    %2272 = vmatpush.bf16.msra.mxu0 %v681
    %2273 = vmatpush.bf16.msra.mxu0 %v677
    %2274 = vmatpush.bf16.msra.mxu0 %v673
    %2275 = vmatpush.bf16.msra.mxu0 %v669
    %2276 = vmatmul.bf16.gmra.mxu0 %v1861
    %v2277 = vpop.f32.mrf.mxu0
    %v2278 = vadd.f32 %v569, %v2277
    %v2279 = vpop.f32.mrf.mxu0
    %2280 = vdwg.mxu0
    %2281 = vmatpush.bf16.msra.mxu0 %v1541
    %2282 = vmatpush.bf16.msra.mxu0 %v1537
    %2283 = vmatpush.bf16.msra.mxu0 %v1533
    %2284 = vmatpush.bf16.msra.mxu0 %v1529
    %2285 = vmatpush.bf16.msra.mxu0 %v1525
    %2286 = vmatpush.bf16.msra.mxu0 %v1521
    %2287 = vmatpush.bf16.msra.mxu0 %v1517
    %2288 = vmatpush.bf16.msra.mxu0 %v1513
    %2289 = vmatmul.bf16.gmra.mxu0 %v1741
    %v2290 = vpop.f32.mrf.mxu0
    %v2291 = vadd.f32 %v2278, %v2290
    %v2292 = vpop.f32.mrf.mxu0
    %2293 = vdwg.mxu0
    %v2294 = vxor.u32 %v2213, 2147483648
    %v2295 = vxor.u32 %v2239, 2147483648
    %v2296 = vxor.u32 %v2265, 2147483648
    %v2297 = vmul.f32 %v2294, 1.442695
    %v2298 = vpow.pop %v2297
    %v2299 = vmul.f32 %v2295, 1.442695
    %v2300 = vpow.pop %v2299
    %v2301 = vmul.f32 %v2296, 1.442695
    %v2302 = vpow.pop %v2301
    %v2303 = vadd.f32 %v2298, 1.0
    %v2304 = vadd.f32 %v2300, 1.0
    %v2305 = vadd.f32 %v2302, 1.0
    %v2306 = vrcp.pop %v2303
    %v2307 = vmul.f32 %v2303, %v2306
    %v2308 = vsub.f32 1.0, %v2307
    %v2309 = vmul.f32 %v2306, %v2308
    %v2310 = vadd.f32 %v2306, %v2309
    %vm2311 = vweird.f32 %v2303
    %vm2312 = vweird.f32 %v2306
    %vm2313 = vmor %vm2311, %vm2312
    %v2314 = vsel %vm2313, %v2306, %v2310
    %v2315 = vand.u32 2147483647, %v2303
    %vm2316 = vcmp.eq.f32.partialorder %v2315, 8.507059e+37
    %v2317 = vand.u32 %v2303, 2147483648
    %v2318 = vor.u32 1.1754944e-38, %v2317
    %v2319 = vsel %vm2316, %v2318, %v2314
    %v2320 = vmul.f32 1.0, %v2319
    %v2321 = vrcp.pop %v2304
    %v2322 = vmul.f32 %v2304, %v2321
    %v2323 = vsub.f32 1.0, %v2322
    %v2324 = vmul.f32 %v2321, %v2323
    %v2325 = vadd.f32 %v2321, %v2324
    %vm2326 = vweird.f32 %v2304
    %vm2327 = vweird.f32 %v2321
    %vm2328 = vmor %vm2326, %vm2327
    %v2329 = vsel %vm2328, %v2321, %v2325
    %v2330 = vand.u32 2147483647, %v2304
    %vm2331 = vcmp.eq.f32.partialorder %v2330, 8.507059e+37
    %v2332 = vand.u32 %v2304, 2147483648
    %v2333 = vor.u32 1.1754944e-38, %v2332
    %v2334 = vsel %vm2331, %v2333, %v2329
    %v2335 = vmul.f32 1.0, %v2334
    %v2336 = vrcp.pop %v2305
    %v2337 = vmul.f32 %v2305, %v2336
    %v2338 = vsub.f32 1.0, %v2337
    %v2339 = vmul.f32 %v2336, %v2338
    %v2340 = vadd.f32 %v2336, %v2339
    %vm2341 = vweird.f32 %v2305
    %vm2342 = vweird.f32 %v2336
    %vm2343 = vmor %vm2341, %vm2342
    %v2344 = vsel %vm2343, %v2336, %v2340
    %v2345 = vand.u32 2147483647, %v2305
    %vm2346 = vcmp.eq.f32.partialorder %v2345, 8.507059e+37
    %v2347 = vand.u32 %v2305, 2147483648
    %v2348 = vor.u32 1.1754944e-38, %v2347
    %v2349 = vsel %vm2346, %v2348, %v2344
    %v2350 = vmul.f32 1.0, %v2349
    %v2351 = vtanh.pop %v2291
    %v2352 = vmul.f32 %v2335, %v1738
    %v2353 = vmul.f32 %v2320, %v2351
    %v2354 = vadd.f32 %v2352, %v2353
    %v2355 = vtanh.pop %v2354
    %v2356 = vmul.f32 %v2350, %v2355
    %v2357 = vpack.c.bf16 %v2356, %v2356
    %2358 = vmatpush.bf16.msra.mxu0 %v970
    %2359 = vmatpush.bf16.msra.mxu0 %v966
    %2360 = vmatpush.bf16.msra.mxu0 %v962
    %2361 = vmatpush.bf16.msra.mxu0 %v958
    %2362 = vmatpush.bf16.msra.mxu0 %v954
    %2363 = vmatpush.bf16.msra.mxu0 %v950
    %2364 = vmatpush.bf16.msra.mxu0 %v946
    %2365 = vmatpush.bf16.msra.mxu0 %v942
    %2366 = vmatmul.bf16.gmra.mxu0 %v1861
    %v2367 = vpop.f32.mrf.mxu0
    %v2368 = vadd.f32 0.0, %v2367
    %v2369 = vpop.f32.mrf.mxu0
    %2370 = vdwg.mxu0
    %2371 = vmatpush.bf16.msra.mxu0 %v971
    %2372 = vmatpush.bf16.msra.mxu0 %v967
    %2373 = vmatpush.bf16.msra.mxu0 %v963
    %2374 = vmatpush.bf16.msra.mxu0 %v959
    %2375 = vmatpush.bf16.msra.mxu0 %v955
    %2376 = vmatpush.bf16.msra.mxu0 %v951
    %2377 = vmatpush.bf16.msra.mxu0 %v947
    %2378 = vmatpush.bf16.msra.mxu0 %v943
    %2379 = vmatmul.bf16.gmra.mxu0 %v1861
    %v2380 = vpop.f32.mrf.mxu0
    %v2381 = vadd.f32 0.0, %v2380
    %v2382 = vpop.f32.mrf.mxu0
    %2383 = vdwg.mxu0
    %2384 = vmatpush.bf16.msra.mxu0 %v972
    %2385 = vmatpush.bf16.msra.mxu0 %v968
    %2386 = vmatpush.bf16.msra.mxu0 %v964
    %2387 = vmatpush.bf16.msra.mxu0 %v960
    %2388 = vmatpush.bf16.msra.mxu0 %v956
    %2389 = vmatpush.bf16.msra.mxu0 %v952
    %2390 = vmatpush.bf16.msra.mxu0 %v948
    %2391 = vmatpush.bf16.msra.mxu0 %v944
    %2392 = vmatmul.bf16.gmra.mxu0 %v1861
    %v2393 = vpop.f32.mrf.mxu0
    %v2394 = vadd.f32 0.0, %v2393
    %v2395 = vpop.f32.mrf.mxu0
    %2396 = vdwg.mxu0
    %2397 = vmatpush.bf16.msra.mxu0 %v973
    %2398 = vmatpush.bf16.msra.mxu0 %v969
    %2399 = vmatpush.bf16.msra.mxu0 %v965
    %2400 = vmatpush.bf16.msra.mxu0 %v961
    %2401 = vmatpush.bf16.msra.mxu0 %v957
    %2402 = vmatpush.bf16.msra.mxu0 %v953
    %2403 = vmatpush.bf16.msra.mxu0 %v949
    %2404 = vmatpush.bf16.msra.mxu0 %v945
    %2405 = vmatmul.bf16.gmra.mxu0 %v1861
    %v2406 = vpop.f32.mrf.mxu0
    %v2407 = vadd.f32 0.0, %v2406
    %v2408 = vpop.f32.mrf.mxu0
    %2409 = vdwg.mxu0
    %v2410 = vadd.f32 %v148, %v2368
    %v2411 = vadd.f32 %v201, %v2381
    %v2412 = vadd.f32 %v254, %v2394
    %v2413 = vadd.f32 %v307, %v2407
    %v2414 = vxor.u32 %v2410, 2147483648
    %v2415 = vxor.u32 %v2411, 2147483648
    %v2416 = vxor.u32 %v2412, 2147483648
    %v2417 = vmul.f32 %v2414, 1.442695
    %v2418 = vpow.pop %v2417
    %v2419 = vmul.f32 %v2415, 1.442695
    %v2420 = vpow.pop %v2419
    %v2421 = vmul.f32 %v2416, 1.442695
    %v2422 = vpow.pop %v2421
    %v2423 = vadd.f32 %v2418, 1.0
    %v2424 = vadd.f32 %v2420, 1.0
    %v2425 = vadd.f32 %v2422, 1.0
    %v2426 = vrcp.pop %v2423
    %v2427 = vmul.f32 %v2423, %v2426
    %v2428 = vsub.f32 1.0, %v2427
    %v2429 = vmul.f32 %v2426, %v2428
    %v2430 = vadd.f32 %v2426, %v2429
    %vm2431 = vweird.f32 %v2423
    %vm2432 = vweird.f32 %v2426
    %vm2433 = vmor %vm2431, %vm2432
    %v2434 = vsel %vm2433, %v2426, %v2430
    %v2435 = vand.u32 2147483647, %v2423
    %vm2436 = vcmp.eq.f32.partialorder %v2435, 8.507059e+37
    %v2437 = vand.u32 %v2423, 2147483648
    %v2438 = vor.u32 1.1754944e-38, %v2437
    %v2439 = vsel %vm2436, %v2438, %v2434
    %v2440 = vmul.f32 1.0, %v2439
    %v2441 = vrcp.pop %v2424
    %v2442 = vmul.f32 %v2424, %v2441
    %v2443 = vsub.f32 1.0, %v2442
    %v2444 = vmul.f32 %v2441, %v2443
    %v2445 = vadd.f32 %v2441, %v2444
    %vm2446 = vweird.f32 %v2424
    %vm2447 = vweird.f32 %v2441
    %vm2448 = vmor %vm2446, %vm2447
    %v2449 = vsel %vm2448, %v2441, %v2445
    %v2450 = vand.u32 2147483647, %v2424
    %vm2451 = vcmp.eq.f32.partialorder %v2450, 8.507059e+37
    %v2452 = vand.u32 %v2424, 2147483648
    %v2453 = vor.u32 1.1754944e-38, %v2452
    %v2454 = vsel %vm2451, %v2453, %v2449
    %v2455 = vmul.f32 1.0, %v2454
    %v2456 = vrcp.pop %v2425
    %v2457 = vmul.f32 %v2425, %v2456
    %v2458 = vsub.f32 1.0, %v2457
    %v2459 = vmul.f32 %v2456, %v2458
    %v2460 = vadd.f32 %v2456, %v2459
    %vm2461 = vweird.f32 %v2425
    %vm2462 = vweird.f32 %v2456
    %vm2463 = vmor %vm2461, %vm2462
    %v2464 = vsel %vm2463, %v2456, %v2460
    %v2465 = vand.u32 2147483647, %v2425
    %vm2466 = vcmp.eq.f32.partialorder %v2465, 8.507059e+37
    %v2467 = vand.u32 %v2425, 2147483648
    %v2468 = vor.u32 1.1754944e-38, %v2467
    %v2469 = vsel %vm2466, %v2468, %v2464
    %v2470 = vmul.f32 1.0, %v2469
    %v2471 = vtanh.pop %v2413
    %v2472 = vmul.f32 %v2455, %v1858
    %v2473 = vmul.f32 %v2440, %v2471
    %v2474 = vadd.f32 %v2472, %v2473
    %v2475 = vtanh.pop %v2474
    %v2476 = vmul.f32 %v2470, %v2475
    %v2477 = vpack.c.bf16 %v2476, %v2476
    %2478 = vmatpush.bf16.msra.mxu0 %v1262
    %2479 = vmatpush.bf16.msra.mxu0 %v1258
    %2480 = vmatpush.bf16.msra.mxu0 %v1254
    %2481 = vmatpush.bf16.msra.mxu0 %v1250
    %2482 = vmatpush.bf16.msra.mxu0 %v1246
    %2483 = vmatpush.bf16.msra.mxu0 %v1242
    %2484 = vmatpush.bf16.msra.mxu0 %v1238
    %2485 = vmatpush.bf16.msra.mxu0 %v1234
    %2486 = vmatmul.bf16.gmra.mxu0 %v2357
    %v2487 = vpop.f32.mrf.mxu0
    %v2488 = vadd.f32 %v1134, %v2487
    %v2489 = vpop.f32.mrf.mxu0
    %2490 = vdwg.mxu0
    %2491 = vmatpush.bf16.msra.mxu0 %v1986
    %2492 = vmatpush.bf16.msra.mxu0 %v1982
    %2493 = vmatpush.bf16.msra.mxu0 %v1978
    %2494 = vmatpush.bf16.msra.mxu0 %v1974
    %2495 = vmatpush.bf16.msra.mxu0 %v1970
    %2496 = vmatpush.bf16.msra.mxu0 %v1966
    %2497 = vmatpush.bf16.msra.mxu0 %v1962
    %2498 = vmatpush.bf16.msra.mxu0 %v1958
    %2499 = vmatmul.bf16.gmra.mxu0 %v2189
    %v2500 = vpop.f32.mrf.mxu0
    %v2501 = vadd.f32 %v2488, %v2500
    %v2502 = vpop.f32.mrf.mxu0
    %2503 = vdwg.mxu0
    %2504 = vmatpush.bf16.msra.mxu0 %v1263
    %2505 = vmatpush.bf16.msra.mxu0 %v1259
    %2506 = vmatpush.bf16.msra.mxu0 %v1255
    %2507 = vmatpush.bf16.msra.mxu0 %v1251
    %2508 = vmatpush.bf16.msra.mxu0 %v1247
    %2509 = vmatpush.bf16.msra.mxu0 %v1243
    %2510 = vmatpush.bf16.msra.mxu0 %v1239
    %2511 = vmatpush.bf16.msra.mxu0 %v1235
    %2512 = vmatmul.bf16.gmra.mxu0 %v2357
    %v2513 = vpop.f32.mrf.mxu0
    %v2514 = vadd.f32 %v1135, %v2513
    %v2515 = vpop.f32.mrf.mxu0
    %2516 = vdwg.mxu0
    %2517 = vmatpush.bf16.msra.mxu0 %v1987
    %2518 = vmatpush.bf16.msra.mxu0 %v1983
    %2519 = vmatpush.bf16.msra.mxu0 %v1979
    %2520 = vmatpush.bf16.msra.mxu0 %v1975
    %2521 = vmatpush.bf16.msra.mxu0 %v1971
    %2522 = vmatpush.bf16.msra.mxu0 %v1967
    %2523 = vmatpush.bf16.msra.mxu0 %v1963
    %2524 = vmatpush.bf16.msra.mxu0 %v1959
    %2525 = vmatmul.bf16.gmra.mxu0 %v2189
    %v2526 = vpop.f32.mrf.mxu0
    %v2527 = vadd.f32 %v2514, %v2526
    %v2528 = vpop.f32.mrf.mxu0
    %2529 = vdwg.mxu0
    %2530 = vmatpush.bf16.msra.mxu0 %v1264
    %2531 = vmatpush.bf16.msra.mxu0 %v1260
    %2532 = vmatpush.bf16.msra.mxu0 %v1256
    %2533 = vmatpush.bf16.msra.mxu0 %v1252
    %2534 = vmatpush.bf16.msra.mxu0 %v1248
    %2535 = vmatpush.bf16.msra.mxu0 %v1244
    %2536 = vmatpush.bf16.msra.mxu0 %v1240
    %2537 = vmatpush.bf16.msra.mxu0 %v1236
    %2538 = vmatmul.bf16.gmra.mxu0 %v2357
    %v2539 = vpop.f32.mrf.mxu0
    %v2540 = vadd.f32 %v1136, %v2539
    %v2541 = vpop.f32.mrf.mxu0
    %2542 = vdwg.mxu0
    %2543 = vmatpush.bf16.msra.mxu0 %v1988
    %2544 = vmatpush.bf16.msra.mxu0 %v1984
    %2545 = vmatpush.bf16.msra.mxu0 %v1980
    %2546 = vmatpush.bf16.msra.mxu0 %v1976
    %2547 = vmatpush.bf16.msra.mxu0 %v1972
    %2548 = vmatpush.bf16.msra.mxu0 %v1968
    %2549 = vmatpush.bf16.msra.mxu0 %v1964
    %2550 = vmatpush.bf16.msra.mxu0 %v1960
    %2551 = vmatmul.bf16.gmra.mxu0 %v2189
    %v2552 = vpop.f32.mrf.mxu0
    %v2553 = vadd.f32 %v2540, %v2552
    %v2554 = vpop.f32.mrf.mxu0
    %2555 = vdwg.mxu0
    %2556 = vmatpush.bf16.msra.mxu0 %v1265
    %2557 = vmatpush.bf16.msra.mxu0 %v1261
    %2558 = vmatpush.bf16.msra.mxu0 %v1257
    %2559 = vmatpush.bf16.msra.mxu0 %v1253
    %2560 = vmatpush.bf16.msra.mxu0 %v1249
    %2561 = vmatpush.bf16.msra.mxu0 %v1245
    %2562 = vmatpush.bf16.msra.mxu0 %v1241
    %2563 = vmatpush.bf16.msra.mxu0 %v1237
    %2564 = vmatmul.bf16.gmra.mxu0 %v2357
    %v2565 = vpop.f32.mrf.mxu0
    %v2566 = vadd.f32 %v1137, %v2565
    %v2567 = vpop.f32.mrf.mxu0
    %2568 = vdwg.mxu0
    %2569 = vmatpush.bf16.msra.mxu0 %v1989
    %2570 = vmatpush.bf16.msra.mxu0 %v1985
    %2571 = vmatpush.bf16.msra.mxu0 %v1981
    %2572 = vmatpush.bf16.msra.mxu0 %v1977
    %2573 = vmatpush.bf16.msra.mxu0 %v1973
    %2574 = vmatpush.bf16.msra.mxu0 %v1969
    %2575 = vmatpush.bf16.msra.mxu0 %v1965
    %2576 = vmatpush.bf16.msra.mxu0 %v1961
    %2577 = vmatmul.bf16.gmra.mxu0 %v2189
    %v2578 = vpop.f32.mrf.mxu0
    %v2579 = vadd.f32 %v2566, %v2578
    %v2580 = vpop.f32.mrf.mxu0
    %2581 = vdwg.mxu0
    %v2582 = vxor.u32 %v2501, 2147483648
    %v2583 = vxor.u32 %v2527, 2147483648
    %v2584 = vxor.u32 %v2553, 2147483648
    %v2585 = vmul.f32 %v2582, 1.442695
    %v2586 = vpow.pop %v2585
    %v2587 = vmul.f32 %v2583, 1.442695
    %v2588 = vpow.pop %v2587
    %v2589 = vmul.f32 %v2584, 1.442695
    %v2590 = vpow.pop %v2589
    %v2591 = vadd.f32 %v2586, 1.0
    %v2592 = vadd.f32 %v2588, 1.0
    %v2593 = vadd.f32 %v2590, 1.0
    %v2594 = vrcp.pop %v2591
    %v2595 = vmul.f32 %v2591, %v2594
    %v2596 = vsub.f32 1.0, %v2595
    %v2597 = vmul.f32 %v2594, %v2596
    %v2598 = vadd.f32 %v2594, %v2597
    %vm2599 = vweird.f32 %v2591
    %vm2600 = vweird.f32 %v2594
    %vm2601 = vmor %vm2599, %vm2600
    %v2602 = vsel %vm2601, %v2594, %v2598
    %v2603 = vand.u32 2147483647, %v2591
    %vm2604 = vcmp.eq.f32.partialorder %v2603, 8.507059e+37
    %v2605 = vand.u32 %v2591, 2147483648
    %v2606 = vor.u32 1.1754944e-38, %v2605
    %v2607 = vsel %vm2604, %v2606, %v2602
    %v2608 = vmul.f32 1.0, %v2607
    %v2609 = vrcp.pop %v2592
    %v2610 = vmul.f32 %v2592, %v2609
    %v2611 = vsub.f32 1.0, %v2610
    %v2612 = vmul.f32 %v2609, %v2611
    %v2613 = vadd.f32 %v2609, %v2612
    %vm2614 = vweird.f32 %v2592
    %vm2615 = vweird.f32 %v2609
    %vm2616 = vmor %vm2614, %vm2615
    %v2617 = vsel %vm2616, %v2609, %v2613
    %v2618 = vand.u32 2147483647, %v2592
    %vm2619 = vcmp.eq.f32.partialorder %v2618, 8.507059e+37
    %v2620 = vand.u32 %v2592, 2147483648
    %v2621 = vor.u32 1.1754944e-38, %v2620
    %v2622 = vsel %vm2619, %v2621, %v2617
    %v2623 = vmul.f32 1.0, %v2622
    %v2624 = vrcp.pop %v2593
    %v2625 = vmul.f32 %v2593, %v2624
    %v2626 = vsub.f32 1.0, %v2625
    %v2627 = vmul.f32 %v2624, %v2626
    %v2628 = vadd.f32 %v2624, %v2627
    %vm2629 = vweird.f32 %v2593
    %vm2630 = vweird.f32 %v2624
    %vm2631 = vmor %vm2629, %vm2630
    %v2632 = vsel %vm2631, %v2624, %v2628
    %v2633 = vand.u32 2147483647, %v2593
    %vm2634 = vcmp.eq.f32.partialorder %v2633, 8.507059e+37
    %v2635 = vand.u32 %v2593, 2147483648
    %v2636 = vor.u32 1.1754944e-38, %v2635
    %v2637 = vsel %vm2634, %v2636, %v2632
    %v2638 = vmul.f32 1.0, %v2637
    %v2639 = vtanh.pop %v2579
    %v2640 = vmul.f32 %v2623, %v2186
    %v2641 = vmul.f32 %v2608, %v2639
    %v2642 = vadd.f32 %v2640, %v2641
    %v2643 = vtanh.pop %v2642
    %v2644 = vmul.f32 %v2638, %v2643
    %v2645 = vpack.c.bf16 %v2644, %v2644
    %2646 = vmatpush.bf16.msra.mxu0 %v694
    %2647 = vmatpush.bf16.msra.mxu0 %v690
    %2648 = vmatpush.bf16.msra.mxu0 %v686
    %2649 = vmatpush.bf16.msra.mxu0 %v682
    %2650 = vmatpush.bf16.msra.mxu0 %v678
    %2651 = vmatpush.bf16.msra.mxu0 %v674
    %2652 = vmatpush.bf16.msra.mxu0 %v670
    %2653 = vmatpush.bf16.msra.mxu0 %v666
    %2654 = vmatmul.bf16.gmra.mxu0 %v2477
    %v2655 = vpop.f32.mrf.mxu0
    %v2656 = vadd.f32 %v566, %v2655
    %v2657 = vpop.f32.mrf.mxu0
    %2658 = vdwg.mxu0
    %2659 = vmatpush.bf16.msra.mxu0 %v1538
    %2660 = vmatpush.bf16.msra.mxu0 %v1534
    %2661 = vmatpush.bf16.msra.mxu0 %v1530
    %2662 = vmatpush.bf16.msra.mxu0 %v1526
    %2663 = vmatpush.bf16.msra.mxu0 %v1522
    %2664 = vmatpush.bf16.msra.mxu0 %v1518
    %2665 = vmatpush.bf16.msra.mxu0 %v1514
    %2666 = vmatpush.bf16.msra.mxu0 %v1510
    %2667 = vmatmul.bf16.gmra.mxu0 %v2357
    %v2668 = vpop.f32.mrf.mxu0
    %v2669 = vadd.f32 %v2656, %v2668
    %v2670 = vpop.f32.mrf.mxu0
    %2671 = vdwg.mxu0
    %2672 = vmatpush.bf16.msra.mxu0 %v695
    %2673 = vmatpush.bf16.msra.mxu0 %v691
    %2674 = vmatpush.bf16.msra.mxu0 %v687
    %2675 = vmatpush.bf16.msra.mxu0 %v683
    %2676 = vmatpush.bf16.msra.mxu0 %v679
    %2677 = vmatpush.bf16.msra.mxu0 %v675
    %2678 = vmatpush.bf16.msra.mxu0 %v671
    %2679 = vmatpush.bf16.msra.mxu0 %v667
    %2680 = vmatmul.bf16.gmra.mxu0 %v2477
    %v2681 = vpop.f32.mrf.mxu0
    %v2682 = vadd.f32 %v567, %v2681
    %v2683 = vpop.f32.mrf.mxu0
    %2684 = vdwg.mxu0
    %2685 = vmatpush.bf16.msra.mxu0 %v1539
    %2686 = vmatpush.bf16.msra.mxu0 %v1535
    %2687 = vmatpush.bf16.msra.mxu0 %v1531
    %2688 = vmatpush.bf16.msra.mxu0 %v1527
    %2689 = vmatpush.bf16.msra.mxu0 %v1523
    %2690 = vmatpush.bf16.msra.mxu0 %v1519
    %2691 = vmatpush.bf16.msra.mxu0 %v1515
    %2692 = vmatpush.bf16.msra.mxu0 %v1511
    %2693 = vmatmul.bf16.gmra.mxu0 %v2357
    %v2694 = vpop.f32.mrf.mxu0
    %v2695 = vadd.f32 %v2682, %v2694
    %v2696 = vpop.f32.mrf.mxu0
    %2697 = vdwg.mxu0
    %2698 = vmatpush.bf16.msra.mxu0 %v696
    %2699 = vmatpush.bf16.msra.mxu0 %v692
    %2700 = vmatpush.bf16.msra.mxu0 %v688
    %2701 = vmatpush.bf16.msra.mxu0 %v684
    %2702 = vmatpush.bf16.msra.mxu0 %v680
    %2703 = vmatpush.bf16.msra.mxu0 %v676
    %2704 = vmatpush.bf16.msra.mxu0 %v672
    %2705 = vmatpush.bf16.msra.mxu0 %v668
    %2706 = vmatmul.bf16.gmra.mxu0 %v2477
    %v2707 = vpop.f32.mrf.mxu0
    %v2708 = vadd.f32 %v568, %v2707
    %v2709 = vpop.f32.mrf.mxu0
    %2710 = vdwg.mxu0
    %2711 = vmatpush.bf16.msra.mxu0 %v1540
    %2712 = vmatpush.bf16.msra.mxu0 %v1536
    %2713 = vmatpush.bf16.msra.mxu0 %v1532
    %2714 = vmatpush.bf16.msra.mxu0 %v1528
    %2715 = vmatpush.bf16.msra.mxu0 %v1524
    %2716 = vmatpush.bf16.msra.mxu0 %v1520
    %2717 = vmatpush.bf16.msra.mxu0 %v1516
    %2718 = vmatpush.bf16.msra.mxu0 %v1512
    %2719 = vmatmul.bf16.gmra.mxu0 %v2357
    %v2720 = vpop.f32.mrf.mxu0
    %v2721 = vadd.f32 %v2708, %v2720
    %v2722 = vpop.f32.mrf.mxu0
    %2723 = vdwg.mxu0
    %2724 = vmatpush.bf16.msra.mxu0 %v697
    %2725 = vmatpush.bf16.msra.mxu0 %v693
    %2726 = vmatpush.bf16.msra.mxu0 %v689
    %2727 = vmatpush.bf16.msra.mxu0 %v685
    %2728 = vmatpush.bf16.msra.mxu0 %v681
    %2729 = vmatpush.bf16.msra.mxu0 %v677
    %2730 = vmatpush.bf16.msra.mxu0 %v673
    %2731 = vmatpush.bf16.msra.mxu0 %v669
    %2732 = vmatmul.bf16.gmra.mxu0 %v2477
    %v2733 = vpop.f32.mrf.mxu0
    %v2734 = vadd.f32 %v569, %v2733
    %v2735 = vpop.f32.mrf.mxu0
    %2736 = vdwg.mxu0
    %2737 = vmatpush.bf16.msra.mxu0 %v1541
    %2738 = vmatpush.bf16.msra.mxu0 %v1537
    %2739 = vmatpush.bf16.msra.mxu0 %v1533
    %2740 = vmatpush.bf16.msra.mxu0 %v1529
    %2741 = vmatpush.bf16.msra.mxu0 %v1525
    %2742 = vmatpush.bf16.msra.mxu0 %v1521
    %2743 = vmatpush.bf16.msra.mxu0 %v1517
    %2744 = vmatpush.bf16.msra.mxu0 %v1513
    %2745 = vmatmul.bf16.gmra.mxu0 %v2357
    %v2746 = vpop.f32.mrf.mxu0
    %v2747 = vadd.f32 %v2734, %v2746
    %v2748 = vpop.f32.mrf.mxu0
    %2749 = vdwg.mxu0
    %v2750 = vxor.u32 %v2669, 2147483648
    %v2751 = vxor.u32 %v2695, 2147483648
    %v2752 = vxor.u32 %v2721, 2147483648
    %v2753 = vmul.f32 %v2750, 1.442695
    %v2754 = vpow.pop %v2753
    %v2755 = vmul.f32 %v2751, 1.442695
    %v2756 = vpow.pop %v2755
    %v2757 = vmul.f32 %v2752, 1.442695
    %v2758 = vpow.pop %v2757
    %v2759 = vadd.f32 %v2754, 1.0
    %v2760 = vadd.f32 %v2756, 1.0
    %v2761 = vadd.f32 %v2758, 1.0
    %v2762 = vrcp.pop %v2759
    %v2763 = vmul.f32 %v2759, %v2762
    %v2764 = vsub.f32 1.0, %v2763
    %v2765 = vmul.f32 %v2762, %v2764
    %v2766 = vadd.f32 %v2762, %v2765
    %vm2767 = vweird.f32 %v2759
    %vm2768 = vweird.f32 %v2762
    %vm2769 = vmor %vm2767, %vm2768
    %v2770 = vsel %vm2769, %v2762, %v2766
    %v2771 = vand.u32 2147483647, %v2759
    %vm2772 = vcmp.eq.f32.partialorder %v2771, 8.507059e+37
    %v2773 = vand.u32 %v2759, 2147483648
    %v2774 = vor.u32 1.1754944e-38, %v2773
    %v2775 = vsel %vm2772, %v2774, %v2770
    %v2776 = vmul.f32 1.0, %v2775
    %v2777 = vrcp.pop %v2760
    %v2778 = vmul.f32 %v2760, %v2777
    %v2779 = vsub.f32 1.0, %v2778
    %v2780 = vmul.f32 %v2777, %v2779
    %v2781 = vadd.f32 %v2777, %v2780
    %vm2782 = vweird.f32 %v2760
    %vm2783 = vweird.f32 %v2777
    %vm2784 = vmor %vm2782, %vm2783
    %v2785 = vsel %vm2784, %v2777, %v2781
    %v2786 = vand.u32 2147483647, %v2760
    %vm2787 = vcmp.eq.f32.partialorder %v2786, 8.507059e+37
    %v2788 = vand.u32 %v2760, 2147483648
    %v2789 = vor.u32 1.1754944e-38, %v2788
    %v2790 = vsel %vm2787, %v2789, %v2785
    %v2791 = vmul.f32 1.0, %v2790
    %v2792 = vrcp.pop %v2761
    %v2793 = vmul.f32 %v2761, %v2792
    %v2794 = vsub.f32 1.0, %v2793
    %v2795 = vmul.f32 %v2792, %v2794
    %v2796 = vadd.f32 %v2792, %v2795
    %vm2797 = vweird.f32 %v2761
    %vm2798 = vweird.f32 %v2792
    %vm2799 = vmor %vm2797, %vm2798
    %v2800 = vsel %vm2799, %v2792, %v2796
    %v2801 = vand.u32 2147483647, %v2761
    %vm2802 = vcmp.eq.f32.partialorder %v2801, 8.507059e+37
    %v2803 = vand.u32 %v2761, 2147483648
    %v2804 = vor.u32 1.1754944e-38, %v2803
    %v2805 = vsel %vm2802, %v2804, %v2800
    %v2806 = vmul.f32 1.0, %v2805
    %v2807 = vtanh.pop %v2747
    %v2808 = vmul.f32 %v2791, %v2354
    %v2809 = vmul.f32 %v2776, %v2807
    %v2810 = vadd.f32 %v2808, %v2809
    %v2811 = vtanh.pop %v2810
    %v2812 = vmul.f32 %v2806, %v2811
    %v2813 = vpack.c.bf16 %v2812, %v2812
    %2814 = vmatpush.bf16.msra.mxu0 %v970
    %2815 = vmatpush.bf16.msra.mxu0 %v966
    %2816 = vmatpush.bf16.msra.mxu0 %v962
    %2817 = vmatpush.bf16.msra.mxu0 %v958
    %2818 = vmatpush.bf16.msra.mxu0 %v954
    %2819 = vmatpush.bf16.msra.mxu0 %v950
    %2820 = vmatpush.bf16.msra.mxu0 %v946
    %2821 = vmatpush.bf16.msra.mxu0 %v942
    %2822 = vmatmul.bf16.gmra.mxu0 %v2477
    %v2823 = vpop.f32.mrf.mxu0
    %v2824 = vadd.f32 0.0, %v2823
    %v2825 = vpop.f32.mrf.mxu0
    %2826 = vdwg.mxu0
    %2827 = vmatpush.bf16.msra.mxu0 %v971
    %2828 = vmatpush.bf16.msra.mxu0 %v967
    %2829 = vmatpush.bf16.msra.mxu0 %v963
    %2830 = vmatpush.bf16.msra.mxu0 %v959
    %2831 = vmatpush.bf16.msra.mxu0 %v955
    %2832 = vmatpush.bf16.msra.mxu0 %v951
    %2833 = vmatpush.bf16.msra.mxu0 %v947
    %2834 = vmatpush.bf16.msra.mxu0 %v943
    %2835 = vmatmul.bf16.gmra.mxu0 %v2477
    %v2836 = vpop.f32.mrf.mxu0
    %v2837 = vadd.f32 0.0, %v2836
    %v2838 = vpop.f32.mrf.mxu0
    %2839 = vdwg.mxu0
    %2840 = vmatpush.bf16.msra.mxu0 %v972
    %2841 = vmatpush.bf16.msra.mxu0 %v968
    %2842 = vmatpush.bf16.msra.mxu0 %v964
    %2843 = vmatpush.bf16.msra.mxu0 %v960
    %2844 = vmatpush.bf16.msra.mxu0 %v956
    %2845 = vmatpush.bf16.msra.mxu0 %v952
    %2846 = vmatpush.bf16.msra.mxu0 %v948
    %2847 = vmatpush.bf16.msra.mxu0 %v944
    %2848 = vmatmul.bf16.gmra.mxu0 %v2477
    %v2849 = vpop.f32.mrf.mxu0
    %v2850 = vadd.f32 0.0, %v2849
    %v2851 = vpop.f32.mrf.mxu0
    %2852 = vdwg.mxu0
    %2853 = vmatpush.bf16.msra.mxu0 %v973
    %2854 = vmatpush.bf16.msra.mxu0 %v969
    %2855 = vmatpush.bf16.msra.mxu0 %v965
    %2856 = vmatpush.bf16.msra.mxu0 %v961
    %2857 = vmatpush.bf16.msra.mxu0 %v957
    %2858 = vmatpush.bf16.msra.mxu0 %v953
    %2859 = vmatpush.bf16.msra.mxu0 %v949
    %2860 = vmatpush.bf16.msra.mxu0 %v945
    %2861 = vmatmul.bf16.gmra.mxu0 %v2477
    %v2862 = vpop.f32.mrf.mxu0
    %v2863 = vadd.f32 0.0, %v2862
    %v2864 = vpop.f32.mrf.mxu0
    %2865 = vdwg.mxu0
    %v2866 = vadd.f32 %v151, %v2824
    %v2867 = vadd.f32 %v204, %v2837
    %v2868 = vadd.f32 %v257, %v2850
    %v2869 = vadd.f32 %v310, %v2863
    %v2870 = vxor.u32 %v2866, 2147483648
    %v2871 = vxor.u32 %v2867, 2147483648
    %v2872 = vxor.u32 %v2868, 2147483648
    %v2873 = vmul.f32 %v2870, 1.442695
    %v2874 = vpow.pop %v2873
    %v2875 = vmul.f32 %v2871, 1.442695
    %v2876 = vpow.pop %v2875
    %v2877 = vmul.f32 %v2872, 1.442695
    %v2878 = vpow.pop %v2877
    %v2879 = vadd.f32 %v2874, 1.0
    %v2880 = vadd.f32 %v2876, 1.0
    %v2881 = vadd.f32 %v2878, 1.0
    %v2882 = vrcp.pop %v2879
    %v2883 = vmul.f32 %v2879, %v2882
    %v2884 = vsub.f32 1.0, %v2883
    %v2885 = vmul.f32 %v2882, %v2884
    %v2886 = vadd.f32 %v2882, %v2885
    %vm2887 = vweird.f32 %v2879
    %vm2888 = vweird.f32 %v2882
    %vm2889 = vmor %vm2887, %vm2888
    %v2890 = vsel %vm2889, %v2882, %v2886
    %v2891 = vand.u32 2147483647, %v2879
    %vm2892 = vcmp.eq.f32.partialorder %v2891, 8.507059e+37
    %v2893 = vand.u32 %v2879, 2147483648
    %v2894 = vor.u32 1.1754944e-38, %v2893
    %v2895 = vsel %vm2892, %v2894, %v2890
    %v2896 = vmul.f32 1.0, %v2895
    %v2897 = vrcp.pop %v2880
    %v2898 = vmul.f32 %v2880, %v2897
    %v2899 = vsub.f32 1.0, %v2898
    %v2900 = vmul.f32 %v2897, %v2899
    %v2901 = vadd.f32 %v2897, %v2900
    %vm2902 = vweird.f32 %v2880
    %vm2903 = vweird.f32 %v2897
    %vm2904 = vmor %vm2902, %vm2903
    %v2905 = vsel %vm2904, %v2897, %v2901
    %v2906 = vand.u32 2147483647, %v2880
    %vm2907 = vcmp.eq.f32.partialorder %v2906, 8.507059e+37
    %v2908 = vand.u32 %v2880, 2147483648
    %v2909 = vor.u32 1.1754944e-38, %v2908
    %v2910 = vsel %vm2907, %v2909, %v2905
    %v2911 = vmul.f32 1.0, %v2910
    %v2912 = vrcp.pop %v2881
    %v2913 = vmul.f32 %v2881, %v2912
    %v2914 = vsub.f32 1.0, %v2913
    %v2915 = vmul.f32 %v2912, %v2914
    %v2916 = vadd.f32 %v2912, %v2915
    %vm2917 = vweird.f32 %v2881
    %vm2918 = vweird.f32 %v2912
    %vm2919 = vmor %vm2917, %vm2918
    %v2920 = vsel %vm2919, %v2912, %v2916
    %v2921 = vand.u32 2147483647, %v2881
    %vm2922 = vcmp.eq.f32.partialorder %v2921, 8.507059e+37
    %v2923 = vand.u32 %v2881, 2147483648
    %v2924 = vor.u32 1.1754944e-38, %v2923
    %v2925 = vsel %vm2922, %v2924, %v2920
    %v2926 = vmul.f32 1.0, %v2925
    %v2927 = vtanh.pop %v2869
    %v2928 = vmul.f32 %v2911, %v2474
    %v2929 = vmul.f32 %v2896, %v2927
    %v2930 = vadd.f32 %v2928, %v2929
    %v2931 = vtanh.pop %v2930
    %v2932 = vmul.f32 %v2926, %v2931
    %v2933 = vpack.c.bf16 %v2932, %v2932
    %2934 = vmatpush.bf16.msra.mxu0 %v1262
    %2935 = vmatpush.bf16.msra.mxu0 %v1258
    %2936 = vmatpush.bf16.msra.mxu0 %v1254
    %2937 = vmatpush.bf16.msra.mxu0 %v1250
    %2938 = vmatpush.bf16.msra.mxu0 %v1246
    %2939 = vmatpush.bf16.msra.mxu0 %v1242
    %2940 = vmatpush.bf16.msra.mxu0 %v1238
    %2941 = vmatpush.bf16.msra.mxu0 %v1234
    %2942 = vmatmul.bf16.gmra.mxu0 %v2813
    %v2943 = vpop.f32.mrf.mxu0
    %v2944 = vadd.f32 %v1134, %v2943
    %v2945 = vpop.f32.mrf.mxu0
    %2946 = vdwg.mxu0
    %2947 = vmatpush.bf16.msra.mxu0 %v1986
    %2948 = vmatpush.bf16.msra.mxu0 %v1982
    %2949 = vmatpush.bf16.msra.mxu0 %v1978
    %2950 = vmatpush.bf16.msra.mxu0 %v1974
    %2951 = vmatpush.bf16.msra.mxu0 %v1970
    %2952 = vmatpush.bf16.msra.mxu0 %v1966
    %2953 = vmatpush.bf16.msra.mxu0 %v1962
    %2954 = vmatpush.bf16.msra.mxu0 %v1958
    %2955 = vmatmul.bf16.gmra.mxu0 %v2645
    %v2956 = vpop.f32.mrf.mxu0
    %v2957 = vadd.f32 %v2944, %v2956
    %v2958 = vpop.f32.mrf.mxu0
    %2959 = vdwg.mxu0
    %2960 = vmatpush.bf16.msra.mxu0 %v1263
    %2961 = vmatpush.bf16.msra.mxu0 %v1259
    %2962 = vmatpush.bf16.msra.mxu0 %v1255
    %2963 = vmatpush.bf16.msra.mxu0 %v1251
    %2964 = vmatpush.bf16.msra.mxu0 %v1247
    %2965 = vmatpush.bf16.msra.mxu0 %v1243
    %2966 = vmatpush.bf16.msra.mxu0 %v1239
    %2967 = vmatpush.bf16.msra.mxu0 %v1235
    %2968 = vmatmul.bf16.gmra.mxu0 %v2813
    %v2969 = vpop.f32.mrf.mxu0
    %v2970 = vadd.f32 %v1135, %v2969
    %v2971 = vpop.f32.mrf.mxu0
    %2972 = vdwg.mxu0
    %2973 = vmatpush.bf16.msra.mxu0 %v1987
    %2974 = vmatpush.bf16.msra.mxu0 %v1983
    %2975 = vmatpush.bf16.msra.mxu0 %v1979
    %2976 = vmatpush.bf16.msra.mxu0 %v1975
    %2977 = vmatpush.bf16.msra.mxu0 %v1971
    %2978 = vmatpush.bf16.msra.mxu0 %v1967
    %2979 = vmatpush.bf16.msra.mxu0 %v1963
    %2980 = vmatpush.bf16.msra.mxu0 %v1959
    %2981 = vmatmul.bf16.gmra.mxu0 %v2645
    %v2982 = vpop.f32.mrf.mxu0
    %v2983 = vadd.f32 %v2970, %v2982
    %v2984 = vpop.f32.mrf.mxu0
    %2985 = vdwg.mxu0
    %2986 = vmatpush.bf16.msra.mxu0 %v1264
    %2987 = vmatpush.bf16.msra.mxu0 %v1260
    %2988 = vmatpush.bf16.msra.mxu0 %v1256
    %2989 = vmatpush.bf16.msra.mxu0 %v1252
    %2990 = vmatpush.bf16.msra.mxu0 %v1248
    %2991 = vmatpush.bf16.msra.mxu0 %v1244
    %2992 = vmatpush.bf16.msra.mxu0 %v1240
    %2993 = vmatpush.bf16.msra.mxu0 %v1236
    %2994 = vmatmul.bf16.gmra.mxu0 %v2813
    %v2995 = vpop.f32.mrf.mxu0
    %v2996 = vadd.f32 %v1136, %v2995
    %v2997 = vpop.f32.mrf.mxu0
    %2998 = vdwg.mxu0
    %2999 = vmatpush.bf16.msra.mxu0 %v1988
    %3000 = vmatpush.bf16.msra.mxu0 %v1984
    %3001 = vmatpush.bf16.msra.mxu0 %v1980
    %3002 = vmatpush.bf16.msra.mxu0 %v1976
    %3003 = vmatpush.bf16.msra.mxu0 %v1972
    %3004 = vmatpush.bf16.msra.mxu0 %v1968
    %3005 = vmatpush.bf16.msra.mxu0 %v1964
    %3006 = vmatpush.bf16.msra.mxu0 %v1960
    %3007 = vmatmul.bf16.gmra.mxu0 %v2645
    %v3008 = vpop.f32.mrf.mxu0
    %v3009 = vadd.f32 %v2996, %v3008
    %v3010 = vpop.f32.mrf.mxu0
    %3011 = vdwg.mxu0
    %3012 = vmatpush.bf16.msra.mxu0 %v1265
    %3013 = vmatpush.bf16.msra.mxu0 %v1261
    %3014 = vmatpush.bf16.msra.mxu0 %v1257
    %3015 = vmatpush.bf16.msra.mxu0 %v1253
    %3016 = vmatpush.bf16.msra.mxu0 %v1249
    %3017 = vmatpush.bf16.msra.mxu0 %v1245
    %3018 = vmatpush.bf16.msra.mxu0 %v1241
    %3019 = vmatpush.bf16.msra.mxu0 %v1237
    %3020 = vmatmul.bf16.gmra.mxu0 %v2813
    %v3021 = vpop.f32.mrf.mxu0
    %v3022 = vadd.f32 %v1137, %v3021
    %v3023 = vpop.f32.mrf.mxu0
    %3024 = vdwg.mxu0
    %3025 = vmatpush.bf16.msra.mxu0 %v1989
    %3026 = vmatpush.bf16.msra.mxu0 %v1985
    %3027 = vmatpush.bf16.msra.mxu0 %v1981
    %3028 = vmatpush.bf16.msra.mxu0 %v1977
    %3029 = vmatpush.bf16.msra.mxu0 %v1973
    %3030 = vmatpush.bf16.msra.mxu0 %v1969
    %3031 = vmatpush.bf16.msra.mxu0 %v1965
    %3032 = vmatpush.bf16.msra.mxu0 %v1961
    %3033 = vmatmul.bf16.gmra.mxu0 %v2645
    %v3034 = vpop.f32.mrf.mxu0
    %v3035 = vadd.f32 %v3022, %v3034
    %v3036 = vpop.f32.mrf.mxu0
    %3037 = vdwg.mxu0
    %v3038 = vxor.u32 %v2957, 2147483648
    %v3039 = vxor.u32 %v2983, 2147483648
    %v3040 = vxor.u32 %v3009, 2147483648
    %v3041 = vmul.f32 %v3038, 1.442695
    %v3042 = vpow.pop %v3041
    %v3043 = vmul.f32 %v3039, 1.442695
    %v3044 = vpow.pop %v3043
    %v3045 = vmul.f32 %v3040, 1.442695
    %v3046 = vpow.pop %v3045
    %v3047 = vadd.f32 %v3042, 1.0
    %v3048 = vadd.f32 %v3044, 1.0
    %v3049 = vadd.f32 %v3046, 1.0
    %v3050 = vrcp.pop %v3047
    %v3051 = vmul.f32 %v3047, %v3050
    %v3052 = vsub.f32 1.0, %v3051
    %v3053 = vmul.f32 %v3050, %v3052
    %v3054 = vadd.f32 %v3050, %v3053
    %vm3055 = vweird.f32 %v3047
    %vm3056 = vweird.f32 %v3050
    %vm3057 = vmor %vm3055, %vm3056
    %v3058 = vsel %vm3057, %v3050, %v3054
    %v3059 = vand.u32 2147483647, %v3047
    %vm3060 = vcmp.eq.f32.partialorder %v3059, 8.507059e+37
    %v3061 = vand.u32 %v3047, 2147483648
    %v3062 = vor.u32 1.1754944e-38, %v3061
    %v3063 = vsel %vm3060, %v3062, %v3058
    %v3064 = vmul.f32 1.0, %v3063
    %v3065 = vrcp.pop %v3048
    %v3066 = vmul.f32 %v3048, %v3065
    %v3067 = vsub.f32 1.0, %v3066
    %v3068 = vmul.f32 %v3065, %v3067
    %v3069 = vadd.f32 %v3065, %v3068
    %vm3070 = vweird.f32 %v3048
    %vm3071 = vweird.f32 %v3065
    %vm3072 = vmor %vm3070, %vm3071
    %v3073 = vsel %vm3072, %v3065, %v3069
    %v3074 = vand.u32 2147483647, %v3048
    %vm3075 = vcmp.eq.f32.partialorder %v3074, 8.507059e+37
    %v3076 = vand.u32 %v3048, 2147483648
    %v3077 = vor.u32 1.1754944e-38, %v3076
    %v3078 = vsel %vm3075, %v3077, %v3073
    %v3079 = vmul.f32 1.0, %v3078
    %v3080 = vrcp.pop %v3049
    %v3081 = vmul.f32 %v3049, %v3080
    %v3082 = vsub.f32 1.0, %v3081
    %v3083 = vmul.f32 %v3080, %v3082
    %v3084 = vadd.f32 %v3080, %v3083
    %vm3085 = vweird.f32 %v3049
    %vm3086 = vweird.f32 %v3080
    %vm3087 = vmor %vm3085, %vm3086
    %v3088 = vsel %vm3087, %v3080, %v3084
    %v3089 = vand.u32 2147483647, %v3049
    %vm3090 = vcmp.eq.f32.partialorder %v3089, 8.507059e+37
    %v3091 = vand.u32 %v3049, 2147483648
    %v3092 = vor.u32 1.1754944e-38, %v3091
    %v3093 = vsel %vm3090, %v3092, %v3088
    %v3094 = vmul.f32 1.0, %v3093
    %v3095 = vtanh.pop %v3035
    %v3096 = vmul.f32 %v3079, %v2642
    %v3097 = vmul.f32 %v3064, %v3095
    %v3098 = vadd.f32 %v3096, %v3097
    %v3099 = vtanh.pop %v3098
    %v3100 = vmul.f32 %v3094, %v3099
    %v3101 = vpack.c.bf16 %v3100, %v3100
    %3102 = vmatpush.bf16.msra.mxu0 %v694
    %3103 = vmatpush.bf16.msra.mxu0 %v690
    %3104 = vmatpush.bf16.msra.mxu0 %v686
    %3105 = vmatpush.bf16.msra.mxu0 %v682
    %3106 = vmatpush.bf16.msra.mxu0 %v678
    %3107 = vmatpush.bf16.msra.mxu0 %v674
    %3108 = vmatpush.bf16.msra.mxu0 %v670
    %3109 = vmatpush.bf16.msra.mxu0 %v666
    %3110 = vmatmul.bf16.gmra.mxu0 %v2933
    %v3111 = vpop.f32.mrf.mxu0
    %v3112 = vadd.f32 %v566, %v3111
    %v3113 = vpop.f32.mrf.mxu0
    %3114 = vdwg.mxu0
    %3115 = vmatpush.bf16.msra.mxu0 %v1538
    %3116 = vmatpush.bf16.msra.mxu0 %v1534
    %3117 = vmatpush.bf16.msra.mxu0 %v1530
    %3118 = vmatpush.bf16.msra.mxu0 %v1526
    %3119 = vmatpush.bf16.msra.mxu0 %v1522
    %3120 = vmatpush.bf16.msra.mxu0 %v1518
    %3121 = vmatpush.bf16.msra.mxu0 %v1514
    %3122 = vmatpush.bf16.msra.mxu0 %v1510
    %3123 = vmatmul.bf16.gmra.mxu0 %v2813
    %v3124 = vpop.f32.mrf.mxu0
    %v3125 = vadd.f32 %v3112, %v3124
    %v3126 = vpop.f32.mrf.mxu0
    %3127 = vdwg.mxu0
    %3128 = vmatpush.bf16.msra.mxu0 %v695
    %3129 = vmatpush.bf16.msra.mxu0 %v691
    %3130 = vmatpush.bf16.msra.mxu0 %v687
    %3131 = vmatpush.bf16.msra.mxu0 %v683
    %3132 = vmatpush.bf16.msra.mxu0 %v679
    %3133 = vmatpush.bf16.msra.mxu0 %v675
    %3134 = vmatpush.bf16.msra.mxu0 %v671
    %3135 = vmatpush.bf16.msra.mxu0 %v667
    %3136 = vmatmul.bf16.gmra.mxu0 %v2933
    %v3137 = vpop.f32.mrf.mxu0
    %v3138 = vadd.f32 %v567, %v3137
    %v3139 = vpop.f32.mrf.mxu0
    %3140 = vdwg.mxu0
    %3141 = vmatpush.bf16.msra.mxu0 %v1539
    %3142 = vmatpush.bf16.msra.mxu0 %v1535
    %3143 = vmatpush.bf16.msra.mxu0 %v1531
    %3144 = vmatpush.bf16.msra.mxu0 %v1527
    %3145 = vmatpush.bf16.msra.mxu0 %v1523
    %3146 = vmatpush.bf16.msra.mxu0 %v1519
    %3147 = vmatpush.bf16.msra.mxu0 %v1515
    %3148 = vmatpush.bf16.msra.mxu0 %v1511
    %3149 = vmatmul.bf16.gmra.mxu0 %v2813
    %v3150 = vpop.f32.mrf.mxu0
    %v3151 = vadd.f32 %v3138, %v3150
    %v3152 = vpop.f32.mrf.mxu0
    %3153 = vdwg.mxu0
    %3154 = vmatpush.bf16.msra.mxu0 %v696
    %3155 = vmatpush.bf16.msra.mxu0 %v692
    %3156 = vmatpush.bf16.msra.mxu0 %v688
    %3157 = vmatpush.bf16.msra.mxu0 %v684
    %3158 = vmatpush.bf16.msra.mxu0 %v680
    %3159 = vmatpush.bf16.msra.mxu0 %v676
    %3160 = vmatpush.bf16.msra.mxu0 %v672
    %3161 = vmatpush.bf16.msra.mxu0 %v668
    %3162 = vmatmul.bf16.gmra.mxu0 %v2933
    %v3163 = vpop.f32.mrf.mxu0
    %v3164 = vadd.f32 %v568, %v3163
    %v3165 = vpop.f32.mrf.mxu0
    %3166 = vdwg.mxu0
    %3167 = vmatpush.bf16.msra.mxu0 %v1540
    %3168 = vmatpush.bf16.msra.mxu0 %v1536
    %3169 = vmatpush.bf16.msra.mxu0 %v1532
    %3170 = vmatpush.bf16.msra.mxu0 %v1528
    %3171 = vmatpush.bf16.msra.mxu0 %v1524
    %3172 = vmatpush.bf16.msra.mxu0 %v1520
    %3173 = vmatpush.bf16.msra.mxu0 %v1516
    %3174 = vmatpush.bf16.msra.mxu0 %v1512
    %3175 = vmatmul.bf16.gmra.mxu0 %v2813
    %v3176 = vpop.f32.mrf.mxu0
    %v3177 = vadd.f32 %v3164, %v3176
    %v3178 = vpop.f32.mrf.mxu0
    %3179 = vdwg.mxu0
    %3180 = vmatpush.bf16.msra.mxu0 %v697
    %3181 = vmatpush.bf16.msra.mxu0 %v693
    %3182 = vmatpush.bf16.msra.mxu0 %v689
    %3183 = vmatpush.bf16.msra.mxu0 %v685
    %3184 = vmatpush.bf16.msra.mxu0 %v681
    %3185 = vmatpush.bf16.msra.mxu0 %v677
    %3186 = vmatpush.bf16.msra.mxu0 %v673
    %3187 = vmatpush.bf16.msra.mxu0 %v669
    %3188 = vmatmul.bf16.gmra.mxu0 %v2933
    %v3189 = vpop.f32.mrf.mxu0
    %v3190 = vadd.f32 %v569, %v3189
    %v3191 = vpop.f32.mrf.mxu0
    %3192 = vdwg.mxu0
    %3193 = vmatpush.bf16.msra.mxu0 %v1541
    %3194 = vmatpush.bf16.msra.mxu0 %v1537
    %3195 = vmatpush.bf16.msra.mxu0 %v1533
    %3196 = vmatpush.bf16.msra.mxu0 %v1529
    %3197 = vmatpush.bf16.msra.mxu0 %v1525
    %3198 = vmatpush.bf16.msra.mxu0 %v1521
    %3199 = vmatpush.bf16.msra.mxu0 %v1517
    %3200 = vmatpush.bf16.msra.mxu0 %v1513
    %3201 = vmatmul.bf16.gmra.mxu0 %v2813
    %v3202 = vpop.f32.mrf.mxu0
    %v3203 = vadd.f32 %v3190, %v3202
    %v3204 = vpop.f32.mrf.mxu0
    %3205 = vdwg.mxu0
    %v3206 = vxor.u32 %v3125, 2147483648
    %v3207 = vxor.u32 %v3151, 2147483648
    %v3208 = vxor.u32 %v3177, 2147483648
    %v3209 = vmul.f32 %v3206, 1.442695
    %v3210 = vpow.pop %v3209
    %v3211 = vmul.f32 %v3207, 1.442695
    %v3212 = vpow.pop %v3211
    %v3213 = vmul.f32 %v3208, 1.442695
    %v3214 = vpow.pop %v3213
    %v3215 = vadd.f32 %v3210, 1.0
    %v3216 = vadd.f32 %v3212, 1.0
    %v3217 = vadd.f32 %v3214, 1.0
    %v3218 = vrcp.pop %v3215
    %v3219 = vmul.f32 %v3215, %v3218
    %v3220 = vsub.f32 1.0, %v3219
    %v3221 = vmul.f32 %v3218, %v3220
    %v3222 = vadd.f32 %v3218, %v3221
    %vm3223 = vweird.f32 %v3215
    %vm3224 = vweird.f32 %v3218
    %vm3225 = vmor %vm3223, %vm3224
    %v3226 = vsel %vm3225, %v3218, %v3222
    %v3227 = vand.u32 2147483647, %v3215
    %vm3228 = vcmp.eq.f32.partialorder %v3227, 8.507059e+37
    %v3229 = vand.u32 %v3215, 2147483648
    %v3230 = vor.u32 1.1754944e-38, %v3229
    %v3231 = vsel %vm3228, %v3230, %v3226
    %v3232 = vmul.f32 1.0, %v3231
    %v3233 = vrcp.pop %v3216
    %v3234 = vmul.f32 %v3216, %v3233
    %v3235 = vsub.f32 1.0, %v3234
    %v3236 = vmul.f32 %v3233, %v3235
    %v3237 = vadd.f32 %v3233, %v3236
    %vm3238 = vweird.f32 %v3216
    %vm3239 = vweird.f32 %v3233
    %vm3240 = vmor %vm3238, %vm3239
    %v3241 = vsel %vm3240, %v3233, %v3237
    %v3242 = vand.u32 2147483647, %v3216
    %vm3243 = vcmp.eq.f32.partialorder %v3242, 8.507059e+37
    %v3244 = vand.u32 %v3216, 2147483648
    %v3245 = vor.u32 1.1754944e-38, %v3244
    %v3246 = vsel %vm3243, %v3245, %v3241
    %v3247 = vmul.f32 1.0, %v3246
    %v3248 = vrcp.pop %v3217
    %v3249 = vmul.f32 %v3217, %v3248
    %v3250 = vsub.f32 1.0, %v3249
    %v3251 = vmul.f32 %v3248, %v3250
    %v3252 = vadd.f32 %v3248, %v3251
    %vm3253 = vweird.f32 %v3217
    %vm3254 = vweird.f32 %v3248
    %vm3255 = vmor %vm3253, %vm3254
    %v3256 = vsel %vm3255, %v3248, %v3252
    %v3257 = vand.u32 2147483647, %v3217
    %vm3258 = vcmp.eq.f32.partialorder %v3257, 8.507059e+37
    %v3259 = vand.u32 %v3217, 2147483648
    %v3260 = vor.u32 1.1754944e-38, %v3259
    %v3261 = vsel %vm3258, %v3260, %v3256
    %v3262 = vmul.f32 1.0, %v3261
    %v3263 = vtanh.pop %v3203
    %v3264 = vmul.f32 %v3247, %v2810
    %v3265 = vmul.f32 %v3232, %v3263
    %v3266 = vadd.f32 %v3264, %v3265
    %v3267 = vtanh.pop %v3266
    %v3268 = vmul.f32 %v3262, %v3267
    %v3269 = vpack.c.bf16 %v3268, %v3268
    %3270 = vmatpush.bf16.msra.mxu0 %v970
    %3271 = vmatpush.bf16.msra.mxu0 %v966
    %3272 = vmatpush.bf16.msra.mxu0 %v962
    %3273 = vmatpush.bf16.msra.mxu0 %v958
    %3274 = vmatpush.bf16.msra.mxu0 %v954
    %3275 = vmatpush.bf16.msra.mxu0 %v950
    %3276 = vmatpush.bf16.msra.mxu0 %v946
    %3277 = vmatpush.bf16.msra.mxu0 %v942
    %3278 = vmatmul.bf16.gmra.mxu0 %v2933
    %v3279 = vpop.f32.mrf.mxu0
    %v3280 = vadd.f32 0.0, %v3279
    %v3281 = vpop.f32.mrf.mxu0
    %3282 = vdwg.mxu0
    %3283 = vmatpush.bf16.msra.mxu0 %v971
    %3284 = vmatpush.bf16.msra.mxu0 %v967
    %3285 = vmatpush.bf16.msra.mxu0 %v963
    %3286 = vmatpush.bf16.msra.mxu0 %v959
    %3287 = vmatpush.bf16.msra.mxu0 %v955
    %3288 = vmatpush.bf16.msra.mxu0 %v951
    %3289 = vmatpush.bf16.msra.mxu0 %v947
    %3290 = vmatpush.bf16.msra.mxu0 %v943
    %3291 = vmatmul.bf16.gmra.mxu0 %v2933
    %v3292 = vpop.f32.mrf.mxu0
    %v3293 = vadd.f32 0.0, %v3292
    %v3294 = vpop.f32.mrf.mxu0
    %3295 = vdwg.mxu0
    %3296 = vmatpush.bf16.msra.mxu0 %v972
    %3297 = vmatpush.bf16.msra.mxu0 %v968
    %3298 = vmatpush.bf16.msra.mxu0 %v964
    %3299 = vmatpush.bf16.msra.mxu0 %v960
    %3300 = vmatpush.bf16.msra.mxu0 %v956
    %3301 = vmatpush.bf16.msra.mxu0 %v952
    %3302 = vmatpush.bf16.msra.mxu0 %v948
    %3303 = vmatpush.bf16.msra.mxu0 %v944
    %3304 = vmatmul.bf16.gmra.mxu0 %v2933
    %v3305 = vpop.f32.mrf.mxu0
    %v3306 = vadd.f32 0.0, %v3305
    %v3307 = vpop.f32.mrf.mxu0
    %3308 = vdwg.mxu0
    %3309 = vmatpush.bf16.msra.mxu0 %v973
    %3310 = vmatpush.bf16.msra.mxu0 %v969
    %3311 = vmatpush.bf16.msra.mxu0 %v965
    %3312 = vmatpush.bf16.msra.mxu0 %v961
    %3313 = vmatpush.bf16.msra.mxu0 %v957
    %3314 = vmatpush.bf16.msra.mxu0 %v953
    %3315 = vmatpush.bf16.msra.mxu0 %v949
    %3316 = vmatpush.bf16.msra.mxu0 %v945
    %3317 = vmatmul.bf16.gmra.mxu0 %v2933
    %v3318 = vpop.f32.mrf.mxu0
    %v3319 = vadd.f32 0.0, %v3318
    %v3320 = vpop.f32.mrf.mxu0
    %3321 = vdwg.mxu0
    %v3322 = vadd.f32 %v154, %v3280
    %v3323 = vadd.f32 %v207, %v3293
    %v3324 = vadd.f32 %v260, %v3306
    %v3325 = vadd.f32 %v313, %v3319
    %v3326 = vxor.u32 %v3322, 2147483648
    %v3327 = vxor.u32 %v3323, 2147483648
    %v3328 = vxor.u32 %v3324, 2147483648
    %v3329 = vmul.f32 %v3326, 1.442695
    %v3330 = vpow.pop %v3329
    %v3331 = vmul.f32 %v3327, 1.442695
    %v3332 = vpow.pop %v3331
    %v3333 = vmul.f32 %v3328, 1.442695
    %v3334 = vpow.pop %v3333
    %v3335 = vadd.f32 %v3330, 1.0
    %v3336 = vadd.f32 %v3332, 1.0
    %v3337 = vadd.f32 %v3334, 1.0
    %v3338 = vrcp.pop %v3335
    %v3339 = vmul.f32 %v3335, %v3338
    %v3340 = vsub.f32 1.0, %v3339
    %v3341 = vmul.f32 %v3338, %v3340
    %v3342 = vadd.f32 %v3338, %v3341
    %vm3343 = vweird.f32 %v3335
    %vm3344 = vweird.f32 %v3338
    %vm3345 = vmor %vm3343, %vm3344
    %v3346 = vsel %vm3345, %v3338, %v3342
    %v3347 = vand.u32 2147483647, %v3335
    %vm3348 = vcmp.eq.f32.partialorder %v3347, 8.507059e+37
    %v3349 = vand.u32 %v3335, 2147483648
    %v3350 = vor.u32 1.1754944e-38, %v3349
    %v3351 = vsel %vm3348, %v3350, %v3346
    %v3352 = vmul.f32 1.0, %v3351
    %v3353 = vrcp.pop %v3336
    %v3354 = vmul.f32 %v3336, %v3353
    %v3355 = vsub.f32 1.0, %v3354
    %v3356 = vmul.f32 %v3353, %v3355
    %v3357 = vadd.f32 %v3353, %v3356
    %vm3358 = vweird.f32 %v3336
    %vm3359 = vweird.f32 %v3353
    %vm3360 = vmor %vm3358, %vm3359
    %v3361 = vsel %vm3360, %v3353, %v3357
    %v3362 = vand.u32 2147483647, %v3336
    %vm3363 = vcmp.eq.f32.partialorder %v3362, 8.507059e+37
    %v3364 = vand.u32 %v3336, 2147483648
    %v3365 = vor.u32 1.1754944e-38, %v3364
    %v3366 = vsel %vm3363, %v3365, %v3361
    %v3367 = vmul.f32 1.0, %v3366
    %v3368 = vrcp.pop %v3337
    %v3369 = vmul.f32 %v3337, %v3368
    %v3370 = vsub.f32 1.0, %v3369
    %v3371 = vmul.f32 %v3368, %v3370
    %v3372 = vadd.f32 %v3368, %v3371
    %vm3373 = vweird.f32 %v3337
    %vm3374 = vweird.f32 %v3368
    %vm3375 = vmor %vm3373, %vm3374
    %v3376 = vsel %vm3375, %v3368, %v3372
    %v3377 = vand.u32 2147483647, %v3337
    %vm3378 = vcmp.eq.f32.partialorder %v3377, 8.507059e+37
    %v3379 = vand.u32 %v3337, 2147483648
    %v3380 = vor.u32 1.1754944e-38, %v3379
    %v3381 = vsel %vm3378, %v3380, %v3376
    %v3382 = vmul.f32 1.0, %v3381
    %v3383 = vtanh.pop %v3325
    %v3384 = vmul.f32 %v3367, %v2930
    %v3385 = vmul.f32 %v3352, %v3383
    %v3386 = vadd.f32 %v3384, %v3385
    %v3387 = vtanh.pop %v3386
    %v3388 = vmul.f32 %v3382, %v3387
    %v3389 = vpack.c.bf16 %v3388, %v3388
    %3390 = vmatpush.bf16.msra.mxu0 %v1262
    %3391 = vmatpush.bf16.msra.mxu0 %v1258
    %3392 = vmatpush.bf16.msra.mxu0 %v1254
    %3393 = vmatpush.bf16.msra.mxu0 %v1250
    %3394 = vmatpush.bf16.msra.mxu0 %v1246
    %3395 = vmatpush.bf16.msra.mxu0 %v1242
    %3396 = vmatpush.bf16.msra.mxu0 %v1238
    %3397 = vmatpush.bf16.msra.mxu0 %v1234
    %3398 = vmatmul.bf16.gmra.mxu0 %v3269
    %v3399 = vpop.f32.mrf.mxu0
    %v3400 = vadd.f32 %v1134, %v3399
    %v3401 = vpop.f32.mrf.mxu0
    %3402 = vdwg.mxu0
    %3403 = vmatpush.bf16.msra.mxu0 %v1986
    %3404 = vmatpush.bf16.msra.mxu0 %v1982
    %3405 = vmatpush.bf16.msra.mxu0 %v1978
    %3406 = vmatpush.bf16.msra.mxu0 %v1974
    %3407 = vmatpush.bf16.msra.mxu0 %v1970
    %3408 = vmatpush.bf16.msra.mxu0 %v1966
    %3409 = vmatpush.bf16.msra.mxu0 %v1962
    %3410 = vmatpush.bf16.msra.mxu0 %v1958
    %3411 = vmatmul.bf16.gmra.mxu0 %v3101
    %v3412 = vpop.f32.mrf.mxu0
    %v3413 = vadd.f32 %v3400, %v3412
    %v3414 = vpop.f32.mrf.mxu0
    %3415 = vdwg.mxu0
    %3416 = vmatpush.bf16.msra.mxu0 %v1263
    %3417 = vmatpush.bf16.msra.mxu0 %v1259
    %3418 = vmatpush.bf16.msra.mxu0 %v1255
    %3419 = vmatpush.bf16.msra.mxu0 %v1251
    %3420 = vmatpush.bf16.msra.mxu0 %v1247
    %3421 = vmatpush.bf16.msra.mxu0 %v1243
    %3422 = vmatpush.bf16.msra.mxu0 %v1239
    %3423 = vmatpush.bf16.msra.mxu0 %v1235
    %3424 = vmatmul.bf16.gmra.mxu0 %v3269
    %v3425 = vpop.f32.mrf.mxu0
    %v3426 = vadd.f32 %v1135, %v3425
    %v3427 = vpop.f32.mrf.mxu0
    %3428 = vdwg.mxu0
    %3429 = vmatpush.bf16.msra.mxu0 %v1987
    %3430 = vmatpush.bf16.msra.mxu0 %v1983
    %3431 = vmatpush.bf16.msra.mxu0 %v1979
    %3432 = vmatpush.bf16.msra.mxu0 %v1975
    %3433 = vmatpush.bf16.msra.mxu0 %v1971
    %3434 = vmatpush.bf16.msra.mxu0 %v1967
    %3435 = vmatpush.bf16.msra.mxu0 %v1963
    %3436 = vmatpush.bf16.msra.mxu0 %v1959
    %3437 = vmatmul.bf16.gmra.mxu0 %v3101
    %v3438 = vpop.f32.mrf.mxu0
    %v3439 = vadd.f32 %v3426, %v3438
    %v3440 = vpop.f32.mrf.mxu0
    %3441 = vdwg.mxu0
    %3442 = vmatpush.bf16.msra.mxu0 %v1264
    %3443 = vmatpush.bf16.msra.mxu0 %v1260
    %3444 = vmatpush.bf16.msra.mxu0 %v1256
    %3445 = vmatpush.bf16.msra.mxu0 %v1252
    %3446 = vmatpush.bf16.msra.mxu0 %v1248
    %3447 = vmatpush.bf16.msra.mxu0 %v1244
    %3448 = vmatpush.bf16.msra.mxu0 %v1240
    %3449 = vmatpush.bf16.msra.mxu0 %v1236
    %3450 = vmatmul.bf16.gmra.mxu0 %v3269
    %v3451 = vpop.f32.mrf.mxu0
    %v3452 = vadd.f32 %v1136, %v3451
    %v3453 = vpop.f32.mrf.mxu0
    %3454 = vdwg.mxu0
    %3455 = vmatpush.bf16.msra.mxu0 %v1988
    %3456 = vmatpush.bf16.msra.mxu0 %v1984
    %3457 = vmatpush.bf16.msra.mxu0 %v1980
    %3458 = vmatpush.bf16.msra.mxu0 %v1976
    %3459 = vmatpush.bf16.msra.mxu0 %v1972
    %3460 = vmatpush.bf16.msra.mxu0 %v1968
    %3461 = vmatpush.bf16.msra.mxu0 %v1964
    %3462 = vmatpush.bf16.msra.mxu0 %v1960
    %3463 = vmatmul.bf16.gmra.mxu0 %v3101
    %v3464 = vpop.f32.mrf.mxu0
    %v3465 = vadd.f32 %v3452, %v3464
    %v3466 = vpop.f32.mrf.mxu0
    %3467 = vdwg.mxu0
    %3468 = vmatpush.bf16.msra.mxu0 %v1265
    %3469 = vmatpush.bf16.msra.mxu0 %v1261
    %3470 = vmatpush.bf16.msra.mxu0 %v1257
    %3471 = vmatpush.bf16.msra.mxu0 %v1253
    %3472 = vmatpush.bf16.msra.mxu0 %v1249
    %3473 = vmatpush.bf16.msra.mxu0 %v1245
    %3474 = vmatpush.bf16.msra.mxu0 %v1241
    %3475 = vmatpush.bf16.msra.mxu0 %v1237
    %3476 = vmatmul.bf16.gmra.mxu0 %v3269
    %v3477 = vpop.f32.mrf.mxu0
    %v3478 = vadd.f32 %v1137, %v3477
    %v3479 = vpop.f32.mrf.mxu0
    %3480 = vdwg.mxu0
    %3481 = vmatpush.bf16.msra.mxu0 %v1989
    %3482 = vmatpush.bf16.msra.mxu0 %v1985
    %3483 = vmatpush.bf16.msra.mxu0 %v1981
    %3484 = vmatpush.bf16.msra.mxu0 %v1977
    %3485 = vmatpush.bf16.msra.mxu0 %v1973
    %3486 = vmatpush.bf16.msra.mxu0 %v1969
    %3487 = vmatpush.bf16.msra.mxu0 %v1965
    %3488 = vmatpush.bf16.msra.mxu0 %v1961
    %3489 = vmatmul.bf16.gmra.mxu0 %v3101
    %v3490 = vpop.f32.mrf.mxu0
    %v3491 = vadd.f32 %v3478, %v3490
    %v3492 = vpop.f32.mrf.mxu0
    %3493 = vdwg.mxu0
    %v3494 = vxor.u32 %v3413, 2147483648
    %v3495 = vxor.u32 %v3439, 2147483648
    %v3496 = vxor.u32 %v3465, 2147483648
    %v3497 = vmul.f32 %v3494, 1.442695
    %v3498 = vpow.pop %v3497
    %v3499 = vmul.f32 %v3495, 1.442695
    %v3500 = vpow.pop %v3499
    %v3501 = vmul.f32 %v3496, 1.442695
    %v3502 = vpow.pop %v3501
    %v3503 = vadd.f32 %v3498, 1.0
    %v3504 = vadd.f32 %v3500, 1.0
    %v3505 = vadd.f32 %v3502, 1.0
    %v3506 = vrcp.pop %v3503
    %v3507 = vmul.f32 %v3503, %v3506
    %v3508 = vsub.f32 1.0, %v3507
    %v3509 = vmul.f32 %v3506, %v3508
    %v3510 = vadd.f32 %v3506, %v3509
    %vm3511 = vweird.f32 %v3503
    %vm3512 = vweird.f32 %v3506
    %vm3513 = vmor %vm3511, %vm3512
    %v3514 = vsel %vm3513, %v3506, %v3510
    %v3515 = vand.u32 2147483647, %v3503
    %vm3516 = vcmp.eq.f32.partialorder %v3515, 8.507059e+37
    %v3517 = vand.u32 %v3503, 2147483648
    %v3518 = vor.u32 1.1754944e-38, %v3517
    %v3519 = vsel %vm3516, %v3518, %v3514
    %v3520 = vmul.f32 1.0, %v3519
    %v3521 = vrcp.pop %v3504
    %v3522 = vmul.f32 %v3504, %v3521
    %v3523 = vsub.f32 1.0, %v3522
    %v3524 = vmul.f32 %v3521, %v3523
    %v3525 = vadd.f32 %v3521, %v3524
    %vm3526 = vweird.f32 %v3504
    %vm3527 = vweird.f32 %v3521
    %vm3528 = vmor %vm3526, %vm3527
    %v3529 = vsel %vm3528, %v3521, %v3525
    %v3530 = vand.u32 2147483647, %v3504
    %vm3531 = vcmp.eq.f32.partialorder %v3530, 8.507059e+37
    %v3532 = vand.u32 %v3504, 2147483648
    %v3533 = vor.u32 1.1754944e-38, %v3532
    %v3534 = vsel %vm3531, %v3533, %v3529
    %v3535 = vmul.f32 1.0, %v3534
    %v3536 = vrcp.pop %v3505
    %v3537 = vmul.f32 %v3505, %v3536
    %v3538 = vsub.f32 1.0, %v3537
    %v3539 = vmul.f32 %v3536, %v3538
    %v3540 = vadd.f32 %v3536, %v3539
    %vm3541 = vweird.f32 %v3505
    %vm3542 = vweird.f32 %v3536
    %vm3543 = vmor %vm3541, %vm3542
    %v3544 = vsel %vm3543, %v3536, %v3540
    %v3545 = vand.u32 2147483647, %v3505
    %vm3546 = vcmp.eq.f32.partialorder %v3545, 8.507059e+37
    %v3547 = vand.u32 %v3505, 2147483648
    %v3548 = vor.u32 1.1754944e-38, %v3547
    %v3549 = vsel %vm3546, %v3548, %v3544
    %v3550 = vmul.f32 1.0, %v3549
    %v3551 = vtanh.pop %v3491
    %v3552 = vmul.f32 %v3535, %v3098
    %v3553 = vmul.f32 %v3520, %v3551
    %v3554 = vadd.f32 %v3552, %v3553
    %v3555 = vtanh.pop %v3554
    %v3556 = vmul.f32 %v3550, %v3555
    %v3557 = vpack.c.bf16 %v3556, %v3556
    %3558 = vmatpush.bf16.msra.mxu0 %v694
    %3559 = vmatpush.bf16.msra.mxu0 %v690
    %3560 = vmatpush.bf16.msra.mxu0 %v686
    %3561 = vmatpush.bf16.msra.mxu0 %v682
    %3562 = vmatpush.bf16.msra.mxu0 %v678
    %3563 = vmatpush.bf16.msra.mxu0 %v674
    %3564 = vmatpush.bf16.msra.mxu0 %v670
    %3565 = vmatpush.bf16.msra.mxu0 %v666
    %3566 = vmatmul.bf16.gmra.mxu0 %v3389
    %v3567 = vpop.f32.mrf.mxu0
    %v3568 = vadd.f32 %v566, %v3567
    %v3569 = vpop.f32.mrf.mxu0
    %3570 = vdwg.mxu0
    %3571 = vmatpush.bf16.msra.mxu0 %v1538
    %3572 = vmatpush.bf16.msra.mxu0 %v1534
    %3573 = vmatpush.bf16.msra.mxu0 %v1530
    %3574 = vmatpush.bf16.msra.mxu0 %v1526
    %3575 = vmatpush.bf16.msra.mxu0 %v1522
    %3576 = vmatpush.bf16.msra.mxu0 %v1518
    %3577 = vmatpush.bf16.msra.mxu0 %v1514
    %3578 = vmatpush.bf16.msra.mxu0 %v1510
    %3579 = vmatmul.bf16.gmra.mxu0 %v3269
    %v3580 = vpop.f32.mrf.mxu0
    %v3581 = vadd.f32 %v3568, %v3580
    %v3582 = vpop.f32.mrf.mxu0
    %3583 = vdwg.mxu0
    %3584 = vmatpush.bf16.msra.mxu0 %v695
    %3585 = vmatpush.bf16.msra.mxu0 %v691
    %3586 = vmatpush.bf16.msra.mxu0 %v687
    %3587 = vmatpush.bf16.msra.mxu0 %v683
    %3588 = vmatpush.bf16.msra.mxu0 %v679
    %3589 = vmatpush.bf16.msra.mxu0 %v675
    %3590 = vmatpush.bf16.msra.mxu0 %v671
    %3591 = vmatpush.bf16.msra.mxu0 %v667
    %3592 = vmatmul.bf16.gmra.mxu0 %v3389
    %v3593 = vpop.f32.mrf.mxu0
    %v3594 = vadd.f32 %v567, %v3593
    %v3595 = vpop.f32.mrf.mxu0
    %3596 = vdwg.mxu0
    %3597 = vmatpush.bf16.msra.mxu0 %v1539
    %3598 = vmatpush.bf16.msra.mxu0 %v1535
    %3599 = vmatpush.bf16.msra.mxu0 %v1531
    %3600 = vmatpush.bf16.msra.mxu0 %v1527
    %3601 = vmatpush.bf16.msra.mxu0 %v1523
    %3602 = vmatpush.bf16.msra.mxu0 %v1519
    %3603 = vmatpush.bf16.msra.mxu0 %v1515
    %3604 = vmatpush.bf16.msra.mxu0 %v1511
    %3605 = vmatmul.bf16.gmra.mxu0 %v3269
    %v3606 = vpop.f32.mrf.mxu0
    %v3607 = vadd.f32 %v3594, %v3606
    %v3608 = vpop.f32.mrf.mxu0
    %3609 = vdwg.mxu0
    %3610 = vmatpush.bf16.msra.mxu0 %v696
    %3611 = vmatpush.bf16.msra.mxu0 %v692
    %3612 = vmatpush.bf16.msra.mxu0 %v688
    %3613 = vmatpush.bf16.msra.mxu0 %v684
    %3614 = vmatpush.bf16.msra.mxu0 %v680
    %3615 = vmatpush.bf16.msra.mxu0 %v676
    %3616 = vmatpush.bf16.msra.mxu0 %v672
    %3617 = vmatpush.bf16.msra.mxu0 %v668
    %3618 = vmatmul.bf16.gmra.mxu0 %v3389
    %v3619 = vpop.f32.mrf.mxu0
    %v3620 = vadd.f32 %v568, %v3619
    %v3621 = vpop.f32.mrf.mxu0
    %3622 = vdwg.mxu0
    %3623 = vmatpush.bf16.msra.mxu0 %v1540
    %3624 = vmatpush.bf16.msra.mxu0 %v1536
    %3625 = vmatpush.bf16.msra.mxu0 %v1532
    %3626 = vmatpush.bf16.msra.mxu0 %v1528
    %3627 = vmatpush.bf16.msra.mxu0 %v1524
    %3628 = vmatpush.bf16.msra.mxu0 %v1520
    %3629 = vmatpush.bf16.msra.mxu0 %v1516
    %3630 = vmatpush.bf16.msra.mxu0 %v1512
    %3631 = vmatmul.bf16.gmra.mxu0 %v3269
    %v3632 = vpop.f32.mrf.mxu0
    %v3633 = vadd.f32 %v3620, %v3632
    %v3634 = vpop.f32.mrf.mxu0
    %3635 = vdwg.mxu0
    %3636 = vmatpush.bf16.msra.mxu0 %v697
    %3637 = vmatpush.bf16.msra.mxu0 %v693
    %3638 = vmatpush.bf16.msra.mxu0 %v689
    %3639 = vmatpush.bf16.msra.mxu0 %v685
    %3640 = vmatpush.bf16.msra.mxu0 %v681
    %3641 = vmatpush.bf16.msra.mxu0 %v677
    %3642 = vmatpush.bf16.msra.mxu0 %v673
    %3643 = vmatpush.bf16.msra.mxu0 %v669
    %3644 = vmatmul.bf16.gmra.mxu0 %v3389
    %v3645 = vpop.f32.mrf.mxu0
    %v3646 = vadd.f32 %v569, %v3645
    %v3647 = vpop.f32.mrf.mxu0
    %3648 = vdwg.mxu0
    %3649 = vmatpush.bf16.msra.mxu0 %v1541
    %3650 = vmatpush.bf16.msra.mxu0 %v1537
    %3651 = vmatpush.bf16.msra.mxu0 %v1533
    %3652 = vmatpush.bf16.msra.mxu0 %v1529
    %3653 = vmatpush.bf16.msra.mxu0 %v1525
    %3654 = vmatpush.bf16.msra.mxu0 %v1521
    %3655 = vmatpush.bf16.msra.mxu0 %v1517
    %3656 = vmatpush.bf16.msra.mxu0 %v1513
    %3657 = vmatmul.bf16.gmra.mxu0 %v3269
    %v3658 = vpop.f32.mrf.mxu0
    %v3659 = vadd.f32 %v3646, %v3658
    %v3660 = vpop.f32.mrf.mxu0
    %3661 = vdwg.mxu0
    %v3662 = vxor.u32 %v3581, 2147483648
    %v3663 = vxor.u32 %v3607, 2147483648
    %v3664 = vxor.u32 %v3633, 2147483648
    %v3665 = vmul.f32 %v3662, 1.442695
    %v3666 = vpow.pop %v3665
    %v3667 = vmul.f32 %v3663, 1.442695
    %v3668 = vpow.pop %v3667
    %v3669 = vmul.f32 %v3664, 1.442695
    %v3670 = vpow.pop %v3669
    %v3671 = vadd.f32 %v3666, 1.0
    %v3672 = vadd.f32 %v3668, 1.0
    %v3673 = vadd.f32 %v3670, 1.0
    %v3674 = vrcp.pop %v3671
    %v3675 = vmul.f32 %v3671, %v3674
    %v3676 = vsub.f32 1.0, %v3675
    %v3677 = vmul.f32 %v3674, %v3676
    %v3678 = vadd.f32 %v3674, %v3677
    %vm3679 = vweird.f32 %v3671
    %vm3680 = vweird.f32 %v3674
    %vm3681 = vmor %vm3679, %vm3680
    %v3682 = vsel %vm3681, %v3674, %v3678
    %v3683 = vand.u32 2147483647, %v3671
    %vm3684 = vcmp.eq.f32.partialorder %v3683, 8.507059e+37
    %v3685 = vand.u32 %v3671, 2147483648
    %v3686 = vor.u32 1.1754944e-38, %v3685
    %v3687 = vsel %vm3684, %v3686, %v3682
    %v3688 = vmul.f32 1.0, %v3687
    %v3689 = vrcp.pop %v3672
    %v3690 = vmul.f32 %v3672, %v3689
    %v3691 = vsub.f32 1.0, %v3690
    %v3692 = vmul.f32 %v3689, %v3691
    %v3693 = vadd.f32 %v3689, %v3692
    %vm3694 = vweird.f32 %v3672
    %vm3695 = vweird.f32 %v3689
    %vm3696 = vmor %vm3694, %vm3695
    %v3697 = vsel %vm3696, %v3689, %v3693
    %v3698 = vand.u32 2147483647, %v3672
    %vm3699 = vcmp.eq.f32.partialorder %v3698, 8.507059e+37
    %v3700 = vand.u32 %v3672, 2147483648
    %v3701 = vor.u32 1.1754944e-38, %v3700
    %v3702 = vsel %vm3699, %v3701, %v3697
    %v3703 = vmul.f32 1.0, %v3702
    %v3704 = vrcp.pop %v3673
    %v3705 = vmul.f32 %v3673, %v3704
    %v3706 = vsub.f32 1.0, %v3705
    %v3707 = vmul.f32 %v3704, %v3706
    %v3708 = vadd.f32 %v3704, %v3707
    %vm3709 = vweird.f32 %v3673
    %vm3710 = vweird.f32 %v3704
    %vm3711 = vmor %vm3709, %vm3710
    %v3712 = vsel %vm3711, %v3704, %v3708
    %v3713 = vand.u32 2147483647, %v3673
    %vm3714 = vcmp.eq.f32.partialorder %v3713, 8.507059e+37
    %v3715 = vand.u32 %v3673, 2147483648
    %v3716 = vor.u32 1.1754944e-38, %v3715
    %v3717 = vsel %vm3714, %v3716, %v3712
    %v3718 = vmul.f32 1.0, %v3717
    %v3719 = vtanh.pop %v3659
    %v3720 = vmul.f32 %v3703, %v3266
    %v3721 = vmul.f32 %v3688, %v3719
    %v3722 = vadd.f32 %v3720, %v3721
    %v3723 = vtanh.pop %v3722
    %v3724 = vmul.f32 %v3718, %v3723
    %v3725 = vpack.c.bf16 %v3724, %v3724
    %3726 = vmatpush.bf16.msra.mxu0 %v970
    %3727 = vmatpush.bf16.msra.mxu0 %v966
    %3728 = vmatpush.bf16.msra.mxu0 %v962
    %3729 = vmatpush.bf16.msra.mxu0 %v958
    %3730 = vmatpush.bf16.msra.mxu0 %v954
    %3731 = vmatpush.bf16.msra.mxu0 %v950
    %3732 = vmatpush.bf16.msra.mxu0 %v946
    %3733 = vmatpush.bf16.msra.mxu0 %v942
    %3734 = vmatmul.bf16.gmra.mxu0 %v3389
    %v3735 = vpop.f32.mrf.mxu0
    %v3736 = vadd.f32 0.0, %v3735
    %v3737 = vpop.f32.mrf.mxu0
    %3738 = vdwg.mxu0
    %3739 = vmatpush.bf16.msra.mxu0 %v971
    %3740 = vmatpush.bf16.msra.mxu0 %v967
    %3741 = vmatpush.bf16.msra.mxu0 %v963
    %3742 = vmatpush.bf16.msra.mxu0 %v959
    %3743 = vmatpush.bf16.msra.mxu0 %v955
    %3744 = vmatpush.bf16.msra.mxu0 %v951
    %3745 = vmatpush.bf16.msra.mxu0 %v947
    %3746 = vmatpush.bf16.msra.mxu0 %v943
    %3747 = vmatmul.bf16.gmra.mxu0 %v3389
    %v3748 = vpop.f32.mrf.mxu0
    %v3749 = vadd.f32 0.0, %v3748
    %v3750 = vpop.f32.mrf.mxu0
    %3751 = vdwg.mxu0
    %3752 = vmatpush.bf16.msra.mxu0 %v972
    %3753 = vmatpush.bf16.msra.mxu0 %v968
    %3754 = vmatpush.bf16.msra.mxu0 %v964
    %3755 = vmatpush.bf16.msra.mxu0 %v960
    %3756 = vmatpush.bf16.msra.mxu0 %v956
    %3757 = vmatpush.bf16.msra.mxu0 %v952
    %3758 = vmatpush.bf16.msra.mxu0 %v948
    %3759 = vmatpush.bf16.msra.mxu0 %v944
    %3760 = vmatmul.bf16.gmra.mxu0 %v3389
    %v3761 = vpop.f32.mrf.mxu0
    %v3762 = vadd.f32 0.0, %v3761
    %v3763 = vpop.f32.mrf.mxu0
    %3764 = vdwg.mxu0
    %3765 = vmatpush.bf16.msra.mxu0 %v973
    %3766 = vmatpush.bf16.msra.mxu0 %v969
    %3767 = vmatpush.bf16.msra.mxu0 %v965
    %3768 = vmatpush.bf16.msra.mxu0 %v961
    %3769 = vmatpush.bf16.msra.mxu0 %v957
    %3770 = vmatpush.bf16.msra.mxu0 %v953
    %3771 = vmatpush.bf16.msra.mxu0 %v949
    %3772 = vmatpush.bf16.msra.mxu0 %v945
    %3773 = vmatmul.bf16.gmra.mxu0 %v3389
    %v3774 = vpop.f32.mrf.mxu0
    %v3775 = vadd.f32 0.0, %v3774
    %v3776 = vpop.f32.mrf.mxu0
    %3777 = vdwg.mxu0
    %v3778 = vadd.f32 %v157, %v3736
    %v3779 = vadd.f32 %v210, %v3749
    %v3780 = vadd.f32 %v263, %v3762
    %v3781 = vadd.f32 %v316, %v3775
    %v3782 = vxor.u32 %v3778, 2147483648
    %v3783 = vxor.u32 %v3779, 2147483648
    %v3784 = vxor.u32 %v3780, 2147483648
    %v3785 = vmul.f32 %v3782, 1.442695
    %v3786 = vpow.pop %v3785
    %v3787 = vmul.f32 %v3783, 1.442695
    %v3788 = vpow.pop %v3787
    %v3789 = vmul.f32 %v3784, 1.442695
    %v3790 = vpow.pop %v3789
    %v3791 = vadd.f32 %v3786, 1.0
    %v3792 = vadd.f32 %v3788, 1.0
    %v3793 = vadd.f32 %v3790, 1.0
    %v3794 = vrcp.pop %v3791
    %v3795 = vmul.f32 %v3791, %v3794
    %v3796 = vsub.f32 1.0, %v3795
    %v3797 = vmul.f32 %v3794, %v3796
    %v3798 = vadd.f32 %v3794, %v3797
    %vm3799 = vweird.f32 %v3791
    %vm3800 = vweird.f32 %v3794
    %vm3801 = vmor %vm3799, %vm3800
    %v3802 = vsel %vm3801, %v3794, %v3798
    %v3803 = vand.u32 2147483647, %v3791
    %vm3804 = vcmp.eq.f32.partialorder %v3803, 8.507059e+37
    %v3805 = vand.u32 %v3791, 2147483648
    %v3806 = vor.u32 1.1754944e-38, %v3805
    %v3807 = vsel %vm3804, %v3806, %v3802
    %v3808 = vmul.f32 1.0, %v3807
    %v3809 = vrcp.pop %v3792
    %v3810 = vmul.f32 %v3792, %v3809
    %v3811 = vsub.f32 1.0, %v3810
    %v3812 = vmul.f32 %v3809, %v3811
    %v3813 = vadd.f32 %v3809, %v3812
    %vm3814 = vweird.f32 %v3792
    %vm3815 = vweird.f32 %v3809
    %vm3816 = vmor %vm3814, %vm3815
    %v3817 = vsel %vm3816, %v3809, %v3813
    %v3818 = vand.u32 2147483647, %v3792
    %vm3819 = vcmp.eq.f32.partialorder %v3818, 8.507059e+37
    %v3820 = vand.u32 %v3792, 2147483648
    %v3821 = vor.u32 1.1754944e-38, %v3820
    %v3822 = vsel %vm3819, %v3821, %v3817
    %v3823 = vmul.f32 1.0, %v3822
    %v3824 = vrcp.pop %v3793
    %v3825 = vmul.f32 %v3793, %v3824
    %v3826 = vsub.f32 1.0, %v3825
    %v3827 = vmul.f32 %v3824, %v3826
    %v3828 = vadd.f32 %v3824, %v3827
    %vm3829 = vweird.f32 %v3793
    %vm3830 = vweird.f32 %v3824
    %vm3831 = vmor %vm3829, %vm3830
    %v3832 = vsel %vm3831, %v3824, %v3828
    %v3833 = vand.u32 2147483647, %v3793
    %vm3834 = vcmp.eq.f32.partialorder %v3833, 8.507059e+37
    %v3835 = vand.u32 %v3793, 2147483648
    %v3836 = vor.u32 1.1754944e-38, %v3835
    %v3837 = vsel %vm3834, %v3836, %v3832
    %v3838 = vmul.f32 1.0, %v3837
    %v3839 = vtanh.pop %v3781
    %v3840 = vmul.f32 %v3823, %v3386
    %v3841 = vmul.f32 %v3808, %v3839
    %v3842 = vadd.f32 %v3840, %v3841
    %v3843 = vtanh.pop %v3842
    %v3844 = vmul.f32 %v3838, %v3843
    %v3845 = vpack.c.bf16 %v3844, %v3844
    %3846 = vmatpush.bf16.msra.mxu0 %v1262
    %3847 = vmatpush.bf16.msra.mxu0 %v1258
    %3848 = vmatpush.bf16.msra.mxu0 %v1254
    %3849 = vmatpush.bf16.msra.mxu0 %v1250
    %3850 = vmatpush.bf16.msra.mxu0 %v1246
    %3851 = vmatpush.bf16.msra.mxu0 %v1242
    %3852 = vmatpush.bf16.msra.mxu0 %v1238
    %3853 = vmatpush.bf16.msra.mxu0 %v1234
    %3854 = vmatmul.bf16.gmra.mxu0 %v3725
    %v3855 = vpop.f32.mrf.mxu0
    %v3856 = vadd.f32 %v1134, %v3855
    %v3857 = vpop.f32.mrf.mxu0
    %3858 = vdwg.mxu0
    %3859 = vmatpush.bf16.msra.mxu0 %v1986
    %3860 = vmatpush.bf16.msra.mxu0 %v1982
    %3861 = vmatpush.bf16.msra.mxu0 %v1978
    %3862 = vmatpush.bf16.msra.mxu0 %v1974
    %3863 = vmatpush.bf16.msra.mxu0 %v1970
    %3864 = vmatpush.bf16.msra.mxu0 %v1966
    %3865 = vmatpush.bf16.msra.mxu0 %v1962
    %3866 = vmatpush.bf16.msra.mxu0 %v1958
    %3867 = vmatmul.bf16.gmra.mxu0 %v3557
    %v3868 = vpop.f32.mrf.mxu0
    %v3869 = vadd.f32 %v3856, %v3868
    %v3870 = vpop.f32.mrf.mxu0
    %3871 = vdwg.mxu0
    %3872 = vmatpush.bf16.msra.mxu0 %v1263
    %3873 = vmatpush.bf16.msra.mxu0 %v1259
    %3874 = vmatpush.bf16.msra.mxu0 %v1255
    %3875 = vmatpush.bf16.msra.mxu0 %v1251
    %3876 = vmatpush.bf16.msra.mxu0 %v1247
    %3877 = vmatpush.bf16.msra.mxu0 %v1243
    %3878 = vmatpush.bf16.msra.mxu0 %v1239
    %3879 = vmatpush.bf16.msra.mxu0 %v1235
    %3880 = vmatmul.bf16.gmra.mxu0 %v3725
    %v3881 = vpop.f32.mrf.mxu0
    %v3882 = vadd.f32 %v1135, %v3881
    %v3883 = vpop.f32.mrf.mxu0
    %3884 = vdwg.mxu0
    %3885 = vmatpush.bf16.msra.mxu0 %v1987
    %3886 = vmatpush.bf16.msra.mxu0 %v1983
    %3887 = vmatpush.bf16.msra.mxu0 %v1979
    %3888 = vmatpush.bf16.msra.mxu0 %v1975
    %3889 = vmatpush.bf16.msra.mxu0 %v1971
    %3890 = vmatpush.bf16.msra.mxu0 %v1967
    %3891 = vmatpush.bf16.msra.mxu0 %v1963
    %3892 = vmatpush.bf16.msra.mxu0 %v1959
    %3893 = vmatmul.bf16.gmra.mxu0 %v3557
    %v3894 = vpop.f32.mrf.mxu0
    %v3895 = vadd.f32 %v3882, %v3894
    %v3896 = vpop.f32.mrf.mxu0
    %3897 = vdwg.mxu0
    %3898 = vmatpush.bf16.msra.mxu0 %v1264
    %3899 = vmatpush.bf16.msra.mxu0 %v1260
    %3900 = vmatpush.bf16.msra.mxu0 %v1256
    %3901 = vmatpush.bf16.msra.mxu0 %v1252
    %3902 = vmatpush.bf16.msra.mxu0 %v1248
    %3903 = vmatpush.bf16.msra.mxu0 %v1244
    %3904 = vmatpush.bf16.msra.mxu0 %v1240
    %3905 = vmatpush.bf16.msra.mxu0 %v1236
    %3906 = vmatmul.bf16.gmra.mxu0 %v3725
    %v3907 = vpop.f32.mrf.mxu0
    %v3908 = vadd.f32 %v1136, %v3907
    %v3909 = vpop.f32.mrf.mxu0
    %3910 = vdwg.mxu0
    %3911 = vmatpush.bf16.msra.mxu0 %v1988
    %3912 = vmatpush.bf16.msra.mxu0 %v1984
    %3913 = vmatpush.bf16.msra.mxu0 %v1980
    %3914 = vmatpush.bf16.msra.mxu0 %v1976
    %3915 = vmatpush.bf16.msra.mxu0 %v1972
    %3916 = vmatpush.bf16.msra.mxu0 %v1968
    %3917 = vmatpush.bf16.msra.mxu0 %v1964
    %3918 = vmatpush.bf16.msra.mxu0 %v1960
    %3919 = vmatmul.bf16.gmra.mxu0 %v3557
    %v3920 = vpop.f32.mrf.mxu0
    %v3921 = vadd.f32 %v3908, %v3920
    %v3922 = vpop.f32.mrf.mxu0
    %3923 = vdwg.mxu0
    %3924 = vmatpush.bf16.msra.mxu0 %v1265
    %3925 = vmatpush.bf16.msra.mxu0 %v1261
    %3926 = vmatpush.bf16.msra.mxu0 %v1257
    %3927 = vmatpush.bf16.msra.mxu0 %v1253
    %3928 = vmatpush.bf16.msra.mxu0 %v1249
    %3929 = vmatpush.bf16.msra.mxu0 %v1245
    %3930 = vmatpush.bf16.msra.mxu0 %v1241
    %3931 = vmatpush.bf16.msra.mxu0 %v1237
    %3932 = vmatmul.bf16.gmra.mxu0 %v3725
    %v3933 = vpop.f32.mrf.mxu0
    %v3934 = vadd.f32 %v1137, %v3933
    %v3935 = vpop.f32.mrf.mxu0
    %3936 = vdwg.mxu0
    %3937 = vmatpush.bf16.msra.mxu0 %v1989
    %3938 = vmatpush.bf16.msra.mxu0 %v1985
    %3939 = vmatpush.bf16.msra.mxu0 %v1981
    %3940 = vmatpush.bf16.msra.mxu0 %v1977
    %3941 = vmatpush.bf16.msra.mxu0 %v1973
    %3942 = vmatpush.bf16.msra.mxu0 %v1969
    %3943 = vmatpush.bf16.msra.mxu0 %v1965
    %3944 = vmatpush.bf16.msra.mxu0 %v1961
    %3945 = vmatmul.bf16.gmra.mxu0 %v3557
    %v3946 = vpop.f32.mrf.mxu0
    %v3947 = vadd.f32 %v3934, %v3946
    %v3948 = vpop.f32.mrf.mxu0
    %3949 = vdwg.mxu0
    %v3950 = vxor.u32 %v3869, 2147483648
    %v3951 = vxor.u32 %v3895, 2147483648
    %v3952 = vxor.u32 %v3921, 2147483648
    %v3953 = vmul.f32 %v3950, 1.442695
    %v3954 = vpow.pop %v3953
    %v3955 = vmul.f32 %v3951, 1.442695
    %v3956 = vpow.pop %v3955
    %v3957 = vmul.f32 %v3952, 1.442695
    %v3958 = vpow.pop %v3957
    %v3959 = vadd.f32 %v3954, 1.0
    %v3960 = vadd.f32 %v3956, 1.0
    %v3961 = vadd.f32 %v3958, 1.0
    %v3962 = vrcp.pop %v3959
    %v3963 = vmul.f32 %v3959, %v3962
    %v3964 = vsub.f32 1.0, %v3963
    %v3965 = vmul.f32 %v3962, %v3964
    %v3966 = vadd.f32 %v3962, %v3965
    %vm3967 = vweird.f32 %v3959
    %vm3968 = vweird.f32 %v3962
    %vm3969 = vmor %vm3967, %vm3968
    %v3970 = vsel %vm3969, %v3962, %v3966
    %v3971 = vand.u32 2147483647, %v3959
    %vm3972 = vcmp.eq.f32.partialorder %v3971, 8.507059e+37
    %v3973 = vand.u32 %v3959, 2147483648
    %v3974 = vor.u32 1.1754944e-38, %v3973
    %v3975 = vsel %vm3972, %v3974, %v3970
    %v3976 = vmul.f32 1.0, %v3975
    %v3977 = vrcp.pop %v3960
    %v3978 = vmul.f32 %v3960, %v3977
    %v3979 = vsub.f32 1.0, %v3978
    %v3980 = vmul.f32 %v3977, %v3979
    %v3981 = vadd.f32 %v3977, %v3980
    %vm3982 = vweird.f32 %v3960
    %vm3983 = vweird.f32 %v3977
    %vm3984 = vmor %vm3982, %vm3983
    %v3985 = vsel %vm3984, %v3977, %v3981
    %v3986 = vand.u32 2147483647, %v3960
    %vm3987 = vcmp.eq.f32.partialorder %v3986, 8.507059e+37
    %v3988 = vand.u32 %v3960, 2147483648
    %v3989 = vor.u32 1.1754944e-38, %v3988
    %v3990 = vsel %vm3987, %v3989, %v3985
    %v3991 = vmul.f32 1.0, %v3990
    %v3992 = vrcp.pop %v3961
    %v3993 = vmul.f32 %v3961, %v3992
    %v3994 = vsub.f32 1.0, %v3993
    %v3995 = vmul.f32 %v3992, %v3994
    %v3996 = vadd.f32 %v3992, %v3995
    %vm3997 = vweird.f32 %v3961
    %vm3998 = vweird.f32 %v3992
    %vm3999 = vmor %vm3997, %vm3998
    %v4000 = vsel %vm3999, %v3992, %v3996
    %v4001 = vand.u32 2147483647, %v3961
    %vm4002 = vcmp.eq.f32.partialorder %v4001, 8.507059e+37
    %v4003 = vand.u32 %v3961, 2147483648
    %v4004 = vor.u32 1.1754944e-38, %v4003
    %v4005 = vsel %vm4002, %v4004, %v4000
    %v4006 = vmul.f32 1.0, %v4005
    %v4007 = vtanh.pop %v3947
    %v4008 = vmul.f32 %v3991, %v3554
    %v4009 = vmul.f32 %v3976, %v4007
    %v4010 = vadd.f32 %v4008, %v4009
    %v4011 = vtanh.pop %v4010
    %v4012 = vmul.f32 %v4006, %v4011
    %v4013 = vpack.c.bf16 %v4012, %v4012
    %4014 = vmatpush.bf16.msra.mxu0 %v694
    %4015 = vmatpush.bf16.msra.mxu0 %v690
    %4016 = vmatpush.bf16.msra.mxu0 %v686
    %4017 = vmatpush.bf16.msra.mxu0 %v682
    %4018 = vmatpush.bf16.msra.mxu0 %v678
    %4019 = vmatpush.bf16.msra.mxu0 %v674
    %4020 = vmatpush.bf16.msra.mxu0 %v670
    %4021 = vmatpush.bf16.msra.mxu0 %v666
    %4022 = vmatmul.bf16.gmra.mxu0 %v3845
    %v4023 = vpop.f32.mrf.mxu0
    %v4024 = vadd.f32 %v566, %v4023
    %v4025 = vpop.f32.mrf.mxu0
    %4026 = vdwg.mxu0
    %4027 = vmatpush.bf16.msra.mxu0 %v1538
    %4028 = vmatpush.bf16.msra.mxu0 %v1534
    %4029 = vmatpush.bf16.msra.mxu0 %v1530
    %4030 = vmatpush.bf16.msra.mxu0 %v1526
    %4031 = vmatpush.bf16.msra.mxu0 %v1522
    %4032 = vmatpush.bf16.msra.mxu0 %v1518
    %4033 = vmatpush.bf16.msra.mxu0 %v1514
    %4034 = vmatpush.bf16.msra.mxu0 %v1510
    %4035 = vmatmul.bf16.gmra.mxu0 %v3725
    %v4036 = vpop.f32.mrf.mxu0
    %v4037 = vadd.f32 %v4024, %v4036
    %v4038 = vpop.f32.mrf.mxu0
    %4039 = vdwg.mxu0
    %4040 = vmatpush.bf16.msra.mxu0 %v695
    %4041 = vmatpush.bf16.msra.mxu0 %v691
    %4042 = vmatpush.bf16.msra.mxu0 %v687
    %4043 = vmatpush.bf16.msra.mxu0 %v683
    %4044 = vmatpush.bf16.msra.mxu0 %v679
    %4045 = vmatpush.bf16.msra.mxu0 %v675
    %4046 = vmatpush.bf16.msra.mxu0 %v671
    %4047 = vmatpush.bf16.msra.mxu0 %v667
    %4048 = vmatmul.bf16.gmra.mxu0 %v3845
    %v4049 = vpop.f32.mrf.mxu0
    %v4050 = vadd.f32 %v567, %v4049
    %v4051 = vpop.f32.mrf.mxu0
    %4052 = vdwg.mxu0
    %4053 = vmatpush.bf16.msra.mxu0 %v1539
    %4054 = vmatpush.bf16.msra.mxu0 %v1535
    %4055 = vmatpush.bf16.msra.mxu0 %v1531
    %4056 = vmatpush.bf16.msra.mxu0 %v1527
    %4057 = vmatpush.bf16.msra.mxu0 %v1523
    %4058 = vmatpush.bf16.msra.mxu0 %v1519
    %4059 = vmatpush.bf16.msra.mxu0 %v1515
    %4060 = vmatpush.bf16.msra.mxu0 %v1511
    %4061 = vmatmul.bf16.gmra.mxu0 %v3725
    %v4062 = vpop.f32.mrf.mxu0
    %v4063 = vadd.f32 %v4050, %v4062
    %v4064 = vpop.f32.mrf.mxu0
    %4065 = vdwg.mxu0
    %4066 = vmatpush.bf16.msra.mxu0 %v696
    %4067 = vmatpush.bf16.msra.mxu0 %v692
    %4068 = vmatpush.bf16.msra.mxu0 %v688
    %4069 = vmatpush.bf16.msra.mxu0 %v684
    %4070 = vmatpush.bf16.msra.mxu0 %v680
    %4071 = vmatpush.bf16.msra.mxu0 %v676
    %4072 = vmatpush.bf16.msra.mxu0 %v672
    %4073 = vmatpush.bf16.msra.mxu0 %v668
    %4074 = vmatmul.bf16.gmra.mxu0 %v3845
    %v4075 = vpop.f32.mrf.mxu0
    %v4076 = vadd.f32 %v568, %v4075
    %v4077 = vpop.f32.mrf.mxu0
    %4078 = vdwg.mxu0
    %4079 = vmatpush.bf16.msra.mxu0 %v1540
    %4080 = vmatpush.bf16.msra.mxu0 %v1536
    %4081 = vmatpush.bf16.msra.mxu0 %v1532
    %4082 = vmatpush.bf16.msra.mxu0 %v1528
    %4083 = vmatpush.bf16.msra.mxu0 %v1524
    %4084 = vmatpush.bf16.msra.mxu0 %v1520
    %4085 = vmatpush.bf16.msra.mxu0 %v1516
    %4086 = vmatpush.bf16.msra.mxu0 %v1512
    %4087 = vmatmul.bf16.gmra.mxu0 %v3725
    %v4088 = vpop.f32.mrf.mxu0
    %v4089 = vadd.f32 %v4076, %v4088
    %v4090 = vpop.f32.mrf.mxu0
    %4091 = vdwg.mxu0
    %4092 = vmatpush.bf16.msra.mxu0 %v697
    %4093 = vmatpush.bf16.msra.mxu0 %v693
    %4094 = vmatpush.bf16.msra.mxu0 %v689
    %4095 = vmatpush.bf16.msra.mxu0 %v685
    %4096 = vmatpush.bf16.msra.mxu0 %v681
    %4097 = vmatpush.bf16.msra.mxu0 %v677
    %4098 = vmatpush.bf16.msra.mxu0 %v673
    %4099 = vmatpush.bf16.msra.mxu0 %v669
    %4100 = vmatmul.bf16.gmra.mxu0 %v3845
    %v4101 = vpop.f32.mrf.mxu0
    %v4102 = vadd.f32 %v569, %v4101
    %v4103 = vpop.f32.mrf.mxu0
    %4104 = vdwg.mxu0
    %4105 = vmatpush.bf16.msra.mxu0 %v1541
    %4106 = vmatpush.bf16.msra.mxu0 %v1537
    %4107 = vmatpush.bf16.msra.mxu0 %v1533
    %4108 = vmatpush.bf16.msra.mxu0 %v1529
    %4109 = vmatpush.bf16.msra.mxu0 %v1525
    %4110 = vmatpush.bf16.msra.mxu0 %v1521
    %4111 = vmatpush.bf16.msra.mxu0 %v1517
    %4112 = vmatpush.bf16.msra.mxu0 %v1513
    %4113 = vmatmul.bf16.gmra.mxu0 %v3725
    %v4114 = vpop.f32.mrf.mxu0
    %v4115 = vadd.f32 %v4102, %v4114
    %v4116 = vpop.f32.mrf.mxu0
    %4117 = vdwg.mxu0
    %v4118 = vxor.u32 %v4037, 2147483648
    %v4119 = vxor.u32 %v4063, 2147483648
    %v4120 = vxor.u32 %v4089, 2147483648
    %v4121 = vmul.f32 %v4118, 1.442695
    %v4122 = vpow.pop %v4121
    %v4123 = vmul.f32 %v4119, 1.442695
    %v4124 = vpow.pop %v4123
    %v4125 = vmul.f32 %v4120, 1.442695
    %v4126 = vpow.pop %v4125
    %v4127 = vadd.f32 %v4122, 1.0
    %v4128 = vadd.f32 %v4124, 1.0
    %v4129 = vadd.f32 %v4126, 1.0
    %v4130 = vrcp.pop %v4127
    %v4131 = vmul.f32 %v4127, %v4130
    %v4132 = vsub.f32 1.0, %v4131
    %v4133 = vmul.f32 %v4130, %v4132
    %v4134 = vadd.f32 %v4130, %v4133
    %vm4135 = vweird.f32 %v4127
    %vm4136 = vweird.f32 %v4130
    %vm4137 = vmor %vm4135, %vm4136
    %v4138 = vsel %vm4137, %v4130, %v4134
    %v4139 = vand.u32 2147483647, %v4127
    %vm4140 = vcmp.eq.f32.partialorder %v4139, 8.507059e+37
    %v4141 = vand.u32 %v4127, 2147483648
    %v4142 = vor.u32 1.1754944e-38, %v4141
    %v4143 = vsel %vm4140, %v4142, %v4138
    %v4144 = vmul.f32 1.0, %v4143
    %v4145 = vrcp.pop %v4128
    %v4146 = vmul.f32 %v4128, %v4145
    %v4147 = vsub.f32 1.0, %v4146
    %v4148 = vmul.f32 %v4145, %v4147
    %v4149 = vadd.f32 %v4145, %v4148
    %vm4150 = vweird.f32 %v4128
    %vm4151 = vweird.f32 %v4145
    %vm4152 = vmor %vm4150, %vm4151
    %v4153 = vsel %vm4152, %v4145, %v4149
    %v4154 = vand.u32 2147483647, %v4128
    %vm4155 = vcmp.eq.f32.partialorder %v4154, 8.507059e+37
    %v4156 = vand.u32 %v4128, 2147483648
    %v4157 = vor.u32 1.1754944e-38, %v4156
    %v4158 = vsel %vm4155, %v4157, %v4153
    %v4159 = vmul.f32 1.0, %v4158
    %v4160 = vrcp.pop %v4129
    %v4161 = vmul.f32 %v4129, %v4160
    %v4162 = vsub.f32 1.0, %v4161
    %v4163 = vmul.f32 %v4160, %v4162
    %v4164 = vadd.f32 %v4160, %v4163
    %vm4165 = vweird.f32 %v4129
    %vm4166 = vweird.f32 %v4160
    %vm4167 = vmor %vm4165, %vm4166
    %v4168 = vsel %vm4167, %v4160, %v4164
    %v4169 = vand.u32 2147483647, %v4129
    %vm4170 = vcmp.eq.f32.partialorder %v4169, 8.507059e+37
    %v4171 = vand.u32 %v4129, 2147483648
    %v4172 = vor.u32 1.1754944e-38, %v4171
    %v4173 = vsel %vm4170, %v4172, %v4168
    %v4174 = vmul.f32 1.0, %v4173
    %v4175 = vtanh.pop %v4115
    %v4176 = vmul.f32 %v4159, %v3722
    %v4177 = vmul.f32 %v4144, %v4175
    %v4178 = vadd.f32 %v4176, %v4177
    %v4179 = vtanh.pop %v4178
    %v4180 = vmul.f32 %v4174, %v4179
    %v4181 = vpack.c.bf16 %v4180, %v4180
    %4182 = vmatpush.bf16.msra.mxu0 %v970
    %4183 = vmatpush.bf16.msra.mxu0 %v966
    %4184 = vmatpush.bf16.msra.mxu0 %v962
    %4185 = vmatpush.bf16.msra.mxu0 %v958
    %4186 = vmatpush.bf16.msra.mxu0 %v954
    %4187 = vmatpush.bf16.msra.mxu0 %v950
    %4188 = vmatpush.bf16.msra.mxu0 %v946
    %4189 = vmatpush.bf16.msra.mxu0 %v942
    %4190 = vmatmul.bf16.gmra.mxu0 %v3845
    %v4191 = vpop.f32.mrf.mxu0
    %v4192 = vadd.f32 0.0, %v4191
    %v4193 = vpop.f32.mrf.mxu0
    %4194 = vdwg.mxu0
    %4195 = vmatpush.bf16.msra.mxu0 %v971
    %4196 = vmatpush.bf16.msra.mxu0 %v967
    %4197 = vmatpush.bf16.msra.mxu0 %v963
    %4198 = vmatpush.bf16.msra.mxu0 %v959
    %4199 = vmatpush.bf16.msra.mxu0 %v955
    %4200 = vmatpush.bf16.msra.mxu0 %v951
    %4201 = vmatpush.bf16.msra.mxu0 %v947
    %4202 = vmatpush.bf16.msra.mxu0 %v943
    %4203 = vmatmul.bf16.gmra.mxu0 %v3845
    %v4204 = vpop.f32.mrf.mxu0
    %v4205 = vadd.f32 0.0, %v4204
    %v4206 = vpop.f32.mrf.mxu0
    %4207 = vdwg.mxu0
    %4208 = vmatpush.bf16.msra.mxu0 %v972
    %4209 = vmatpush.bf16.msra.mxu0 %v968
    %4210 = vmatpush.bf16.msra.mxu0 %v964
    %4211 = vmatpush.bf16.msra.mxu0 %v960
    %4212 = vmatpush.bf16.msra.mxu0 %v956
    %4213 = vmatpush.bf16.msra.mxu0 %v952
    %4214 = vmatpush.bf16.msra.mxu0 %v948
    %4215 = vmatpush.bf16.msra.mxu0 %v944
    %4216 = vmatmul.bf16.gmra.mxu0 %v3845
    %v4217 = vpop.f32.mrf.mxu0
    %v4218 = vadd.f32 0.0, %v4217
    %v4219 = vpop.f32.mrf.mxu0
    %4220 = vdwg.mxu0
    %4221 = vmatpush.bf16.msra.mxu0 %v973
    %4222 = vmatpush.bf16.msra.mxu0 %v969
    %4223 = vmatpush.bf16.msra.mxu0 %v965
    %4224 = vmatpush.bf16.msra.mxu0 %v961
    %4225 = vmatpush.bf16.msra.mxu0 %v957
    %4226 = vmatpush.bf16.msra.mxu0 %v953
    %4227 = vmatpush.bf16.msra.mxu0 %v949
    %4228 = vmatpush.bf16.msra.mxu0 %v945
    %4229 = vmatmul.bf16.gmra.mxu0 %v3845
    %v4230 = vpop.f32.mrf.mxu0
    %v4231 = vadd.f32 0.0, %v4230
    %v4232 = vpop.f32.mrf.mxu0
    %4233 = vdwg.mxu0
    %v4234 = vadd.f32 %v160, %v4192
    %v4235 = vadd.f32 %v213, %v4205
    %v4236 = vadd.f32 %v266, %v4218
    %v4237 = vadd.f32 %v319, %v4231
    %v4238 = vxor.u32 %v4234, 2147483648
    %v4239 = vxor.u32 %v4235, 2147483648
    %v4240 = vxor.u32 %v4236, 2147483648
    %v4241 = vmul.f32 %v4238, 1.442695
    %v4242 = vpow.pop %v4241
    %v4243 = vmul.f32 %v4239, 1.442695
    %v4244 = vpow.pop %v4243
    %v4245 = vmul.f32 %v4240, 1.442695
    %v4246 = vpow.pop %v4245
    %v4247 = vadd.f32 %v4242, 1.0
    %v4248 = vadd.f32 %v4244, 1.0
    %v4249 = vadd.f32 %v4246, 1.0
    %v4250 = vrcp.pop %v4247
    %v4251 = vmul.f32 %v4247, %v4250
    %v4252 = vsub.f32 1.0, %v4251
    %v4253 = vmul.f32 %v4250, %v4252
    %v4254 = vadd.f32 %v4250, %v4253
    %vm4255 = vweird.f32 %v4247
    %vm4256 = vweird.f32 %v4250
    %vm4257 = vmor %vm4255, %vm4256
    %v4258 = vsel %vm4257, %v4250, %v4254
    %v4259 = vand.u32 2147483647, %v4247
    %vm4260 = vcmp.eq.f32.partialorder %v4259, 8.507059e+37
    %v4261 = vand.u32 %v4247, 2147483648
    %v4262 = vor.u32 1.1754944e-38, %v4261
    %v4263 = vsel %vm4260, %v4262, %v4258
    %v4264 = vmul.f32 1.0, %v4263
    %v4265 = vrcp.pop %v4248
    %v4266 = vmul.f32 %v4248, %v4265
    %v4267 = vsub.f32 1.0, %v4266
    %v4268 = vmul.f32 %v4265, %v4267
    %v4269 = vadd.f32 %v4265, %v4268
    %vm4270 = vweird.f32 %v4248
    %vm4271 = vweird.f32 %v4265
    %vm4272 = vmor %vm4270, %vm4271
    %v4273 = vsel %vm4272, %v4265, %v4269
    %v4274 = vand.u32 2147483647, %v4248
    %vm4275 = vcmp.eq.f32.partialorder %v4274, 8.507059e+37
    %v4276 = vand.u32 %v4248, 2147483648
    %v4277 = vor.u32 1.1754944e-38, %v4276
    %v4278 = vsel %vm4275, %v4277, %v4273
    %v4279 = vmul.f32 1.0, %v4278
    %v4280 = vrcp.pop %v4249
    %v4281 = vmul.f32 %v4249, %v4280
    %v4282 = vsub.f32 1.0, %v4281
    %v4283 = vmul.f32 %v4280, %v4282
    %v4284 = vadd.f32 %v4280, %v4283
    %vm4285 = vweird.f32 %v4249
    %vm4286 = vweird.f32 %v4280
    %vm4287 = vmor %vm4285, %vm4286
    %v4288 = vsel %vm4287, %v4280, %v4284
    %v4289 = vand.u32 2147483647, %v4249
    %vm4290 = vcmp.eq.f32.partialorder %v4289, 8.507059e+37
    %v4291 = vand.u32 %v4249, 2147483648
    %v4292 = vor.u32 1.1754944e-38, %v4291
    %v4293 = vsel %vm4290, %v4292, %v4288
    %v4294 = vmul.f32 1.0, %v4293
    %v4295 = vtanh.pop %v4237
    %v4296 = vmul.f32 %v4279, %v3842
    %v4297 = vmul.f32 %v4264, %v4295
    %v4298 = vadd.f32 %v4296, %v4297
    %v4299 = vtanh.pop %v4298
    %v4300 = vmul.f32 %v4294, %v4299
    %v4301 = vpack.c.bf16 %v4300, %v4300
    %4302 = vmatpush.bf16.msra.mxu0 %v1262
    %4303 = vmatpush.bf16.msra.mxu0 %v1258
    %4304 = vmatpush.bf16.msra.mxu0 %v1254
    %4305 = vmatpush.bf16.msra.mxu0 %v1250
    %4306 = vmatpush.bf16.msra.mxu0 %v1246
    %4307 = vmatpush.bf16.msra.mxu0 %v1242
    %4308 = vmatpush.bf16.msra.mxu0 %v1238
    %4309 = vmatpush.bf16.msra.mxu0 %v1234
    %4310 = vmatmul.bf16.gmra.mxu0 %v4181
    %v4311 = vpop.f32.mrf.mxu0
    %v4312 = vadd.f32 %v1134, %v4311
    %v4313 = vpop.f32.mrf.mxu0
    %4314 = vdwg.mxu0
    %4315 = vmatpush.bf16.msra.mxu0 %v1986
    %4316 = vmatpush.bf16.msra.mxu0 %v1982
    %4317 = vmatpush.bf16.msra.mxu0 %v1978
    %4318 = vmatpush.bf16.msra.mxu0 %v1974
    %4319 = vmatpush.bf16.msra.mxu0 %v1970
    %4320 = vmatpush.bf16.msra.mxu0 %v1966
    %4321 = vmatpush.bf16.msra.mxu0 %v1962
    %4322 = vmatpush.bf16.msra.mxu0 %v1958
    %4323 = vmatmul.bf16.gmra.mxu0 %v4013
    %v4324 = vpop.f32.mrf.mxu0
    %v4325 = vadd.f32 %v4312, %v4324
    %v4326 = vpop.f32.mrf.mxu0
    %4327 = vdwg.mxu0
    %4328 = vmatpush.bf16.msra.mxu0 %v1263
    %4329 = vmatpush.bf16.msra.mxu0 %v1259
    %4330 = vmatpush.bf16.msra.mxu0 %v1255
    %4331 = vmatpush.bf16.msra.mxu0 %v1251
    %4332 = vmatpush.bf16.msra.mxu0 %v1247
    %4333 = vmatpush.bf16.msra.mxu0 %v1243
    %4334 = vmatpush.bf16.msra.mxu0 %v1239
    %4335 = vmatpush.bf16.msra.mxu0 %v1235
    %4336 = vmatmul.bf16.gmra.mxu0 %v4181
    %v4337 = vpop.f32.mrf.mxu0
    %v4338 = vadd.f32 %v1135, %v4337
    %v4339 = vpop.f32.mrf.mxu0
    %4340 = vdwg.mxu0
    %4341 = vmatpush.bf16.msra.mxu0 %v1987
    %4342 = vmatpush.bf16.msra.mxu0 %v1983
    %4343 = vmatpush.bf16.msra.mxu0 %v1979
    %4344 = vmatpush.bf16.msra.mxu0 %v1975
    %4345 = vmatpush.bf16.msra.mxu0 %v1971
    %4346 = vmatpush.bf16.msra.mxu0 %v1967
    %4347 = vmatpush.bf16.msra.mxu0 %v1963
    %4348 = vmatpush.bf16.msra.mxu0 %v1959
    %4349 = vmatmul.bf16.gmra.mxu0 %v4013
    %v4350 = vpop.f32.mrf.mxu0
    %v4351 = vadd.f32 %v4338, %v4350
    %v4352 = vpop.f32.mrf.mxu0
    %4353 = vdwg.mxu0
    %4354 = vmatpush.bf16.msra.mxu0 %v1264
    %4355 = vmatpush.bf16.msra.mxu0 %v1260
    %4356 = vmatpush.bf16.msra.mxu0 %v1256
    %4357 = vmatpush.bf16.msra.mxu0 %v1252
    %4358 = vmatpush.bf16.msra.mxu0 %v1248
    %4359 = vmatpush.bf16.msra.mxu0 %v1244
    %4360 = vmatpush.bf16.msra.mxu0 %v1240
    %4361 = vmatpush.bf16.msra.mxu0 %v1236
    %4362 = vmatmul.bf16.gmra.mxu0 %v4181
    %v4363 = vpop.f32.mrf.mxu0
    %v4364 = vadd.f32 %v1136, %v4363
    %v4365 = vpop.f32.mrf.mxu0
    %4366 = vdwg.mxu0
    %4367 = vmatpush.bf16.msra.mxu0 %v1988
    %4368 = vmatpush.bf16.msra.mxu0 %v1984
    %4369 = vmatpush.bf16.msra.mxu0 %v1980
    %4370 = vmatpush.bf16.msra.mxu0 %v1976
    %4371 = vmatpush.bf16.msra.mxu0 %v1972
    %4372 = vmatpush.bf16.msra.mxu0 %v1968
    %4373 = vmatpush.bf16.msra.mxu0 %v1964
    %4374 = vmatpush.bf16.msra.mxu0 %v1960
    %4375 = vmatmul.bf16.gmra.mxu0 %v4013
    %v4376 = vpop.f32.mrf.mxu0
    %v4377 = vadd.f32 %v4364, %v4376
    %v4378 = vpop.f32.mrf.mxu0
    %4379 = vdwg.mxu0
    %4380 = vmatpush.bf16.msra.mxu0 %v1265
    %4381 = vmatpush.bf16.msra.mxu0 %v1261
    %4382 = vmatpush.bf16.msra.mxu0 %v1257
    %4383 = vmatpush.bf16.msra.mxu0 %v1253
    %4384 = vmatpush.bf16.msra.mxu0 %v1249
    %4385 = vmatpush.bf16.msra.mxu0 %v1245
    %4386 = vmatpush.bf16.msra.mxu0 %v1241
    %4387 = vmatpush.bf16.msra.mxu0 %v1237
    %4388 = vmatmul.bf16.gmra.mxu0 %v4181
    %v4389 = vpop.f32.mrf.mxu0
    %v4390 = vadd.f32 %v1137, %v4389
    %v4391 = vpop.f32.mrf.mxu0
    %4392 = vdwg.mxu0
    %4393 = vmatpush.bf16.msra.mxu0 %v1989
    %4394 = vmatpush.bf16.msra.mxu0 %v1985
    %4395 = vmatpush.bf16.msra.mxu0 %v1981
    %4396 = vmatpush.bf16.msra.mxu0 %v1977
    %4397 = vmatpush.bf16.msra.mxu0 %v1973
    %4398 = vmatpush.bf16.msra.mxu0 %v1969
    %4399 = vmatpush.bf16.msra.mxu0 %v1965
    %4400 = vmatpush.bf16.msra.mxu0 %v1961
    %4401 = vmatmul.bf16.gmra.mxu0 %v4013
    %v4402 = vpop.f32.mrf.mxu0
    %v4403 = vadd.f32 %v4390, %v4402
    %v4404 = vpop.f32.mrf.mxu0
    %4405 = vdwg.mxu0
    %v4406 = vxor.u32 %v4325, 2147483648
    %v4407 = vxor.u32 %v4351, 2147483648
    %v4408 = vxor.u32 %v4377, 2147483648
    %v4409 = vmul.f32 %v4406, 1.442695
    %v4410 = vpow.pop %v4409
    %v4411 = vmul.f32 %v4407, 1.442695
    %v4412 = vpow.pop %v4411
    %v4413 = vmul.f32 %v4408, 1.442695
    %v4414 = vpow.pop %v4413
    %v4415 = vadd.f32 %v4410, 1.0
    %v4416 = vadd.f32 %v4412, 1.0
    %v4417 = vadd.f32 %v4414, 1.0
    %v4418 = vrcp.pop %v4415
    %v4419 = vmul.f32 %v4415, %v4418
    %v4420 = vsub.f32 1.0, %v4419
    %v4421 = vmul.f32 %v4418, %v4420
    %v4422 = vadd.f32 %v4418, %v4421
    %vm4423 = vweird.f32 %v4415
    %vm4424 = vweird.f32 %v4418
    %vm4425 = vmor %vm4423, %vm4424
    %v4426 = vsel %vm4425, %v4418, %v4422
    %v4427 = vand.u32 2147483647, %v4415
    %vm4428 = vcmp.eq.f32.partialorder %v4427, 8.507059e+37
    %v4429 = vand.u32 %v4415, 2147483648
    %v4430 = vor.u32 1.1754944e-38, %v4429
    %v4431 = vsel %vm4428, %v4430, %v4426
    %v4432 = vmul.f32 1.0, %v4431
    %v4433 = vrcp.pop %v4416
    %v4434 = vmul.f32 %v4416, %v4433
    %v4435 = vsub.f32 1.0, %v4434
    %v4436 = vmul.f32 %v4433, %v4435
    %v4437 = vadd.f32 %v4433, %v4436
    %vm4438 = vweird.f32 %v4416
    %vm4439 = vweird.f32 %v4433
    %vm4440 = vmor %vm4438, %vm4439
    %v4441 = vsel %vm4440, %v4433, %v4437
    %v4442 = vand.u32 2147483647, %v4416
    %vm4443 = vcmp.eq.f32.partialorder %v4442, 8.507059e+37
    %v4444 = vand.u32 %v4416, 2147483648
    %v4445 = vor.u32 1.1754944e-38, %v4444
    %v4446 = vsel %vm4443, %v4445, %v4441
    %v4447 = vmul.f32 1.0, %v4446
    %v4448 = vrcp.pop %v4417
    %v4449 = vmul.f32 %v4417, %v4448
    %v4450 = vsub.f32 1.0, %v4449
    %v4451 = vmul.f32 %v4448, %v4450
    %v4452 = vadd.f32 %v4448, %v4451
    %vm4453 = vweird.f32 %v4417
    %vm4454 = vweird.f32 %v4448
    %vm4455 = vmor %vm4453, %vm4454
    %v4456 = vsel %vm4455, %v4448, %v4452
    %v4457 = vand.u32 2147483647, %v4417
    %vm4458 = vcmp.eq.f32.partialorder %v4457, 8.507059e+37
    %v4459 = vand.u32 %v4417, 2147483648
    %v4460 = vor.u32 1.1754944e-38, %v4459
    %v4461 = vsel %vm4458, %v4460, %v4456
    %v4462 = vmul.f32 1.0, %v4461
    %v4463 = vtanh.pop %v4403
    %v4464 = vmul.f32 %v4447, %v4010
    %v4465 = vmul.f32 %v4432, %v4463
    %v4466 = vadd.f32 %v4464, %v4465
    %v4467 = vtanh.pop %v4466
    %v4468 = vmul.f32 %v4462, %v4467
    %v4469 = vpack.c.bf16 %v4468, %v4468
    %4470 = vmatpush.bf16.msra.mxu0 %v694
    %4471 = vmatpush.bf16.msra.mxu0 %v690
    %4472 = vmatpush.bf16.msra.mxu0 %v686
    %4473 = vmatpush.bf16.msra.mxu0 %v682
    %4474 = vmatpush.bf16.msra.mxu0 %v678
    %4475 = vmatpush.bf16.msra.mxu0 %v674
    %4476 = vmatpush.bf16.msra.mxu0 %v670
    %4477 = vmatpush.bf16.msra.mxu0 %v666
    %4478 = vmatmul.bf16.gmra.mxu0 %v4301
    %v4479 = vpop.f32.mrf.mxu0
    %v4480 = vadd.f32 %v566, %v4479
    %v4481 = vpop.f32.mrf.mxu0
    %4482 = vdwg.mxu0
    %4483 = vmatpush.bf16.msra.mxu0 %v1538
    %4484 = vmatpush.bf16.msra.mxu0 %v1534
    %4485 = vmatpush.bf16.msra.mxu0 %v1530
    %4486 = vmatpush.bf16.msra.mxu0 %v1526
    %4487 = vmatpush.bf16.msra.mxu0 %v1522
    %4488 = vmatpush.bf16.msra.mxu0 %v1518
    %4489 = vmatpush.bf16.msra.mxu0 %v1514
    %4490 = vmatpush.bf16.msra.mxu0 %v1510
    %4491 = vmatmul.bf16.gmra.mxu0 %v4181
    %v4492 = vpop.f32.mrf.mxu0
    %v4493 = vadd.f32 %v4480, %v4492
    %v4494 = vpop.f32.mrf.mxu0
    %4495 = vdwg.mxu0
    %4496 = vmatpush.bf16.msra.mxu0 %v695
    %4497 = vmatpush.bf16.msra.mxu0 %v691
    %4498 = vmatpush.bf16.msra.mxu0 %v687
    %4499 = vmatpush.bf16.msra.mxu0 %v683
    %4500 = vmatpush.bf16.msra.mxu0 %v679
    %4501 = vmatpush.bf16.msra.mxu0 %v675
    %4502 = vmatpush.bf16.msra.mxu0 %v671
    %4503 = vmatpush.bf16.msra.mxu0 %v667
    %4504 = vmatmul.bf16.gmra.mxu0 %v4301
    %v4505 = vpop.f32.mrf.mxu0
    %v4506 = vadd.f32 %v567, %v4505
    %v4507 = vpop.f32.mrf.mxu0
    %4508 = vdwg.mxu0
    %4509 = vmatpush.bf16.msra.mxu0 %v1539
    %4510 = vmatpush.bf16.msra.mxu0 %v1535
    %4511 = vmatpush.bf16.msra.mxu0 %v1531
    %4512 = vmatpush.bf16.msra.mxu0 %v1527
    %4513 = vmatpush.bf16.msra.mxu0 %v1523
    %4514 = vmatpush.bf16.msra.mxu0 %v1519
    %4515 = vmatpush.bf16.msra.mxu0 %v1515
    %4516 = vmatpush.bf16.msra.mxu0 %v1511
    %4517 = vmatmul.bf16.gmra.mxu0 %v4181
    %v4518 = vpop.f32.mrf.mxu0
    %v4519 = vadd.f32 %v4506, %v4518
    %v4520 = vpop.f32.mrf.mxu0
    %4521 = vdwg.mxu0
    %4522 = vmatpush.bf16.msra.mxu0 %v696
    %4523 = vmatpush.bf16.msra.mxu0 %v692
    %4524 = vmatpush.bf16.msra.mxu0 %v688
    %4525 = vmatpush.bf16.msra.mxu0 %v684
    %4526 = vmatpush.bf16.msra.mxu0 %v680
    %4527 = vmatpush.bf16.msra.mxu0 %v676
    %4528 = vmatpush.bf16.msra.mxu0 %v672
    %4529 = vmatpush.bf16.msra.mxu0 %v668
    %4530 = vmatmul.bf16.gmra.mxu0 %v4301
    %v4531 = vpop.f32.mrf.mxu0
    %v4532 = vadd.f32 %v568, %v4531
    %v4533 = vpop.f32.mrf.mxu0
    %4534 = vdwg.mxu0
    %4535 = vmatpush.bf16.msra.mxu0 %v1540
    %4536 = vmatpush.bf16.msra.mxu0 %v1536
    %4537 = vmatpush.bf16.msra.mxu0 %v1532
    %4538 = vmatpush.bf16.msra.mxu0 %v1528
    %4539 = vmatpush.bf16.msra.mxu0 %v1524
    %4540 = vmatpush.bf16.msra.mxu0 %v1520
    %4541 = vmatpush.bf16.msra.mxu0 %v1516
    %4542 = vmatpush.bf16.msra.mxu0 %v1512
    %4543 = vmatmul.bf16.gmra.mxu0 %v4181
    %v4544 = vpop.f32.mrf.mxu0
    %v4545 = vadd.f32 %v4532, %v4544
    %v4546 = vpop.f32.mrf.mxu0
    %4547 = vdwg.mxu0
    %4548 = vmatpush.bf16.msra.mxu0 %v697
    %4549 = vmatpush.bf16.msra.mxu0 %v693
    %4550 = vmatpush.bf16.msra.mxu0 %v689
    %4551 = vmatpush.bf16.msra.mxu0 %v685
    %4552 = vmatpush.bf16.msra.mxu0 %v681
    %4553 = vmatpush.bf16.msra.mxu0 %v677
    %4554 = vmatpush.bf16.msra.mxu0 %v673
    %4555 = vmatpush.bf16.msra.mxu0 %v669
    %4556 = vmatmul.bf16.gmra.mxu0 %v4301
    %v4557 = vpop.f32.mrf.mxu0
    %v4558 = vadd.f32 %v569, %v4557
    %v4559 = vpop.f32.mrf.mxu0
    %4560 = vdwg.mxu0
    %4561 = vmatpush.bf16.msra.mxu0 %v1541
    %4562 = vmatpush.bf16.msra.mxu0 %v1537
    %4563 = vmatpush.bf16.msra.mxu0 %v1533
    %4564 = vmatpush.bf16.msra.mxu0 %v1529
    %4565 = vmatpush.bf16.msra.mxu0 %v1525
    %4566 = vmatpush.bf16.msra.mxu0 %v1521
    %4567 = vmatpush.bf16.msra.mxu0 %v1517
    %4568 = vmatpush.bf16.msra.mxu0 %v1513
    %4569 = vmatmul.bf16.gmra.mxu0 %v4181
    %v4570 = vpop.f32.mrf.mxu0
    %v4571 = vadd.f32 %v4558, %v4570
    %v4572 = vpop.f32.mrf.mxu0
    %4573 = vdwg.mxu0
    %v4574 = vxor.u32 %v4493, 2147483648
    %v4575 = vxor.u32 %v4519, 2147483648
    %v4576 = vxor.u32 %v4545, 2147483648
    %v4577 = vmul.f32 %v4574, 1.442695
    %v4578 = vpow.pop %v4577
    %v4579 = vmul.f32 %v4575, 1.442695
    %v4580 = vpow.pop %v4579
    %v4581 = vmul.f32 %v4576, 1.442695
    %v4582 = vpow.pop %v4581
    %v4583 = vadd.f32 %v4578, 1.0
    %v4584 = vadd.f32 %v4580, 1.0
    %v4585 = vadd.f32 %v4582, 1.0
    %v4586 = vrcp.pop %v4583
    %v4587 = vmul.f32 %v4583, %v4586
    %v4588 = vsub.f32 1.0, %v4587
    %v4589 = vmul.f32 %v4586, %v4588
    %v4590 = vadd.f32 %v4586, %v4589
    %vm4591 = vweird.f32 %v4583
    %vm4592 = vweird.f32 %v4586
    %vm4593 = vmor %vm4591, %vm4592
    %v4594 = vsel %vm4593, %v4586, %v4590
    %v4595 = vand.u32 2147483647, %v4583
    %vm4596 = vcmp.eq.f32.partialorder %v4595, 8.507059e+37
    %v4597 = vand.u32 %v4583, 2147483648
    %v4598 = vor.u32 1.1754944e-38, %v4597
    %v4599 = vsel %vm4596, %v4598, %v4594
    %v4600 = vmul.f32 1.0, %v4599
    %v4601 = vrcp.pop %v4584
    %v4602 = vmul.f32 %v4584, %v4601
    %v4603 = vsub.f32 1.0, %v4602
    %v4604 = vmul.f32 %v4601, %v4603
    %v4605 = vadd.f32 %v4601, %v4604
    %vm4606 = vweird.f32 %v4584
    %vm4607 = vweird.f32 %v4601
    %vm4608 = vmor %vm4606, %vm4607
    %v4609 = vsel %vm4608, %v4601, %v4605
    %v4610 = vand.u32 2147483647, %v4584
    %vm4611 = vcmp.eq.f32.partialorder %v4610, 8.507059e+37
    %v4612 = vand.u32 %v4584, 2147483648
    %v4613 = vor.u32 1.1754944e-38, %v4612
    %v4614 = vsel %vm4611, %v4613, %v4609
    %v4615 = vmul.f32 1.0, %v4614
    %v4616 = vrcp.pop %v4585
    %v4617 = vmul.f32 %v4585, %v4616
    %v4618 = vsub.f32 1.0, %v4617
    %v4619 = vmul.f32 %v4616, %v4618
    %v4620 = vadd.f32 %v4616, %v4619
    %vm4621 = vweird.f32 %v4585
    %vm4622 = vweird.f32 %v4616
    %vm4623 = vmor %vm4621, %vm4622
    %v4624 = vsel %vm4623, %v4616, %v4620
    %v4625 = vand.u32 2147483647, %v4585
    %vm4626 = vcmp.eq.f32.partialorder %v4625, 8.507059e+37
    %v4627 = vand.u32 %v4585, 2147483648
    %v4628 = vor.u32 1.1754944e-38, %v4627
    %v4629 = vsel %vm4626, %v4628, %v4624
    %v4630 = vmul.f32 1.0, %v4629
    %v4631 = vtanh.pop %v4571
    %v4632 = vmul.f32 %v4615, %v4178
    %v4633 = vmul.f32 %v4600, %v4631
    %v4634 = vadd.f32 %v4632, %v4633
    %v4635 = vtanh.pop %v4634
    %v4636 = vmul.f32 %v4630, %v4635
    %v4637 = vpack.c.bf16 %v4636, %v4636
    %4638 = vmatpush.bf16.msra.mxu0 %v970
    %4639 = vmatpush.bf16.msra.mxu0 %v966
    %4640 = vmatpush.bf16.msra.mxu0 %v962
    %4641 = vmatpush.bf16.msra.mxu0 %v958
    %4642 = vmatpush.bf16.msra.mxu0 %v954
    %4643 = vmatpush.bf16.msra.mxu0 %v950
    %4644 = vmatpush.bf16.msra.mxu0 %v946
    %4645 = vmatpush.bf16.msra.mxu0 %v942
    %4646 = vmatmul.bf16.gmra.mxu0 %v4301
    %v4647 = vpop.f32.mrf.mxu0
    %v4648 = vadd.f32 0.0, %v4647
    %v4649 = vpop.f32.mrf.mxu0
    %4650 = vdwg.mxu0
    %4651 = vmatpush.bf16.msra.mxu0 %v971
    %4652 = vmatpush.bf16.msra.mxu0 %v967
    %4653 = vmatpush.bf16.msra.mxu0 %v963
    %4654 = vmatpush.bf16.msra.mxu0 %v959
    %4655 = vmatpush.bf16.msra.mxu0 %v955
    %4656 = vmatpush.bf16.msra.mxu0 %v951
    %4657 = vmatpush.bf16.msra.mxu0 %v947
    %4658 = vmatpush.bf16.msra.mxu0 %v943
    %4659 = vmatmul.bf16.gmra.mxu0 %v4301
    %v4660 = vpop.f32.mrf.mxu0
    %v4661 = vadd.f32 0.0, %v4660
    %v4662 = vpop.f32.mrf.mxu0
    %4663 = vdwg.mxu0
    %4664 = vmatpush.bf16.msra.mxu0 %v972
    %4665 = vmatpush.bf16.msra.mxu0 %v968
    %4666 = vmatpush.bf16.msra.mxu0 %v964
    %4667 = vmatpush.bf16.msra.mxu0 %v960
    %4668 = vmatpush.bf16.msra.mxu0 %v956
    %4669 = vmatpush.bf16.msra.mxu0 %v952
    %4670 = vmatpush.bf16.msra.mxu0 %v948
    %4671 = vmatpush.bf16.msra.mxu0 %v944
    %4672 = vmatmul.bf16.gmra.mxu0 %v4301
    %v4673 = vpop.f32.mrf.mxu0
    %v4674 = vadd.f32 0.0, %v4673
    %v4675 = vpop.f32.mrf.mxu0
    %4676 = vdwg.mxu0
    %4677 = vmatpush.bf16.msra.mxu0 %v973
    %4678 = vmatpush.bf16.msra.mxu0 %v969
    %4679 = vmatpush.bf16.msra.mxu0 %v965
    %4680 = vmatpush.bf16.msra.mxu0 %v961
    %4681 = vmatpush.bf16.msra.mxu0 %v957
    %4682 = vmatpush.bf16.msra.mxu0 %v953
    %4683 = vmatpush.bf16.msra.mxu0 %v949
    %4684 = vmatpush.bf16.msra.mxu0 %v945
    %4685 = vmatmul.bf16.gmra.mxu0 %v4301
    %v4686 = vpop.f32.mrf.mxu0
    %v4687 = vadd.f32 0.0, %v4686
    %v4688 = vpop.f32.mrf.mxu0
    %4689 = vdwg.mxu0
    %v4690 = vadd.f32 %v163, %v4648
    %v4691 = vadd.f32 %v216, %v4661
    %v4692 = vadd.f32 %v269, %v4674
    %v4693 = vadd.f32 %v322, %v4687
    %v4694 = vxor.u32 %v4690, 2147483648
    %v4695 = vxor.u32 %v4691, 2147483648
    %v4696 = vxor.u32 %v4692, 2147483648
    %v4697 = vmul.f32 %v4694, 1.442695
    %v4698 = vpow.pop %v4697
    %v4699 = vmul.f32 %v4695, 1.442695
    %v4700 = vpow.pop %v4699
    %v4701 = vmul.f32 %v4696, 1.442695
    %v4702 = vpow.pop %v4701
    %v4703 = vadd.f32 %v4698, 1.0
    %v4704 = vadd.f32 %v4700, 1.0
    %v4705 = vadd.f32 %v4702, 1.0
    %v4706 = vrcp.pop %v4703
    %v4707 = vmul.f32 %v4703, %v4706
    %v4708 = vsub.f32 1.0, %v4707
    %v4709 = vmul.f32 %v4706, %v4708
    %v4710 = vadd.f32 %v4706, %v4709
    %vm4711 = vweird.f32 %v4703
    %vm4712 = vweird.f32 %v4706
    %vm4713 = vmor %vm4711, %vm4712
    %v4714 = vsel %vm4713, %v4706, %v4710
    %v4715 = vand.u32 2147483647, %v4703
    %vm4716 = vcmp.eq.f32.partialorder %v4715, 8.507059e+37
    %v4717 = vand.u32 %v4703, 2147483648
    %v4718 = vor.u32 1.1754944e-38, %v4717
    %v4719 = vsel %vm4716, %v4718, %v4714
    %v4720 = vmul.f32 1.0, %v4719
    %v4721 = vrcp.pop %v4704
    %v4722 = vmul.f32 %v4704, %v4721
    %v4723 = vsub.f32 1.0, %v4722
    %v4724 = vmul.f32 %v4721, %v4723
    %v4725 = vadd.f32 %v4721, %v4724
    %vm4726 = vweird.f32 %v4704
    %vm4727 = vweird.f32 %v4721
    %vm4728 = vmor %vm4726, %vm4727
    %v4729 = vsel %vm4728, %v4721, %v4725
    %v4730 = vand.u32 2147483647, %v4704
    %vm4731 = vcmp.eq.f32.partialorder %v4730, 8.507059e+37
    %v4732 = vand.u32 %v4704, 2147483648
    %v4733 = vor.u32 1.1754944e-38, %v4732
    %v4734 = vsel %vm4731, %v4733, %v4729
    %v4735 = vmul.f32 1.0, %v4734
    %v4736 = vrcp.pop %v4705
    %v4737 = vmul.f32 %v4705, %v4736
    %v4738 = vsub.f32 1.0, %v4737
    %v4739 = vmul.f32 %v4736, %v4738
    %v4740 = vadd.f32 %v4736, %v4739
    %vm4741 = vweird.f32 %v4705
    %vm4742 = vweird.f32 %v4736
    %vm4743 = vmor %vm4741, %vm4742
    %v4744 = vsel %vm4743, %v4736, %v4740
    %v4745 = vand.u32 2147483647, %v4705
    %vm4746 = vcmp.eq.f32.partialorder %v4745, 8.507059e+37
    %v4747 = vand.u32 %v4705, 2147483648
    %v4748 = vor.u32 1.1754944e-38, %v4747
    %v4749 = vsel %vm4746, %v4748, %v4744
    %v4750 = vmul.f32 1.0, %v4749
    %v4751 = vtanh.pop %v4693
    %v4752 = vmul.f32 %v4735, %v4298
    %v4753 = vmul.f32 %v4720, %v4751
    %v4754 = vadd.f32 %v4752, %v4753
    %v4755 = vtanh.pop %v4754
    %v4756 = vmul.f32 %v4750, %v4755
    %v4757 = vpack.c.bf16 %v4756, %v4756
    %4758 = vmatpush.bf16.msra.mxu0 %v1262
    %4759 = vmatpush.bf16.msra.mxu0 %v1258
    %4760 = vmatpush.bf16.msra.mxu0 %v1254
    %4761 = vmatpush.bf16.msra.mxu0 %v1250
    %4762 = vmatpush.bf16.msra.mxu0 %v1246
    %4763 = vmatpush.bf16.msra.mxu0 %v1242
    %4764 = vmatpush.bf16.msra.mxu0 %v1238
    %4765 = vmatpush.bf16.msra.mxu0 %v1234
    %4766 = vmatmul.bf16.gmra.mxu0 %v4637
    %v4767 = vpop.f32.mrf.mxu0
    %v4768 = vadd.f32 %v1134, %v4767
    %v4769 = vpop.f32.mrf.mxu0
    %4770 = vdwg.mxu0
    %4771 = vmatpush.bf16.msra.mxu0 %v1986
    %4772 = vmatpush.bf16.msra.mxu0 %v1982
    %4773 = vmatpush.bf16.msra.mxu0 %v1978
    %4774 = vmatpush.bf16.msra.mxu0 %v1974
    %4775 = vmatpush.bf16.msra.mxu0 %v1970
    %4776 = vmatpush.bf16.msra.mxu0 %v1966
    %4777 = vmatpush.bf16.msra.mxu0 %v1962
    %4778 = vmatpush.bf16.msra.mxu0 %v1958
    %4779 = vmatmul.bf16.gmra.mxu0 %v4469
    %v4780 = vpop.f32.mrf.mxu0
    %v4781 = vadd.f32 %v4768, %v4780
    %v4782 = vpop.f32.mrf.mxu0
    %4783 = vdwg.mxu0
    %4784 = vmatpush.bf16.msra.mxu0 %v1263
    %4785 = vmatpush.bf16.msra.mxu0 %v1259
    %4786 = vmatpush.bf16.msra.mxu0 %v1255
    %4787 = vmatpush.bf16.msra.mxu0 %v1251
    %4788 = vmatpush.bf16.msra.mxu0 %v1247
    %4789 = vmatpush.bf16.msra.mxu0 %v1243
    %4790 = vmatpush.bf16.msra.mxu0 %v1239
    %4791 = vmatpush.bf16.msra.mxu0 %v1235
    %4792 = vmatmul.bf16.gmra.mxu0 %v4637
    %v4793 = vpop.f32.mrf.mxu0
    %v4794 = vadd.f32 %v1135, %v4793
    %v4795 = vpop.f32.mrf.mxu0
    %4796 = vdwg.mxu0
    %4797 = vmatpush.bf16.msra.mxu0 %v1987
    %4798 = vmatpush.bf16.msra.mxu0 %v1983
    %4799 = vmatpush.bf16.msra.mxu0 %v1979
    %4800 = vmatpush.bf16.msra.mxu0 %v1975
    %4801 = vmatpush.bf16.msra.mxu0 %v1971
    %4802 = vmatpush.bf16.msra.mxu0 %v1967
    %4803 = vmatpush.bf16.msra.mxu0 %v1963
    %4804 = vmatpush.bf16.msra.mxu0 %v1959
    %4805 = vmatmul.bf16.gmra.mxu0 %v4469
    %v4806 = vpop.f32.mrf.mxu0
    %v4807 = vadd.f32 %v4794, %v4806
    %v4808 = vpop.f32.mrf.mxu0
    %4809 = vdwg.mxu0
    %4810 = vmatpush.bf16.msra.mxu0 %v1264
    %4811 = vmatpush.bf16.msra.mxu0 %v1260
    %4812 = vmatpush.bf16.msra.mxu0 %v1256
    %4813 = vmatpush.bf16.msra.mxu0 %v1252
    %4814 = vmatpush.bf16.msra.mxu0 %v1248
    %4815 = vmatpush.bf16.msra.mxu0 %v1244
    %4816 = vmatpush.bf16.msra.mxu0 %v1240
    %4817 = vmatpush.bf16.msra.mxu0 %v1236
    %4818 = vmatmul.bf16.gmra.mxu0 %v4637
    %v4819 = vpop.f32.mrf.mxu0
    %v4820 = vadd.f32 %v1136, %v4819
    %v4821 = vpop.f32.mrf.mxu0
    %4822 = vdwg.mxu0
    %4823 = vmatpush.bf16.msra.mxu0 %v1988
    %4824 = vmatpush.bf16.msra.mxu0 %v1984
    %4825 = vmatpush.bf16.msra.mxu0 %v1980
    %4826 = vmatpush.bf16.msra.mxu0 %v1976
    %4827 = vmatpush.bf16.msra.mxu0 %v1972
    %4828 = vmatpush.bf16.msra.mxu0 %v1968
    %4829 = vmatpush.bf16.msra.mxu0 %v1964
    %4830 = vmatpush.bf16.msra.mxu0 %v1960
    %4831 = vmatmul.bf16.gmra.mxu0 %v4469
    %v4832 = vpop.f32.mrf.mxu0
    %v4833 = vadd.f32 %v4820, %v4832
    %v4834 = vpop.f32.mrf.mxu0
    %4835 = vdwg.mxu0
    %4836 = vmatpush.bf16.msra.mxu0 %v1265
    %4837 = vmatpush.bf16.msra.mxu0 %v1261
    %4838 = vmatpush.bf16.msra.mxu0 %v1257
    %4839 = vmatpush.bf16.msra.mxu0 %v1253
    %4840 = vmatpush.bf16.msra.mxu0 %v1249
    %4841 = vmatpush.bf16.msra.mxu0 %v1245
    %4842 = vmatpush.bf16.msra.mxu0 %v1241
    %4843 = vmatpush.bf16.msra.mxu0 %v1237
    %4844 = vmatmul.bf16.gmra.mxu0 %v4637
    %v4845 = vpop.f32.mrf.mxu0
    %v4846 = vadd.f32 %v1137, %v4845
    %v4847 = vpop.f32.mrf.mxu0
    %4848 = vdwg.mxu0
    %4849 = vmatpush.bf16.msra.mxu0 %v1989
    %4850 = vmatpush.bf16.msra.mxu0 %v1985
    %4851 = vmatpush.bf16.msra.mxu0 %v1981
    %4852 = vmatpush.bf16.msra.mxu0 %v1977
    %4853 = vmatpush.bf16.msra.mxu0 %v1973
    %4854 = vmatpush.bf16.msra.mxu0 %v1969
    %4855 = vmatpush.bf16.msra.mxu0 %v1965
    %4856 = vmatpush.bf16.msra.mxu0 %v1961
    %4857 = vmatmul.bf16.gmra.mxu0 %v4469
    %v4858 = vpop.f32.mrf.mxu0
    %v4859 = vadd.f32 %v4846, %v4858
    %v4860 = vpop.f32.mrf.mxu0
    %4861 = vdwg.mxu0
    %v4862 = vxor.u32 %v4781, 2147483648
    %v4863 = vxor.u32 %v4807, 2147483648
    %v4864 = vxor.u32 %v4833, 2147483648
    %v4865 = vmul.f32 %v4862, 1.442695
    %v4866 = vpow.pop %v4865
    %v4867 = vmul.f32 %v4863, 1.442695
    %v4868 = vpow.pop %v4867
    %v4869 = vmul.f32 %v4864, 1.442695
    %v4870 = vpow.pop %v4869
    %v4871 = vadd.f32 %v4866, 1.0
    %v4872 = vadd.f32 %v4868, 1.0
    %v4873 = vadd.f32 %v4870, 1.0
    %v4874 = vrcp.pop %v4871
    %v4875 = vmul.f32 %v4871, %v4874
    %v4876 = vsub.f32 1.0, %v4875
    %v4877 = vmul.f32 %v4874, %v4876
    %v4878 = vadd.f32 %v4874, %v4877
    %vm4879 = vweird.f32 %v4871
    %vm4880 = vweird.f32 %v4874
    %vm4881 = vmor %vm4879, %vm4880
    %v4882 = vsel %vm4881, %v4874, %v4878
    %v4883 = vand.u32 2147483647, %v4871
    %vm4884 = vcmp.eq.f32.partialorder %v4883, 8.507059e+37
    %v4885 = vand.u32 %v4871, 2147483648
    %v4886 = vor.u32 1.1754944e-38, %v4885
    %v4887 = vsel %vm4884, %v4886, %v4882
    %v4888 = vmul.f32 1.0, %v4887
    %v4889 = vrcp.pop %v4872
    %v4890 = vmul.f32 %v4872, %v4889
    %v4891 = vsub.f32 1.0, %v4890
    %v4892 = vmul.f32 %v4889, %v4891
    %v4893 = vadd.f32 %v4889, %v4892
    %vm4894 = vweird.f32 %v4872
    %vm4895 = vweird.f32 %v4889
    %vm4896 = vmor %vm4894, %vm4895
    %v4897 = vsel %vm4896, %v4889, %v4893
    %v4898 = vand.u32 2147483647, %v4872
    %vm4899 = vcmp.eq.f32.partialorder %v4898, 8.507059e+37
    %v4900 = vand.u32 %v4872, 2147483648
    %v4901 = vor.u32 1.1754944e-38, %v4900
    %v4902 = vsel %vm4899, %v4901, %v4897
    %v4903 = vmul.f32 1.0, %v4902
    %v4904 = vrcp.pop %v4873
    %v4905 = vmul.f32 %v4873, %v4904
    %v4906 = vsub.f32 1.0, %v4905
    %v4907 = vmul.f32 %v4904, %v4906
    %v4908 = vadd.f32 %v4904, %v4907
    %vm4909 = vweird.f32 %v4873
    %vm4910 = vweird.f32 %v4904
    %vm4911 = vmor %vm4909, %vm4910
    %v4912 = vsel %vm4911, %v4904, %v4908
    %v4913 = vand.u32 2147483647, %v4873
    %vm4914 = vcmp.eq.f32.partialorder %v4913, 8.507059e+37
    %v4915 = vand.u32 %v4873, 2147483648
    %v4916 = vor.u32 1.1754944e-38, %v4915
    %v4917 = vsel %vm4914, %v4916, %v4912
    %v4918 = vmul.f32 1.0, %v4917
    %v4919 = vtanh.pop %v4859
    %v4920 = vmul.f32 %v4903, %v4466
    %v4921 = vmul.f32 %v4888, %v4919
    %v4922 = vadd.f32 %v4920, %v4921
    %v4923 = vtanh.pop %v4922
    %v4924 = vmul.f32 %v4918, %v4923
    %v4925 = vpack.c.bf16 %v4924, %v4924
    %4926 = vmatpush.bf16.msra.mxu0 %v694
    %4927 = vmatpush.bf16.msra.mxu0 %v690
    %4928 = vmatpush.bf16.msra.mxu0 %v686
    %4929 = vmatpush.bf16.msra.mxu0 %v682
    %4930 = vmatpush.bf16.msra.mxu0 %v678
    %4931 = vmatpush.bf16.msra.mxu0 %v674
    %4932 = vmatpush.bf16.msra.mxu0 %v670
    %4933 = vmatpush.bf16.msra.mxu0 %v666
    %4934 = vmatmul.bf16.gmra.mxu0 %v4757
    %v4935 = vpop.f32.mrf.mxu0
    %v4936 = vadd.f32 %v566, %v4935
    %v4937 = vpop.f32.mrf.mxu0
    %4938 = vdwg.mxu0
    %4939 = vmatpush.bf16.msra.mxu0 %v1538
    %4940 = vmatpush.bf16.msra.mxu0 %v1534
    %4941 = vmatpush.bf16.msra.mxu0 %v1530
    %4942 = vmatpush.bf16.msra.mxu0 %v1526
    %4943 = vmatpush.bf16.msra.mxu0 %v1522
    %4944 = vmatpush.bf16.msra.mxu0 %v1518
    %4945 = vmatpush.bf16.msra.mxu0 %v1514
    %4946 = vmatpush.bf16.msra.mxu0 %v1510
    %4947 = vmatmul.bf16.gmra.mxu0 %v4637
    %v4948 = vpop.f32.mrf.mxu0
    %v4949 = vadd.f32 %v4936, %v4948
    %v4950 = vpop.f32.mrf.mxu0
    %4951 = vdwg.mxu0
    %4952 = vmatpush.bf16.msra.mxu0 %v695
    %4953 = vmatpush.bf16.msra.mxu0 %v691
    %4954 = vmatpush.bf16.msra.mxu0 %v687
    %4955 = vmatpush.bf16.msra.mxu0 %v683
    %4956 = vmatpush.bf16.msra.mxu0 %v679
    %4957 = vmatpush.bf16.msra.mxu0 %v675
    %4958 = vmatpush.bf16.msra.mxu0 %v671
    %4959 = vmatpush.bf16.msra.mxu0 %v667
    %4960 = vmatmul.bf16.gmra.mxu0 %v4757
    %v4961 = vpop.f32.mrf.mxu0
    %v4962 = vadd.f32 %v567, %v4961
    %v4963 = vpop.f32.mrf.mxu0
    %4964 = vdwg.mxu0
    %4965 = vmatpush.bf16.msra.mxu0 %v1539
    %4966 = vmatpush.bf16.msra.mxu0 %v1535
    %4967 = vmatpush.bf16.msra.mxu0 %v1531
    %4968 = vmatpush.bf16.msra.mxu0 %v1527
    %4969 = vmatpush.bf16.msra.mxu0 %v1523
    %4970 = vmatpush.bf16.msra.mxu0 %v1519
    %4971 = vmatpush.bf16.msra.mxu0 %v1515
    %4972 = vmatpush.bf16.msra.mxu0 %v1511
    %4973 = vmatmul.bf16.gmra.mxu0 %v4637
    %v4974 = vpop.f32.mrf.mxu0
    %v4975 = vadd.f32 %v4962, %v4974
    %v4976 = vpop.f32.mrf.mxu0
    %4977 = vdwg.mxu0
    %4978 = vmatpush.bf16.msra.mxu0 %v696
    %4979 = vmatpush.bf16.msra.mxu0 %v692
    %4980 = vmatpush.bf16.msra.mxu0 %v688
    %4981 = vmatpush.bf16.msra.mxu0 %v684
    %4982 = vmatpush.bf16.msra.mxu0 %v680
    %4983 = vmatpush.bf16.msra.mxu0 %v676
    %4984 = vmatpush.bf16.msra.mxu0 %v672
    %4985 = vmatpush.bf16.msra.mxu0 %v668
    %4986 = vmatmul.bf16.gmra.mxu0 %v4757
    %v4987 = vpop.f32.mrf.mxu0
    %v4988 = vadd.f32 %v568, %v4987
    %v4989 = vpop.f32.mrf.mxu0
    %4990 = vdwg.mxu0
    %4991 = vmatpush.bf16.msra.mxu0 %v1540
    %4992 = vmatpush.bf16.msra.mxu0 %v1536
    %4993 = vmatpush.bf16.msra.mxu0 %v1532
    %4994 = vmatpush.bf16.msra.mxu0 %v1528
    %4995 = vmatpush.bf16.msra.mxu0 %v1524
    %4996 = vmatpush.bf16.msra.mxu0 %v1520
    %4997 = vmatpush.bf16.msra.mxu0 %v1516
    %4998 = vmatpush.bf16.msra.mxu0 %v1512
    %4999 = vmatmul.bf16.gmra.mxu0 %v4637
    %v5000 = vpop.f32.mrf.mxu0
    %v5001 = vadd.f32 %v4988, %v5000
    %v5002 = vpop.f32.mrf.mxu0
    %5003 = vdwg.mxu0
    %5004 = vmatpush.bf16.msra.mxu0 %v697
    %5005 = vmatpush.bf16.msra.mxu0 %v693
    %5006 = vmatpush.bf16.msra.mxu0 %v689
    %5007 = vmatpush.bf16.msra.mxu0 %v685
    %5008 = vmatpush.bf16.msra.mxu0 %v681
    %5009 = vmatpush.bf16.msra.mxu0 %v677
    %5010 = vmatpush.bf16.msra.mxu0 %v673
    %5011 = vmatpush.bf16.msra.mxu0 %v669
    %5012 = vmatmul.bf16.gmra.mxu0 %v4757
    %v5013 = vpop.f32.mrf.mxu0
    %v5014 = vadd.f32 %v569, %v5013
    %v5015 = vpop.f32.mrf.mxu0
    %5016 = vdwg.mxu0
    %5017 = vmatpush.bf16.msra.mxu0 %v1541
    %5018 = vmatpush.bf16.msra.mxu0 %v1537
    %5019 = vmatpush.bf16.msra.mxu0 %v1533
    %5020 = vmatpush.bf16.msra.mxu0 %v1529
    %5021 = vmatpush.bf16.msra.mxu0 %v1525
    %5022 = vmatpush.bf16.msra.mxu0 %v1521
    %5023 = vmatpush.bf16.msra.mxu0 %v1517
    %5024 = vmatpush.bf16.msra.mxu0 %v1513
    %5025 = vmatmul.bf16.gmra.mxu0 %v4637
    %v5026 = vpop.f32.mrf.mxu0
    %v5027 = vadd.f32 %v5014, %v5026
    %v5028 = vpop.f32.mrf.mxu0
    %5029 = vdwg.mxu0
    %v5030 = vxor.u32 %v4949, 2147483648
    %v5031 = vxor.u32 %v4975, 2147483648
    %v5032 = vxor.u32 %v5001, 2147483648
    %v5033 = vmul.f32 %v5030, 1.442695
    %v5034 = vpow.pop %v5033
    %v5035 = vmul.f32 %v5031, 1.442695
    %v5036 = vpow.pop %v5035
    %v5037 = vmul.f32 %v5032, 1.442695
    %v5038 = vpow.pop %v5037
    %v5039 = vadd.f32 %v5034, 1.0
    %v5040 = vadd.f32 %v5036, 1.0
    %v5041 = vadd.f32 %v5038, 1.0
    %v5042 = vrcp.pop %v5039
    %v5043 = vmul.f32 %v5039, %v5042
    %v5044 = vsub.f32 1.0, %v5043
    %v5045 = vmul.f32 %v5042, %v5044
    %v5046 = vadd.f32 %v5042, %v5045
    %vm5047 = vweird.f32 %v5039
    %vm5048 = vweird.f32 %v5042
    %vm5049 = vmor %vm5047, %vm5048
    %v5050 = vsel %vm5049, %v5042, %v5046
    %v5051 = vand.u32 2147483647, %v5039
    %vm5052 = vcmp.eq.f32.partialorder %v5051, 8.507059e+37
    %v5053 = vand.u32 %v5039, 2147483648
    %v5054 = vor.u32 1.1754944e-38, %v5053
    %v5055 = vsel %vm5052, %v5054, %v5050
    %v5056 = vmul.f32 1.0, %v5055
    %v5057 = vrcp.pop %v5040
    %v5058 = vmul.f32 %v5040, %v5057
    %v5059 = vsub.f32 1.0, %v5058
    %v5060 = vmul.f32 %v5057, %v5059
    %v5061 = vadd.f32 %v5057, %v5060
    %vm5062 = vweird.f32 %v5040
    %vm5063 = vweird.f32 %v5057
    %vm5064 = vmor %vm5062, %vm5063
    %v5065 = vsel %vm5064, %v5057, %v5061
    %v5066 = vand.u32 2147483647, %v5040
    %vm5067 = vcmp.eq.f32.partialorder %v5066, 8.507059e+37
    %v5068 = vand.u32 %v5040, 2147483648
    %v5069 = vor.u32 1.1754944e-38, %v5068
    %v5070 = vsel %vm5067, %v5069, %v5065
    %v5071 = vmul.f32 1.0, %v5070
    %v5072 = vrcp.pop %v5041
    %v5073 = vmul.f32 %v5041, %v5072
    %v5074 = vsub.f32 1.0, %v5073
    %v5075 = vmul.f32 %v5072, %v5074
    %v5076 = vadd.f32 %v5072, %v5075
    %vm5077 = vweird.f32 %v5041
    %vm5078 = vweird.f32 %v5072
    %vm5079 = vmor %vm5077, %vm5078
    %v5080 = vsel %vm5079, %v5072, %v5076
    %v5081 = vand.u32 2147483647, %v5041
    %vm5082 = vcmp.eq.f32.partialorder %v5081, 8.507059e+37
    %v5083 = vand.u32 %v5041, 2147483648
    %v5084 = vor.u32 1.1754944e-38, %v5083
    %v5085 = vsel %vm5082, %v5084, %v5080
    %v5086 = vmul.f32 1.0, %v5085
    %v5087 = vtanh.pop %v5027
    %v5088 = vmul.f32 %v5071, %v4634
    %v5089 = vmul.f32 %v5056, %v5087
    %v5090 = vadd.f32 %v5088, %v5089
    %v5091 = vtanh.pop %v5090
    %v5092 = vmul.f32 %v5086, %v5091
    %v5093 = vpack.c.bf16 %v5092, %v5092
    %5094 = vmatpush.bf16.msra.mxu0 %v970
    %5095 = vmatpush.bf16.msra.mxu0 %v966
    %5096 = vmatpush.bf16.msra.mxu0 %v962
    %5097 = vmatpush.bf16.msra.mxu0 %v958
    %5098 = vmatpush.bf16.msra.mxu0 %v954
    %5099 = vmatpush.bf16.msra.mxu0 %v950
    %5100 = vmatpush.bf16.msra.mxu0 %v946
    %5101 = vmatpush.bf16.msra.mxu0 %v942
    %5102 = vmatmul.bf16.gmra.mxu0 %v4757
    %v5103 = vpop.f32.mrf.mxu0
    %v5104 = vadd.f32 0.0, %v5103
    %v5105 = vpop.f32.mrf.mxu0
    %5106 = vdwg.mxu0
    %5107 = vmatpush.bf16.msra.mxu0 %v971
    %5108 = vmatpush.bf16.msra.mxu0 %v967
    %5109 = vmatpush.bf16.msra.mxu0 %v963
    %5110 = vmatpush.bf16.msra.mxu0 %v959
    %5111 = vmatpush.bf16.msra.mxu0 %v955
    %5112 = vmatpush.bf16.msra.mxu0 %v951
    %5113 = vmatpush.bf16.msra.mxu0 %v947
    %5114 = vmatpush.bf16.msra.mxu0 %v943
    %5115 = vmatmul.bf16.gmra.mxu0 %v4757
    %v5116 = vpop.f32.mrf.mxu0
    %v5117 = vadd.f32 0.0, %v5116
    %v5118 = vpop.f32.mrf.mxu0
    %5119 = vdwg.mxu0
    %5120 = vmatpush.bf16.msra.mxu0 %v972
    %5121 = vmatpush.bf16.msra.mxu0 %v968
    %5122 = vmatpush.bf16.msra.mxu0 %v964
    %5123 = vmatpush.bf16.msra.mxu0 %v960
    %5124 = vmatpush.bf16.msra.mxu0 %v956
    %5125 = vmatpush.bf16.msra.mxu0 %v952
    %5126 = vmatpush.bf16.msra.mxu0 %v948
    %5127 = vmatpush.bf16.msra.mxu0 %v944
    %5128 = vmatmul.bf16.gmra.mxu0 %v4757
    %v5129 = vpop.f32.mrf.mxu0
    %v5130 = vadd.f32 0.0, %v5129
    %v5131 = vpop.f32.mrf.mxu0
    %5132 = vdwg.mxu0
    %5133 = vmatpush.bf16.msra.mxu0 %v973
    %5134 = vmatpush.bf16.msra.mxu0 %v969
    %5135 = vmatpush.bf16.msra.mxu0 %v965
    %5136 = vmatpush.bf16.msra.mxu0 %v961
    %5137 = vmatpush.bf16.msra.mxu0 %v957
    %5138 = vmatpush.bf16.msra.mxu0 %v953
    %5139 = vmatpush.bf16.msra.mxu0 %v949
    %5140 = vmatpush.bf16.msra.mxu0 %v945
    %5141 = vmatmul.bf16.gmra.mxu0 %v4757
    %v5142 = vpop.f32.mrf.mxu0
    %v5143 = vadd.f32 0.0, %v5142
    %v5144 = vpop.f32.mrf.mxu0
    %5145 = vdwg.mxu0
    %v5146 = vadd.f32 %v166, %v5104
    %v5147 = vadd.f32 %v219, %v5117
    %v5148 = vadd.f32 %v272, %v5130
    %v5149 = vadd.f32 %v325, %v5143
    %v5150 = vxor.u32 %v5146, 2147483648
    %v5151 = vxor.u32 %v5147, 2147483648
    %v5152 = vxor.u32 %v5148, 2147483648
    %v5153 = vmul.f32 %v5150, 1.442695
    %v5154 = vpow.pop %v5153
    %v5155 = vmul.f32 %v5151, 1.442695
    %v5156 = vpow.pop %v5155
    %v5157 = vmul.f32 %v5152, 1.442695
    %v5158 = vpow.pop %v5157
    %v5159 = vadd.f32 %v5154, 1.0
    %v5160 = vadd.f32 %v5156, 1.0
    %v5161 = vadd.f32 %v5158, 1.0
    %v5162 = vrcp.pop %v5159
    %v5163 = vmul.f32 %v5159, %v5162
    %v5164 = vsub.f32 1.0, %v5163
    %v5165 = vmul.f32 %v5162, %v5164
    %v5166 = vadd.f32 %v5162, %v5165
    %vm5167 = vweird.f32 %v5159
    %vm5168 = vweird.f32 %v5162
    %vm5169 = vmor %vm5167, %vm5168
    %v5170 = vsel %vm5169, %v5162, %v5166
    %v5171 = vand.u32 2147483647, %v5159
    %vm5172 = vcmp.eq.f32.partialorder %v5171, 8.507059e+37
    %v5173 = vand.u32 %v5159, 2147483648
    %v5174 = vor.u32 1.1754944e-38, %v5173
    %v5175 = vsel %vm5172, %v5174, %v5170
    %v5176 = vmul.f32 1.0, %v5175
    %v5177 = vrcp.pop %v5160
    %v5178 = vmul.f32 %v5160, %v5177
    %v5179 = vsub.f32 1.0, %v5178
    %v5180 = vmul.f32 %v5177, %v5179
    %v5181 = vadd.f32 %v5177, %v5180
    %vm5182 = vweird.f32 %v5160
    %vm5183 = vweird.f32 %v5177
    %vm5184 = vmor %vm5182, %vm5183
    %v5185 = vsel %vm5184, %v5177, %v5181
    %v5186 = vand.u32 2147483647, %v5160
    %vm5187 = vcmp.eq.f32.partialorder %v5186, 8.507059e+37
    %v5188 = vand.u32 %v5160, 2147483648
    %v5189 = vor.u32 1.1754944e-38, %v5188
    %v5190 = vsel %vm5187, %v5189, %v5185
    %v5191 = vmul.f32 1.0, %v5190
    %v5192 = vrcp.pop %v5161
    %v5193 = vmul.f32 %v5161, %v5192
    %v5194 = vsub.f32 1.0, %v5193
    %v5195 = vmul.f32 %v5192, %v5194
    %v5196 = vadd.f32 %v5192, %v5195
    %vm5197 = vweird.f32 %v5161
    %vm5198 = vweird.f32 %v5192
    %vm5199 = vmor %vm5197, %vm5198
    %v5200 = vsel %vm5199, %v5192, %v5196
    %v5201 = vand.u32 2147483647, %v5161
    %vm5202 = vcmp.eq.f32.partialorder %v5201, 8.507059e+37
    %v5203 = vand.u32 %v5161, 2147483648
    %v5204 = vor.u32 1.1754944e-38, %v5203
    %v5205 = vsel %vm5202, %v5204, %v5200
    %v5206 = vmul.f32 1.0, %v5205
    %v5207 = vtanh.pop %v5149
    %v5208 = vmul.f32 %v5191, %v4754
    %v5209 = vmul.f32 %v5176, %v5207
    %v5210 = vadd.f32 %v5208, %v5209
    %v5211 = vtanh.pop %v5210
    %v5212 = vmul.f32 %v5206, %v5211
    %v5213 = vpack.c.bf16 %v5212, %v5212
    %5214 = vmatpush.bf16.msra.mxu0 %v1262
    %5215 = vmatpush.bf16.msra.mxu0 %v1258
    %5216 = vmatpush.bf16.msra.mxu0 %v1254
    %5217 = vmatpush.bf16.msra.mxu0 %v1250
    %5218 = vmatpush.bf16.msra.mxu0 %v1246
    %5219 = vmatpush.bf16.msra.mxu0 %v1242
    %5220 = vmatpush.bf16.msra.mxu0 %v1238
    %5221 = vmatpush.bf16.msra.mxu0 %v1234
    %5222 = vmatmul.bf16.gmra.mxu0 %v5093
    %v5223 = vpop.f32.mrf.mxu0
    %v5224 = vadd.f32 %v1134, %v5223
    %v5225 = vpop.f32.mrf.mxu0
    %5226 = vdwg.mxu0
    %5227 = vmatpush.bf16.msra.mxu0 %v1986
    %5228 = vmatpush.bf16.msra.mxu0 %v1982
    %5229 = vmatpush.bf16.msra.mxu0 %v1978
    %5230 = vmatpush.bf16.msra.mxu0 %v1974
    %5231 = vmatpush.bf16.msra.mxu0 %v1970
    %5232 = vmatpush.bf16.msra.mxu0 %v1966
    %5233 = vmatpush.bf16.msra.mxu0 %v1962
    %5234 = vmatpush.bf16.msra.mxu0 %v1958
    %5235 = vmatmul.bf16.gmra.mxu0 %v4925
    %v5236 = vpop.f32.mrf.mxu0
    %v5237 = vadd.f32 %v5224, %v5236
    %v5238 = vpop.f32.mrf.mxu0
    %5239 = vdwg.mxu0
    %5240 = vmatpush.bf16.msra.mxu0 %v1263
    %5241 = vmatpush.bf16.msra.mxu0 %v1259
    %5242 = vmatpush.bf16.msra.mxu0 %v1255
    %5243 = vmatpush.bf16.msra.mxu0 %v1251
    %5244 = vmatpush.bf16.msra.mxu0 %v1247
    %5245 = vmatpush.bf16.msra.mxu0 %v1243
    %5246 = vmatpush.bf16.msra.mxu0 %v1239
    %5247 = vmatpush.bf16.msra.mxu0 %v1235
    %5248 = vmatmul.bf16.gmra.mxu0 %v5093
    %v5249 = vpop.f32.mrf.mxu0
    %v5250 = vadd.f32 %v1135, %v5249
    %v5251 = vpop.f32.mrf.mxu0
    %5252 = vdwg.mxu0
    %5253 = vmatpush.bf16.msra.mxu0 %v1987
    %5254 = vmatpush.bf16.msra.mxu0 %v1983
    %5255 = vmatpush.bf16.msra.mxu0 %v1979
    %5256 = vmatpush.bf16.msra.mxu0 %v1975
    %5257 = vmatpush.bf16.msra.mxu0 %v1971
    %5258 = vmatpush.bf16.msra.mxu0 %v1967
    %5259 = vmatpush.bf16.msra.mxu0 %v1963
    %5260 = vmatpush.bf16.msra.mxu0 %v1959
    %5261 = vmatmul.bf16.gmra.mxu0 %v4925
    %v5262 = vpop.f32.mrf.mxu0
    %v5263 = vadd.f32 %v5250, %v5262
    %v5264 = vpop.f32.mrf.mxu0
    %5265 = vdwg.mxu0
    %5266 = vmatpush.bf16.msra.mxu0 %v1264
    %5267 = vmatpush.bf16.msra.mxu0 %v1260
    %5268 = vmatpush.bf16.msra.mxu0 %v1256
    %5269 = vmatpush.bf16.msra.mxu0 %v1252
    %5270 = vmatpush.bf16.msra.mxu0 %v1248
    %5271 = vmatpush.bf16.msra.mxu0 %v1244
    %5272 = vmatpush.bf16.msra.mxu0 %v1240
    %5273 = vmatpush.bf16.msra.mxu0 %v1236
    %5274 = vmatmul.bf16.gmra.mxu0 %v5093
    %v5275 = vpop.f32.mrf.mxu0
    %v5276 = vadd.f32 %v1136, %v5275
    %v5277 = vpop.f32.mrf.mxu0
    %5278 = vdwg.mxu0
    %5279 = vmatpush.bf16.msra.mxu0 %v1988
    %5280 = vmatpush.bf16.msra.mxu0 %v1984
    %5281 = vmatpush.bf16.msra.mxu0 %v1980
    %5282 = vmatpush.bf16.msra.mxu0 %v1976
    %5283 = vmatpush.bf16.msra.mxu0 %v1972
    %5284 = vmatpush.bf16.msra.mxu0 %v1968
    %5285 = vmatpush.bf16.msra.mxu0 %v1964
    %5286 = vmatpush.bf16.msra.mxu0 %v1960
    %5287 = vmatmul.bf16.gmra.mxu0 %v4925
    %v5288 = vpop.f32.mrf.mxu0
    %v5289 = vadd.f32 %v5276, %v5288
    %v5290 = vpop.f32.mrf.mxu0
    %5291 = vdwg.mxu0
    %5292 = vmatpush.bf16.msra.mxu0 %v1265
    %5293 = vmatpush.bf16.msra.mxu0 %v1261
    %5294 = vmatpush.bf16.msra.mxu0 %v1257
    %5295 = vmatpush.bf16.msra.mxu0 %v1253
    %5296 = vmatpush.bf16.msra.mxu0 %v1249
    %5297 = vmatpush.bf16.msra.mxu0 %v1245
    %5298 = vmatpush.bf16.msra.mxu0 %v1241
    %5299 = vmatpush.bf16.msra.mxu0 %v1237
    %5300 = vmatmul.bf16.gmra.mxu0 %v5093
    %v5301 = vpop.f32.mrf.mxu0
    %v5302 = vadd.f32 %v1137, %v5301
    %v5303 = vpop.f32.mrf.mxu0
    %5304 = vdwg.mxu0
    %5305 = vmatpush.bf16.msra.mxu0 %v1989
    %5306 = vmatpush.bf16.msra.mxu0 %v1985
    %5307 = vmatpush.bf16.msra.mxu0 %v1981
    %5308 = vmatpush.bf16.msra.mxu0 %v1977
    %5309 = vmatpush.bf16.msra.mxu0 %v1973
    %5310 = vmatpush.bf16.msra.mxu0 %v1969
    %5311 = vmatpush.bf16.msra.mxu0 %v1965
    %5312 = vmatpush.bf16.msra.mxu0 %v1961
    %5313 = vmatmul.bf16.gmra.mxu0 %v4925
    %v5314 = vpop.f32.mrf.mxu0
    %v5315 = vadd.f32 %v5302, %v5314
    %v5316 = vpop.f32.mrf.mxu0
    %5317 = vdwg.mxu0
    %v5318 = vxor.u32 %v5237, 2147483648
    %v5319 = vxor.u32 %v5263, 2147483648
    %v5320 = vxor.u32 %v5289, 2147483648
    %v5321 = vmul.f32 %v5318, 1.442695
    %v5322 = vpow.pop %v5321
    %v5323 = vmul.f32 %v5319, 1.442695
    %v5324 = vpow.pop %v5323
    %v5325 = vmul.f32 %v5320, 1.442695
    %v5326 = vpow.pop %v5325
    %v5327 = vadd.f32 %v5322, 1.0
    %v5328 = vadd.f32 %v5324, 1.0
    %v5329 = vadd.f32 %v5326, 1.0
    %v5330 = vrcp.pop %v5327
    %v5331 = vmul.f32 %v5327, %v5330
    %v5332 = vsub.f32 1.0, %v5331
    %v5333 = vmul.f32 %v5330, %v5332
    %v5334 = vadd.f32 %v5330, %v5333
    %vm5335 = vweird.f32 %v5327
    %vm5336 = vweird.f32 %v5330
    %vm5337 = vmor %vm5335, %vm5336
    %v5338 = vsel %vm5337, %v5330, %v5334
    %v5339 = vand.u32 2147483647, %v5327
    %vm5340 = vcmp.eq.f32.partialorder %v5339, 8.507059e+37
    %v5341 = vand.u32 %v5327, 2147483648
    %v5342 = vor.u32 1.1754944e-38, %v5341
    %v5343 = vsel %vm5340, %v5342, %v5338
    %v5344 = vmul.f32 1.0, %v5343
    %v5345 = vrcp.pop %v5328
    %v5346 = vmul.f32 %v5328, %v5345
    %v5347 = vsub.f32 1.0, %v5346
    %v5348 = vmul.f32 %v5345, %v5347
    %v5349 = vadd.f32 %v5345, %v5348
    %vm5350 = vweird.f32 %v5328
    %vm5351 = vweird.f32 %v5345
    %vm5352 = vmor %vm5350, %vm5351
    %v5353 = vsel %vm5352, %v5345, %v5349
    %v5354 = vand.u32 2147483647, %v5328
    %vm5355 = vcmp.eq.f32.partialorder %v5354, 8.507059e+37
    %v5356 = vand.u32 %v5328, 2147483648
    %v5357 = vor.u32 1.1754944e-38, %v5356
    %v5358 = vsel %vm5355, %v5357, %v5353
    %v5359 = vmul.f32 1.0, %v5358
    %v5360 = vrcp.pop %v5329
    %v5361 = vmul.f32 %v5329, %v5360
    %v5362 = vsub.f32 1.0, %v5361
    %v5363 = vmul.f32 %v5360, %v5362
    %v5364 = vadd.f32 %v5360, %v5363
    %vm5365 = vweird.f32 %v5329
    %vm5366 = vweird.f32 %v5360
    %vm5367 = vmor %vm5365, %vm5366
    %v5368 = vsel %vm5367, %v5360, %v5364
    %v5369 = vand.u32 2147483647, %v5329
    %vm5370 = vcmp.eq.f32.partialorder %v5369, 8.507059e+37
    %v5371 = vand.u32 %v5329, 2147483648
    %v5372 = vor.u32 1.1754944e-38, %v5371
    %v5373 = vsel %vm5370, %v5372, %v5368
    %v5374 = vmul.f32 1.0, %v5373
    %v5375 = vtanh.pop %v5315
    %v5376 = vmul.f32 %v5359, %v4922
    %v5377 = vmul.f32 %v5344, %v5375
    %v5378 = vadd.f32 %v5376, %v5377
    %v5379 = vtanh.pop %v5378
    %v5380 = vmul.f32 %v5374, %v5379
    %v5381 = vpack.c.bf16 %v5380, %v5380
    %5382 = vmatpush.bf16.msra.mxu0 %v694
    %5383 = vmatpush.bf16.msra.mxu0 %v690
    %5384 = vmatpush.bf16.msra.mxu0 %v686
    %5385 = vmatpush.bf16.msra.mxu0 %v682
    %5386 = vmatpush.bf16.msra.mxu0 %v678
    %5387 = vmatpush.bf16.msra.mxu0 %v674
    %5388 = vmatpush.bf16.msra.mxu0 %v670
    %5389 = vmatpush.bf16.msra.mxu0 %v666
    %5390 = vmatmul.bf16.gmra.mxu0 %v5213
    %v5391 = vpop.f32.mrf.mxu0
    %v5392 = vadd.f32 %v566, %v5391
    %v5393 = vpop.f32.mrf.mxu0
    %5394 = vdwg.mxu0
    %5395 = vmatpush.bf16.msra.mxu0 %v1538
    %5396 = vmatpush.bf16.msra.mxu0 %v1534
    %5397 = vmatpush.bf16.msra.mxu0 %v1530
    %5398 = vmatpush.bf16.msra.mxu0 %v1526
    %5399 = vmatpush.bf16.msra.mxu0 %v1522
    %5400 = vmatpush.bf16.msra.mxu0 %v1518
    %5401 = vmatpush.bf16.msra.mxu0 %v1514
    %5402 = vmatpush.bf16.msra.mxu0 %v1510
    %5403 = vmatmul.bf16.gmra.mxu0 %v5093
    %v5404 = vpop.f32.mrf.mxu0
    %v5405 = vadd.f32 %v5392, %v5404
    %v5406 = vpop.f32.mrf.mxu0
    %5407 = vdwg.mxu0
    %5408 = vmatpush.bf16.msra.mxu0 %v695
    %5409 = vmatpush.bf16.msra.mxu0 %v691
    %5410 = vmatpush.bf16.msra.mxu0 %v687
    %5411 = vmatpush.bf16.msra.mxu0 %v683
    %5412 = vmatpush.bf16.msra.mxu0 %v679
    %5413 = vmatpush.bf16.msra.mxu0 %v675
    %5414 = vmatpush.bf16.msra.mxu0 %v671
    %5415 = vmatpush.bf16.msra.mxu0 %v667
    %5416 = vmatmul.bf16.gmra.mxu0 %v5213
    %v5417 = vpop.f32.mrf.mxu0
    %v5418 = vadd.f32 %v567, %v5417
    %v5419 = vpop.f32.mrf.mxu0
    %5420 = vdwg.mxu0
    %5421 = vmatpush.bf16.msra.mxu0 %v1539
    %5422 = vmatpush.bf16.msra.mxu0 %v1535
    %5423 = vmatpush.bf16.msra.mxu0 %v1531
    %5424 = vmatpush.bf16.msra.mxu0 %v1527
    %5425 = vmatpush.bf16.msra.mxu0 %v1523
    %5426 = vmatpush.bf16.msra.mxu0 %v1519
    %5427 = vmatpush.bf16.msra.mxu0 %v1515
    %5428 = vmatpush.bf16.msra.mxu0 %v1511
    %5429 = vmatmul.bf16.gmra.mxu0 %v5093
    %v5430 = vpop.f32.mrf.mxu0
    %v5431 = vadd.f32 %v5418, %v5430
    %v5432 = vpop.f32.mrf.mxu0
    %5433 = vdwg.mxu0
    %5434 = vmatpush.bf16.msra.mxu0 %v696
    %5435 = vmatpush.bf16.msra.mxu0 %v692
    %5436 = vmatpush.bf16.msra.mxu0 %v688
    %5437 = vmatpush.bf16.msra.mxu0 %v684
    %5438 = vmatpush.bf16.msra.mxu0 %v680
    %5439 = vmatpush.bf16.msra.mxu0 %v676
    %5440 = vmatpush.bf16.msra.mxu0 %v672
    %5441 = vmatpush.bf16.msra.mxu0 %v668
    %5442 = vmatmul.bf16.gmra.mxu0 %v5213
    %v5443 = vpop.f32.mrf.mxu0
    %v5444 = vadd.f32 %v568, %v5443
    %v5445 = vpop.f32.mrf.mxu0
    %5446 = vdwg.mxu0
    %5447 = vmatpush.bf16.msra.mxu0 %v1540
    %5448 = vmatpush.bf16.msra.mxu0 %v1536
    %5449 = vmatpush.bf16.msra.mxu0 %v1532
    %5450 = vmatpush.bf16.msra.mxu0 %v1528
    %5451 = vmatpush.bf16.msra.mxu0 %v1524
    %5452 = vmatpush.bf16.msra.mxu0 %v1520
    %5453 = vmatpush.bf16.msra.mxu0 %v1516
    %5454 = vmatpush.bf16.msra.mxu0 %v1512
    %5455 = vmatmul.bf16.gmra.mxu0 %v5093
    %v5456 = vpop.f32.mrf.mxu0
    %v5457 = vadd.f32 %v5444, %v5456
    %v5458 = vpop.f32.mrf.mxu0
    %5459 = vdwg.mxu0
    %5460 = vmatpush.bf16.msra.mxu0 %v697
    %5461 = vmatpush.bf16.msra.mxu0 %v693
    %5462 = vmatpush.bf16.msra.mxu0 %v689
    %5463 = vmatpush.bf16.msra.mxu0 %v685
    %5464 = vmatpush.bf16.msra.mxu0 %v681
    %5465 = vmatpush.bf16.msra.mxu0 %v677
    %5466 = vmatpush.bf16.msra.mxu0 %v673
    %5467 = vmatpush.bf16.msra.mxu0 %v669
    %5468 = vmatmul.bf16.gmra.mxu0 %v5213
    %v5469 = vpop.f32.mrf.mxu0
    %v5470 = vadd.f32 %v569, %v5469
    %v5471 = vpop.f32.mrf.mxu0
    %5472 = vdwg.mxu0
    %5473 = vmatpush.bf16.msra.mxu0 %v1541
    %5474 = vmatpush.bf16.msra.mxu0 %v1537
    %5475 = vmatpush.bf16.msra.mxu0 %v1533
    %5476 = vmatpush.bf16.msra.mxu0 %v1529
    %5477 = vmatpush.bf16.msra.mxu0 %v1525
    %5478 = vmatpush.bf16.msra.mxu0 %v1521
    %5479 = vmatpush.bf16.msra.mxu0 %v1517
    %5480 = vmatpush.bf16.msra.mxu0 %v1513
    %5481 = vmatmul.bf16.gmra.mxu0 %v5093
    %v5482 = vpop.f32.mrf.mxu0
    %v5483 = vadd.f32 %v5470, %v5482
    %v5484 = vpop.f32.mrf.mxu0
    %5485 = vdwg.mxu0
    %v5486 = vxor.u32 %v5405, 2147483648
    %v5487 = vxor.u32 %v5431, 2147483648
    %v5488 = vxor.u32 %v5457, 2147483648
    %v5489 = vmul.f32 %v5486, 1.442695
    %v5490 = vpow.pop %v5489
    %v5491 = vmul.f32 %v5487, 1.442695
    %v5492 = vpow.pop %v5491
    %v5493 = vmul.f32 %v5488, 1.442695
    %v5494 = vpow.pop %v5493
    %v5495 = vadd.f32 %v5490, 1.0
    %v5496 = vadd.f32 %v5492, 1.0
    %v5497 = vadd.f32 %v5494, 1.0
    %v5498 = vrcp.pop %v5495
    %v5499 = vmul.f32 %v5495, %v5498
    %v5500 = vsub.f32 1.0, %v5499
    %v5501 = vmul.f32 %v5498, %v5500
    %v5502 = vadd.f32 %v5498, %v5501
    %vm5503 = vweird.f32 %v5495
    %vm5504 = vweird.f32 %v5498
    %vm5505 = vmor %vm5503, %vm5504
    %v5506 = vsel %vm5505, %v5498, %v5502
    %v5507 = vand.u32 2147483647, %v5495
    %vm5508 = vcmp.eq.f32.partialorder %v5507, 8.507059e+37
    %v5509 = vand.u32 %v5495, 2147483648
    %v5510 = vor.u32 1.1754944e-38, %v5509
    %v5511 = vsel %vm5508, %v5510, %v5506
    %v5512 = vmul.f32 1.0, %v5511
    %v5513 = vrcp.pop %v5496
    %v5514 = vmul.f32 %v5496, %v5513
    %v5515 = vsub.f32 1.0, %v5514
    %v5516 = vmul.f32 %v5513, %v5515
    %v5517 = vadd.f32 %v5513, %v5516
    %vm5518 = vweird.f32 %v5496
    %vm5519 = vweird.f32 %v5513
    %vm5520 = vmor %vm5518, %vm5519
    %v5521 = vsel %vm5520, %v5513, %v5517
    %v5522 = vand.u32 2147483647, %v5496
    %vm5523 = vcmp.eq.f32.partialorder %v5522, 8.507059e+37
    %v5524 = vand.u32 %v5496, 2147483648
    %v5525 = vor.u32 1.1754944e-38, %v5524
    %v5526 = vsel %vm5523, %v5525, %v5521
    %v5527 = vmul.f32 1.0, %v5526
    %v5528 = vrcp.pop %v5497
    %v5529 = vmul.f32 %v5497, %v5528
    %v5530 = vsub.f32 1.0, %v5529
    %v5531 = vmul.f32 %v5528, %v5530
    %v5532 = vadd.f32 %v5528, %v5531
    %vm5533 = vweird.f32 %v5497
    %vm5534 = vweird.f32 %v5528
    %vm5535 = vmor %vm5533, %vm5534
    %v5536 = vsel %vm5535, %v5528, %v5532
    %v5537 = vand.u32 2147483647, %v5497
    %vm5538 = vcmp.eq.f32.partialorder %v5537, 8.507059e+37
    %v5539 = vand.u32 %v5497, 2147483648
    %v5540 = vor.u32 1.1754944e-38, %v5539
    %v5541 = vsel %vm5538, %v5540, %v5536
    %v5542 = vmul.f32 1.0, %v5541
    %v5543 = vtanh.pop %v5483
    %v5544 = vmul.f32 %v5527, %v5090
    %v5545 = vmul.f32 %v5512, %v5543
    %v5546 = vadd.f32 %v5544, %v5545
    %v5547 = vtanh.pop %v5546
    %v5548 = vmul.f32 %v5542, %v5547
    %v5549 = vpack.c.bf16 %v5548, %v5548
    %5550 = vmatpush.bf16.msra.mxu0 %v970
    %5551 = vmatpush.bf16.msra.mxu0 %v966
    %5552 = vmatpush.bf16.msra.mxu0 %v962
    %5553 = vmatpush.bf16.msra.mxu0 %v958
    %5554 = vmatpush.bf16.msra.mxu0 %v954
    %5555 = vmatpush.bf16.msra.mxu0 %v950
    %5556 = vmatpush.bf16.msra.mxu0 %v946
    %5557 = vmatpush.bf16.msra.mxu0 %v942
    %5558 = vmatmul.bf16.gmra.mxu0 %v5213
    %v5559 = vpop.f32.mrf.mxu0
    %v5560 = vadd.f32 0.0, %v5559
    %v5561 = vpop.f32.mrf.mxu0
    %5562 = vdwg.mxu0
    %5563 = vmatpush.bf16.msra.mxu0 %v971
    %5564 = vmatpush.bf16.msra.mxu0 %v967
    %5565 = vmatpush.bf16.msra.mxu0 %v963
    %5566 = vmatpush.bf16.msra.mxu0 %v959
    %5567 = vmatpush.bf16.msra.mxu0 %v955
    %5568 = vmatpush.bf16.msra.mxu0 %v951
    %5569 = vmatpush.bf16.msra.mxu0 %v947
    %5570 = vmatpush.bf16.msra.mxu0 %v943
    %5571 = vmatmul.bf16.gmra.mxu0 %v5213
    %v5572 = vpop.f32.mrf.mxu0
    %v5573 = vadd.f32 0.0, %v5572
    %v5574 = vpop.f32.mrf.mxu0
    %5575 = vdwg.mxu0
    %5576 = vmatpush.bf16.msra.mxu0 %v972
    %5577 = vmatpush.bf16.msra.mxu0 %v968
    %5578 = vmatpush.bf16.msra.mxu0 %v964
    %5579 = vmatpush.bf16.msra.mxu0 %v960
    %5580 = vmatpush.bf16.msra.mxu0 %v956
    %5581 = vmatpush.bf16.msra.mxu0 %v952
    %5582 = vmatpush.bf16.msra.mxu0 %v948
    %5583 = vmatpush.bf16.msra.mxu0 %v944
    %5584 = vmatmul.bf16.gmra.mxu0 %v5213
    %v5585 = vpop.f32.mrf.mxu0
    %v5586 = vadd.f32 0.0, %v5585
    %v5587 = vpop.f32.mrf.mxu0
    %5588 = vdwg.mxu0
    %5589 = vmatpush.bf16.msra.mxu0 %v973
    %5590 = vmatpush.bf16.msra.mxu0 %v969
    %5591 = vmatpush.bf16.msra.mxu0 %v965
    %5592 = vmatpush.bf16.msra.mxu0 %v961
    %5593 = vmatpush.bf16.msra.mxu0 %v957
    %5594 = vmatpush.bf16.msra.mxu0 %v953
    %5595 = vmatpush.bf16.msra.mxu0 %v949
    %5596 = vmatpush.bf16.msra.mxu0 %v945
    %5597 = vmatmul.bf16.gmra.mxu0 %v5213
    %v5598 = vpop.f32.mrf.mxu0
    %v5599 = vadd.f32 0.0, %v5598
    %v5600 = vpop.f32.mrf.mxu0
    %5601 = vdwg.mxu0
    %v5602 = vadd.f32 %v169, %v5560
    %v5603 = vadd.f32 %v222, %v5573
    %v5604 = vadd.f32 %v275, %v5586
    %v5605 = vadd.f32 %v328, %v5599
    %v5606 = vxor.u32 %v5602, 2147483648
    %v5607 = vxor.u32 %v5603, 2147483648
    %v5608 = vxor.u32 %v5604, 2147483648
    %v5609 = vmul.f32 %v5606, 1.442695
    %v5610 = vpow.pop %v5609
    %v5611 = vmul.f32 %v5607, 1.442695
    %v5612 = vpow.pop %v5611
    %v5613 = vmul.f32 %v5608, 1.442695
    %v5614 = vpow.pop %v5613
    %v5615 = vadd.f32 %v5610, 1.0
    %v5616 = vadd.f32 %v5612, 1.0
    %v5617 = vadd.f32 %v5614, 1.0
    %v5618 = vrcp.pop %v5615
    %v5619 = vmul.f32 %v5615, %v5618
    %v5620 = vsub.f32 1.0, %v5619
    %v5621 = vmul.f32 %v5618, %v5620
    %v5622 = vadd.f32 %v5618, %v5621
    %vm5623 = vweird.f32 %v5615
    %vm5624 = vweird.f32 %v5618
    %vm5625 = vmor %vm5623, %vm5624
    %v5626 = vsel %vm5625, %v5618, %v5622
    %v5627 = vand.u32 2147483647, %v5615
    %vm5628 = vcmp.eq.f32.partialorder %v5627, 8.507059e+37
    %v5629 = vand.u32 %v5615, 2147483648
    %v5630 = vor.u32 1.1754944e-38, %v5629
    %v5631 = vsel %vm5628, %v5630, %v5626
    %v5632 = vmul.f32 1.0, %v5631
    %v5633 = vrcp.pop %v5616
    %v5634 = vmul.f32 %v5616, %v5633
    %v5635 = vsub.f32 1.0, %v5634
    %v5636 = vmul.f32 %v5633, %v5635
    %v5637 = vadd.f32 %v5633, %v5636
    %vm5638 = vweird.f32 %v5616
    %vm5639 = vweird.f32 %v5633
    %vm5640 = vmor %vm5638, %vm5639
    %v5641 = vsel %vm5640, %v5633, %v5637
    %v5642 = vand.u32 2147483647, %v5616
    %vm5643 = vcmp.eq.f32.partialorder %v5642, 8.507059e+37
    %v5644 = vand.u32 %v5616, 2147483648
    %v5645 = vor.u32 1.1754944e-38, %v5644
    %v5646 = vsel %vm5643, %v5645, %v5641
    %v5647 = vmul.f32 1.0, %v5646
    %v5648 = vrcp.pop %v5617
    %v5649 = vmul.f32 %v5617, %v5648
    %v5650 = vsub.f32 1.0, %v5649
    %v5651 = vmul.f32 %v5648, %v5650
    %v5652 = vadd.f32 %v5648, %v5651
    %vm5653 = vweird.f32 %v5617
    %vm5654 = vweird.f32 %v5648
    %vm5655 = vmor %vm5653, %vm5654
    %v5656 = vsel %vm5655, %v5648, %v5652
    %v5657 = vand.u32 2147483647, %v5617
    %vm5658 = vcmp.eq.f32.partialorder %v5657, 8.507059e+37
    %v5659 = vand.u32 %v5617, 2147483648
    %v5660 = vor.u32 1.1754944e-38, %v5659
    %v5661 = vsel %vm5658, %v5660, %v5656
    %v5662 = vmul.f32 1.0, %v5661
    %v5663 = vtanh.pop %v5605
    %v5664 = vmul.f32 %v5647, %v5210
    %v5665 = vmul.f32 %v5632, %v5663
    %v5666 = vadd.f32 %v5664, %v5665
    %v5667 = vtanh.pop %v5666
    %v5668 = vmul.f32 %v5662, %v5667
    %v5669 = vpack.c.bf16 %v5668, %v5668
    %5670 = vmatpush.bf16.msra.mxu0 %v1262
    %5671 = vmatpush.bf16.msra.mxu0 %v1258
    %5672 = vmatpush.bf16.msra.mxu0 %v1254
    %5673 = vmatpush.bf16.msra.mxu0 %v1250
    %5674 = vmatpush.bf16.msra.mxu0 %v1246
    %5675 = vmatpush.bf16.msra.mxu0 %v1242
    %5676 = vmatpush.bf16.msra.mxu0 %v1238
    %5677 = vmatpush.bf16.msra.mxu0 %v1234
    %5678 = vmatmul.bf16.gmra.mxu0 %v5549
    %v5679 = vpop.f32.mrf.mxu0
    %v5680 = vadd.f32 %v1134, %v5679
    %v5681 = vpop.f32.mrf.mxu0
    %5682 = vdwg.mxu0
    %5683 = vmatpush.bf16.msra.mxu0 %v1986
    %5684 = vmatpush.bf16.msra.mxu0 %v1982
    %5685 = vmatpush.bf16.msra.mxu0 %v1978
    %5686 = vmatpush.bf16.msra.mxu0 %v1974
    %5687 = vmatpush.bf16.msra.mxu0 %v1970
    %5688 = vmatpush.bf16.msra.mxu0 %v1966
    %5689 = vmatpush.bf16.msra.mxu0 %v1962
    %5690 = vmatpush.bf16.msra.mxu0 %v1958
    %5691 = vmatmul.bf16.gmra.mxu0 %v5381
    %v5692 = vpop.f32.mrf.mxu0
    %v5693 = vadd.f32 %v5680, %v5692
    %v5694 = vpop.f32.mrf.mxu0
    %5695 = vdwg.mxu0
    %5696 = vmatpush.bf16.msra.mxu0 %v1263
    %5697 = vmatpush.bf16.msra.mxu0 %v1259
    %5698 = vmatpush.bf16.msra.mxu0 %v1255
    %5699 = vmatpush.bf16.msra.mxu0 %v1251
    %5700 = vmatpush.bf16.msra.mxu0 %v1247
    %5701 = vmatpush.bf16.msra.mxu0 %v1243
    %5702 = vmatpush.bf16.msra.mxu0 %v1239
    %5703 = vmatpush.bf16.msra.mxu0 %v1235
    %5704 = vmatmul.bf16.gmra.mxu0 %v5549
    %v5705 = vpop.f32.mrf.mxu0
    %v5706 = vadd.f32 %v1135, %v5705
    %v5707 = vpop.f32.mrf.mxu0
    %5708 = vdwg.mxu0
    %5709 = vmatpush.bf16.msra.mxu0 %v1987
    %5710 = vmatpush.bf16.msra.mxu0 %v1983
    %5711 = vmatpush.bf16.msra.mxu0 %v1979
    %5712 = vmatpush.bf16.msra.mxu0 %v1975
    %5713 = vmatpush.bf16.msra.mxu0 %v1971
    %5714 = vmatpush.bf16.msra.mxu0 %v1967
    %5715 = vmatpush.bf16.msra.mxu0 %v1963
    %5716 = vmatpush.bf16.msra.mxu0 %v1959
    %5717 = vmatmul.bf16.gmra.mxu0 %v5381
    %v5718 = vpop.f32.mrf.mxu0
    %v5719 = vadd.f32 %v5706, %v5718
    %v5720 = vpop.f32.mrf.mxu0
    %5721 = vdwg.mxu0
    %5722 = vmatpush.bf16.msra.mxu0 %v1264
    %5723 = vmatpush.bf16.msra.mxu0 %v1260
    %5724 = vmatpush.bf16.msra.mxu0 %v1256
    %5725 = vmatpush.bf16.msra.mxu0 %v1252
    %5726 = vmatpush.bf16.msra.mxu0 %v1248
    %5727 = vmatpush.bf16.msra.mxu0 %v1244
    %5728 = vmatpush.bf16.msra.mxu0 %v1240
    %5729 = vmatpush.bf16.msra.mxu0 %v1236
    %5730 = vmatmul.bf16.gmra.mxu0 %v5549
    %v5731 = vpop.f32.mrf.mxu0
    %v5732 = vadd.f32 %v1136, %v5731
    %v5733 = vpop.f32.mrf.mxu0
    %5734 = vdwg.mxu0
    %5735 = vmatpush.bf16.msra.mxu0 %v1988
    %5736 = vmatpush.bf16.msra.mxu0 %v1984
    %5737 = vmatpush.bf16.msra.mxu0 %v1980
    %5738 = vmatpush.bf16.msra.mxu0 %v1976
    %5739 = vmatpush.bf16.msra.mxu0 %v1972
    %5740 = vmatpush.bf16.msra.mxu0 %v1968
    %5741 = vmatpush.bf16.msra.mxu0 %v1964
    %5742 = vmatpush.bf16.msra.mxu0 %v1960
    %5743 = vmatmul.bf16.gmra.mxu0 %v5381
    %v5744 = vpop.f32.mrf.mxu0
    %v5745 = vadd.f32 %v5732, %v5744
    %v5746 = vpop.f32.mrf.mxu0
    %5747 = vdwg.mxu0
    %5748 = vmatpush.bf16.msra.mxu0 %v1265
    %5749 = vmatpush.bf16.msra.mxu0 %v1261
    %5750 = vmatpush.bf16.msra.mxu0 %v1257
    %5751 = vmatpush.bf16.msra.mxu0 %v1253
    %5752 = vmatpush.bf16.msra.mxu0 %v1249
    %5753 = vmatpush.bf16.msra.mxu0 %v1245
    %5754 = vmatpush.bf16.msra.mxu0 %v1241
    %5755 = vmatpush.bf16.msra.mxu0 %v1237
    %5756 = vmatmul.bf16.gmra.mxu0 %v5549
    %v5757 = vpop.f32.mrf.mxu0
    %v5758 = vadd.f32 %v1137, %v5757
    %v5759 = vpop.f32.mrf.mxu0
    %5760 = vdwg.mxu0
    %5761 = vmatpush.bf16.msra.mxu0 %v1989
    %5762 = vmatpush.bf16.msra.mxu0 %v1985
    %5763 = vmatpush.bf16.msra.mxu0 %v1981
    %5764 = vmatpush.bf16.msra.mxu0 %v1977
    %5765 = vmatpush.bf16.msra.mxu0 %v1973
    %5766 = vmatpush.bf16.msra.mxu0 %v1969
    %5767 = vmatpush.bf16.msra.mxu0 %v1965
    %5768 = vmatpush.bf16.msra.mxu0 %v1961
    %5769 = vmatmul.bf16.gmra.mxu0 %v5381
    %v5770 = vpop.f32.mrf.mxu0
    %v5771 = vadd.f32 %v5758, %v5770
    %v5772 = vpop.f32.mrf.mxu0
    %5773 = vdwg.mxu0
    %v5774 = vxor.u32 %v5693, 2147483648
    %v5775 = vxor.u32 %v5719, 2147483648
    %v5776 = vxor.u32 %v5745, 2147483648
    %v5777 = vmul.f32 %v5774, 1.442695
    %v5778 = vpow.pop %v5777
    %v5779 = vmul.f32 %v5775, 1.442695
    %v5780 = vpow.pop %v5779
    %v5781 = vmul.f32 %v5776, 1.442695
    %v5782 = vpow.pop %v5781
    %v5783 = vadd.f32 %v5778, 1.0
    %v5784 = vadd.f32 %v5780, 1.0
    %v5785 = vadd.f32 %v5782, 1.0
    %v5786 = vrcp.pop %v5783
    %v5787 = vmul.f32 %v5783, %v5786
    %v5788 = vsub.f32 1.0, %v5787
    %v5789 = vmul.f32 %v5786, %v5788
    %v5790 = vadd.f32 %v5786, %v5789
    %vm5791 = vweird.f32 %v5783
    %vm5792 = vweird.f32 %v5786
    %vm5793 = vmor %vm5791, %vm5792
    %v5794 = vsel %vm5793, %v5786, %v5790
    %v5795 = vand.u32 2147483647, %v5783
    %vm5796 = vcmp.eq.f32.partialorder %v5795, 8.507059e+37
    %v5797 = vand.u32 %v5783, 2147483648
    %v5798 = vor.u32 1.1754944e-38, %v5797
    %v5799 = vsel %vm5796, %v5798, %v5794
    %v5800 = vmul.f32 1.0, %v5799
    %v5801 = vrcp.pop %v5784
    %v5802 = vmul.f32 %v5784, %v5801
    %v5803 = vsub.f32 1.0, %v5802
    %v5804 = vmul.f32 %v5801, %v5803
    %v5805 = vadd.f32 %v5801, %v5804
    %vm5806 = vweird.f32 %v5784
    %vm5807 = vweird.f32 %v5801
    %vm5808 = vmor %vm5806, %vm5807
    %v5809 = vsel %vm5808, %v5801, %v5805
    %v5810 = vand.u32 2147483647, %v5784
    %vm5811 = vcmp.eq.f32.partialorder %v5810, 8.507059e+37
    %v5812 = vand.u32 %v5784, 2147483648
    %v5813 = vor.u32 1.1754944e-38, %v5812
    %v5814 = vsel %vm5811, %v5813, %v5809
    %v5815 = vmul.f32 1.0, %v5814
    %v5816 = vrcp.pop %v5785
    %v5817 = vmul.f32 %v5785, %v5816
    %v5818 = vsub.f32 1.0, %v5817
    %v5819 = vmul.f32 %v5816, %v5818
    %v5820 = vadd.f32 %v5816, %v5819
    %vm5821 = vweird.f32 %v5785
    %vm5822 = vweird.f32 %v5816
    %vm5823 = vmor %vm5821, %vm5822
    %v5824 = vsel %vm5823, %v5816, %v5820
    %v5825 = vand.u32 2147483647, %v5785
    %vm5826 = vcmp.eq.f32.partialorder %v5825, 8.507059e+37
    %v5827 = vand.u32 %v5785, 2147483648
    %v5828 = vor.u32 1.1754944e-38, %v5827
    %v5829 = vsel %vm5826, %v5828, %v5824
    %v5830 = vmul.f32 1.0, %v5829
    %v5831 = vtanh.pop %v5771
    %v5832 = vmul.f32 %v5815, %v5378
    %v5833 = vmul.f32 %v5800, %v5831
    %v5834 = vadd.f32 %v5832, %v5833
    %v5835 = vtanh.pop %v5834
    %v5836 = vmul.f32 %v5830, %v5835
    %v5837 = vpack.c.bf16 %v5836, %v5836
    %5838 = vmatpush.bf16.msra.mxu0 %v694
    %5839 = vmatpush.bf16.msra.mxu0 %v690
    %5840 = vmatpush.bf16.msra.mxu0 %v686
    %5841 = vmatpush.bf16.msra.mxu0 %v682
    %5842 = vmatpush.bf16.msra.mxu0 %v678
    %5843 = vmatpush.bf16.msra.mxu0 %v674
    %5844 = vmatpush.bf16.msra.mxu0 %v670
    %5845 = vmatpush.bf16.msra.mxu0 %v666
    %5846 = vmatmul.bf16.gmra.mxu0 %v5669
    %v5847 = vpop.f32.mrf.mxu0
    %v5848 = vadd.f32 %v566, %v5847
    %v5849 = vpop.f32.mrf.mxu0
    %5850 = vdwg.mxu0
    %5851 = vmatpush.bf16.msra.mxu0 %v1538
    %5852 = vmatpush.bf16.msra.mxu0 %v1534
    %5853 = vmatpush.bf16.msra.mxu0 %v1530
    %5854 = vmatpush.bf16.msra.mxu0 %v1526
    %5855 = vmatpush.bf16.msra.mxu0 %v1522
    %5856 = vmatpush.bf16.msra.mxu0 %v1518
    %5857 = vmatpush.bf16.msra.mxu0 %v1514
    %5858 = vmatpush.bf16.msra.mxu0 %v1510
    %5859 = vmatmul.bf16.gmra.mxu0 %v5549
    %v5860 = vpop.f32.mrf.mxu0
    %v5861 = vadd.f32 %v5848, %v5860
    %v5862 = vpop.f32.mrf.mxu0
    %5863 = vdwg.mxu0
    %5864 = vmatpush.bf16.msra.mxu0 %v695
    %5865 = vmatpush.bf16.msra.mxu0 %v691
    %5866 = vmatpush.bf16.msra.mxu0 %v687
    %5867 = vmatpush.bf16.msra.mxu0 %v683
    %5868 = vmatpush.bf16.msra.mxu0 %v679
    %5869 = vmatpush.bf16.msra.mxu0 %v675
    %5870 = vmatpush.bf16.msra.mxu0 %v671
    %5871 = vmatpush.bf16.msra.mxu0 %v667
    %5872 = vmatmul.bf16.gmra.mxu0 %v5669
    %v5873 = vpop.f32.mrf.mxu0
    %v5874 = vadd.f32 %v567, %v5873
    %v5875 = vpop.f32.mrf.mxu0
    %5876 = vdwg.mxu0
    %5877 = vmatpush.bf16.msra.mxu0 %v1539
    %5878 = vmatpush.bf16.msra.mxu0 %v1535
    %5879 = vmatpush.bf16.msra.mxu0 %v1531
    %5880 = vmatpush.bf16.msra.mxu0 %v1527
    %5881 = vmatpush.bf16.msra.mxu0 %v1523
    %5882 = vmatpush.bf16.msra.mxu0 %v1519
    %5883 = vmatpush.bf16.msra.mxu0 %v1515
    %5884 = vmatpush.bf16.msra.mxu0 %v1511
    %5885 = vmatmul.bf16.gmra.mxu0 %v5549
    %v5886 = vpop.f32.mrf.mxu0
    %v5887 = vadd.f32 %v5874, %v5886
    %v5888 = vpop.f32.mrf.mxu0
    %5889 = vdwg.mxu0
    %5890 = vmatpush.bf16.msra.mxu0 %v696
    %5891 = vmatpush.bf16.msra.mxu0 %v692
    %5892 = vmatpush.bf16.msra.mxu0 %v688
    %5893 = vmatpush.bf16.msra.mxu0 %v684
    %5894 = vmatpush.bf16.msra.mxu0 %v680
    %5895 = vmatpush.bf16.msra.mxu0 %v676
    %5896 = vmatpush.bf16.msra.mxu0 %v672
    %5897 = vmatpush.bf16.msra.mxu0 %v668
    %5898 = vmatmul.bf16.gmra.mxu0 %v5669
    %v5899 = vpop.f32.mrf.mxu0
    %v5900 = vadd.f32 %v568, %v5899
    %v5901 = vpop.f32.mrf.mxu0
    %5902 = vdwg.mxu0
    %5903 = vmatpush.bf16.msra.mxu0 %v1540
    %5904 = vmatpush.bf16.msra.mxu0 %v1536
    %5905 = vmatpush.bf16.msra.mxu0 %v1532
    %5906 = vmatpush.bf16.msra.mxu0 %v1528
    %5907 = vmatpush.bf16.msra.mxu0 %v1524
    %5908 = vmatpush.bf16.msra.mxu0 %v1520
    %5909 = vmatpush.bf16.msra.mxu0 %v1516
    %5910 = vmatpush.bf16.msra.mxu0 %v1512
    %5911 = vmatmul.bf16.gmra.mxu0 %v5549
    %v5912 = vpop.f32.mrf.mxu0
    %v5913 = vadd.f32 %v5900, %v5912
    %v5914 = vpop.f32.mrf.mxu0
    %5915 = vdwg.mxu0
    %5916 = vmatpush.bf16.msra.mxu0 %v697
    %5917 = vmatpush.bf16.msra.mxu0 %v693
    %5918 = vmatpush.bf16.msra.mxu0 %v689
    %5919 = vmatpush.bf16.msra.mxu0 %v685
    %5920 = vmatpush.bf16.msra.mxu0 %v681
    %5921 = vmatpush.bf16.msra.mxu0 %v677
    %5922 = vmatpush.bf16.msra.mxu0 %v673
    %5923 = vmatpush.bf16.msra.mxu0 %v669
    %5924 = vmatmul.bf16.gmra.mxu0 %v5669
    %v5925 = vpop.f32.mrf.mxu0
    %v5926 = vadd.f32 %v569, %v5925
    %v5927 = vpop.f32.mrf.mxu0
    %5928 = vdwg.mxu0
    %5929 = vmatpush.bf16.msra.mxu0 %v1541
    %5930 = vmatpush.bf16.msra.mxu0 %v1537
    %5931 = vmatpush.bf16.msra.mxu0 %v1533
    %5932 = vmatpush.bf16.msra.mxu0 %v1529
    %5933 = vmatpush.bf16.msra.mxu0 %v1525
    %5934 = vmatpush.bf16.msra.mxu0 %v1521
    %5935 = vmatpush.bf16.msra.mxu0 %v1517
    %5936 = vmatpush.bf16.msra.mxu0 %v1513
    %5937 = vmatmul.bf16.gmra.mxu0 %v5549
    %v5938 = vpop.f32.mrf.mxu0
    %v5939 = vadd.f32 %v5926, %v5938
    %v5940 = vpop.f32.mrf.mxu0
    %5941 = vdwg.mxu0
    %v5942 = vxor.u32 %v5861, 2147483648
    %v5943 = vxor.u32 %v5887, 2147483648
    %v5944 = vxor.u32 %v5913, 2147483648
    %v5945 = vmul.f32 %v5942, 1.442695
    %v5946 = vpow.pop %v5945
    %v5947 = vmul.f32 %v5943, 1.442695
    %v5948 = vpow.pop %v5947
    %v5949 = vmul.f32 %v5944, 1.442695
    %v5950 = vpow.pop %v5949
    %v5951 = vadd.f32 %v5946, 1.0
    %v5952 = vadd.f32 %v5948, 1.0
    %v5953 = vadd.f32 %v5950, 1.0
    %v5954 = vrcp.pop %v5951
    %v5955 = vmul.f32 %v5951, %v5954
    %v5956 = vsub.f32 1.0, %v5955
    %v5957 = vmul.f32 %v5954, %v5956
    %v5958 = vadd.f32 %v5954, %v5957
    %vm5959 = vweird.f32 %v5951
    %vm5960 = vweird.f32 %v5954
    %vm5961 = vmor %vm5959, %vm5960
    %v5962 = vsel %vm5961, %v5954, %v5958
    %v5963 = vand.u32 2147483647, %v5951
    %vm5964 = vcmp.eq.f32.partialorder %v5963, 8.507059e+37
    %v5965 = vand.u32 %v5951, 2147483648
    %v5966 = vor.u32 1.1754944e-38, %v5965
    %v5967 = vsel %vm5964, %v5966, %v5962
    %v5968 = vmul.f32 1.0, %v5967
    %v5969 = vrcp.pop %v5952
    %v5970 = vmul.f32 %v5952, %v5969
    %v5971 = vsub.f32 1.0, %v5970
    %v5972 = vmul.f32 %v5969, %v5971
    %v5973 = vadd.f32 %v5969, %v5972
    %vm5974 = vweird.f32 %v5952
    %vm5975 = vweird.f32 %v5969
    %vm5976 = vmor %vm5974, %vm5975
    %v5977 = vsel %vm5976, %v5969, %v5973
    %v5978 = vand.u32 2147483647, %v5952
    %vm5979 = vcmp.eq.f32.partialorder %v5978, 8.507059e+37
    %v5980 = vand.u32 %v5952, 2147483648
    %v5981 = vor.u32 1.1754944e-38, %v5980
    %v5982 = vsel %vm5979, %v5981, %v5977
    %v5983 = vmul.f32 1.0, %v5982
    %v5984 = vrcp.pop %v5953
    %v5985 = vmul.f32 %v5953, %v5984
    %v5986 = vsub.f32 1.0, %v5985
    %v5987 = vmul.f32 %v5984, %v5986
    %v5988 = vadd.f32 %v5984, %v5987
    %vm5989 = vweird.f32 %v5953
    %vm5990 = vweird.f32 %v5984
    %vm5991 = vmor %vm5989, %vm5990
    %v5992 = vsel %vm5991, %v5984, %v5988
    %v5993 = vand.u32 2147483647, %v5953
    %vm5994 = vcmp.eq.f32.partialorder %v5993, 8.507059e+37
    %v5995 = vand.u32 %v5953, 2147483648
    %v5996 = vor.u32 1.1754944e-38, %v5995
    %v5997 = vsel %vm5994, %v5996, %v5992
    %v5998 = vmul.f32 1.0, %v5997
    %v5999 = vtanh.pop %v5939
    %v6000 = vmul.f32 %v5983, %v5546
    %v6001 = vmul.f32 %v5968, %v5999
    %v6002 = vadd.f32 %v6000, %v6001
    %v6003 = vtanh.pop %v6002
    %v6004 = vmul.f32 %v5998, %v6003
    %v6005 = vpack.c.bf16 %v6004, %v6004
    %6006 = vmatpush.bf16.msra.mxu0 %v970
    %6007 = vmatpush.bf16.msra.mxu0 %v966
    %6008 = vmatpush.bf16.msra.mxu0 %v962
    %6009 = vmatpush.bf16.msra.mxu0 %v958
    %6010 = vmatpush.bf16.msra.mxu0 %v954
    %6011 = vmatpush.bf16.msra.mxu0 %v950
    %6012 = vmatpush.bf16.msra.mxu0 %v946
    %6013 = vmatpush.bf16.msra.mxu0 %v942
    %6014 = vmatmul.bf16.gmra.mxu0 %v5669
    %v6015 = vpop.f32.mrf.mxu0
    %v6016 = vadd.f32 0.0, %v6015
    %v6017 = vpop.f32.mrf.mxu0
    %6018 = vdwg.mxu0
    %6019 = vmatpush.bf16.msra.mxu0 %v971
    %6020 = vmatpush.bf16.msra.mxu0 %v967
    %6021 = vmatpush.bf16.msra.mxu0 %v963
    %6022 = vmatpush.bf16.msra.mxu0 %v959
    %6023 = vmatpush.bf16.msra.mxu0 %v955
    %6024 = vmatpush.bf16.msra.mxu0 %v951
    %6025 = vmatpush.bf16.msra.mxu0 %v947
    %6026 = vmatpush.bf16.msra.mxu0 %v943
    %6027 = vmatmul.bf16.gmra.mxu0 %v5669
    %v6028 = vpop.f32.mrf.mxu0
    %v6029 = vadd.f32 0.0, %v6028
    %v6030 = vpop.f32.mrf.mxu0
    %6031 = vdwg.mxu0
    %6032 = vmatpush.bf16.msra.mxu0 %v972
    %6033 = vmatpush.bf16.msra.mxu0 %v968
    %6034 = vmatpush.bf16.msra.mxu0 %v964
    %6035 = vmatpush.bf16.msra.mxu0 %v960
    %6036 = vmatpush.bf16.msra.mxu0 %v956
    %6037 = vmatpush.bf16.msra.mxu0 %v952
    %6038 = vmatpush.bf16.msra.mxu0 %v948
    %6039 = vmatpush.bf16.msra.mxu0 %v944
    %6040 = vmatmul.bf16.gmra.mxu0 %v5669
    %v6041 = vpop.f32.mrf.mxu0
    %v6042 = vadd.f32 0.0, %v6041
    %v6043 = vpop.f32.mrf.mxu0
    %6044 = vdwg.mxu0
    %6045 = vmatpush.bf16.msra.mxu0 %v973
    %6046 = vmatpush.bf16.msra.mxu0 %v969
    %6047 = vmatpush.bf16.msra.mxu0 %v965
    %6048 = vmatpush.bf16.msra.mxu0 %v961
    %6049 = vmatpush.bf16.msra.mxu0 %v957
    %6050 = vmatpush.bf16.msra.mxu0 %v953
    %6051 = vmatpush.bf16.msra.mxu0 %v949
    %6052 = vmatpush.bf16.msra.mxu0 %v945
    %6053 = vmatmul.bf16.gmra.mxu0 %v5669
    %v6054 = vpop.f32.mrf.mxu0
    %v6055 = vadd.f32 0.0, %v6054
    %v6056 = vpop.f32.mrf.mxu0
    %6057 = vdwg.mxu0
    %v6058 = vadd.f32 %v172, %v6016
    %v6059 = vadd.f32 %v225, %v6029
    %v6060 = vadd.f32 %v278, %v6042
    %v6061 = vadd.f32 %v331, %v6055
    %v6062 = vxor.u32 %v6058, 2147483648
    %v6063 = vxor.u32 %v6059, 2147483648
    %v6064 = vxor.u32 %v6060, 2147483648
    %v6065 = vmul.f32 %v6062, 1.442695
    %v6066 = vpow.pop %v6065
    %v6067 = vmul.f32 %v6063, 1.442695
    %v6068 = vpow.pop %v6067
    %v6069 = vmul.f32 %v6064, 1.442695
    %v6070 = vpow.pop %v6069
    %v6071 = vadd.f32 %v6066, 1.0
    %v6072 = vadd.f32 %v6068, 1.0
    %v6073 = vadd.f32 %v6070, 1.0
    %v6074 = vrcp.pop %v6071
    %v6075 = vmul.f32 %v6071, %v6074
    %v6076 = vsub.f32 1.0, %v6075
    %v6077 = vmul.f32 %v6074, %v6076
    %v6078 = vadd.f32 %v6074, %v6077
    %vm6079 = vweird.f32 %v6071
    %vm6080 = vweird.f32 %v6074
    %vm6081 = vmor %vm6079, %vm6080
    %v6082 = vsel %vm6081, %v6074, %v6078
    %v6083 = vand.u32 2147483647, %v6071
    %vm6084 = vcmp.eq.f32.partialorder %v6083, 8.507059e+37
    %v6085 = vand.u32 %v6071, 2147483648
    %v6086 = vor.u32 1.1754944e-38, %v6085
    %v6087 = vsel %vm6084, %v6086, %v6082
    %v6088 = vmul.f32 1.0, %v6087
    %v6089 = vrcp.pop %v6072
    %v6090 = vmul.f32 %v6072, %v6089
    %v6091 = vsub.f32 1.0, %v6090
    %v6092 = vmul.f32 %v6089, %v6091
    %v6093 = vadd.f32 %v6089, %v6092
    %vm6094 = vweird.f32 %v6072
    %vm6095 = vweird.f32 %v6089
    %vm6096 = vmor %vm6094, %vm6095
    %v6097 = vsel %vm6096, %v6089, %v6093
    %v6098 = vand.u32 2147483647, %v6072
    %vm6099 = vcmp.eq.f32.partialorder %v6098, 8.507059e+37
    %v6100 = vand.u32 %v6072, 2147483648
    %v6101 = vor.u32 1.1754944e-38, %v6100
    %v6102 = vsel %vm6099, %v6101, %v6097
    %v6103 = vmul.f32 1.0, %v6102
    %v6104 = vrcp.pop %v6073
    %v6105 = vmul.f32 %v6073, %v6104
    %v6106 = vsub.f32 1.0, %v6105
    %v6107 = vmul.f32 %v6104, %v6106
    %v6108 = vadd.f32 %v6104, %v6107
    %vm6109 = vweird.f32 %v6073
    %vm6110 = vweird.f32 %v6104
    %vm6111 = vmor %vm6109, %vm6110
    %v6112 = vsel %vm6111, %v6104, %v6108
    %v6113 = vand.u32 2147483647, %v6073
    %vm6114 = vcmp.eq.f32.partialorder %v6113, 8.507059e+37
    %v6115 = vand.u32 %v6073, 2147483648
    %v6116 = vor.u32 1.1754944e-38, %v6115
    %v6117 = vsel %vm6114, %v6116, %v6112
    %v6118 = vmul.f32 1.0, %v6117
    %v6119 = vtanh.pop %v6061
    %v6120 = vmul.f32 %v6103, %v5666
    %v6121 = vmul.f32 %v6088, %v6119
    %v6122 = vadd.f32 %v6120, %v6121
    %v6123 = vtanh.pop %v6122
    %v6124 = vmul.f32 %v6118, %v6123
    %v6125 = vpack.c.bf16 %v6124, %v6124
    %6126 = vmatpush.bf16.msra.mxu0 %v1262
    %6127 = vmatpush.bf16.msra.mxu0 %v1258
    %6128 = vmatpush.bf16.msra.mxu0 %v1254
    %6129 = vmatpush.bf16.msra.mxu0 %v1250
    %6130 = vmatpush.bf16.msra.mxu0 %v1246
    %6131 = vmatpush.bf16.msra.mxu0 %v1242
    %6132 = vmatpush.bf16.msra.mxu0 %v1238
    %6133 = vmatpush.bf16.msra.mxu0 %v1234
    %6134 = vmatmul.bf16.gmra.mxu0 %v6005
    %v6135 = vpop.f32.mrf.mxu0
    %v6136 = vadd.f32 %v1134, %v6135
    %v6137 = vpop.f32.mrf.mxu0
    %6138 = vdwg.mxu0
    %6139 = vmatpush.bf16.msra.mxu0 %v1986
    %6140 = vmatpush.bf16.msra.mxu0 %v1982
    %6141 = vmatpush.bf16.msra.mxu0 %v1978
    %6142 = vmatpush.bf16.msra.mxu0 %v1974
    %6143 = vmatpush.bf16.msra.mxu0 %v1970
    %6144 = vmatpush.bf16.msra.mxu0 %v1966
    %6145 = vmatpush.bf16.msra.mxu0 %v1962
    %6146 = vmatpush.bf16.msra.mxu0 %v1958
    %6147 = vmatmul.bf16.gmra.mxu0 %v5837
    %v6148 = vpop.f32.mrf.mxu0
    %v6149 = vadd.f32 %v6136, %v6148
    %v6150 = vpop.f32.mrf.mxu0
    %6151 = vdwg.mxu0
    %6152 = vmatpush.bf16.msra.mxu0 %v1263
    %6153 = vmatpush.bf16.msra.mxu0 %v1259
    %6154 = vmatpush.bf16.msra.mxu0 %v1255
    %6155 = vmatpush.bf16.msra.mxu0 %v1251
    %6156 = vmatpush.bf16.msra.mxu0 %v1247
    %6157 = vmatpush.bf16.msra.mxu0 %v1243
    %6158 = vmatpush.bf16.msra.mxu0 %v1239
    %6159 = vmatpush.bf16.msra.mxu0 %v1235
    %6160 = vmatmul.bf16.gmra.mxu0 %v6005
    %v6161 = vpop.f32.mrf.mxu0
    %v6162 = vadd.f32 %v1135, %v6161
    %v6163 = vpop.f32.mrf.mxu0
    %6164 = vdwg.mxu0
    %6165 = vmatpush.bf16.msra.mxu0 %v1987
    %6166 = vmatpush.bf16.msra.mxu0 %v1983
    %6167 = vmatpush.bf16.msra.mxu0 %v1979
    %6168 = vmatpush.bf16.msra.mxu0 %v1975
    %6169 = vmatpush.bf16.msra.mxu0 %v1971
    %6170 = vmatpush.bf16.msra.mxu0 %v1967
    %6171 = vmatpush.bf16.msra.mxu0 %v1963
    %6172 = vmatpush.bf16.msra.mxu0 %v1959
    %6173 = vmatmul.bf16.gmra.mxu0 %v5837
    %v6174 = vpop.f32.mrf.mxu0
    %v6175 = vadd.f32 %v6162, %v6174
    %v6176 = vpop.f32.mrf.mxu0
    %6177 = vdwg.mxu0
    %6178 = vmatpush.bf16.msra.mxu0 %v1264
    %6179 = vmatpush.bf16.msra.mxu0 %v1260
    %6180 = vmatpush.bf16.msra.mxu0 %v1256
    %6181 = vmatpush.bf16.msra.mxu0 %v1252
    %6182 = vmatpush.bf16.msra.mxu0 %v1248
    %6183 = vmatpush.bf16.msra.mxu0 %v1244
    %6184 = vmatpush.bf16.msra.mxu0 %v1240
    %6185 = vmatpush.bf16.msra.mxu0 %v1236
    %6186 = vmatmul.bf16.gmra.mxu0 %v6005
    %v6187 = vpop.f32.mrf.mxu0
    %v6188 = vadd.f32 %v1136, %v6187
    %v6189 = vpop.f32.mrf.mxu0
    %6190 = vdwg.mxu0
    %6191 = vmatpush.bf16.msra.mxu0 %v1988
    %6192 = vmatpush.bf16.msra.mxu0 %v1984
    %6193 = vmatpush.bf16.msra.mxu0 %v1980
    %6194 = vmatpush.bf16.msra.mxu0 %v1976
    %6195 = vmatpush.bf16.msra.mxu0 %v1972
    %6196 = vmatpush.bf16.msra.mxu0 %v1968
    %6197 = vmatpush.bf16.msra.mxu0 %v1964
    %6198 = vmatpush.bf16.msra.mxu0 %v1960
    %6199 = vmatmul.bf16.gmra.mxu0 %v5837
    %v6200 = vpop.f32.mrf.mxu0
    %v6201 = vadd.f32 %v6188, %v6200
    %v6202 = vpop.f32.mrf.mxu0
    %6203 = vdwg.mxu0
    %6204 = vmatpush.bf16.msra.mxu0 %v1265
    %6205 = vmatpush.bf16.msra.mxu0 %v1261
    %6206 = vmatpush.bf16.msra.mxu0 %v1257
    %6207 = vmatpush.bf16.msra.mxu0 %v1253
    %6208 = vmatpush.bf16.msra.mxu0 %v1249
    %6209 = vmatpush.bf16.msra.mxu0 %v1245
    %6210 = vmatpush.bf16.msra.mxu0 %v1241
    %6211 = vmatpush.bf16.msra.mxu0 %v1237
    %6212 = vmatmul.bf16.gmra.mxu0 %v6005
    %v6213 = vpop.f32.mrf.mxu0
    %v6214 = vadd.f32 %v1137, %v6213
    %v6215 = vpop.f32.mrf.mxu0
    %6216 = vdwg.mxu0
    %6217 = vmatpush.bf16.msra.mxu0 %v1989
    %6218 = vmatpush.bf16.msra.mxu0 %v1985
    %6219 = vmatpush.bf16.msra.mxu0 %v1981
    %6220 = vmatpush.bf16.msra.mxu0 %v1977
    %6221 = vmatpush.bf16.msra.mxu0 %v1973
    %6222 = vmatpush.bf16.msra.mxu0 %v1969
    %6223 = vmatpush.bf16.msra.mxu0 %v1965
    %6224 = vmatpush.bf16.msra.mxu0 %v1961
    %6225 = vmatmul.bf16.gmra.mxu0 %v5837
    %v6226 = vpop.f32.mrf.mxu0
    %v6227 = vadd.f32 %v6214, %v6226
    %v6228 = vpop.f32.mrf.mxu0
    %6229 = vdwg.mxu0
    %v6230 = vxor.u32 %v6149, 2147483648
    %v6231 = vxor.u32 %v6175, 2147483648
    %v6232 = vxor.u32 %v6201, 2147483648
    %v6233 = vmul.f32 %v6230, 1.442695
    %v6234 = vpow.pop %v6233
    %v6235 = vmul.f32 %v6231, 1.442695
    %v6236 = vpow.pop %v6235
    %v6237 = vmul.f32 %v6232, 1.442695
    %v6238 = vpow.pop %v6237
    %v6239 = vadd.f32 %v6234, 1.0
    %v6240 = vadd.f32 %v6236, 1.0
    %v6241 = vadd.f32 %v6238, 1.0
    %v6242 = vrcp.pop %v6239
    %v6243 = vmul.f32 %v6239, %v6242
    %v6244 = vsub.f32 1.0, %v6243
    %v6245 = vmul.f32 %v6242, %v6244
    %v6246 = vadd.f32 %v6242, %v6245
    %vm6247 = vweird.f32 %v6239
    %vm6248 = vweird.f32 %v6242
    %vm6249 = vmor %vm6247, %vm6248
    %v6250 = vsel %vm6249, %v6242, %v6246
    %v6251 = vand.u32 2147483647, %v6239
    %vm6252 = vcmp.eq.f32.partialorder %v6251, 8.507059e+37
    %v6253 = vand.u32 %v6239, 2147483648
    %v6254 = vor.u32 1.1754944e-38, %v6253
    %v6255 = vsel %vm6252, %v6254, %v6250
    %v6256 = vmul.f32 1.0, %v6255
    %v6257 = vrcp.pop %v6240
    %v6258 = vmul.f32 %v6240, %v6257
    %v6259 = vsub.f32 1.0, %v6258
    %v6260 = vmul.f32 %v6257, %v6259
    %v6261 = vadd.f32 %v6257, %v6260
    %vm6262 = vweird.f32 %v6240
    %vm6263 = vweird.f32 %v6257
    %vm6264 = vmor %vm6262, %vm6263
    %v6265 = vsel %vm6264, %v6257, %v6261
    %v6266 = vand.u32 2147483647, %v6240
    %vm6267 = vcmp.eq.f32.partialorder %v6266, 8.507059e+37
    %v6268 = vand.u32 %v6240, 2147483648
    %v6269 = vor.u32 1.1754944e-38, %v6268
    %v6270 = vsel %vm6267, %v6269, %v6265
    %v6271 = vmul.f32 1.0, %v6270
    %v6272 = vrcp.pop %v6241
    %v6273 = vmul.f32 %v6241, %v6272
    %v6274 = vsub.f32 1.0, %v6273
    %v6275 = vmul.f32 %v6272, %v6274
    %v6276 = vadd.f32 %v6272, %v6275
    %vm6277 = vweird.f32 %v6241
    %vm6278 = vweird.f32 %v6272
    %vm6279 = vmor %vm6277, %vm6278
    %v6280 = vsel %vm6279, %v6272, %v6276
    %v6281 = vand.u32 2147483647, %v6241
    %vm6282 = vcmp.eq.f32.partialorder %v6281, 8.507059e+37
    %v6283 = vand.u32 %v6241, 2147483648
    %v6284 = vor.u32 1.1754944e-38, %v6283
    %v6285 = vsel %vm6282, %v6284, %v6280
    %v6286 = vmul.f32 1.0, %v6285
    %v6287 = vtanh.pop %v6227
    %v6288 = vmul.f32 %v6271, %v5834
    %v6289 = vmul.f32 %v6256, %v6287
    %v6290 = vadd.f32 %v6288, %v6289
    %v6291 = vtanh.pop %v6290
    %v6292 = vmul.f32 %v6286, %v6291
    %v6293 = vpack.c.bf16 %v6292, %v6292
    %6294 = vmatpush.bf16.msra.mxu0 %v694
    %6295 = vmatpush.bf16.msra.mxu0 %v690
    %6296 = vmatpush.bf16.msra.mxu0 %v686
    %6297 = vmatpush.bf16.msra.mxu0 %v682
    %6298 = vmatpush.bf16.msra.mxu0 %v678
    %6299 = vmatpush.bf16.msra.mxu0 %v674
    %6300 = vmatpush.bf16.msra.mxu0 %v670
    %6301 = vmatpush.bf16.msra.mxu0 %v666
    %6302 = vmatmul.bf16.gmra.mxu0 %v6125
    %v6303 = vpop.f32.mrf.mxu0
    %v6304 = vadd.f32 %v566, %v6303
    %v6305 = vpop.f32.mrf.mxu0
    %6306 = vdwg.mxu0
    %6307 = vmatpush.bf16.msra.mxu0 %v1538
    %6308 = vmatpush.bf16.msra.mxu0 %v1534
    %6309 = vmatpush.bf16.msra.mxu0 %v1530
    %6310 = vmatpush.bf16.msra.mxu0 %v1526
    %6311 = vmatpush.bf16.msra.mxu0 %v1522
    %6312 = vmatpush.bf16.msra.mxu0 %v1518
    %6313 = vmatpush.bf16.msra.mxu0 %v1514
    %6314 = vmatpush.bf16.msra.mxu0 %v1510
    %6315 = vmatmul.bf16.gmra.mxu0 %v6005
    %v6316 = vpop.f32.mrf.mxu0
    %v6317 = vadd.f32 %v6304, %v6316
    %v6318 = vpop.f32.mrf.mxu0
    %6319 = vdwg.mxu0
    %6320 = vmatpush.bf16.msra.mxu0 %v695
    %6321 = vmatpush.bf16.msra.mxu0 %v691
    %6322 = vmatpush.bf16.msra.mxu0 %v687
    %6323 = vmatpush.bf16.msra.mxu0 %v683
    %6324 = vmatpush.bf16.msra.mxu0 %v679
    %6325 = vmatpush.bf16.msra.mxu0 %v675
    %6326 = vmatpush.bf16.msra.mxu0 %v671
    %6327 = vmatpush.bf16.msra.mxu0 %v667
    %6328 = vmatmul.bf16.gmra.mxu0 %v6125
    %v6329 = vpop.f32.mrf.mxu0
    %v6330 = vadd.f32 %v567, %v6329
    %v6331 = vpop.f32.mrf.mxu0
    %6332 = vdwg.mxu0
    %6333 = vmatpush.bf16.msra.mxu0 %v1539
    %6334 = vmatpush.bf16.msra.mxu0 %v1535
    %6335 = vmatpush.bf16.msra.mxu0 %v1531
    %6336 = vmatpush.bf16.msra.mxu0 %v1527
    %6337 = vmatpush.bf16.msra.mxu0 %v1523
    %6338 = vmatpush.bf16.msra.mxu0 %v1519
    %6339 = vmatpush.bf16.msra.mxu0 %v1515
    %6340 = vmatpush.bf16.msra.mxu0 %v1511
    %6341 = vmatmul.bf16.gmra.mxu0 %v6005
    %v6342 = vpop.f32.mrf.mxu0
    %v6343 = vadd.f32 %v6330, %v6342
    %v6344 = vpop.f32.mrf.mxu0
    %6345 = vdwg.mxu0
    %6346 = vmatpush.bf16.msra.mxu0 %v696
    %6347 = vmatpush.bf16.msra.mxu0 %v692
    %6348 = vmatpush.bf16.msra.mxu0 %v688
    %6349 = vmatpush.bf16.msra.mxu0 %v684
    %6350 = vmatpush.bf16.msra.mxu0 %v680
    %6351 = vmatpush.bf16.msra.mxu0 %v676
    %6352 = vmatpush.bf16.msra.mxu0 %v672
    %6353 = vmatpush.bf16.msra.mxu0 %v668
    %6354 = vmatmul.bf16.gmra.mxu0 %v6125
    %v6355 = vpop.f32.mrf.mxu0
    %v6356 = vadd.f32 %v568, %v6355
    %v6357 = vpop.f32.mrf.mxu0
    %6358 = vdwg.mxu0
    %6359 = vmatpush.bf16.msra.mxu0 %v1540
    %6360 = vmatpush.bf16.msra.mxu0 %v1536
    %6361 = vmatpush.bf16.msra.mxu0 %v1532
    %6362 = vmatpush.bf16.msra.mxu0 %v1528
    %6363 = vmatpush.bf16.msra.mxu0 %v1524
    %6364 = vmatpush.bf16.msra.mxu0 %v1520
    %6365 = vmatpush.bf16.msra.mxu0 %v1516
    %6366 = vmatpush.bf16.msra.mxu0 %v1512
    %6367 = vmatmul.bf16.gmra.mxu0 %v6005
    %v6368 = vpop.f32.mrf.mxu0
    %v6369 = vadd.f32 %v6356, %v6368
    %v6370 = vpop.f32.mrf.mxu0
    %6371 = vdwg.mxu0
    %6372 = vmatpush.bf16.msra.mxu0 %v697
    %6373 = vmatpush.bf16.msra.mxu0 %v693
    %6374 = vmatpush.bf16.msra.mxu0 %v689
    %6375 = vmatpush.bf16.msra.mxu0 %v685
    %6376 = vmatpush.bf16.msra.mxu0 %v681
    %6377 = vmatpush.bf16.msra.mxu0 %v677
    %6378 = vmatpush.bf16.msra.mxu0 %v673
    %6379 = vmatpush.bf16.msra.mxu0 %v669
    %6380 = vmatmul.bf16.gmra.mxu0 %v6125
    %v6381 = vpop.f32.mrf.mxu0
    %v6382 = vadd.f32 %v569, %v6381
    %v6383 = vpop.f32.mrf.mxu0
    %6384 = vdwg.mxu0
    %6385 = vmatpush.bf16.msra.mxu0 %v1541
    %6386 = vmatpush.bf16.msra.mxu0 %v1537
    %6387 = vmatpush.bf16.msra.mxu0 %v1533
    %6388 = vmatpush.bf16.msra.mxu0 %v1529
    %6389 = vmatpush.bf16.msra.mxu0 %v1525
    %6390 = vmatpush.bf16.msra.mxu0 %v1521
    %6391 = vmatpush.bf16.msra.mxu0 %v1517
    %6392 = vmatpush.bf16.msra.mxu0 %v1513
    %6393 = vmatmul.bf16.gmra.mxu0 %v6005
    %v6394 = vpop.f32.mrf.mxu0
    %v6395 = vadd.f32 %v6382, %v6394
    %v6396 = vpop.f32.mrf.mxu0
    %6397 = vdwg.mxu0
    %v6398 = vxor.u32 %v6317, 2147483648
    %v6399 = vxor.u32 %v6343, 2147483648
    %v6400 = vxor.u32 %v6369, 2147483648
    %v6401 = vmul.f32 %v6398, 1.442695
    %v6402 = vpow.pop %v6401
    %v6403 = vmul.f32 %v6399, 1.442695
    %v6404 = vpow.pop %v6403
    %v6405 = vmul.f32 %v6400, 1.442695
    %v6406 = vpow.pop %v6405
    %v6407 = vadd.f32 %v6402, 1.0
    %v6408 = vadd.f32 %v6404, 1.0
    %v6409 = vadd.f32 %v6406, 1.0
    %v6410 = vrcp.pop %v6407
    %v6411 = vmul.f32 %v6407, %v6410
    %v6412 = vsub.f32 1.0, %v6411
    %v6413 = vmul.f32 %v6410, %v6412
    %v6414 = vadd.f32 %v6410, %v6413
    %vm6415 = vweird.f32 %v6407
    %vm6416 = vweird.f32 %v6410
    %vm6417 = vmor %vm6415, %vm6416
    %v6418 = vsel %vm6417, %v6410, %v6414
    %v6419 = vand.u32 2147483647, %v6407
    %vm6420 = vcmp.eq.f32.partialorder %v6419, 8.507059e+37
    %v6421 = vand.u32 %v6407, 2147483648
    %v6422 = vor.u32 1.1754944e-38, %v6421
    %v6423 = vsel %vm6420, %v6422, %v6418
    %v6424 = vmul.f32 1.0, %v6423
    %v6425 = vrcp.pop %v6408
    %v6426 = vmul.f32 %v6408, %v6425
    %v6427 = vsub.f32 1.0, %v6426
    %v6428 = vmul.f32 %v6425, %v6427
    %v6429 = vadd.f32 %v6425, %v6428
    %vm6430 = vweird.f32 %v6408
    %vm6431 = vweird.f32 %v6425
    %vm6432 = vmor %vm6430, %vm6431
    %v6433 = vsel %vm6432, %v6425, %v6429
    %v6434 = vand.u32 2147483647, %v6408
    %vm6435 = vcmp.eq.f32.partialorder %v6434, 8.507059e+37
    %v6436 = vand.u32 %v6408, 2147483648
    %v6437 = vor.u32 1.1754944e-38, %v6436
    %v6438 = vsel %vm6435, %v6437, %v6433
    %v6439 = vmul.f32 1.0, %v6438
    %v6440 = vrcp.pop %v6409
    %v6441 = vmul.f32 %v6409, %v6440
    %v6442 = vsub.f32 1.0, %v6441
    %v6443 = vmul.f32 %v6440, %v6442
    %v6444 = vadd.f32 %v6440, %v6443
    %vm6445 = vweird.f32 %v6409
    %vm6446 = vweird.f32 %v6440
    %vm6447 = vmor %vm6445, %vm6446
    %v6448 = vsel %vm6447, %v6440, %v6444
    %v6449 = vand.u32 2147483647, %v6409
    %vm6450 = vcmp.eq.f32.partialorder %v6449, 8.507059e+37
    %v6451 = vand.u32 %v6409, 2147483648
    %v6452 = vor.u32 1.1754944e-38, %v6451
    %v6453 = vsel %vm6450, %v6452, %v6448
    %v6454 = vmul.f32 1.0, %v6453
    %v6455 = vtanh.pop %v6395
    %v6456 = vmul.f32 %v6439, %v6002
    %v6457 = vmul.f32 %v6424, %v6455
    %v6458 = vadd.f32 %v6456, %v6457
    %v6459 = vtanh.pop %v6458
    %v6460 = vmul.f32 %v6454, %v6459
    %v6461 = vpack.c.bf16 %v6460, %v6460
    %6462 = vmatpush.bf16.msra.mxu0 %v1262
    %6463 = vmatpush.bf16.msra.mxu0 %v1258
    %6464 = vmatpush.bf16.msra.mxu0 %v1254
    %6465 = vmatpush.bf16.msra.mxu0 %v1250
    %6466 = vmatpush.bf16.msra.mxu0 %v1246
    %6467 = vmatpush.bf16.msra.mxu0 %v1242
    %6468 = vmatpush.bf16.msra.mxu0 %v1238
    %6469 = vmatpush.bf16.msra.mxu0 %v1234
    %6470 = vmatmul.bf16.gmra.mxu0 %v6461
    %v6471 = vpop.f32.mrf.mxu0
    %v6472 = vadd.f32 %v1134, %v6471
    %v6473 = vpop.f32.mrf.mxu0
    %6474 = vdwg.mxu0
    %6475 = vmatpush.bf16.msra.mxu0 %v1986
    %6476 = vmatpush.bf16.msra.mxu0 %v1982
    %6477 = vmatpush.bf16.msra.mxu0 %v1978
    %6478 = vmatpush.bf16.msra.mxu0 %v1974
    %6479 = vmatpush.bf16.msra.mxu0 %v1970
    %6480 = vmatpush.bf16.msra.mxu0 %v1966
    %6481 = vmatpush.bf16.msra.mxu0 %v1962
    %6482 = vmatpush.bf16.msra.mxu0 %v1958
    %6483 = vmatmul.bf16.gmra.mxu0 %v6293
    %v6484 = vpop.f32.mrf.mxu0
    %v6485 = vadd.f32 %v6472, %v6484
    %v6486 = vpop.f32.mrf.mxu0
    %6487 = vdwg.mxu0
    %6488 = vmatpush.bf16.msra.mxu0 %v1263
    %6489 = vmatpush.bf16.msra.mxu0 %v1259
    %6490 = vmatpush.bf16.msra.mxu0 %v1255
    %6491 = vmatpush.bf16.msra.mxu0 %v1251
    %6492 = vmatpush.bf16.msra.mxu0 %v1247
    %6493 = vmatpush.bf16.msra.mxu0 %v1243
    %6494 = vmatpush.bf16.msra.mxu0 %v1239
    %6495 = vmatpush.bf16.msra.mxu0 %v1235
    %6496 = vmatmul.bf16.gmra.mxu0 %v6461
    %v6497 = vpop.f32.mrf.mxu0
    %v6498 = vadd.f32 %v1135, %v6497
    %v6499 = vpop.f32.mrf.mxu0
    %6500 = vdwg.mxu0
    %6501 = vmatpush.bf16.msra.mxu0 %v1987
    %6502 = vmatpush.bf16.msra.mxu0 %v1983
    %6503 = vmatpush.bf16.msra.mxu0 %v1979
    %6504 = vmatpush.bf16.msra.mxu0 %v1975
    %6505 = vmatpush.bf16.msra.mxu0 %v1971
    %6506 = vmatpush.bf16.msra.mxu0 %v1967
    %6507 = vmatpush.bf16.msra.mxu0 %v1963
    %6508 = vmatpush.bf16.msra.mxu0 %v1959
    %6509 = vmatmul.bf16.gmra.mxu0 %v6293
    %v6510 = vpop.f32.mrf.mxu0
    %v6511 = vadd.f32 %v6498, %v6510
    %v6512 = vpop.f32.mrf.mxu0
    %6513 = vdwg.mxu0
    %6514 = vmatpush.bf16.msra.mxu0 %v1264
    %6515 = vmatpush.bf16.msra.mxu0 %v1260
    %6516 = vmatpush.bf16.msra.mxu0 %v1256
    %6517 = vmatpush.bf16.msra.mxu0 %v1252
    %6518 = vmatpush.bf16.msra.mxu0 %v1248
    %6519 = vmatpush.bf16.msra.mxu0 %v1244
    %6520 = vmatpush.bf16.msra.mxu0 %v1240
    %6521 = vmatpush.bf16.msra.mxu0 %v1236
    %6522 = vmatmul.bf16.gmra.mxu0 %v6461
    %v6523 = vpop.f32.mrf.mxu0
    %v6524 = vadd.f32 %v1136, %v6523
    %v6525 = vpop.f32.mrf.mxu0
    %6526 = vdwg.mxu0
    %6527 = vmatpush.bf16.msra.mxu0 %v1988
    %6528 = vmatpush.bf16.msra.mxu0 %v1984
    %6529 = vmatpush.bf16.msra.mxu0 %v1980
    %6530 = vmatpush.bf16.msra.mxu0 %v1976
    %6531 = vmatpush.bf16.msra.mxu0 %v1972
    %6532 = vmatpush.bf16.msra.mxu0 %v1968
    %6533 = vmatpush.bf16.msra.mxu0 %v1964
    %6534 = vmatpush.bf16.msra.mxu0 %v1960
    %6535 = vmatmul.bf16.gmra.mxu0 %v6293
    %v6536 = vpop.f32.mrf.mxu0
    %v6537 = vadd.f32 %v6524, %v6536
    %v6538 = vpop.f32.mrf.mxu0
    %6539 = vdwg.mxu0
    %6540 = vmatpush.bf16.msra.mxu0 %v1265
    %6541 = vmatpush.bf16.msra.mxu0 %v1261
    %6542 = vmatpush.bf16.msra.mxu0 %v1257
    %6543 = vmatpush.bf16.msra.mxu0 %v1253
    %6544 = vmatpush.bf16.msra.mxu0 %v1249
    %6545 = vmatpush.bf16.msra.mxu0 %v1245
    %6546 = vmatpush.bf16.msra.mxu0 %v1241
    %6547 = vmatpush.bf16.msra.mxu0 %v1237
    %6548 = vmatmul.bf16.gmra.mxu0 %v6461
    %v6549 = vpop.f32.mrf.mxu0
    %v6550 = vadd.f32 %v1137, %v6549
    %v6551 = vpop.f32.mrf.mxu0
    %6552 = vdwg.mxu0
    %6553 = vmatpush.bf16.msra.mxu0 %v1989
    %6554 = vmatpush.bf16.msra.mxu0 %v1985
    %6555 = vmatpush.bf16.msra.mxu0 %v1981
    %6556 = vmatpush.bf16.msra.mxu0 %v1977
    %6557 = vmatpush.bf16.msra.mxu0 %v1973
    %6558 = vmatpush.bf16.msra.mxu0 %v1969
    %6559 = vmatpush.bf16.msra.mxu0 %v1965
    %6560 = vmatpush.bf16.msra.mxu0 %v1961
    %6561 = vmatmul.bf16.gmra.mxu0 %v6293
    %v6562 = vpop.f32.mrf.mxu0
    %v6563 = vadd.f32 %v6550, %v6562
    %v6564 = vpop.f32.mrf.mxu0
    %6565 = vdwg.mxu0
    %v6566 = vxor.u32 %v6485, 2147483648
    %v6567 = vxor.u32 %v6511, 2147483648
    %v6568 = vxor.u32 %v6537, 2147483648
    %v6569 = vmul.f32 %v6566, 1.442695
    %v6570 = vpow.pop %v6569
    %v6571 = vmul.f32 %v6567, 1.442695
    %v6572 = vpow.pop %v6571
    %v6573 = vmul.f32 %v6568, 1.442695
    %v6574 = vpow.pop %v6573
    %v6575 = vadd.f32 %v6570, 1.0
    %v6576 = vadd.f32 %v6572, 1.0
    %v6577 = vadd.f32 %v6574, 1.0
    %v6578 = vrcp.pop %v6575
    %v6579 = vmul.f32 %v6575, %v6578
    %v6580 = vsub.f32 1.0, %v6579
    %v6581 = vmul.f32 %v6578, %v6580
    %v6582 = vadd.f32 %v6578, %v6581
    %vm6583 = vweird.f32 %v6575
    %vm6584 = vweird.f32 %v6578
    %vm6585 = vmor %vm6583, %vm6584
    %v6586 = vsel %vm6585, %v6578, %v6582
    %v6587 = vand.u32 2147483647, %v6575
    %vm6588 = vcmp.eq.f32.partialorder %v6587, 8.507059e+37
    %v6589 = vand.u32 %v6575, 2147483648
    %v6590 = vor.u32 1.1754944e-38, %v6589
    %v6591 = vsel %vm6588, %v6590, %v6586
    %v6592 = vmul.f32 1.0, %v6591
    %v6593 = vrcp.pop %v6576
    %v6594 = vmul.f32 %v6576, %v6593
    %v6595 = vsub.f32 1.0, %v6594
    %v6596 = vmul.f32 %v6593, %v6595
    %v6597 = vadd.f32 %v6593, %v6596
    %vm6598 = vweird.f32 %v6576
    %vm6599 = vweird.f32 %v6593
    %vm6600 = vmor %vm6598, %vm6599
    %v6601 = vsel %vm6600, %v6593, %v6597
    %v6602 = vand.u32 2147483647, %v6576
    %vm6603 = vcmp.eq.f32.partialorder %v6602, 8.507059e+37
    %v6604 = vand.u32 %v6576, 2147483648
    %v6605 = vor.u32 1.1754944e-38, %v6604
    %v6606 = vsel %vm6603, %v6605, %v6601
    %v6607 = vmul.f32 1.0, %v6606
    %v6608 = vrcp.pop %v6577
    %v6609 = vmul.f32 %v6577, %v6608
    %v6610 = vsub.f32 1.0, %v6609
    %v6611 = vmul.f32 %v6608, %v6610
    %v6612 = vadd.f32 %v6608, %v6611
    %vm6613 = vweird.f32 %v6577
    %vm6614 = vweird.f32 %v6608
    %vm6615 = vmor %vm6613, %vm6614
    %v6616 = vsel %vm6615, %v6608, %v6612
    %v6617 = vand.u32 2147483647, %v6577
    %vm6618 = vcmp.eq.f32.partialorder %v6617, 8.507059e+37
    %v6619 = vand.u32 %v6577, 2147483648
    %v6620 = vor.u32 1.1754944e-38, %v6619
    %v6621 = vsel %vm6618, %v6620, %v6616
    %v6622 = vmul.f32 1.0, %v6621
    %v6623 = vtanh.pop %v6563
    %v6624 = vmul.f32 %v6607, %v6290
    %v6625 = vmul.f32 %v6592, %v6623
    %v6626 = vadd.f32 %v6624, %v6625
    %v6627 = vtanh.pop %v6626
    %v6628 = vmul.f32 %v6622, %v6627
    %v6629 = vpack.c.bf16 %v6628, %v6628
    %v6630 = vld [vmem:[%s6] sm:$0xf]
    %v6631 = vld [vmem:[%s6 + $0x4] sm:$0xf]
    %v6632 = vld [vmem:[%s6 + $0x8] sm:$0xf]
    %v6633 = vld [vmem:[%s6 + $0xc] sm:$0xf]
    %v6634 = vld [vmem:[%s6 + $0x10] sm:$0xf]
    %v6635 = vld [vmem:[%s6 + $0x14] sm:$0xf]
    %v6636 = vld [vmem:[%s6 + $0x18] sm:$0xf]
    %v6637 = vld [vmem:[%s6 + $0x1c] sm:$0xf]
    %v6638 = vld [vmem:[%s6 + $0x20] sm:$0xf]
    %v6639 = vld [vmem:[%s6 + $0x24] sm:$0xf]
    %v6640 = vld [vmem:[%s6 + $0x28] sm:$0xf]
    %v6641 = vld [vmem:[%s6 + $0x2c] sm:$0xf]
    %v6642 = vld [vmem:[%s6 + $0x30] sm:$0xf]
    %v6643 = vld [vmem:[%s6 + $0x34] sm:$0xf]
    %v6644 = vld [vmem:[%s6 + $0x38] sm:$0xf]
    %v6645 = vld [vmem:[%s6 + $0x3c] sm:$0xf]
    %v6646 = vld [vmem:[%s7] sm:$0x1]
    %v6648 = vperm.slane %v6646, 0
    %v6666 = vunpack.c.l.b16 %v6630
    %v6667 = vunpack.c.l.b16 %v6631
    %v6668 = vunpack.c.l.b16 %v6632
    %v6669 = vunpack.c.l.b16 %v6633
    %v6670 = vunpack.c.l.b16 %v6634
    %v6671 = vunpack.c.l.b16 %v6635
    %v6672 = vunpack.c.l.b16 %v6636
    %v6673 = vunpack.c.l.b16 %v6637
    %v6674 = vunpack.c.l.b16 %v6638
    %v6675 = vunpack.c.l.b16 %v6639
    %v6676 = vunpack.c.l.b16 %v6640
    %v6677 = vunpack.c.l.b16 %v6641
    %v6678 = vunpack.c.l.b16 %v6642
    %v6679 = vunpack.c.l.b16 %v6643
    %v6680 = vunpack.c.l.b16 %v6644
    %v6681 = vunpack.c.l.b16 %v6645
    %v6682 = vpack.c.b16 %v6667, %v6666
    %v6683 = vpack.c.b16 %v6669, %v6668
    %v6684 = vpack.c.b16 %v6671, %v6670
    %v6685 = vpack.c.b16 %v6673, %v6672
    %v6686 = vpack.c.b16 %v6675, %v6674
    %v6687 = vpack.c.b16 %v6677, %v6676
    %v6688 = vpack.c.b16 %v6679, %v6678
    %v6689 = vpack.c.b16 %v6681, %v6680
    %6698 = vmatpush.bf16.msra.mxu0 %v6689
    %6699 = vmatpush.bf16.msra.mxu0 %v6688
    %6700 = vmatpush.bf16.msra.mxu0 %v6687
    %6701 = vmatpush.bf16.msra.mxu0 %v6686
    %6702 = vmatpush.bf16.msra.mxu0 %v6685
    %6703 = vmatpush.bf16.msra.mxu0 %v6684
    %6704 = vmatpush.bf16.msra.mxu0 %v6683
    %6705 = vmatpush.bf16.msra.mxu0 %v6682
    %6706 = vmatmul.bf16.gmra.mxu0 %v6629
    %v6707 = vpop.f32.mrf.mxu0
    %v6708 = vadd.f32 %v6648, %v6707
    %v6709 = vpop.f32.mrf.mxu0
    %6710 = vdwg.mxu0
    %v6711 = vld [vmem:[%s8] sm:$0xf]
    %v6712 = vld [vmem:[%s8 + $0x4] sm:$0xf]
    %v6713 = vld [vmem:[%s8 + $0x8] sm:$0xf]
    %v6714 = vld [vmem:[%s8 + $0xc] sm:$0xf]
    %v6715 = vld [vmem:[%s8 + $0x10] sm:$0xf]
    %v6716 = vld [vmem:[%s8 + $0x14] sm:$0xf]
    %v6717 = vld [vmem:[%s8 + $0x18] sm:$0xf]
    %v6718 = vld [vmem:[%s8 + $0x1c] sm:$0xf]
    %v6719 = vld [vmem:[%s8 + $0x20] sm:$0xf]
    %v6720 = vld [vmem:[%s8 + $0x24] sm:$0xf]
    %v6721 = vld [vmem:[%s8 + $0x28] sm:$0xf]
    %v6722 = vld [vmem:[%s8 + $0x2c] sm:$0xf]
    %v6723 = vld [vmem:[%s8 + $0x30] sm:$0xf]
    %v6724 = vld [vmem:[%s8 + $0x34] sm:$0xf]
    %v6725 = vld [vmem:[%s8 + $0x38] sm:$0xf]
    %v6726 = vld [vmem:[%s8 + $0x3c] sm:$0xf]
    %v6727 = vld [vmem:[%s8 + $0x40] sm:$0xf]
    %v6728 = vld [vmem:[%s8 + $0x44] sm:$0xf]
    %v6729 = vld [vmem:[%s8 + $0x48] sm:$0xf]
    %v6730 = vld [vmem:[%s8 + $0x4c] sm:$0xf]
    %v6731 = vld [vmem:[%s8 + $0x50] sm:$0xf]
    %v6732 = vld [vmem:[%s8 + $0x54] sm:$0xf]
    %v6733 = vld [vmem:[%s8 + $0x58] sm:$0xf]
    %v6734 = vld [vmem:[%s8 + $0x5c] sm:$0xf]
    %v6735 = vld [vmem:[%s8 + $0x60] sm:$0xf]
    %v6736 = vld [vmem:[%s8 + $0x64] sm:$0xf]
    %v6737 = vld [vmem:[%s8 + $0x68] sm:$0xf]
    %v6738 = vld [vmem:[%s8 + $0x6c] sm:$0xf]
    %v6739 = vld [vmem:[%s8 + $0x70] sm:$0xf]
    %v6740 = vld [vmem:[%s8 + $0x74] sm:$0xf]
    %v6741 = vld [vmem:[%s9] sm:$0x1f]
    %v6742 = vld [vmem:[%s1] sm:$0xff]
    %v6743 = vpack.c.bf16 %v6708, %v6708
    %6745 = vset.pattern.permute.xlu0 0
    %6746 = vperm.xlu0 %6745, %v6742
    %v6747 = vpop.permute.xlu0 %6746
    %v6749 = vperm.slane %v6741, 4
    %v6750 = vmul.f32 %v6747, %v6749
    %v6767 = vunpack.c.l.b16 %v6711
    %v6768 = vunpack.c.l.b16 %v6712
    %v6769 = vunpack.c.l.b16 %v6713
    %v6770 = vunpack.c.l.b16 %v6714
    %v6771 = vunpack.c.l.b16 %v6715
    %v6772 = vunpack.c.l.b16 %v6716
    %v6773 = vunpack.c.l.b16 %v6717
    %v6774 = vunpack.c.l.b16 %v6718
    %v6775 = vunpack.c.l.b16 %v6719
    %v6776 = vunpack.c.l.b16 %v6720
    %v6777 = vunpack.c.l.b16 %v6721
    %v6778 = vunpack.c.l.b16 %v6722
    %v6779 = vunpack.c.l.b16 %v6723
    %v6780 = vunpack.c.l.b16 %v6724
    %v6781 = vunpack.c.l.b16 %v6725
    %v6782 = vunpack.c.l.b16 %v6726
    %v6783 = vpack.c.b16 %v6768, %v6767
    %v6784 = vpack.c.b16 %v6770, %v6769
    %v6785 = vpack.c.b16 %v6772, %v6771
    %v6786 = vpack.c.b16 %v6774, %v6773
    %v6787 = vpack.c.b16 %v6776, %v6775
    %v6788 = vpack.c.b16 %v6778, %v6777
    %v6789 = vpack.c.b16 %v6780, %v6779
    %v6790 = vpack.c.b16 %v6782, %v6781
    %6799 = vmatpush.bf16.msra.mxu0 %v6790
    %6800 = vmatpush.bf16.msra.mxu0 %v6789
    %6801 = vmatpush.bf16.msra.mxu0 %v6788
    %6802 = vmatpush.bf16.msra.mxu0 %v6787
    %6803 = vmatpush.bf16.msra.mxu0 %v6786
    %6804 = vmatpush.bf16.msra.mxu0 %v6785
    %6805 = vmatpush.bf16.msra.mxu0 %v6784
    %6806 = vmatpush.bf16.msra.mxu0 %v6783
    %6807 = vmatmul.bf16.gmra.mxu0 %v6743
    %v6808 = vpop.f32.mrf.mxu0
    %v6809 = vadd.f32 %v6750, %v6808
    %v6810 = vpop.f32.mrf.mxu0
    %6811 = vdwg.mxu0
    %v6812 = vperm.slane %v6741, 0
    %v6813 = vadd.f32 %v6809, %v6812
    %v6814 = vmax.f32 %v6813, 0.0
    %v6815 = vpack.c.bf16 %v6814, %v6814
    %v6816 = vperm.slane %v6741, 1
    %v6825 = vunpack.c.l.b16 %v6727
    %v6826 = vunpack.c.l.b16 %v6728
    %v6827 = vunpack.c.l.b16 %v6729
    %v6828 = vunpack.c.l.b16 %v6730
    %v6829 = vunpack.c.l.b16 %v6731
    %v6830 = vunpack.c.l.b16 %v6732
    %v6831 = vunpack.c.l.b16 %v6733
    %v6832 = vunpack.c.l.b16 %v6734
    %v6833 = vpack.c.b16 %v6826, %v6825
    %v6834 = vpack.c.b16 %v6828, %v6827
    %v6835 = vpack.c.b16 %v6830, %v6829
    %v6836 = vpack.c.b16 %v6832, %v6831
    %vm6841 = vcmask 523264
    %v6843 = vsel %vm6841, %v6815, 0
    %6845 = vmatpush.bf16.msra.mxu0 0
    %6846 = vmatpush.bf16.msra.mxu0 0
    %6847 = vmatpush.bf16.msra.mxu0 0
    %6848 = vmatpush.bf16.msra.mxu0 0
    %6849 = vmatpush.bf16.msra.mxu0 %v6836
    %6850 = vmatpush.bf16.msra.mxu0 %v6835
    %6851 = vmatpush.bf16.msra.mxu0 %v6834
    %6852 = vmatpush.bf16.msra.mxu0 %v6833
    %6853 = vmatmul.bf16.gmra.mxu0 %v6843
    %v6854 = vpop.f32.mrf.mxu0
    %v6855 = vadd.f32 %v6816, %v6854
    %v6856 = vpop.f32.mrf.mxu0
    %6857 = vdwg.mxu0
    %v6858 = vmax.f32 %v6855, 0.0
    %v6859 = vpack.c.bf16 %v6858, %v6858
    %v6860 = vperm.slane %v6741, 2
    %v6865 = vunpack.c.l.b16 %v6735
    %v6866 = vunpack.c.l.b16 %v6736
    %v6867 = vunpack.c.l.b16 %v6737
    %v6868 = vunpack.c.l.b16 %v6738
    %v6869 = vpack.c.b16 %v6866, %v6865
    %v6870 = vpack.c.b16 %v6868, %v6867
    %vm6873 = vcmask 261120
    %v6875 = vsel %vm6873, %v6859, 0
    %6877 = vmatpush.bf16.msra.mxu0 0
    %6878 = vmatpush.bf16.msra.mxu0 0
    %6879 = vmatpush.bf16.msra.mxu0 0
    %6880 = vmatpush.bf16.msra.mxu0 0
    %6881 = vmatpush.bf16.msra.mxu0 0
    %6882 = vmatpush.bf16.msra.mxu0 0
    %6883 = vmatpush.bf16.msra.mxu0 %v6870
    %6884 = vmatpush.bf16.msra.mxu0 %v6869
    %6885 = vmatmul.bf16.gmra.mxu0 %v6875
    %v6886 = vpop.f32.mrf.mxu0
    %v6887 = vadd.f32 %v6860, %v6886
    %v6888 = vpop.f32.mrf.mxu0
    %6889 = vdwg.mxu0
    %v6890 = vmax.f32 %v6887, 0.0
    %v6891 = vpack.c.bf16 %v6890, %v6890
    %v6892 = vperm.slane %v6741, 3
    %v6895 = vunpack.c.l.b16 %v6739
    %v6896 = vunpack.c.l.b16 %v6740
    %v6897 = vpack.c.b16 %v6896, %v6895
    %vm6899 = vcmask 130048
    %v6901 = vsel %vm6899, %v6891, 0
    %6903 = vmatpush.bf16.msra.mxu0 0
    %6904 = vmatpush.bf16.msra.mxu0 0
    %6905 = vmatpush.bf16.msra.mxu0 0
    %6906 = vmatpush.bf16.msra.mxu0 0
    %6907 = vmatpush.bf16.msra.mxu0 0
    %6908 = vmatpush.bf16.msra.mxu0 0
    %6909 = vmatpush.bf16.msra.mxu0 0
    %6910 = vmatpush.bf16.msra.mxu0 %v6897
    %6911 = vmatmul.bf16.gmra.mxu0 %v6901
    %v6912 = vpop.f32.mrf.mxu0
    %v6913 = vadd.f32 %v6892, %v6912
    %v6914 = vpop.f32.mrf.mxu0
    %6915 = vdwg.mxu0
    %vm6916 = vcmask 7168
    %6917 = vst.msk [vmem:[%s10] sm:$0xff] %vm6916, %v6913
    // Predicated region
    $region46: #{lstm_model_forward.1} parent=1 // pred_check
      _
    $region47: #{lstm_model_forward.1} parent=1 // pred_check_branch
      %6919 = sbr.rel (0) target = $region49
    $region48: #{lstm_model_forward.1} parent=1 // pred_region
      _
    $region49: #{lstm_model_forward.1} parent=1 // pred_fallthru
      _
    // Predicated region
    $region50: #{lstm_model_forward.1} parent=1 // pred_check
      _
    $region51: #{lstm_model_forward.1} parent=1 // pred_check_branch
      %6921 = sbr.rel (0) target = $region53
    $region52: #{lstm_model_forward.1} parent=1 // pred_region
      _
    $region53: #{lstm_model_forward.1} parent=1 // pred_fallthru
      _
    %6922 = vsyncpa [#allocation3], 1

</llo_original>
